<compile_context>
chip_gen: v7x
topology: tpu7x:2x2x1
jax: 0.10.0
libtpu: 0.0.40
codegen_flags: <defaults>
</compile_context>

<pallas_src>
import functools

import jax
import jax.numpy as jnp
import numpy as np
from jax.experimental import pallas as pl
from jax.experimental.pallas import tpu as pltpu

EPS = 1e-5  # nn.BatchNorm2d default eps
LANE = 128


def _round_up(x, m):
    return (x + m - 1) // m * m


def _vmem_limit_bytes():
    """64 MiB scoped limit on 128 MiB parts (v5e/v6e), 32 MiB on v7x (64 MiB)."""
    try:
        cap = int(pltpu.get_tpu_info().vmem_capacity_bytes)
    except Exception:
        cap = 64 * 1024 * 1024
    return int(min(64 * 1024 * 1024, max(32 * 1024 * 1024, cap // 2)))


def _choose_th(H, W, Cp, cdt_bytes, budget_bytes):
    """Largest divisor of H whose per-grid-step VMEM estimate fits the budget.

    Accounts for the resident (double-buffered) 3x3 weight block, the streamed
    halo/body/output blocks and the f32 in-kernel temporaries.
    """
    weights = 2 * 9 * Cp * Cp * cdt_bytes

    def per_step(th):
        halo = (th + 2) * W * Cp
        body = th * W * Cp
        streamed = 2 * (halo + 2 * body) * 4   # double-buffered ins + outs, f32 worst case
        temps = 6 * halo * 4                   # assembled tile + column shifts + accumulator
        return weights + streamed + temps

    best = 1
    for th in range(1, H + 1):
        if H % th == 0 and per_step(th) <= budget_bytes:
            best = th
    return best
    # NOTE: for very large Cp (>= 512) an output-column grid axis on the weight
    # block would be the next step; not needed at the shapes exercised here.


# ---------------------------------------------------------------------------
# In-kernel helpers
# ---------------------------------------------------------------------------
def _shifted_windows(y, TH, W, Cp):
    """y: (TH+2, W, Cp).  Returns (kw=0, kw=1, kw=2) column-shifted variants
    with zero padding, i.e. variant[kw][:, c, :] = input column c + kw - 1."""
    zc = jnp.zeros((TH + 2, 1, Cp), y.dtype)
    y_l = jnp.concatenate([zc, y[:, : W - 1, :]], axis=1)
    y_r = jnp.concatenate([y[:, 1:, :], zc], axis=1)
    return (y_l, y, y_r)


def _conv3x3_from_tile(y, w_ref, TH, W, Cp):
    """3x3 conv of an assembled halo tile via 9 accumulated MXU dots.

    y: (TH+2, W, Cp) in compute dtype (already zero at all padding positions),
    w_ref: (9, Cp, Cp) tap-major (kh*3 + kw) weights.  Returns (TH*W, Cp) f32.
    """
    shifts = _shifted_windows(y, TH, W, Cp)
    acc = jnp.zeros((TH * W, Cp), jnp.float32)
    for kh in range(3):
        for kw in range(3):
            win = shifts[kw][kh:kh + TH].reshape(TH * W, Cp)
            acc = acc + jnp.dot(win, w_ref[kh * 3 + kw],
                                preferred_element_type=jnp.float32)
    return acc


def _tile_stats(acc):
    """Per-tile (sum, sumsq) over rows of the f32 accumulator -> (1, 2, Cp)."""
    s = jnp.sum(acc, axis=0, keepdims=True)
    q = jnp.sum(acc * acc, axis=0, keepdims=True)
    return jnp.concatenate([s, q], axis=0)[None]


# ---------------------------------------------------------------------------
# Kernels
# ---------------------------------------------------------------------------
def _conv2_stats_kernel(nH, TH, W, Cp,
                        xb_ref, xt_ref, xbt_ref, w_ref,
                        raw_ref, part_ref):
    """Stage 1: raw2 = conv3x3(x) on a halo tile + per-tile BN partial stats."""
    h = pl.program_id(1)
    cdt = xb_ref.dtype
    gate_t = (h > 0).astype(cdt)            # top halo is image padding when h == 0
    gate_b = (h < nH - 1).astype(cdt)       # bottom halo is padding on the last tile
    top = xt_ref[0] * gate_t                # (1, W, Cp)
    bot = xbt_ref[0] * gate_b               # (1, W, Cp)
    y = jnp.concatenate([top, xb_ref[0], bot], axis=0)   # (TH+2, W, Cp)

    acc = _conv3x3_from_tile(y, w_ref, TH, W, Cp)
    raw_ref[...] = acc.reshape(1, TH, W, Cp).astype(raw_ref.dtype)
    part_ref[...] = _tile_stats(acc)


def _conv3_stats_kernel(nH, TH, W, Cp, cdt,
                        rb_ref, rt_ref, rbt_ref, w_ref, sc_ref, sh_ref,
                        raw_ref, part_ref):
    """Stage 2: apply BN2 affine to the raw2 halo tile in-kernel (exact: halo
    rows/columns are zero-gated AFTER the affine, matching conv_3's zero
    padding), then raw3 = conv3x3(y2) + per-tile BN3 partial stats."""
    h = pl.program_id(1)
    f32 = jnp.float32
    sc = sc_ref[...].reshape(1, 1, Cp)
    sh = sh_ref[...].reshape(1, 1, Cp)
    gate_t = (h > 0).astype(f32)
    gate_b = (h < nH - 1).astype(f32)

    top = (rt_ref[0].astype(f32) * sc + sh) * gate_t
    bot = (rbt_ref[0].astype(f32) * sc + sh) * gate_b
    body = rb_ref[0].astype(f32) * sc + sh
    y = jnp.concatenate([top, body, bot], axis=0).astype(cdt)   # (TH+2, W, Cp)

    acc = _conv3x3_from_tile(y, w_ref, TH, W, Cp)
    raw_ref[...] = acc.reshape(1, TH, W, Cp).astype(raw_ref.dtype)
    part_ref[...] = _tile_stats(acc)


def _final_kernel(neg_slope, TH, W, Cp,
                  r3_ref, x_ref, w1_ref, b1_ref, sc_ref, sh_ref, o_ref):
    """Stage 3: road1 = LeakyReLU(BN3(raw3)); road2 = conv1x1(x) + b1;
    out = LeakyReLU(road1 + road2)."""
    f32 = jnp.float32
    sc = sc_ref[...].reshape(1, 1, Cp)
    sh = sh_ref[...].reshape(1, 1, Cp)

    road1 = r3_ref[0].astype(f32) * sc + sh
    road1 = jnp.where(road1 >= 0, road1, neg_slope * road1)

    x2d = x_ref[0].reshape(TH * W, Cp)
    road2 = jnp.dot(x2d, w1_ref[...], preferred_element_type=f32)
    road2 = road2.reshape(TH, W, Cp) + b1_ref[...].reshape(1, 1, Cp)

    s = road1 + road2
    o_ref[...] = jnp.where(s >= 0, s, neg_slope * s)[None].astype(o_ref.dtype)


# ---------------------------------------------------------------------------
# BN finalize (tiny, plain JAX)
# ---------------------------------------------------------------------------
def _bn_scale_shift(partials, cnt, gamma, beta):
    """Merge per-tile (sum, sumsq) into BN scale/shift using batch statistics.

    Chan-style merge (per-tile M2, then recombine) for better numerical
    cancellation than a single global E[x^2] - E[x]^2."""
    s = partials[:, 0, :]                       # (G, Cp)
    q = partials[:, 1, :]
    g = partials.shape[0]
    total = g * cnt
    mean_i = s / cnt
    m2_i = jnp.maximum(q - s * mean_i, 0.0)
    mean = jnp.sum(s, axis=0) / total           # (Cp,)
    m2 = jnp.sum(m2_i, axis=0) + cnt * jnp.sum((mean_i - mean[None, :]) ** 2, axis=0)
    var = jnp.maximum(m2 / total, 0.0)
    inv = jax.lax.rsqrt(var + EPS)
    scale = gamma.reshape(-1) * inv
    shift = beta.reshape(-1) - mean * scale
    return scale.reshape(1, -1), shift.reshape(1, -1)


# ---------------------------------------------------------------------------
# Parameters
# ---------------------------------------------------------------------------
def init_params(key, C):
    """Deterministic init with PyTorch-like fan_in-scaled uniform bounds."""
    ks = jax.random.split(key, 6)

    def uni(k, shape, fan_in):
        bound = 1.0 / np.sqrt(fan_in)
        return jax.random.uniform(k, shape, jnp.float32, -bound, bound)

    return {
        # conv_2: 3x3 conv + BN          (w*: (tap, c_in, c_out) tap-major kh*3+kw)
        "w2": uni(ks[0], (9, C, C), C * 9),
        "b2": uni(ks[1], (1, C), C * 9),
        "g2": jnp.ones((1, C), jnp.float32),
        "beta2": jnp.zeros((1, C), jnp.float32),
        # conv_3: 3x3 conv + BN (+ LeakyReLU)
        "w3": uni(ks[2], (9, C, C), C * 9),
        "b3": uni(ks[3], (1, C), C * 9),
        "g3": jnp.ones((1, C), jnp.float32),
        "beta3": jnp.zeros((1, C), jnp.float32),
        # conv1d: 1x1 conv               (w1: (c_in, c_out))
        "w1": uni(ks[4], (C, C), C),
        "b1": uni(ks[5], (1, C), C),
    }


# ---------------------------------------------------------------------------
# Forward
# ---------------------------------------------------------------------------
def conv_block_forward(x_nchw, params, negative_slope, compute_dtype=jnp.bfloat16):
    f32 = jnp.float32
    N, C, H, W = x_nchw.shape
    Cp = _round_up(C, LANE)
    cdt = jnp.dtype(compute_dtype)
    raw_dtype = cdt                          # raw conv outputs stored in compute dtype
    vmem_limit = _vmem_limit_bytes()

    TH = _choose_th(H, W, Cp, cdt.itemsize, min(8 * 1024 * 1024, vmem_limit // 4))
    nH = H // TH
    G = N * nH
    cnt = TH * W                             # pixels per grid step

    cparams = pltpu.CompilerParams(
        dimension_semantics=("parallel", "parallel"),
        vmem_limit_bytes=vmem_limit)

    # ---- inputs / weights (cast early, lane-dense channel padding) ----
    x = jnp.transpose(x_nchw.astype(cdt), (0, 2, 3, 1))         # NHWC, compute dtype
    x = jnp.pad(x, ((0, 0), (0, 0), (0, 0), (0, Cp - C)))       # (N, H, W, Cp)

    def pad_w9(w):                                              # (9, C, C) -> (9, Cp, Cp)
        return jnp.pad(w, ((0, 0), (0, Cp - C), (0, Cp - C))).astype(cdt)

    def pad_vec(v):                                             # (1, C) -> (1, Cp) f32
        return jnp.pad(v, ((0, 0), (0, Cp - C))).astype(f32)

    w2 = pad_w9(params["w2"])
    w3 = pad_w9(params["w3"])
    w1 = jnp.pad(params["w1"], ((0, Cp - C), (0, Cp - C))).astype(cdt)
    b1 = pad_vec(params["b1"])
    g2, be2 = pad_vec(params["g2"]), pad_vec(params["beta2"])
    g3, be3 = pad_vec(params["g3"]), pad_vec(params["beta3"])
    # b2 / b3 are intentionally dropped: added before BatchNorm, exactly
    # cancelled by the batch-mean subtraction.

    # ---- BlockSpecs ----
    grid = (N, nH)
    body = pl.BlockSpec((1, TH, W, Cp), lambda n, h: (n, h, 0, 0))
    # Halo rows: block size 1 along H => block index == row index.  Clamp at the
    # image boundary and zero-gate in-kernel (conv zero padding).
    top = pl.BlockSpec((1, 1, W, Cp),
                       lambda n, h: (n, jnp.maximum(h * TH - 1, 0), 0, 0))
    bot = pl.BlockSpec((1, 1, W, Cp),
                       lambda n, h: (n, jnp.minimum(h * TH + TH, H - 1), 0, 0))
    w9_spec = pl.BlockSpec((9, Cp, Cp), lambda n, h: (0, 0, 0))
    w1_spec = pl.BlockSpec((Cp, Cp), lambda n, h: (0, 0))
    vec_spec = pl.BlockSpec((1, Cp), lambda n, h: (0, 0))
    part_spec = pl.BlockSpec((1, 2, Cp), lambda n, h: (n * nH + h, 0, 0))

    # ---- Stage 1: conv_2 (halo-tiled 3x3) + per-tile BN2 partial stats ----
    raw2, part2 = pl.pallas_call(
        functools.partial(_conv2_stats_kernel, nH, TH, W, Cp),
        grid=grid,
        in_specs=[body, top, bot, w9_spec],
        out_specs=(body, part_spec),
        out_shape=(jax.ShapeDtypeStruct((N, H, W, Cp), raw_dtype),
                   jax.ShapeDtypeStruct((G, 2, Cp), f32)),
        compiler_params=cparams,
    )(x, x, x, w2)

    sc2, sh2 = _bn_scale_shift(part2, cnt, g2, be2)

    # ---- Stage 2: BN2-apply fused into conv_3 (halo-tiled 3x3) + BN3 stats ----
    raw3, part3 = pl.pallas_call(
        functools.partial(_conv3_stats_kernel, nH, TH, W, Cp, cdt),
        grid=grid,
        in_specs=[body, top, bot, w9_spec, vec_spec, vec_spec],
        out_specs=(body, part_spec),
        out_shape=(jax.ShapeDtypeStruct((N, H, W, Cp), raw_dtype),
                   jax.ShapeDtypeStruct((G, 2, Cp), f32)),
        compiler_params=cparams,
    )(raw2, raw2, raw2, w3, sc2, sh2)

    sc3, sh3 = _bn_scale_shift(part3, cnt, g3, be3)

    # ---- Stage 3: BN3 + LeakyReLU, 1x1-conv residual (+b1), final LeakyReLU ----
    out = pl.pallas_call(
        functools.partial(_final_kernel, negative_slope, TH, W, Cp),
        grid=grid,
        in_specs=[body, body, w1_spec, vec_spec, vec_spec, vec_spec],
        out_specs=body,
        out_shape=jax.ShapeDtypeStruct((N, H, W, Cp), f32),
        compiler_params=cparams,
    )(raw3, x, w1, b1, sc3, sh3)

    out = out[:, :, :, :C]
    return jnp.transpose(out, (0, 3, 1, 2))


# ---------------------------------------------------------------------------
# Pure-JAX reference (faithful to the PyTorch module, incl. the cancelled biases)
# ---------------------------------------------------------------------------
def _im2col_3x3(x_nhwc):
    N, H, W, C = x_nhwc.shape
    xp = jnp.pad(x_nhwc, ((0, 0), (1, 1), (1, 1), (0, 0)))
    cols = [xp[:, kh:kh + H, kw:kw + W, :].reshape(N * H * W, C)
            for kh in range(3) for kw in range(3)]
    return jnp.concatenate(cols, axis=1)


def ref_forward(x_nchw, params, negative_slope):
    x = jnp.transpose(x_nchw, (0, 2, 3, 1)).astype(jnp.float32)
    N, H, W, C = x.shape

    def conv3x3(a, w9, b):
        xs = _im2col_3x3(a)                     # (M, 9*C)
        y = xs @ w9.reshape(9 * C, C) + b
        return y.reshape(N, H, W, C)

    def bn(a, g, beta):
        m = jnp.mean(a, axis=(0, 1, 2), keepdims=True)
        v = jnp.mean((a - m) ** 2, axis=(0, 1, 2), keepdims=True)
        return (a - m) * jax.lax.rsqrt(v + EPS) * g.reshape(1, 1, 1, -1) + beta.reshape(1, 1, 1, -1)

    def lrelu(a):
        return jnp.where(a >= 0, a, negative_slope * a)

    y2 = bn(conv3x3(x, params["w2"], params["b2"]), params["g2"], params["beta2"])
    road1 = lrelu(bn(conv3x3(y2, params["w3"], params["b3"]), params["g3"], params["beta3"]))
    road2 = jnp.einsum("nhwc,cd->nhwd", x, params["w1"]) + params["b1"].reshape(1, 1, 1, -1)
    out = lrelu(road1 + road2)
    return jnp.transpose(out, (0, 3, 1, 2))


if __name__ == "__main__":
    N, C, H, W = 2, 4, 16, 16
    negative_slope = 0.1

    key = jax.random.PRNGKey(0)
    k_x, k_p = jax.random.split(key)
    x = jax.random.normal(k_x, (N, C, H, W), jnp.float32)
    params = init_params(k_p, C)

    fwd = jax.jit(conv_block_forward,
                  static_argnames=("negative_slope", "compute_dtype"))

    ref = np.asarray(ref_forward(x, params, negative_slope))

    # f32 path: tight correctness anchor vs. the pure-JAX reference.
    out_f32 = jax.block_until_ready(
        fwd(x, params, negative_slope=negative_slope, compute_dtype=jnp.float32))
    np.testing.assert_allclose(np.asarray(out_f32), ref, rtol=1e-3, atol=1e-3)

    # bf16 fast path (MXU-native, bf16 raw intermediates): looser tolerance.
    out_bf16 = jax.block_until_ready(
        fwd(x, params, negative_slope=negative_slope, compute_dtype=jnp.bfloat16))
    np.testing.assert_allclose(np.asarray(out_bf16), ref, rtol=5e-2, atol=5e-2)

    assert out_f32.shape == (N, C, H, W) and out_bf16.shape == (N, C, H, W)
    print("KERNEL_OK")
</pallas_src>

<mosaic_0001>
module attributes {stable_mosaic.version = 11 : i64} {
  func.func @_conv2_stats_kernel(%arg0: i32, %arg1: i32, %arg2: memref<1x16x16x128xf32, #tpu.memory_space<vmem>>, %arg3: memref<1x1x16x128xf32, #tpu.memory_space<vmem>>, %arg4: memref<1x1x16x128xf32, #tpu.memory_space<vmem>>, %arg5: memref<9x128x128xf32, #tpu.memory_space<vmem>>, %arg6: memref<1x16x16x128xf32, #tpu.memory_space<vmem>>, %arg7: memref<1x2x128xf32, #tpu.memory_space<vmem>>) attributes {dimension_semantics = [#tpu.dimension_semantics<parallel>, #tpu.dimension_semantics<parallel>], iteration_bounds = array<i64: 2, 1>, scalar_prefetch = 0 : i64, scratch_operands = 0 : i64, tpu.core_type = #tpu.core_type<tc>, window_params = [{transform_indices = @transform_0, window_bounds = array<i64: 1, 16, 16, 128>}, {transform_indices = @transform_1, window_bounds = array<i64: 1, 1, 16, 128>}, {transform_indices = @transform_2, window_bounds = array<i64: 1, 1, 16, 128>}, {pipeline_mode = #tpu.pipeline_mode<synchronous>, transform_indices = @transform_3, window_bounds = array<i64: 9, 128, 128>}, {transform_indices = @transform_4, window_bounds = array<i64: 1, 16, 16, 128>}, {transform_indices = @transform_5, window_bounds = array<i64: 1, 2, 128>}]} {
    %c0_i32 = arith.constant 0 : i32
    %0 = arith.cmpi sgt, %arg1, %c0_i32 : i32
    %1 = arith.extui %0 : i1 to i32
    %2 = arith.sitofp %1 : i32 to f32
    %c0_i32_0 = arith.constant 0 : i32
    %3 = arith.cmpi slt, %arg1, %c0_i32_0 : i32
    %4 = arith.extui %3 : i1 to i32
    %5 = arith.sitofp %4 : i32 to f32
    %c0 = arith.constant 0 : index
    %c0_1 = arith.constant 0 : index
    %c0_2 = arith.constant 0 : index
    %c0_3 = arith.constant 0 : index
    %6 = vector.load %arg3[%c0, %c0_1, %c0_2, %c0_3] : memref<1x1x16x128xf32, #tpu.memory_space<vmem>>, vector<1x1x16x128xf32>
    %7 = vector.shape_cast %6 : vector<1x1x16x128xf32> to vector<1x16x128xf32>
    %8 = vector.broadcast %2 : f32 to vector<1x16x128xf32>
    %9 = arith.mulf %7, %8 : vector<1x16x128xf32>
    %c0_4 = arith.constant 0 : index
    %c0_5 = arith.constant 0 : index
    %c0_6 = arith.constant 0 : index
    %c0_7 = arith.constant 0 : index
    %10 = vector.load %arg4[%c0_4, %c0_5, %c0_6, %c0_7] : memref<1x1x16x128xf32, #tpu.memory_space<vmem>>, vector<1x1x16x128xf32>
    %11 = vector.shape_cast %10 : vector<1x1x16x128xf32> to vector<1x16x128xf32>
    %12 = vector.broadcast %5 : f32 to vector<1x16x128xf32>
    %13 = arith.mulf %11, %12 : vector<1x16x128xf32>
    %c0_8 = arith.constant 0 : index
    %c0_9 = arith.constant 0 : index
    %c0_10 = arith.constant 0 : index
    %c0_11 = arith.constant 0 : index
    %14 = vector.load %arg2[%c0_8, %c0_9, %c0_10, %c0_11] : memref<1x16x16x128xf32, #tpu.memory_space<vmem>>, vector<1x16x16x128xf32>
    %15 = vector.shape_cast %14 : vector<1x16x16x128xf32> to vector<16x16x128xf32>
    %16 = tpu.concatenate %9, %15, %13 in 0 : vector<1x16x128xf32>, vector<16x16x128xf32>, vector<1x16x128xf32> -> vector<18x16x128xf32>
    %cst = arith.constant 0.000000e+00 : f32
    %17 = vector.broadcast %cst : f32 to vector<18x1x128xf32>
    %18 = vector.extract_strided_slice %16 {offsets = [0, 0, 0], sizes = [18, 15, 128], strides = [1, 1, 1]} : vector<18x16x128xf32> to vector<18x15x128xf32>
    %19 = tpu.concatenate %17, %18 in 1 : vector<18x1x128xf32>, vector<18x15x128xf32> -> vector<18x16x128xf32>
    %20 = vector.extract_strided_slice %16 {offsets = [0, 1, 0], sizes = [18, 15, 128], strides = [1, 1, 1]} : vector<18x16x128xf32> to vector<18x15x128xf32>
    %21 = tpu.concatenate %20, %17 in 1 : vector<18x15x128xf32>, vector<18x1x128xf32> -> vector<18x16x128xf32>
    %cst_12 = arith.constant 0.000000e+00 : f32
    %22 = vector.broadcast %cst_12 : f32 to vector<256x128xf32>
    %23 = vector.extract_strided_slice %19 {offsets = [0, 0, 0], sizes = [16, 16, 128], strides = [1, 1, 1]} : vector<18x16x128xf32> to vector<16x16x128xf32>
    %24 = vector.shape_cast %23 : vector<16x16x128xf32> to vector<256x128xf32>
    %c0_13 = arith.constant 0 : index
    %c0_14 = arith.constant 0 : index
    %c0_15 = arith.constant 0 : index
    %25 = vector.load %arg5[%c0_13, %c0_14, %c0_15] : memref<9x128x128xf32, #tpu.memory_space<vmem>>, vector<1x128x128xf32>
    %26 = vector.shape_cast %25 : vector<1x128x128xf32> to vector<128x128xf32>
    %cst_16 = arith.constant dense<0.000000e+00> : vector<256x128xf32>
    %27 = tpu.matmul %24, %26, %cst_16 {dimension_numbers = #tpu.dot_dimension_numbers<[1], [0], [0], [1], [0, 0, 1, 1], [], []>} : vector<256x128xf32>, vector<128x128xf32>, vector<256x128xf32> -> vector<256x128xf32>
    %28 = arith.addf %22, %27 : vector<256x128xf32>
    %29 = vector.extract_strided_slice %16 {offsets = [0, 0, 0], sizes = [16, 16, 128], strides = [1, 1, 1]} : vector<18x16x128xf32> to vector<16x16x128xf32>
    %30 = vector.shape_cast %29 : vector<16x16x128xf32> to vector<256x128xf32>
    %c1 = arith.constant 1 : index
    %c0_17 = arith.constant 0 : index
    %c0_18 = arith.constant 0 : index
    %31 = vector.load %arg5[%c1, %c0_17, %c0_18] : memref<9x128x128xf32, #tpu.memory_space<vmem>>, vector<1x128x128xf32>
    %32 = vector.shape_cast %31 : vector<1x128x128xf32> to vector<128x128xf32>
    %cst_19 = arith.constant dense<0.000000e+00> : vector<256x128xf32>
    %33 = tpu.matmul %30, %32, %cst_19 {dimension_numbers = #tpu.dot_dimension_numbers<[1], [0], [0], [1], [0, 0, 1, 1], [], []>} : vector<256x128xf32>, vector<128x128xf32>, vector<256x128xf32> -> vector<256x128xf32>
    %34 = arith.addf %28, %33 : vector<256x128xf32>
    %35 = vector.extract_strided_slice %21 {offsets = [0, 0, 0], sizes = [16, 16, 128], strides = [1, 1, 1]} : vector<18x16x128xf32> to vector<16x16x128xf32>
    %36 = vector.shape_cast %35 : vector<16x16x128xf32> to vector<256x128xf32>
    %c2 = arith.constant 2 : index
    %c0_20 = arith.constant 0 : index
    %c0_21 = arith.constant 0 : index
    %37 = vector.load %arg5[%c2, %c0_20, %c0_21] : memref<9x128x128xf32, #tpu.memory_space<vmem>>, vector<1x128x128xf32>
    %38 = vector.shape_cast %37 : vector<1x128x128xf32> to vector<128x128xf32>
    %cst_22 = arith.constant dense<0.000000e+00> : vector<256x128xf32>
    %39 = tpu.matmul %36, %38, %cst_22 {dimension_numbers = #tpu.dot_dimension_numbers<[1], [0], [0], [1], [0, 0, 1, 1], [], []>} : vector<256x128xf32>, vector<128x128xf32>, vector<256x128xf32> -> vector<256x128xf32>
    %40 = arith.addf %34, %39 : vector<256x128xf32>
    %41 = vector.extract_strided_slice %19 {offsets = [1, 0, 0], sizes = [16, 16, 128], strides = [1, 1, 1]} : vector<18x16x128xf32> to vector<16x16x128xf32>
    %42 = vector.shape_cast %41 : vector<16x16x128xf32> to vector<256x128xf32>
    %c3 = arith.constant 3 : index
    %c0_23 = arith.constant 0 : index
    %c0_24 = arith.constant 0 : index
    %43 = vector.load %arg5[%c3, %c0_23, %c0_24] : memref<9x128x128xf32, #tpu.memory_space<vmem>>, vector<1x128x128xf32>
    %44 = vector.shape_cast %43 : vector<1x128x128xf32> to vector<128x128xf32>
    %cst_25 = arith.constant dense<0.000000e+00> : vector<256x128xf32>
    %45 = tpu.matmul %42, %44, %cst_25 {dimension_numbers = #tpu.dot_dimension_numbers<[1], [0], [0], [1], [0, 0, 1, 1], [], []>} : vector<256x128xf32>, vector<128x128xf32>, vector<256x128xf32> -> vector<256x128xf32>
    %46 = arith.addf %40, %45 : vector<256x128xf32>
    %47 = vector.extract_strided_slice %16 {offsets = [1, 0, 0], sizes = [16, 16, 128], strides = [1, 1, 1]} : vector<18x16x128xf32> to vector<16x16x128xf32>
    %48 = vector.shape_cast %47 : vector<16x16x128xf32> to vector<256x128xf32>
    %c4 = arith.constant 4 : index
    %c0_26 = arith.constant 0 : index
    %c0_27 = arith.constant 0 : index
    %49 = vector.load %arg5[%c4, %c0_26, %c0_27] : memref<9x128x128xf32, #tpu.memory_space<vmem>>, vector<1x128x128xf32>
    %50 = vector.shape_cast %49 : vector<1x128x128xf32> to vector<128x128xf32>
    %cst_28 = arith.constant dense<0.000000e+00> : vector<256x128xf32>
    %51 = tpu.matmul %48, %50, %cst_28 {dimension_numbers = #tpu.dot_dimension_numbers<[1], [0], [0], [1], [0, 0, 1, 1], [], []>} : vector<256x128xf32>, vector<128x128xf32>, vector<256x128xf32> -> vector<256x128xf32>
    %52 = arith.addf %46, %51 : vector<256x128xf32>
    %53 = vector.extract_strided_slice %21 {offsets = [1, 0, 0], sizes = [16, 16, 128], strides = [1, 1, 1]} : vector<18x16x128xf32> to vector<16x16x128xf32>
    %54 = vector.shape_cast %53 : vector<16x16x128xf32> to vector<256x128xf32>
    %c5 = arith.constant 5 : index
    %c0_29 = arith.constant 0 : index
    %c0_30 = arith.constant 0 : index
    %55 = vector.load %arg5[%c5, %c0_29, %c0_30] : memref<9x128x128xf32, #tpu.memory_space<vmem>>, vector<1x128x128xf32>
    %56 = vector.shape_cast %55 : vector<1x128x128xf32> to vector<128x128xf32>
    %cst_31 = arith.constant dense<0.000000e+00> : vector<256x128xf32>
    %57 = tpu.matmul %54, %56, %cst_31 {dimension_numbers = #tpu.dot_dimension_numbers<[1], [0], [0], [1], [0, 0, 1, 1], [], []>} : vector<256x128xf32>, vector<128x128xf32>, vector<256x128xf32> -> vector<256x128xf32>
    %58 = arith.addf %52, %57 : vector<256x128xf32>
    %59 = vector.extract_strided_slice %19 {offsets = [2, 0, 0], sizes = [16, 16, 128], strides = [1, 1, 1]} : vector<18x16x128xf32> to vector<16x16x128xf32>
    %60 = vector.shape_cast %59 : vector<16x16x128xf32> to vector<256x128xf32>
    %c6 = arith.constant 6 : index
    %c0_32 = arith.constant 0 : index
    %c0_33 = arith.constant 0 : index
    %61 = vector.load %arg5[%c6, %c0_32, %c0_33] : memref<9x128x128xf32, #tpu.memory_space<vmem>>, vector<1x128x128xf32>
    %62 = vector.shape_cast %61 : vector<1x128x128xf32> to vector<128x128xf32>
    %cst_34 = arith.constant dense<0.000000e+00> : vector<256x128xf32>
    %63 = tpu.matmul %60, %62, %cst_34 {dimension_numbers = #tpu.dot_dimension_numbers<[1], [0], [0], [1], [0, 0, 1, 1], [], []>} : vector<256x128xf32>, vector<128x128xf32>, vector<256x128xf32> -> vector<256x128xf32>
    %64 = arith.addf %58, %63 : vector<256x128xf32>
    %65 = vector.extract_strided_slice %16 {offsets = [2, 0, 0], sizes = [16, 16, 128], strides = [1, 1, 1]} : vector<18x16x128xf32> to vector<16x16x128xf32>
    %66 = vector.shape_cast %65 : vector<16x16x128xf32> to vector<256x128xf32>
    %c7 = arith.constant 7 : index
    %c0_35 = arith.constant 0 : index
    %c0_36 = arith.constant 0 : index
    %67 = vector.load %arg5[%c7, %c0_35, %c0_36] : memref<9x128x128xf32, #tpu.memory_space<vmem>>, vector<1x128x128xf32>
    %68 = vector.shape_cast %67 : vector<1x128x128xf32> to vector<128x128xf32>
    %cst_37 = arith.constant dense<0.000000e+00> : vector<256x128xf32>
    %69 = tpu.matmul %66, %68, %cst_37 {dimension_numbers = #tpu.dot_dimension_numbers<[1], [0], [0], [1], [0, 0, 1, 1], [], []>} : vector<256x128xf32>, vector<128x128xf32>, vector<256x128xf32> -> vector<256x128xf32>
    %70 = arith.addf %64, %69 : vector<256x128xf32>
    %71 = vector.extract_strided_slice %21 {offsets = [2, 0, 0], sizes = [16, 16, 128], strides = [1, 1, 1]} : vector<18x16x128xf32> to vector<16x16x128xf32>
    %72 = vector.shape_cast %71 : vector<16x16x128xf32> to vector<256x128xf32>
    %c8 = arith.constant 8 : index
    %c0_38 = arith.constant 0 : index
    %c0_39 = arith.constant 0 : index
    %73 = vector.load %arg5[%c8, %c0_38, %c0_39] : memref<9x128x128xf32, #tpu.memory_space<vmem>>, vector<1x128x128xf32>
    %74 = vector.shape_cast %73 : vector<1x128x128xf32> to vector<128x128xf32>
    %cst_40 = arith.constant dense<0.000000e+00> : vector<256x128xf32>
    %75 = tpu.matmul %72, %74, %cst_40 {dimension_numbers = #tpu.dot_dimension_numbers<[1], [0], [0], [1], [0, 0, 1, 1], [], []>} : vector<256x128xf32>, vector<128x128xf32>, vector<256x128xf32> -> vector<256x128xf32>
    %76 = arith.addf %70, %75 : vector<256x128xf32>
    %77 = vector.shape_cast %76 : vector<256x128xf32> to vector<1x16x16x128xf32>
    %c0_41 = arith.constant 0 : index
    %c0_42 = arith.constant 0 : index
    %c0_43 = arith.constant 0 : index
    %c0_44 = arith.constant 0 : index
    %78 = vector.load %arg6[%c0_41, %c0_42, %c0_43, %c0_44] : memref<1x16x16x128xf32, #tpu.memory_space<vmem>>, vector<1x16x16x128xf32>
    tpu.vector_store %arg6[%c0_41, %c0_42, %c0_43, %c0_44], %77 {strides = array<i32>} : memref<1x16x16x128xf32, #tpu.memory_space<vmem>>, vector<1x16x16x128xf32>,
    %cst_45 = arith.constant dense<0.000000e+00> : vector<128xf32>
    %79 = vector.multi_reduction <add>, %76, %cst_45 [0] : vector<256x128xf32> to vector<128xf32>
    %80 = vector.shape_cast %79 : vector<128xf32> to vector<1x128xf32>
    %81 = arith.mulf %76, %76 : vector<256x128xf32>
    %cst_46 = arith.constant dense<0.000000e+00> : vector<128xf32>
    %82 = vector.multi_reduction <add>, %81, %cst_46 [0] : vector<256x128xf32> to vector<128xf32>
    %83 = vector.shape_cast %82 : vector<128xf32> to vector<1x128xf32>
    %84 = tpu.concatenate %80, %83 in 0 : vector<1x128xf32>, vector<1x128xf32> -> vector<2x128xf32>
    %85 = vector.shape_cast %84 : vector<2x128xf32> to vector<1x2x128xf32>
    %c0_47 = arith.constant 0 : index
    %c0_48 = arith.constant 0 : index
    %c0_49 = arith.constant 0 : index
    %86 = vector.load %arg7[%c0_47, %c0_48, %c0_49] : memref<1x2x128xf32, #tpu.memory_space<vmem>>, vector<1x2x128xf32>
    tpu.vector_store %arg7[%c0_47, %c0_48, %c0_49], %85 {strides = array<i32>} : memref<1x2x128xf32, #tpu.memory_space<vmem>>, vector<1x2x128xf32>,
    return
  }
  func.func @transform_0(%arg0: i32, %arg1: i32) -> (i32, i32, i32, i32) {
    %c0_i32 = arith.constant 0 : i32
    %c0_i32_0 = arith.constant 0 : i32
    %c0_i32_1 = arith.constant 0 : i32
    return %arg0, %arg1, %c0_i32, %c0_i32_0 : i32, i32, i32, i32
  }
  func.func @transform_1(%arg0: i32, %arg1: i32) -> (i32, i32, i32, i32) {
    %c16_i32 = arith.constant 16 : i32
    %0 = arith.muli %arg1, %c16_i32 : i32
    %c1_i32 = arith.constant 1 : i32
    %1 = arith.subi %0, %c1_i32 : i32
    %c0_i32 = arith.constant 0 : i32
    %2 = arith.maxsi %1, %c0_i32 : i32
    %c0_i32_0 = arith.constant 0 : i32
    %c0_i32_1 = arith.constant 0 : i32
    %c0_i32_2 = arith.constant 0 : i32
    return %arg0, %2, %c0_i32_0, %c0_i32_1 : i32, i32, i32, i32
  }
  func.func @transform_2(%arg0: i32, %arg1: i32) -> (i32, i32, i32, i32) {
    %c16_i32 = arith.constant 16 : i32
    %0 = arith.muli %arg1, %c16_i32 : i32
    %c16_i32_0 = arith.constant 16 : i32
    %1 = arith.addi %0, %c16_i32_0 : i32
    %c15_i32 = arith.constant 15 : i32
    %2 = arith.minsi %1, %c15_i32 : i32
    %c0_i32 = arith.constant 0 : i32
    %c0_i32_1 = arith.constant 0 : i32
    %c0_i32_2 = arith.constant 0 : i32
    return %arg0, %2, %c0_i32, %c0_i32_1 : i32, i32, i32, i32
  }
  func.func @transform_3(%arg0: i32, %arg1: i32) -> (i32, i32, i32) {
    %c0_i32 = arith.constant 0 : i32
    %c0_i32_0 = arith.constant 0 : i32
    %c0_i32_1 = arith.constant 0 : i32
    %c0_i32_2 = arith.constant 0 : i32
    return %c0_i32, %c0_i32_0, %c0_i32_1 : i32, i32, i32
  }
  func.func @transform_4(%arg0: i32, %arg1: i32) -> (i32, i32, i32, i32) {
    %c0_i32 = arith.constant 0 : i32
    %c0_i32_0 = arith.constant 0 : i32
    %c0_i32_1 = arith.constant 0 : i32
    return %arg0, %arg1, %c0_i32, %c0_i32_0 : i32, i32, i32, i32
  }
  func.func @transform_5(%arg0: i32, %arg1: i32) -> (i32, i32, i32) {
    %c1_i32 = arith.constant 1 : i32
    %0 = arith.muli %arg0, %c1_i32 : i32
    %1 = arith.addi %0, %arg1 : i32
    %c0_i32 = arith.constant 0 : i32
    %c0_i32_0 = arith.constant 0 : i32
    %c0_i32_1 = arith.constant 0 : i32
    return %1, %c0_i32, %c0_i32_0 : i32, i32, i32
  }
}

module attributes {stable_mosaic.version = 11 : i64} {
  func.func @_conv3_stats_kernel(%arg0: i32, %arg1: i32, %arg2: memref<1x16x16x128xf32, #tpu.memory_space<vmem>>, %arg3: memref<1x1x16x128xf32, #tpu.memory_space<vmem>>, %arg4: memref<1x1x16x128xf32, #tpu.memory_space<vmem>>, %arg5: memref<9x128x128xf32, #tpu.memory_space<vmem>>, %arg6: memref<1x128xf32, #tpu.memory_space<vmem>>, %arg7: memref<1x128xf32, #tpu.memory_space<vmem>>, %arg8: memref<1x16x16x128xf32, #tpu.memory_space<vmem>>, %arg9: memref<1x2x128xf32, #tpu.memory_space<vmem>>) attributes {dimension_semantics = [#tpu.dimension_semantics<parallel>, #tpu.dimension_semantics<parallel>], iteration_bounds = array<i64: 2, 1>, scalar_prefetch = 0 : i64, scratch_operands = 0 : i64, tpu.core_type = #tpu.core_type<tc>, window_params = [{transform_indices = @transform_0, window_bounds = array<i64: 1, 16, 16, 128>}, {transform_indices = @transform_1, window_bounds = array<i64: 1, 1, 16, 128>}, {transform_indices = @transform_2, window_bounds = array<i64: 1, 1, 16, 128>}, {pipeline_mode = #tpu.pipeline_mode<synchronous>, transform_indices = @transform_3, window_bounds = array<i64: 9, 128, 128>}, {pipeline_mode = #tpu.pipeline_mode<synchronous>, transform_indices = @transform_4, window_bounds = array<i64: 1, 128>}, {pipeline_mode = #tpu.pipeline_mode<synchronous>, transform_indices = @transform_5, window_bounds = array<i64: 1, 128>}, {transform_indices = @transform_6, window_bounds = array<i64: 1, 16, 16, 128>}, {transform_indices = @transform_7, window_bounds = array<i64: 1, 2, 128>}]} {
    %c0 = arith.constant 0 : index
    %c0_0 = arith.constant 0 : index
    %0 = vector.load %arg6[%c0, %c0_0] : memref<1x128xf32, #tpu.memory_space<vmem>>, vector<1x128xf32>
    %1 = vector.shape_cast %0 : vector<1x128xf32> to vector<1x1x128xf32>
    %c0_1 = arith.constant 0 : index
    %c0_2 = arith.constant 0 : index
    %2 = vector.load %arg7[%c0_1, %c0_2] : memref<1x128xf32, #tpu.memory_space<vmem>>, vector<1x128xf32>
    %3 = vector.shape_cast %2 : vector<1x128xf32> to vector<1x1x128xf32>
    %c0_i32 = arith.constant 0 : i32
    %4 = arith.cmpi sgt, %arg1, %c0_i32 : i32
    %5 = arith.extui %4 : i1 to i32
    %6 = arith.sitofp %5 : i32 to f32
    %c0_i32_3 = arith.constant 0 : i32
    %7 = arith.cmpi slt, %arg1, %c0_i32_3 : i32
    %8 = arith.extui %7 : i1 to i32
    %9 = arith.sitofp %8 : i32 to f32
    %c0_4 = arith.constant 0 : index
    %c0_5 = arith.constant 0 : index
    %c0_6 = arith.constant 0 : index
    %c0_7 = arith.constant 0 : index
    %10 = vector.load %arg3[%c0_4, %c0_5, %c0_6, %c0_7] : memref<1x1x16x128xf32, #tpu.memory_space<vmem>>, vector<1x1x16x128xf32>
    %11 = vector.shape_cast %10 : vector<1x1x16x128xf32> to vector<1x16x128xf32>
    %12 = vector.broadcast %1 : vector<1x1x128xf32> to vector<1x16x128xf32>
    %13 = arith.mulf %11, %12 : vector<1x16x128xf32>
    %14 = vector.broadcast %3 : vector<1x1x128xf32> to vector<1x16x128xf32>
    %15 = arith.addf %13, %14 : vector<1x16x128xf32>
    %16 = vector.broadcast %6 : f32 to vector<1x16x128xf32>
    %17 = arith.mulf %15, %16 : vector<1x16x128xf32>
    %c0_8 = arith.constant 0 : index
    %c0_9 = arith.constant 0 : index
    %c0_10 = arith.constant 0 : index
    %c0_11 = arith.constant 0 : index
    %18 = vector.load %arg4[%c0_8, %c0_9, %c0_10, %c0_11] : memref<1x1x16x128xf32, #tpu.memory_space<vmem>>, vector<1x1x16x128xf32>
    %19 = vector.shape_cast %18 : vector<1x1x16x128xf32> to vector<1x16x128xf32>
    %20 = vector.broadcast %1 : vector<1x1x128xf32> to vector<1x16x128xf32>
    %21 = arith.mulf %19, %20 : vector<1x16x128xf32>
    %22 = vector.broadcast %3 : vector<1x1x128xf32> to vector<1x16x128xf32>
    %23 = arith.addf %21, %22 : vector<1x16x128xf32>
    %24 = vector.broadcast %9 : f32 to vector<1x16x128xf32>
    %25 = arith.mulf %23, %24 : vector<1x16x128xf32>
    %c0_12 = arith.constant 0 : index
    %c0_13 = arith.constant 0 : index
    %c0_14 = arith.constant 0 : index
    %c0_15 = arith.constant 0 : index
    %26 = vector.load %arg2[%c0_12, %c0_13, %c0_14, %c0_15] : memref<1x16x16x128xf32, #tpu.memory_space<vmem>>, vector<1x16x16x128xf32>
    %27 = vector.shape_cast %26 : vector<1x16x16x128xf32> to vector<16x16x128xf32>
    %28 = vector.broadcast %1 : vector<1x1x128xf32> to vector<16x16x128xf32>
    %29 = arith.mulf %27, %28 : vector<16x16x128xf32>
    %30 = vector.broadcast %3 : vector<1x1x128xf32> to vector<16x16x128xf32>
    %31 = arith.addf %29, %30 : vector<16x16x128xf32>
    %32 = tpu.concatenate %17, %31, %25 in 0 : vector<1x16x128xf32>, vector<16x16x128xf32>, vector<1x16x128xf32> -> vector<18x16x128xf32>
    %cst = arith.constant 0.000000e+00 : f32
    %33 = vector.broadcast %cst : f32 to vector<18x1x128xf32>
    %34 = vector.extract_strided_slice %32 {offsets = [0, 0, 0], sizes = [18, 15, 128], strides = [1, 1, 1]} : vector<18x16x128xf32> to vector<18x15x128xf32>
    %35 = tpu.concatenate %33, %34 in 1 : vector<18x1x128xf32>, vector<18x15x128xf32> -> vector<18x16x128xf32>
    %36 = vector.extract_strided_slice %32 {offsets = [0, 1, 0], sizes = [18, 15, 128], strides = [1, 1, 1]} : vector<18x16x128xf32> to vector<18x15x128xf32>
    %37 = tpu.concatenate %36, %33 in 1 : vector<18x15x128xf32>, vector<18x1x128xf32> -> vector<18x16x128xf32>
    %cst_16 = arith.constant 0.000000e+00 : f32
    %38 = vector.broadcast %cst_16 : f32 to vector<256x128xf32>
    %39 = vector.extract_strided_slice %35 {offsets = [0, 0, 0], sizes = [16, 16, 128], strides = [1, 1, 1]} : vector<18x16x128xf32> to vector<16x16x128xf32>
    %40 = vector.shape_cast %39 : vector<16x16x128xf32> to vector<256x128xf32>
    %c0_17 = arith.constant 0 : index
    %c0_18 = arith.constant 0 : index
    %c0_19 = arith.constant 0 : index
    %41 = vector.load %arg5[%c0_17, %c0_18, %c0_19] : memref<9x128x128xf32, #tpu.memory_space<vmem>>, vector<1x128x128xf32>
    %42 = vector.shape_cast %41 : vector<1x128x128xf32> to vector<128x128xf32>
    %cst_20 = arith.constant dense<0.000000e+00> : vector<256x128xf32>
    %43 = tpu.matmul %40, %42, %cst_20 {dimension_numbers = #tpu.dot_dimension_numbers<[1], [0], [0], [1], [0, 0, 1, 1], [], []>} : vector<256x128xf32>, vector<128x128xf32>, vector<256x128xf32> -> vector<256x128xf32>
    %44 = arith.addf %38, %43 : vector<256x128xf32>
    %45 = vector.extract_strided_slice %32 {offsets = [0, 0, 0], sizes = [16, 16, 128], strides = [1, 1, 1]} : vector<18x16x128xf32> to vector<16x16x128xf32>
    %46 = vector.shape_cast %45 : vector<16x16x128xf32> to vector<256x128xf32>
    %c1 = arith.constant 1 : index
    %c0_21 = arith.constant 0 : index
    %c0_22 = arith.constant 0 : index
    %47 = vector.load %arg5[%c1, %c0_21, %c0_22] : memref<9x128x128xf32, #tpu.memory_space<vmem>>, vector<1x128x128xf32>
    %48 = vector.shape_cast %47 : vector<1x128x128xf32> to vector<128x128xf32>
    %cst_23 = arith.constant dense<0.000000e+00> : vector<256x128xf32>
    %49 = tpu.matmul %46, %48, %cst_23 {dimension_numbers = #tpu.dot_dimension_numbers<[1], [0], [0], [1], [0, 0, 1, 1], [], []>} : vector<256x128xf32>, vector<128x128xf32>, vector<256x128xf32> -> vector<256x128xf32>
    %50 = arith.addf %44, %49 : vector<256x128xf32>
    %51 = vector.extract_strided_slice %37 {offsets = [0, 0, 0], sizes = [16, 16, 128], strides = [1, 1, 1]} : vector<18x16x128xf32> to vector<16x16x128xf32>
    %52 = vector.shape_cast %51 : vector<16x16x128xf32> to vector<256x128xf32>
    %c2 = arith.constant 2 : index
    %c0_24 = arith.constant 0 : index
    %c0_25 = arith.constant 0 : index
    %53 = vector.load %arg5[%c2, %c0_24, %c0_25] : memref<9x128x128xf32, #tpu.memory_space<vmem>>, vector<1x128x128xf32>
    %54 = vector.shape_cast %53 : vector<1x128x128xf32> to vector<128x128xf32>
    %cst_26 = arith.constant dense<0.000000e+00> : vector<256x128xf32>
    %55 = tpu.matmul %52, %54, %cst_26 {dimension_numbers = #tpu.dot_dimension_numbers<[1], [0], [0], [1], [0, 0, 1, 1], [], []>} : vector<256x128xf32>, vector<128x128xf32>, vector<256x128xf32> -> vector<256x128xf32>
    %56 = arith.addf %50, %55 : vector<256x128xf32>
    %57 = vector.extract_strided_slice %35 {offsets = [1, 0, 0], sizes = [16, 16, 128], strides = [1, 1, 1]} : vector<18x16x128xf32> to vector<16x16x128xf32>
    %58 = vector.shape_cast %57 : vector<16x16x128xf32> to vector<256x128xf32>
    %c3 = arith.constant 3 : index
    %c0_27 = arith.constant 0 : index
    %c0_28 = arith.constant 0 : index
    %59 = vector.load %arg5[%c3, %c0_27, %c0_28] : memref<9x128x128xf32, #tpu.memory_space<vmem>>, vector<1x128x128xf32>
    %60 = vector.shape_cast %59 : vector<1x128x128xf32> to vector<128x128xf32>
    %cst_29 = arith.constant dense<0.000000e+00> : vector<256x128xf32>
    %61 = tpu.matmul %58, %60, %cst_29 {dimension_numbers = #tpu.dot_dimension_numbers<[1], [0], [0], [1], [0, 0, 1, 1], [], []>} : vector<256x128xf32>, vector<128x128xf32>, vector<256x128xf32> -> vector<256x128xf32>
    %62 = arith.addf %56, %61 : vector<256x128xf32>
    %63 = vector.extract_strided_slice %32 {offsets = [1, 0, 0], sizes = [16, 16, 128], strides = [1, 1, 1]} : vector<18x16x128xf32> to vector<16x16x128xf32>
    %64 = vector.shape_cast %63 : vector<16x16x128xf32> to vector<256x128xf32>
    %c4 = arith.constant 4 : index
    %c0_30 = arith.constant 0 : index
    %c0_31 = arith.constant 0 : index
    %65 = vector.load %arg5[%c4, %c0_30, %c0_31] : memref<9x128x128xf32, #tpu.memory_space<vmem>>, vector<1x128x128xf32>
    %66 = vector.shape_cast %65 : vector<1x128x128xf32> to vector<128x128xf32>
    %cst_32 = arith.constant dense<0.000000e+00> : vector<256x128xf32>
    %67 = tpu.matmul %64, %66, %cst_32 {dimension_numbers = #tpu.dot_dimension_numbers<[1], [0], [0], [1], [0, 0, 1, 1], [], []>} : vector<256x128xf32>, vector<128x128xf32>, vector<256x128xf32> -> vector<256x128xf32>
    %68 = arith.addf %62, %67 : vector<256x128xf32>
    %69 = vector.extract_strided_slice %37 {offsets = [1, 0, 0], sizes = [16, 16, 128], strides = [1, 1, 1]} : vector<18x16x128xf32> to vector<16x16x128xf32>
    %70 = vector.shape_cast %69 : vector<16x16x128xf32> to vector<256x128xf32>
    %c5 = arith.constant 5 : index
    %c0_33 = arith.constant 0 : index
    %c0_34 = arith.constant 0 : index
    %71 = vector.load %arg5[%c5, %c0_33, %c0_34] : memref<9x128x128xf32, #tpu.memory_space<vmem>>, vector<1x128x128xf32>
    %72 = vector.shape_cast %71 : vector<1x128x128xf32> to vector<128x128xf32>
    %cst_35 = arith.constant dense<0.000000e+00> : vector<256x128xf32>
    %73 = tpu.matmul %70, %72, %cst_35 {dimension_numbers = #tpu.dot_dimension_numbers<[1], [0], [0], [1], [0, 0, 1, 1], [], []>} : vector<256x128xf32>, vector<128x128xf32>, vector<256x128xf32> -> vector<256x128xf32>
    %74 = arith.addf %68, %73 : vector<256x128xf32>
    %75 = vector.extract_strided_slice %35 {offsets = [2, 0, 0], sizes = [16, 16, 128], strides = [1, 1, 1]} : vector<18x16x128xf32> to vector<16x16x128xf32>
    %76 = vector.shape_cast %75 : vector<16x16x128xf32> to vector<256x128xf32>
    %c6 = arith.constant 6 : index
    %c0_36 = arith.constant 0 : index
    %c0_37 = arith.constant 0 : index
    %77 = vector.load %arg5[%c6, %c0_36, %c0_37] : memref<9x128x128xf32, #tpu.memory_space<vmem>>, vector<1x128x128xf32>
    %78 = vector.shape_cast %77 : vector<1x128x128xf32> to vector<128x128xf32>
    %cst_38 = arith.constant dense<0.000000e+00> : vector<256x128xf32>
    %79 = tpu.matmul %76, %78, %cst_38 {dimension_numbers = #tpu.dot_dimension_numbers<[1], [0], [0], [1], [0, 0, 1, 1], [], []>} : vector<256x128xf32>, vector<128x128xf32>, vector<256x128xf32> -> vector<256x128xf32>
    %80 = arith.addf %74, %79 : vector<256x128xf32>
    %81 = vector.extract_strided_slice %32 {offsets = [2, 0, 0], sizes = [16, 16, 128], strides = [1, 1, 1]} : vector<18x16x128xf32> to vector<16x16x128xf32>
    %82 = vector.shape_cast %81 : vector<16x16x128xf32> to vector<256x128xf32>
    %c7 = arith.constant 7 : index
    %c0_39 = arith.constant 0 : index
    %c0_40 = arith.constant 0 : index
    %83 = vector.load %arg5[%c7, %c0_39, %c0_40] : memref<9x128x128xf32, #tpu.memory_space<vmem>>, vector<1x128x128xf32>
    %84 = vector.shape_cast %83 : vector<1x128x128xf32> to vector<128x128xf32>
    %cst_41 = arith.constant dense<0.000000e+00> : vector<256x128xf32>
    %85 = tpu.matmul %82, %84, %cst_41 {dimension_numbers = #tpu.dot_dimension_numbers<[1], [0], [0], [1], [0, 0, 1, 1], [], []>} : vector<256x128xf32>, vector<128x128xf32>, vector<256x128xf32> -> vector<256x128xf32>
    %86 = arith.addf %80, %85 : vector<256x128xf32>
    %87 = vector.extract_strided_slice %37 {offsets = [2, 0, 0], sizes = [16, 16, 128], strides = [1, 1, 1]} : vector<18x16x128xf32> to vector<16x16x128xf32>
    %88 = vector.shape_cast %87 : vector<16x16x128xf32> to vector<256x128xf32>
    %c8 = arith.constant 8 : index
    %c0_42 = arith.constant 0 : index
    %c0_43 = arith.constant 0 : index
    %89 = vector.load %arg5[%c8, %c0_42, %c0_43] : memref<9x128x128xf32, #tpu.memory_space<vmem>>, vector<1x128x128xf32>
    %90 = vector.shape_cast %89 : vector<1x128x128xf32> to vector<128x128xf32>
    %cst_44 = arith.constant dense<0.000000e+00> : vector<256x128xf32>
    %91 = tpu.matmul %88, %90, %cst_44 {dimension_numbers = #tpu.dot_dimension_numbers<[1], [0], [0], [1], [0, 0, 1, 1], [], []>} : vector<256x128xf32>, vector<128x128xf32>, vector<256x128xf32> -> vector<256x128xf32>
    %92 = arith.addf %86, %91 : vector<256x128xf32>
    %93 = vector.shape_cast %92 : vector<256x128xf32> to vector<1x16x16x128xf32>
    %c0_45 = arith.constant 0 : index
    %c0_46 = arith.constant 0 : index
    %c0_47 = arith.constant 0 : index
    %c0_48 = arith.constant 0 : index
    %94 = vector.load %arg8[%c0_45, %c0_46, %c0_47, %c0_48] : memref<1x16x16x128xf32, #tpu.memory_space<vmem>>, vector<1x16x16x128xf32>
    tpu.vector_store %arg8[%c0_45, %c0_46, %c0_47, %c0_48], %93 {strides = array<i32>} : memref<1x16x16x128xf32, #tpu.memory_space<vmem>>, vector<1x16x16x128xf32>,
    %cst_49 = arith.constant dense<0.000000e+00> : vector<128xf32>
    %95 = vector.multi_reduction <add>, %92, %cst_49 [0] : vector<256x128xf32> to vector<128xf32>
    %96 = vector.shape_cast %95 : vector<128xf32> to vector<1x128xf32>
    %97 = arith.mulf %92, %92 : vector<256x128xf32>
    %cst_50 = arith.constant dense<0.000000e+00> : vector<128xf32>
    %98 = vector.multi_reduction <add>, %97, %cst_50 [0] : vector<256x128xf32> to vector<128xf32>
    %99 = vector.shape_cast %98 : vector<128xf32> to vector<1x128xf32>
    %100 = tpu.concatenate %96, %99 in 0 : vector<1x128xf32>, vector<1x128xf32> -> vector<2x128xf32>
    %101 = vector.shape_cast %100 : vector<2x128xf32> to vector<1x2x128xf32>
    %c0_51 = arith.constant 0 : index
    %c0_52 = arith.constant 0 : index
    %c0_53 = arith.constant 0 : index
    %102 = vector.load %arg9[%c0_51, %c0_52, %c0_53] : memref<1x2x128xf32, #tpu.memory_space<vmem>>, vector<1x2x128xf32>
    tpu.vector_store %arg9[%c0_51, %c0_52, %c0_53], %101 {strides = array<i32>} : memref<1x2x128xf32, #tpu.memory_space<vmem>>, vector<1x2x128xf32>,
    return
  }
  func.func @transform_0(%arg0: i32, %arg1: i32) -> (i32, i32, i32, i32) {
    %c0_i32 = arith.constant 0 : i32
    %c0_i32_0 = arith.constant 0 : i32
    %c0_i32_1 = arith.constant 0 : i32
    return %arg0, %arg1, %c0_i32, %c0_i32_0 : i32, i32, i32, i32
  }
  func.func @transform_1(%arg0: i32, %arg1: i32) -> (i32, i32, i32, i32) {
    %c16_i32 = arith.constant 16 : i32
    %0 = arith.muli %arg1, %c16_i32 : i32
    %c1_i32 = arith.constant 1 : i32
    %1 = arith.subi %0, %c1_i32 : i32
    %c0_i32 = arith.constant 0 : i32
    %2 = arith.maxsi %1, %c0_i32 : i32
    %c0_i32_0 = arith.constant 0 : i32
    %c0_i32_1 = arith.constant 0 : i32
    %c0_i32_2 = arith.constant 0 : i32
    return %arg0, %2, %c0_i32_0, %c0_i32_1 : i32, i32, i32, i32
  }
  func.func @transform_2(%arg0: i32, %arg1: i32) -> (i32, i32, i32, i32) {
    %c16_i32 = arith.constant 16 : i32
    %0 = arith.muli %arg1, %c16_i32 : i32
    %c16_i32_0 = arith.constant 16 : i32
    %1 = arith.addi %0, %c16_i32_0 : i32
    %c15_i32 = arith.constant 15 : i32
    %2 = arith.minsi %1, %c15_i32 : i32
    %c0_i32 = arith.constant 0 : i32
    %c0_i32_1 = arith.constant 0 : i32
    %c0_i32_2 = arith.constant 0 : i32
    return %arg0, %2, %c0_i32, %c0_i32_1 : i32, i32, i32, i32
  }
  func.func @transform_3(%arg0: i32, %arg1: i32) -> (i32, i32, i32) {
    %c0_i32 = arith.constant 0 : i32
    %c0_i32_0 = arith.constant 0 : i32
    %c0_i32_1 = arith.constant 0 : i32
    %c0_i32_2 = arith.constant 0 : i32
    return %c0_i32, %c0_i32_0, %c0_i32_1 : i32, i32, i32
  }
  func.func @transform_4(%arg0: i32, %arg1: i32) -> (i32, i32) {
    %c0_i32 = arith.constant 0 : i32
    %c0_i32_0 = arith.constant 0 : i32
    %c0_i32_1 = arith.constant 0 : i32
    return %c0_i32, %c0_i32_0 : i32, i32
  }
  func.func @transform_5(%arg0: i32, %arg1: i32) -> (i32, i32) {
    %c0_i32 = arith.constant 0 : i32
    %c0_i32_0 = arith.constant 0 : i32
    %c0_i32_1 = arith.constant 0 : i32
    return %c0_i32, %c0_i32_0 : i32, i32
  }
  func.func @transform_6(%arg0: i32, %arg1: i32) -> (i32, i32, i32, i32) {
    %c0_i32 = arith.constant 0 : i32
    %c0_i32_0 = arith.constant 0 : i32
    %c0_i32_1 = arith.constant 0 : i32
    return %arg0, %arg1, %c0_i32, %c0_i32_0 : i32, i32, i32, i32
  }
  func.func @transform_7(%arg0: i32, %arg1: i32) -> (i32, i32, i32) {
    %c1_i32 = arith.constant 1 : i32
    %0 = arith.muli %arg0, %c1_i32 : i32
    %1 = arith.addi %0, %arg1 : i32
    %c0_i32 = arith.constant 0 : i32
    %c0_i32_0 = arith.constant 0 : i32
    %c0_i32_1 = arith.constant 0 : i32
    return %1, %c0_i32, %c0_i32_0 : i32, i32, i32
  }
}

module attributes {stable_mosaic.version = 11 : i64} {
  func.func @_final_kernel(%arg0: i32, %arg1: i32, %arg2: memref<1x16x16x128xf32, #tpu.memory_space<vmem>>, %arg3: memref<1x16x16x128xf32, #tpu.memory_space<vmem>>, %arg4: memref<128x128xf32, #tpu.memory_space<vmem>>, %arg5: memref<1x128xf32, #tpu.memory_space<vmem>>, %arg6: memref<1x128xf32, #tpu.memory_space<vmem>>, %arg7: memref<1x128xf32, #tpu.memory_space<vmem>>, %arg8: memref<1x16x16x128xf32, #tpu.memory_space<vmem>>) attributes {dimension_semantics = [#tpu.dimension_semantics<parallel>, #tpu.dimension_semantics<parallel>], iteration_bounds = array<i64: 2, 1>, scalar_prefetch = 0 : i64, scratch_operands = 0 : i64, tpu.core_type = #tpu.core_type<tc>, window_params = [{transform_indices = @transform_0, window_bounds = array<i64: 1, 16, 16, 128>}, {transform_indices = @transform_1, window_bounds = array<i64: 1, 16, 16, 128>}, {pipeline_mode = #tpu.pipeline_mode<synchronous>, transform_indices = @transform_2, window_bounds = array<i64: 128, 128>}, {pipeline_mode = #tpu.pipeline_mode<synchronous>, transform_indices = @transform_3, window_bounds = array<i64: 1, 128>}, {pipeline_mode = #tpu.pipeline_mode<synchronous>, transform_indices = @transform_4, window_bounds = array<i64: 1, 128>}, {pipeline_mode = #tpu.pipeline_mode<synchronous>, transform_indices = @transform_5, window_bounds = array<i64: 1, 128>}, {transform_indices = @transform_6, window_bounds = array<i64: 1, 16, 16, 128>}]} {
    %c0 = arith.constant 0 : index
    %c0_0 = arith.constant 0 : index
    %0 = vector.load %arg6[%c0, %c0_0] : memref<1x128xf32, #tpu.memory_space<vmem>>, vector<1x128xf32>
    %1 = vector.shape_cast %0 : vector<1x128xf32> to vector<1x1x128xf32>
    %c0_1 = arith.constant 0 : index
    %c0_2 = arith.constant 0 : index
    %2 = vector.load %arg7[%c0_1, %c0_2] : memref<1x128xf32, #tpu.memory_space<vmem>>, vector<1x128xf32>
    %3 = vector.shape_cast %2 : vector<1x128xf32> to vector<1x1x128xf32>
    %c0_3 = arith.constant 0 : index
    %c0_4 = arith.constant 0 : index
    %c0_5 = arith.constant 0 : index
    %c0_6 = arith.constant 0 : index
    %4 = vector.load %arg2[%c0_3, %c0_4, %c0_5, %c0_6] : memref<1x16x16x128xf32, #tpu.memory_space<vmem>>, vector<1x16x16x128xf32>
    %5 = vector.shape_cast %4 : vector<1x16x16x128xf32> to vector<16x16x128xf32>
    %6 = vector.broadcast %1 : vector<1x1x128xf32> to vector<16x16x128xf32>
    %7 = arith.mulf %5, %6 : vector<16x16x128xf32>
    %8 = vector.broadcast %3 : vector<1x1x128xf32> to vector<16x16x128xf32>
    %9 = arith.addf %7, %8 : vector<16x16x128xf32>
    %cst = arith.constant 0.000000e+00 : f32
    %10 = vector.broadcast %cst : f32 to vector<16x16x128xf32>
    %11 = arith.cmpf oge, %9, %10 : vector<16x16x128xf32>
    %cst_7 = arith.constant 1.000000e-01 : f32
    %12 = vector.broadcast %cst_7 : f32 to vector<16x16x128xf32>
    %13 = arith.mulf %12, %9 : vector<16x16x128xf32>
    %14 = arith.select %11, %9, %13 : vector<16x16x128xi1>, vector<16x16x128xf32>
    %c0_8 = arith.constant 0 : index
    %c0_9 = arith.constant 0 : index
    %c0_10 = arith.constant 0 : index
    %c0_11 = arith.constant 0 : index
    %15 = vector.load %arg3[%c0_8, %c0_9, %c0_10, %c0_11] : memref<1x16x16x128xf32, #tpu.memory_space<vmem>>, vector<1x16x16x128xf32>
    %16 = vector.shape_cast %15 : vector<1x16x16x128xf32> to vector<16x16x128xf32>
    %17 = vector.shape_cast %16 : vector<16x16x128xf32> to vector<256x128xf32>
    %c0_12 = arith.constant 0 : index
    %c0_13 = arith.constant 0 : index
    %18 = vector.load %arg4[%c0_12, %c0_13] : memref<128x128xf32, #tpu.memory_space<vmem>>, vector<128x128xf32>
    %cst_14 = arith.constant dense<0.000000e+00> : vector<256x128xf32>
    %19 = tpu.matmul %17, %18, %cst_14 {dimension_numbers = #tpu.dot_dimension_numbers<[1], [0], [0], [1], [0, 0, 1, 1], [], []>} : vector<256x128xf32>, vector<128x128xf32>, vector<256x128xf32> -> vector<256x128xf32>
    %20 = vector.shape_cast %19 : vector<256x128xf32> to vector<16x16x128xf32>
    %c0_15 = arith.constant 0 : index
    %c0_16 = arith.constant 0 : index
    %21 = vector.load %arg5[%c0_15, %c0_16] : memref<1x128xf32, #tpu.memory_space<vmem>>, vector<1x128xf32>
    %22 = vector.shape_cast %21 : vector<1x128xf32> to vector<1x1x128xf32>
    %23 = vector.broadcast %22 : vector<1x1x128xf32> to vector<16x16x128xf32>
    %24 = arith.addf %20, %23 : vector<16x16x128xf32>
    %25 = arith.addf %14, %24 : vector<16x16x128xf32>
    %cst_17 = arith.constant 0.000000e+00 : f32
    %26 = vector.broadcast %cst_17 : f32 to vector<16x16x128xf32>
    %27 = arith.cmpf oge, %25, %26 : vector<16x16x128xf32>
    %cst_18 = arith.constant 1.000000e-01 : f32
    %28 = vector.broadcast %cst_18 : f32 to vector<16x16x128xf32>
    %29 = arith.mulf %28, %25 : vector<16x16x128xf32>
    %30 = arith.select %27, %25, %29 : vector<16x16x128xi1>, vector<16x16x128xf32>
    %31 = vector.shape_cast %30 : vector<16x16x128xf32> to vector<1x16x16x128xf32>
    %c0_19 = arith.constant 0 : index
    %c0_20 = arith.constant 0 : index
    %c0_21 = arith.constant 0 : index
    %c0_22 = arith.constant 0 : index
    %32 = vector.load %arg8[%c0_19, %c0_20, %c0_21, %c0_22] : memref<1x16x16x128xf32, #tpu.memory_space<vmem>>, vector<1x16x16x128xf32>
    tpu.vector_store %arg8[%c0_19, %c0_20, %c0_21, %c0_22], %31 {strides = array<i32>} : memref<1x16x16x128xf32, #tpu.memory_space<vmem>>, vector<1x16x16x128xf32>,
    return
  }
  func.func @transform_0(%arg0: i32, %arg1: i32) -> (i32, i32, i32, i32) {
    %c0_i32 = arith.constant 0 : i32
    %c0_i32_0 = arith.constant 0 : i32
    %c0_i32_1 = arith.constant 0 : i32
    return %arg0, %arg1, %c0_i32, %c0_i32_0 : i32, i32, i32, i32
  }
  func.func @transform_1(%arg0: i32, %arg1: i32) -> (i32, i32, i32, i32) {
    %c0_i32 = arith.constant 0 : i32
    %c0_i32_0 = arith.constant 0 : i32
    %c0_i32_1 = arith.constant 0 : i32
    return %arg0, %arg1, %c0_i32, %c0_i32_0 : i32, i32, i32, i32
  }
  func.func @transform_2(%arg0: i32, %arg1: i32) -> (i32, i32) {
    %c0_i32 = arith.constant 0 : i32
    %c0_i32_0 = arith.constant 0 : i32
    %c0_i32_1 = arith.constant 0 : i32
    return %c0_i32, %c0_i32_0 : i32, i32
  }
  func.func @transform_3(%arg0: i32, %arg1: i32) -> (i32, i32) {
    %c0_i32 = arith.constant 0 : i32
    %c0_i32_0 = arith.constant 0 : i32
    %c0_i32_1 = arith.constant 0 : i32
    return %c0_i32, %c0_i32_0 : i32, i32
  }
  func.func @transform_4(%arg0: i32, %arg1: i32) -> (i32, i32) {
    %c0_i32 = arith.constant 0 : i32
    %c0_i32_0 = arith.constant 0 : i32
    %c0_i32_1 = arith.constant 0 : i32
    return %c0_i32, %c0_i32_0 : i32, i32
  }
  func.func @transform_5(%arg0: i32, %arg1: i32) -> (i32, i32) {
    %c0_i32 = arith.constant 0 : i32
    %c0_i32_0 = arith.constant 0 : i32
    %c0_i32_1 = arith.constant 0 : i32
    return %c0_i32, %c0_i32_0 : i32, i32
  }
  func.func @transform_6(%arg0: i32, %arg1: i32) -> (i32, i32, i32, i32) {
    %c0_i32 = arith.constant 0 : i32
    %c0_i32_0 = arith.constant 0 : i32
    %c0_i32_1 = arith.constant 0 : i32
    return %arg0, %arg1, %c0_i32, %c0_i32_0 : i32, i32, i32, i32
  }
}

</mosaic_0001>

<llo_original>
// kernel: conv_block_forward.5
$region0: #{conv_block_forward.5}
  #allocation0 [shape = 'u32[]', space=smem, size = 0x4, offset = 0x4, fixed_abs, tag = 'smem constant byte address 0x4 - core index']
  #allocation1 [shape = 'u32[144,128]{1,0:T(1,128)}', space=vmem, size = 0x12000, scoped, tag = 'internal scratch']
  %s0 = inlined_call_operand.vmem [shape: f32[2,16,16,128], index: 0, kind: input, shape index: {}]
  %s1 = inlined_call_operand.vmem [shape: f32[2,16,16,128], index: 1, kind: input, shape index: {}]
  %s2 = inlined_call_operand.vmem [shape: f32[128,128], index: 2, kind: input, shape index: {}]
  %s3 = inlined_call_operand.vmem [shape: f32[1,128], index: 3, kind: input, shape index: {}]
  %s4 = inlined_call_operand.vmem [shape: f32[1,128], index: 4, kind: input, shape index: {}]
  %s5 = inlined_call_operand.vmem [shape: f32[1,128], index: 5, kind: input, shape index: {}]
  %s6 = inlined_call_operand.vmem [shape: f32[2,16,16,128], index: 6, kind: output, shape index: {}]
  %s7 = sld [smem:[#allocation0]]
  $region57: #{conv_block_forward.5} parent=0
    _
  %s9 = ssub.s32 1, %s7
  %s10 = scalar_select 0, %s9, %s7
  loop: start=0, step=1, limit=4
  $region2: #{conv_block_forward.5} parent=0 // loop_pre_header
    _
  $region3: #{conv_block_forward.5} parent=0 // loop_header
    %s12 = sphi 0, %s16
    %p13 = scmp.ge.s32.totalorder %s12, 4
    %s19 = sphi 0, %s31
    %s20 = sphi 0, %s27
    %s21 = sphi 0, %s19
    %s22 = sphi 0, %s20
    %s23 = sphi 0, %s21
    %s24 = sphi 0, %s22
    %s36 = sphi 0, %s38
    %s39 = sphi 0, %s36
    %s40 = sphi 0, %s39
    %s56 = sphi 0, %s40
    %s64 = sphi 0, %s66
    %s67 = sphi 0, %s64
    %s68 = sphi 0, %s67
    %s84 = sphi 0, %s68
    %s88 = sphi 0, %s88
    %s90 = sphi 0, %s88
    %s91 = sphi 0, %s90
    %s105 = sphi 0, %s91
    %s109 = sphi 0, %s109
    %s111 = sphi 0, %s109
    %s112 = sphi 0, %s111
    %s126 = sphi 0, %s112
    %s130 = sphi 0, %s130
    %s132 = sphi 0, %s130
    %s133 = sphi 0, %s132
    %s147 = sphi 0, %s133
    %s151 = sphi 0, %s151
    %s153 = sphi 0, %s151
    %s154 = sphi 0, %s153
    %s168 = sphi 0, %s154
    %s176 = sphi 0, %s178
    %s179 = sphi 0, %s176
    %s180 = sphi 0, %s179
    %s196 = sphi 0, %s180
  $region4: #{conv_block_forward.5} parent=0 // loop_header_branch
    %15 = sbr.rel (%p13) target = $region8
  $region5: #{conv_block_forward.5} parent=0 // loop_body
    %s17 = ssub.s32 %s12, 1
    %s18 = ssub.s32 %s12, 2
    %s25 = sadd.s32 1, %s20
    %p26 = scmp.ge.s32.totalorder %s25, 1
    %s27 = scalar_select %p26, 0, %s25
    %s28 = sadd.s32 1, %s19
    %s29 = scalar_select %p26, %s28, %s19
    %p30 = scmp.ge.s32.totalorder %s29, 2
    %s31 = scalar_select %p30, 0, %s29
    %s32 = ssub.s32 %s19, %s31
    %s33 = ssub.s32 %s20, %s27
    %s34 = sor.u32 %s32, %s33
    %p35 = scmp.eq.s32.totalorder %s34, 0
    %s37 = sadd.s32 %s36, 1
    %s38 = scalar_select %p35, %s36, %s37
    %p41 = pneg %p35
    %p42 = scmp.eq.s32.totalorder %s12, 1
    %p43 = por %p41, %p42
    %p44 = scmp.ne.s32.totalorder %s36, %s39
    %p45 = scmp.eq.s32.totalorder %s12, 0
    %p46 = por %p44, %p45
    %p47 = scmp.ne.s32.totalorder %s36, %s39
    %p48 = scmp.eq.s32.totalorder %s17, 1
    %p49 = por %p47, %p48
    %p50 = scmp.ne.s32.totalorder %s39, %s40
    %p51 = scmp.eq.s32.totalorder %s17, 0
    %p52 = por %p50, %p51
    %p53 = scmp.ne.s32.totalorder %s39, %s40
    %p54 = scmp.eq.s32.totalorder %s18, 1
    %p55 = por %p53, %p54
    %p57 = scmp.ne.s32.totalorder %s40, %s56
    %p58 = scmp.eq.s32.totalorder %s18, 0
    %p59 = por %p57, %p58
    %s60 = ssub.s32 %s19, %s31
    %s61 = ssub.s32 %s20, %s27
    %s62 = sor.u32 %s60, %s61
    %p63 = scmp.eq.s32.totalorder %s62, 0
    %s65 = sadd.s32 %s64, 1
    %s66 = scalar_select %p63, %s64, %s65
    %p69 = pneg %p63
    %p70 = scmp.eq.s32.totalorder %s12, 1
    %p71 = por %p69, %p70
    %p72 = scmp.ne.s32.totalorder %s64, %s67
    %p73 = scmp.eq.s32.totalorder %s12, 0
    %p74 = por %p72, %p73
    %p75 = scmp.ne.s32.totalorder %s64, %s67
    %p76 = scmp.eq.s32.totalorder %s17, 1
    %p77 = por %p75, %p76
    %p78 = scmp.ne.s32.totalorder %s67, %s68
    %p79 = scmp.eq.s32.totalorder %s17, 0
    %p80 = por %p78, %p79
    %p81 = scmp.ne.s32.totalorder %s67, %s68
    %p82 = scmp.eq.s32.totalorder %s18, 1
    %p83 = por %p81, %p82
    %p85 = scmp.ne.s32.totalorder %s68, %s84
    %p86 = scmp.eq.s32.totalorder %s18, 0
    %p87 = por %p85, %p86
    %s89 = sadd.s32 %s88, 1
    %p92 = scmp.eq.s32.totalorder %s12, 1
    %p93 = scmp.ne.s32.totalorder %s88, %s90
    %p94 = scmp.eq.s32.totalorder %s12, 0
    %p95 = por %p93, %p94
    %p96 = scmp.ne.s32.totalorder %s88, %s90
    %p97 = scmp.eq.s32.totalorder %s17, 1
    %p98 = por %p96, %p97
    %p99 = scmp.ne.s32.totalorder %s90, %s91
    %p100 = scmp.eq.s32.totalorder %s17, 0
    %p101 = por %p99, %p100
    %p102 = scmp.ne.s32.totalorder %s90, %s91
    %p103 = scmp.eq.s32.totalorder %s18, 1
    %p104 = por %p102, %p103
    %p106 = scmp.ne.s32.totalorder %s91, %s105
    %p107 = scmp.eq.s32.totalorder %s18, 0
    %p108 = por %p106, %p107
    %s110 = sadd.s32 %s109, 1
    %p113 = scmp.eq.s32.totalorder %s12, 1
    %p114 = scmp.ne.s32.totalorder %s109, %s111
    %p115 = scmp.eq.s32.totalorder %s12, 0
    %p116 = por %p114, %p115
    %p117 = scmp.ne.s32.totalorder %s109, %s111
    %p118 = scmp.eq.s32.totalorder %s17, 1
    %p119 = por %p117, %p118
    %p120 = scmp.ne.s32.totalorder %s111, %s112
    %p121 = scmp.eq.s32.totalorder %s17, 0
    %p122 = por %p120, %p121
    %p123 = scmp.ne.s32.totalorder %s111, %s112
    %p124 = scmp.eq.s32.totalorder %s18, 1
    %p125 = por %p123, %p124
    %p127 = scmp.ne.s32.totalorder %s112, %s126
    %p128 = scmp.eq.s32.totalorder %s18, 0
    %p129 = por %p127, %p128
    %s131 = sadd.s32 %s130, 1
    %p134 = scmp.eq.s32.totalorder %s12, 1
    %p135 = scmp.ne.s32.totalorder %s130, %s132
    %p136 = scmp.eq.s32.totalorder %s12, 0
    %p137 = por %p135, %p136
    %p138 = scmp.ne.s32.totalorder %s130, %s132
    %p139 = scmp.eq.s32.totalorder %s17, 1
    %p140 = por %p138, %p139
    %p141 = scmp.ne.s32.totalorder %s132, %s133
    %p142 = scmp.eq.s32.totalorder %s17, 0
    %p143 = por %p141, %p142
    %p144 = scmp.ne.s32.totalorder %s132, %s133
    %p145 = scmp.eq.s32.totalorder %s18, 1
    %p146 = por %p144, %p145
    %p148 = scmp.ne.s32.totalorder %s133, %s147
    %p149 = scmp.eq.s32.totalorder %s18, 0
    %p150 = por %p148, %p149
    %s152 = sadd.s32 %s151, 1
    %p155 = scmp.eq.s32.totalorder %s12, 1
    %p156 = scmp.ne.s32.totalorder %s151, %s153
    %p157 = scmp.eq.s32.totalorder %s12, 0
    %p158 = por %p156, %p157
    %p159 = scmp.ne.s32.totalorder %s151, %s153
    %p160 = scmp.eq.s32.totalorder %s17, 1
    %p161 = por %p159, %p160
    %p162 = scmp.ne.s32.totalorder %s153, %s154
    %p163 = scmp.eq.s32.totalorder %s17, 0
    %p164 = por %p162, %p163
    %p165 = scmp.ne.s32.totalorder %s153, %s154
    %p166 = scmp.eq.s32.totalorder %s18, 1
    %p167 = por %p165, %p166
    %p169 = scmp.ne.s32.totalorder %s154, %s168
    %p170 = scmp.eq.s32.totalorder %s18, 0
    %p171 = por %p169, %p170
    %s172 = ssub.s32 %s19, %s31
    %s173 = ssub.s32 %s20, %s27
    %s174 = sor.u32 %s172, %s173
    %p175 = scmp.eq.s32.totalorder %s174, 0
    %s177 = sadd.s32 %s176, 1
    %s178 = scalar_select %p175, %s176, %s177
    %p181 = pneg %p175
    %p182 = scmp.eq.s32.totalorder %s12, 1
    %p183 = por %p181, %p182
    %p184 = scmp.ne.s32.totalorder %s176, %s179
    %p185 = scmp.eq.s32.totalorder %s12, 0
    %p186 = por %p184, %p185
    %p187 = scmp.ne.s32.totalorder %s176, %s179
    %p188 = scmp.eq.s32.totalorder %s17, 1
    %p189 = por %p187, %p188
    %p190 = scmp.ne.s32.totalorder %s179, %s180
    %p191 = scmp.eq.s32.totalorder %s17, 0
    %p192 = por %p190, %p191
    %p193 = scmp.ne.s32.totalorder %s179, %s180
    %p194 = scmp.eq.s32.totalorder %s18, 1
    %p195 = por %p193, %p194
    %p197 = scmp.ne.s32.totalorder %s180, %s196
    %p198 = scmp.eq.s32.totalorder %s18, 0
    %p199 = por %p197, %p198
    %p200 = scmp.le.s32.totalorder 1, %s12
    %p201 = scmp.lt.s32.totalorder %s12, 3
    %p202 = pnand %p200, %p201
    %p203 = pneg %p202
    // Predicated region
    $region9: #{conv_block_forward.5} parent=5 // pred_check
      _
    $region10: #{conv_block_forward.5} parent=5 // pred_check_branch
      %205 = sbr.rel (%p202) target = $region12
    $region11: #{conv_block_forward.5} parent=5 // pred_region
      %s206 = ssub.s32 %s12, 1
      // Predicated region
      $region13: #{conv_block_forward.5} parent=11 // pred_check
        %p207 = pneg %p101
      $region14: #{conv_block_forward.5} parent=11 // pred_check_branch
        %209 = sbr.rel (%p207) target = $region16
      $region15: #{conv_block_forward.5} parent=11 // pred_region
        _
      $region16: #{conv_block_forward.5} parent=11 // pred_fallthru
        _
      // Predicated region
      $region17: #{conv_block_forward.5} parent=11 // pred_check
        %p210 = pneg %p122
      $region18: #{conv_block_forward.5} parent=11 // pred_check_branch
        %212 = sbr.rel (%p210) target = $region20
      $region19: #{conv_block_forward.5} parent=11 // pred_region
        _
      $region20: #{conv_block_forward.5} parent=11 // pred_fallthru
        _
      // Predicated region
      $region21: #{conv_block_forward.5} parent=11 // pred_check
        %p213 = pneg %p143
      $region22: #{conv_block_forward.5} parent=11 // pred_check_branch
        %215 = sbr.rel (%p213) target = $region24
      $region23: #{conv_block_forward.5} parent=11 // pred_region
        _
      $region24: #{conv_block_forward.5} parent=11 // pred_fallthru
        _
      // Predicated region
      $region25: #{conv_block_forward.5} parent=11 // pred_check
        %p216 = pneg %p164
      $region26: #{conv_block_forward.5} parent=11 // pred_check_branch
        %218 = sbr.rel (%p216) target = $region28
      $region27: #{conv_block_forward.5} parent=11 // pred_region
        _
      $region28: #{conv_block_forward.5} parent=11 // pred_fallthru
        _
    $region12: #{conv_block_forward.5} parent=5 // pred_fallthru
      _
    %p219 = scmp.lt.s32.totalorder %s12, 2
    // Predicated region
    $region29: #{conv_block_forward.5} parent=5 // pred_check
      %p220 = pneg %p219
    $region30: #{conv_block_forward.5} parent=5 // pred_check_branch
      %222 = sbr.rel (%p220) target = $region32
    $region31: #{conv_block_forward.5} parent=5 // pred_region
      // Predicated region
      $region33: #{conv_block_forward.5} parent=31 // pred_check
        %p223 = pneg %p46
      $region34: #{conv_block_forward.5} parent=31 // pred_check_branch
        %225 = sbr.rel (%p223) target = $region36
      $region35: #{conv_block_forward.5} parent=31 // pred_region
        %s226 = smul.u32 16, %s20
        %p227 = scmp.lt.s32.totalorder %s19, 1
        %s228 = scalar_select %p227, %s19, 1
        %p229 = scmp.lt.s32.totalorder %s226, 15
        %s230 = scalar_select %p229, %s226, 15
        %s231 = smul.addr %s230, 2
        %s232 = smul.addr %s228, 32
        %s233 = sadd.s32 %s231, %s232
        %s234 = smul.addr %s233, 8
        %s235 = scalar_lea.vmem %s0, %s234
        %s236 = smul.u32 16, %s20
      $region36: #{conv_block_forward.5} parent=31 // pred_fallthru
        _
      // Predicated region
      $region37: #{conv_block_forward.5} parent=31 // pred_check
        %p237 = pneg %p74
      $region38: #{conv_block_forward.5} parent=31 // pred_check_branch
        %239 = sbr.rel (%p237) target = $region40
      $region39: #{conv_block_forward.5} parent=31 // pred_region
        %s240 = smul.u32 16, %s20
        %p241 = scmp.lt.s32.totalorder %s19, 1
        %s242 = scalar_select %p241, %s19, 1
        %p243 = scmp.lt.s32.totalorder %s240, 15
        %s244 = scalar_select %p243, %s240, 15
        %s245 = smul.addr %s244, 2
        %s246 = smul.addr %s242, 32
        %s247 = sadd.s32 %s245, %s246
        %s248 = smul.addr %s247, 8
        %s249 = scalar_lea.vmem %s1, %s248
        %s250 = smul.u32 16, %s20
      $region40: #{conv_block_forward.5} parent=31 // pred_fallthru
        _
    $region32: #{conv_block_forward.5} parent=5 // pred_fallthru
      _
    %p251 = scmp.le.s32.totalorder 1, %s12
    %p252 = scmp.lt.s32.totalorder %s12, 3
    %p253 = pnand %p251, %p252
    %p254 = pneg %p253
    // Predicated region
    $region41: #{conv_block_forward.5} parent=5 // pred_check
      _
    $region42: #{conv_block_forward.5} parent=5 // pred_check_branch
      %256 = sbr.rel (%p253) target = $region44
    $region43: #{conv_block_forward.5} parent=5 // pred_region
      %s257 = ssub.s32 %s12, 1
      %s258 = smul.u32 16, %s22
      %p259 = scmp.lt.s32.totalorder %s21, 1
      %s260 = scalar_select %p259, %s21, 1
      %p261 = scmp.lt.s32.totalorder %s258, 15
      %s262 = scalar_select %p261, %s258, 15
      %s263 = smul.addr %s262, 2
      %s264 = smul.addr %s260, 32
      %s265 = sadd.s32 %s263, %s264
      %s266 = smul.addr %s265, 8
      %s267 = scalar_lea.vmem %s0, %s266
      %p268 = pneg %p52
      %p269 = pneg %p49
      %s270 = smul.u32 16, %s22
      %p271 = scmp.lt.s32.totalorder %s21, 1
      %s272 = scalar_select %p271, %s21, 1
      %p273 = scmp.lt.s32.totalorder %s270, 15
      %s274 = scalar_select %p273, %s270, 15
      %s275 = smul.addr %s274, 2
      %s276 = smul.addr %s272, 32
      %s277 = sadd.s32 %s275, %s276
      %s278 = smul.addr %s277, 8
      %s279 = scalar_lea.vmem %s1, %s278
      %p280 = pneg %p80
      %p281 = pneg %p77
      %p282 = pneg %p101
      %p283 = pneg %p98
      %p284 = pneg %p122
      %p285 = pneg %p119
      %p286 = pneg %p143
      %p287 = pneg %p140
      %p288 = pneg %p164
      %p289 = pneg %p161
      %p290 = pneg %p192
      %p291 = pneg %p189
      %s292 = smul.u32 16, %s22
      %p293 = scmp.lt.s32.totalorder %s21, 1
      %s294 = scalar_select %p293, %s21, 1
      %p295 = scmp.lt.s32.totalorder %s292, 15
      %s296 = scalar_select %p295, %s292, 15
      %s297 = smul.addr %s296, 2
      %s298 = smul.addr %s294, 32
      %s299 = sadd.s32 %s297, %s298
      %s300 = smul.addr %s299, 8
      %s301 = scalar_lea.vmem %s6, %s300
      %s302 = smul.u32 16, %s22
      %p303 = scmp.lt.s32.totalorder %s21, 1
      %s304 = scalar_select %p303, %s21, 1
      %p305 = scmp.lt.s32.totalorder %s302, 15
      %s306 = scalar_select %p305, %s302, 15
      %s307 = smul.addr %s306, 2
      %s308 = smul.addr %s304, 32
      %s309 = sadd.s32 %s307, %s308
      %s310 = smul.addr %s309, 8
      %s311 = scalar_lea.vmem %s0, %s310
      %s312 = smul.u32 16, %s22
      %s313 = smul.u32 16, %s22
      %p314 = scmp.lt.s32.totalorder %s21, 1
      %s315 = scalar_select %p314, %s21, 1
      %p316 = scmp.lt.s32.totalorder %s313, 15
      %s317 = scalar_select %p316, %s313, 15
      %s318 = smul.addr %s317, 2
      %s319 = smul.addr %s315, 32
      %s320 = sadd.s32 %s318, %s319
      %s321 = smul.addr %s320, 8
      %s322 = scalar_lea.vmem %s1, %s321
      %s323 = smul.u32 16, %s22
      %s324 = smul.u32 16, %s22
      %p325 = scmp.lt.s32.totalorder %s21, 1
      %s326 = scalar_select %p325, %s21, 1
      %p327 = scmp.lt.s32.totalorder %s324, 15
      %s328 = scalar_select %p327, %s324, 15
      %s329 = smul.addr %s328, 2
      %s330 = smul.addr %s326, 32
      %s331 = sadd.s32 %s329, %s330
      %s332 = smul.addr %s331, 8
      %s333 = scalar_lea.vmem %s6, %s332
      %s334 = smul.u32 16, %s22
      %v335 = vld [vmem:[%s4] sm:$0x1]
      %v336 = vld [vmem:[%s5] sm:$0x1]
      %v337 = vld [vmem:[%s311] sm:$0xff]
      %v338 = vld [vmem:[%s311 + $0x8] sm:$0xff]
      %v339 = vld [vmem:[%s311 + $0x10] sm:$0xff]
      %v340 = vld [vmem:[%s311 + $0x18] sm:$0xff]
      %v341 = vld [vmem:[%s311 + $0x20] sm:$0xff]
      %v342 = vld [vmem:[%s311 + $0x28] sm:$0xff]
      %v343 = vld [vmem:[%s311 + $0x30] sm:$0xff]
      %v344 = vld [vmem:[%s311 + $0x38] sm:$0xff]
      %v345 = vld [vmem:[%s311 + $0x40] sm:$0xff]
      %v346 = vld [vmem:[%s311 + $0x48] sm:$0xff]
      %v347 = vld [vmem:[%s311 + $0x50] sm:$0xff]
      %v348 = vld [vmem:[%s311 + $0x58] sm:$0xff]
      %v349 = vld [vmem:[%s311 + $0x60] sm:$0xff]
      %v350 = vld [vmem:[%s311 + $0x68] sm:$0xff]
      %v351 = vld [vmem:[%s311 + $0x70] sm:$0xff]
      %v352 = vld [vmem:[%s311 + $0x78] sm:$0xff]
      %v353 = vld [vmem:[%s311 + $0x80] sm:$0xff]
      %v354 = vld [vmem:[%s311 + $0x88] sm:$0xff]
      %v355 = vld [vmem:[%s311 + $0x90] sm:$0xff]
      %v356 = vld [vmem:[%s311 + $0x98] sm:$0xff]
      %v357 = vld [vmem:[%s311 + $0xa0] sm:$0xff]
      %v358 = vld [vmem:[%s311 + $0xa8] sm:$0xff]
      %v359 = vld [vmem:[%s311 + $0xb0] sm:$0xff]
      %v360 = vld [vmem:[%s311 + $0xb8] sm:$0xff]
      %v361 = vld [vmem:[%s311 + $0xc0] sm:$0xff]
      %v362 = vld [vmem:[%s311 + $0xc8] sm:$0xff]
      %v363 = vld [vmem:[%s311 + $0xd0] sm:$0xff]
      %v364 = vld [vmem:[%s311 + $0xd8] sm:$0xff]
      %v365 = vld [vmem:[%s311 + $0xe0] sm:$0xff]
      %v366 = vld [vmem:[%s311 + $0xe8] sm:$0xff]
      %v367 = vld [vmem:[%s311 + $0xf0] sm:$0xff]
      %v368 = vld [vmem:[%s311 + $0xf8] sm:$0xff]
      %v370 = vlaneseq
      %v371 = vshrl.u32 %v370, 7
      %v372 = vsub.s32 0, %v371
      %v373 = vrot.slane %v335, %v372
      %v375 = vmul.f32 %v337, %v373
      %v376 = vmul.f32 %v338, %v373
      %v377 = vmul.f32 %v339, %v373
      %v378 = vmul.f32 %v340, %v373
      %v379 = vmul.f32 %v341, %v373
      %v380 = vmul.f32 %v342, %v373
      %v381 = vmul.f32 %v343, %v373
      %v382 = vmul.f32 %v344, %v373
      %v383 = vmul.f32 %v345, %v373
      %v384 = vmul.f32 %v346, %v373
      %v385 = vmul.f32 %v347, %v373
      %v386 = vmul.f32 %v348, %v373
      %v387 = vmul.f32 %v349, %v373
      %v388 = vmul.f32 %v350, %v373
      %v389 = vmul.f32 %v351, %v373
      %v390 = vmul.f32 %v352, %v373
      %v391 = vmul.f32 %v353, %v373
      %v392 = vmul.f32 %v354, %v373
      %v393 = vmul.f32 %v355, %v373
      %v394 = vmul.f32 %v356, %v373
      %v395 = vmul.f32 %v357, %v373
      %v396 = vmul.f32 %v358, %v373
      %v397 = vmul.f32 %v359, %v373
      %v398 = vmul.f32 %v360, %v373
      %v399 = vmul.f32 %v361, %v373
      %v400 = vmul.f32 %v362, %v373
      %v401 = vmul.f32 %v363, %v373
      %v402 = vmul.f32 %v364, %v373
      %v403 = vmul.f32 %v365, %v373
      %v404 = vmul.f32 %v366, %v373
      %v405 = vmul.f32 %v367, %v373
      %v406 = vmul.f32 %v368, %v373
      %v408 = vlaneseq
      %v409 = vshrl.u32 %v408, 7
      %v410 = vsub.s32 0, %v409
      %v411 = vrot.slane %v336, %v410
      %v413 = vadd.f32 %v375, %v411
      %v414 = vadd.f32 %v376, %v411
      %v415 = vadd.f32 %v377, %v411
      %v416 = vadd.f32 %v378, %v411
      %v417 = vadd.f32 %v379, %v411
      %v418 = vadd.f32 %v380, %v411
      %v419 = vadd.f32 %v381, %v411
      %v420 = vadd.f32 %v382, %v411
      %v421 = vadd.f32 %v383, %v411
      %v422 = vadd.f32 %v384, %v411
      %v423 = vadd.f32 %v385, %v411
      %v424 = vadd.f32 %v386, %v411
      %v425 = vadd.f32 %v387, %v411
      %v426 = vadd.f32 %v388, %v411
      %v427 = vadd.f32 %v389, %v411
      %v428 = vadd.f32 %v390, %v411
      %v429 = vadd.f32 %v391, %v411
      %v430 = vadd.f32 %v392, %v411
      %v431 = vadd.f32 %v393, %v411
      %v432 = vadd.f32 %v394, %v411
      %v433 = vadd.f32 %v395, %v411
      %v434 = vadd.f32 %v396, %v411
      %v435 = vadd.f32 %v397, %v411
      %v436 = vadd.f32 %v398, %v411
      %v437 = vadd.f32 %v399, %v411
      %v438 = vadd.f32 %v400, %v411
      %v439 = vadd.f32 %v401, %v411
      %v440 = vadd.f32 %v402, %v411
      %v441 = vadd.f32 %v403, %v411
      %v442 = vadd.f32 %v404, %v411
      %v443 = vadd.f32 %v405, %v411
      %v444 = vadd.f32 %v406, %v411
      %vm445 = vcmp.ge.f32.partialorder %v413, 0.0
      %vm446 = vcmp.ge.f32.partialorder %v414, 0.0
      %vm447 = vcmp.ge.f32.partialorder %v415, 0.0
      %vm448 = vcmp.ge.f32.partialorder %v416, 0.0
      %vm449 = vcmp.ge.f32.partialorder %v417, 0.0
      %vm450 = vcmp.ge.f32.partialorder %v418, 0.0
      %vm451 = vcmp.ge.f32.partialorder %v419, 0.0
      %vm452 = vcmp.ge.f32.partialorder %v420, 0.0
      %vm453 = vcmp.ge.f32.partialorder %v421, 0.0
      %vm454 = vcmp.ge.f32.partialorder %v422, 0.0
      %vm455 = vcmp.ge.f32.partialorder %v423, 0.0
      %vm456 = vcmp.ge.f32.partialorder %v424, 0.0
      %vm457 = vcmp.ge.f32.partialorder %v425, 0.0
      %vm458 = vcmp.ge.f32.partialorder %v426, 0.0
      %vm459 = vcmp.ge.f32.partialorder %v427, 0.0
      %vm460 = vcmp.ge.f32.partialorder %v428, 0.0
      %vm461 = vcmp.ge.f32.partialorder %v429, 0.0
      %vm462 = vcmp.ge.f32.partialorder %v430, 0.0
      %vm463 = vcmp.ge.f32.partialorder %v431, 0.0
      %vm464 = vcmp.ge.f32.partialorder %v432, 0.0
      %vm465 = vcmp.ge.f32.partialorder %v433, 0.0
      %vm466 = vcmp.ge.f32.partialorder %v434, 0.0
      %vm467 = vcmp.ge.f32.partialorder %v435, 0.0
      %vm468 = vcmp.ge.f32.partialorder %v436, 0.0
      %vm469 = vcmp.ge.f32.partialorder %v437, 0.0
      %vm470 = vcmp.ge.f32.partialorder %v438, 0.0
      %vm471 = vcmp.ge.f32.partialorder %v439, 0.0
      %vm472 = vcmp.ge.f32.partialorder %v440, 0.0
      %vm473 = vcmp.ge.f32.partialorder %v441, 0.0
      %vm474 = vcmp.ge.f32.partialorder %v442, 0.0
      %vm475 = vcmp.ge.f32.partialorder %v443, 0.0
      %vm476 = vcmp.ge.f32.partialorder %v444, 0.0
      %v477 = vmul.f32 %v413, 0.1
      %v478 = vmul.f32 %v414, 0.1
      %v479 = vmul.f32 %v415, 0.1
      %v480 = vmul.f32 %v416, 0.1
      %v481 = vmul.f32 %v417, 0.1
      %v482 = vmul.f32 %v418, 0.1
      %v483 = vmul.f32 %v419, 0.1
      %v484 = vmul.f32 %v420, 0.1
      %v485 = vmul.f32 %v421, 0.1
      %v486 = vmul.f32 %v422, 0.1
      %v487 = vmul.f32 %v423, 0.1
      %v488 = vmul.f32 %v424, 0.1
      %v489 = vmul.f32 %v425, 0.1
      %v490 = vmul.f32 %v426, 0.1
      %v491 = vmul.f32 %v427, 0.1
      %v492 = vmul.f32 %v428, 0.1
      %v493 = vmul.f32 %v429, 0.1
      %v494 = vmul.f32 %v430, 0.1
      %v495 = vmul.f32 %v431, 0.1
      %v496 = vmul.f32 %v432, 0.1
      %v497 = vmul.f32 %v433, 0.1
      %v498 = vmul.f32 %v434, 0.1
      %v499 = vmul.f32 %v435, 0.1
      %v500 = vmul.f32 %v436, 0.1
      %v501 = vmul.f32 %v437, 0.1
      %v502 = vmul.f32 %v438, 0.1
      %v503 = vmul.f32 %v439, 0.1
      %v504 = vmul.f32 %v440, 0.1
      %v505 = vmul.f32 %v441, 0.1
      %v506 = vmul.f32 %v442, 0.1
      %v507 = vmul.f32 %v443, 0.1
      %v508 = vmul.f32 %v444, 0.1
      %v509 = vsel %vm445, %v413, %v477
      %v510 = vsel %vm446, %v414, %v478
      %v511 = vsel %vm447, %v415, %v479
      %v512 = vsel %vm448, %v416, %v480
      %v513 = vsel %vm449, %v417, %v481
      %v514 = vsel %vm450, %v418, %v482
      %v515 = vsel %vm451, %v419, %v483
      %v516 = vsel %vm452, %v420, %v484
      %v517 = vsel %vm453, %v421, %v485
      %v518 = vsel %vm454, %v422, %v486
      %v519 = vsel %vm455, %v423, %v487
      %v520 = vsel %vm456, %v424, %v488
      %v521 = vsel %vm457, %v425, %v489
      %v522 = vsel %vm458, %v426, %v490
      %v523 = vsel %vm459, %v427, %v491
      %v524 = vsel %vm460, %v428, %v492
      %v525 = vsel %vm461, %v429, %v493
      %v526 = vsel %vm462, %v430, %v494
      %v527 = vsel %vm463, %v431, %v495
      %v528 = vsel %vm464, %v432, %v496
      %v529 = vsel %vm465, %v433, %v497
      %v530 = vsel %vm466, %v434, %v498
      %v531 = vsel %vm467, %v435, %v499
      %v532 = vsel %vm468, %v436, %v500
      %v533 = vsel %vm469, %v437, %v501
      %v534 = vsel %vm470, %v438, %v502
      %v535 = vsel %vm471, %v439, %v503
      %v536 = vsel %vm472, %v440, %v504
      %v537 = vsel %vm473, %v441, %v505
      %v538 = vsel %vm474, %v442, %v506
      %v539 = vsel %vm475, %v443, %v507
      %v540 = vsel %vm476, %v444, %v508
      %v541 = vld [vmem:[%s322] sm:$0xff]
      %v542 = vld [vmem:[%s322 + $0x8] sm:$0xff]
      %v543 = vld [vmem:[%s322 + $0x10] sm:$0xff]
      %v544 = vld [vmem:[%s322 + $0x18] sm:$0xff]
      %v545 = vld [vmem:[%s322 + $0x20] sm:$0xff]
      %v546 = vld [vmem:[%s322 + $0x28] sm:$0xff]
      %v547 = vld [vmem:[%s322 + $0x30] sm:$0xff]
      %v548 = vld [vmem:[%s322 + $0x38] sm:$0xff]
      %v549 = vld [vmem:[%s322 + $0x40] sm:$0xff]
      %v550 = vld [vmem:[%s322 + $0x48] sm:$0xff]
      %v551 = vld [vmem:[%s322 + $0x50] sm:$0xff]
      %v552 = vld [vmem:[%s322 + $0x58] sm:$0xff]
      %v553 = vld [vmem:[%s322 + $0x60] sm:$0xff]
      %v554 = vld [vmem:[%s322 + $0x68] sm:$0xff]
      %v555 = vld [vmem:[%s322 + $0x70] sm:$0xff]
      %v556 = vld [vmem:[%s322 + $0x78] sm:$0xff]
      %v557 = vld [vmem:[%s322 + $0x80] sm:$0xff]
      %v558 = vld [vmem:[%s322 + $0x88] sm:$0xff]
      %v559 = vld [vmem:[%s322 + $0x90] sm:$0xff]
      %v560 = vld [vmem:[%s322 + $0x98] sm:$0xff]
      %v561 = vld [vmem:[%s322 + $0xa0] sm:$0xff]
      %v562 = vld [vmem:[%s322 + $0xa8] sm:$0xff]
      %v563 = vld [vmem:[%s322 + $0xb0] sm:$0xff]
      %v564 = vld [vmem:[%s322 + $0xb8] sm:$0xff]
      %v565 = vld [vmem:[%s322 + $0xc0] sm:$0xff]
      %v566 = vld [vmem:[%s322 + $0xc8] sm:$0xff]
      %v567 = vld [vmem:[%s322 + $0xd0] sm:$0xff]
      %v568 = vld [vmem:[%s322 + $0xd8] sm:$0xff]
      %v569 = vld [vmem:[%s322 + $0xe0] sm:$0xff]
      %v570 = vld [vmem:[%s322 + $0xe8] sm:$0xff]
      %v571 = vld [vmem:[%s322 + $0xf0] sm:$0xff]
      %v572 = vld [vmem:[%s322 + $0xf8] sm:$0xff]
      %v573 = vld [vmem:[%s2] sm:$0xff]
      %v574 = vld [vmem:[%s2 + $0x8] sm:$0xff]
      %v575 = vld [vmem:[%s2 + $0x10] sm:$0xff]
      %v576 = vld [vmem:[%s2 + $0x18] sm:$0xff]
      %v577 = vld [vmem:[%s2 + $0x20] sm:$0xff]
      %v578 = vld [vmem:[%s2 + $0x28] sm:$0xff]
      %v579 = vld [vmem:[%s2 + $0x30] sm:$0xff]
      %v580 = vld [vmem:[%s2 + $0x38] sm:$0xff]
      %v581 = vld [vmem:[%s2 + $0x40] sm:$0xff]
      %v582 = vld [vmem:[%s2 + $0x48] sm:$0xff]
      %v583 = vld [vmem:[%s2 + $0x50] sm:$0xff]
      %v584 = vld [vmem:[%s2 + $0x58] sm:$0xff]
      %v585 = vld [vmem:[%s2 + $0x60] sm:$0xff]
      %v586 = vld [vmem:[%s2 + $0x68] sm:$0xff]
      %v587 = vld [vmem:[%s2 + $0x70] sm:$0xff]
      %v588 = vld [vmem:[%s2 + $0x78] sm:$0xff]
      %589 = vmatprep.subr.mxu0 0.0
      %590 = vmatpush1.msra.mxu0 %v573
      %591 = vmatprep.subr.mxu0 0.0
      %592 = vmatpush1.msra.mxu0 %v574
      %593 = vmatprep.subr.mxu0 0.0
      %594 = vmatpush1.msra.mxu0 %v575
      %595 = vmatprep.subr.mxu0 0.0
      %596 = vmatpush1.msra.mxu0 %v576
      %597 = vmatprep.subr.mxu0 0.0
      %598 = vmatpush1.msra.mxu0 %v577
      %599 = vmatprep.subr.mxu0 0.0
      %600 = vmatpush1.msra.mxu0 %v578
      %601 = vmatprep.subr.mxu0 0.0
      %602 = vmatpush1.msra.mxu0 %v579
      %603 = vmatprep.subr.mxu0 0.0
      %604 = vmatpush1.msra.mxu0 %v580
      %605 = vmatprep.subr.mxu0 0.0
      %606 = vmatpush1.msra.mxu0 %v581
      %607 = vmatprep.subr.mxu0 0.0
      %608 = vmatpush1.msra.mxu0 %v582
      %609 = vmatprep.subr.mxu0 0.0
      %610 = vmatpush1.msra.mxu0 %v583
      %611 = vmatprep.subr.mxu0 0.0
      %612 = vmatpush1.msra.mxu0 %v584
      %613 = vmatprep.subr.mxu0 0.0
      %614 = vmatpush1.msra.mxu0 %v585
      %615 = vmatprep.subr.mxu0 0.0
      %616 = vmatpush1.msra.mxu0 %v586
      %617 = vmatprep.subr.mxu0 0.0
      %618 = vmatpush1.msra.mxu0 %v587
      %619 = vmatprep.subr.mxu0 0.0
      %620 = vmatpush1.msra.mxu0 %v588
      %621 = vmatprep.subr.mxu0 0.0
      %622 = vmatpush1.msra.mxu0 0.0
      %623 = vmatprep.subr.mxu0 0.0
      %624 = vmatpush1.msra.mxu0 0.0
      %625 = vmatprep.subr.mxu0 0.0
      %626 = vmatpush1.msra.mxu0 0.0
      %627 = vmatprep.subr.mxu0 0.0
      %628 = vmatpush1.msra.mxu0 0.0
      %629 = vmatprep.subr.mxu0 0.0
      %630 = vmatpush1.msra.mxu0 0.0
      %631 = vmatprep.subr.mxu0 0.0
      %632 = vmatpush1.msra.mxu0 0.0
      %633 = vmatprep.subr.mxu0 0.0
      %634 = vmatpush1.msra.mxu0 0.0
      %635 = vmatprep.subr.mxu0 0.0
      %636 = vmatpush1.msra.mxu0 0.0
      %637 = vmatprep.subr.mxu0 0.0
      %638 = vmatpush1.msra.mxu0 0.0
      %639 = vmatprep.subr.mxu0 0.0
      %640 = vmatpush1.msra.mxu0 0.0
      %641 = vmatprep.subr.mxu0 0.0
      %642 = vmatpush1.msra.mxu0 0.0
      %643 = vmatprep.subr.mxu0 0.0
      %644 = vmatpush1.msra.mxu0 0.0
      %645 = vmatprep.subr.mxu0 0.0
      %646 = vmatpush1.msra.mxu0 0.0
      %647 = vmatprep.subr.mxu0 0.0
      %648 = vmatpush1.msra.mxu0 0.0
      %649 = vmatprep.subr.mxu0 0.0
      %650 = vmatpush1.msra.mxu0 0.0
      %651 = vmatprep.subr.mxu0 0.0
      %652 = vmatpush1.msra.mxu0 0.0
      %653 = vmatprep.mubr.f32.mxu0 0.0
      %654 = vmatmul.mubr.f32.gmra.mrb[0].mxu0 %v541
      %v655 = vpop.f32.mrb[0].mxu0
      %v656 = vadd.f32 0.0, %v655
      %v657 = vpop.f32.mrb[0].mxu0
      %658 = vmatprep.mubr.f32.mxu0 0.0
      %659 = vmatmul.mubr.f32.gmra.mrb[0].mxu0 %v542
      %v660 = vpop.f32.mrb[0].mxu0
      %v661 = vadd.f32 0.0, %v660
      %v662 = vpop.f32.mrb[0].mxu0
      %663 = vmatprep.mubr.f32.mxu0 0.0
      %664 = vmatmul.mubr.f32.gmra.mrb[0].mxu0 %v543
      %v665 = vpop.f32.mrb[0].mxu0
      %v666 = vadd.f32 0.0, %v665
      %v667 = vpop.f32.mrb[0].mxu0
      %668 = vmatprep.mubr.f32.mxu0 0.0
      %669 = vmatmul.mubr.f32.gmra.mrb[0].mxu0 %v544
      %v670 = vpop.f32.mrb[0].mxu0
      %v671 = vadd.f32 0.0, %v670
      %v672 = vpop.f32.mrb[0].mxu0
      %673 = vmatprep.mubr.f32.mxu0 0.0
      %674 = vmatmul.mubr.f32.gmra.mrb[0].mxu0 %v545
      %v675 = vpop.f32.mrb[0].mxu0
      %v676 = vadd.f32 0.0, %v675
      %v677 = vpop.f32.mrb[0].mxu0
      %678 = vmatprep.mubr.f32.mxu0 0.0
      %679 = vmatmul.mubr.f32.gmra.mrb[0].mxu0 %v546
      %v680 = vpop.f32.mrb[0].mxu0
      %v681 = vadd.f32 0.0, %v680
      %v682 = vpop.f32.mrb[0].mxu0
      %683 = vmatprep.mubr.f32.mxu0 0.0
      %684 = vmatmul.mubr.f32.gmra.mrb[0].mxu0 %v547
      %v685 = vpop.f32.mrb[0].mxu0
      %v686 = vadd.f32 0.0, %v685
      %v687 = vpop.f32.mrb[0].mxu0
      %688 = vmatprep.mubr.f32.mxu0 0.0
      %689 = vmatmul.mubr.f32.gmra.mrb[0].mxu0 %v548
      %v690 = vpop.f32.mrb[0].mxu0
      %v691 = vadd.f32 0.0, %v690
      %v692 = vpop.f32.mrb[0].mxu0
      %693 = vmatprep.mubr.f32.mxu0 0.0
      %694 = vmatmul.mubr.f32.gmra.mrb[0].mxu0 %v549
      %v695 = vpop.f32.mrb[0].mxu0
      %v696 = vadd.f32 0.0, %v695
      %v697 = vpop.f32.mrb[0].mxu0
      %698 = vmatprep.mubr.f32.mxu0 0.0
      %699 = vmatmul.mubr.f32.gmra.mrb[0].mxu0 %v550
      %v700 = vpop.f32.mrb[0].mxu0
      %v701 = vadd.f32 0.0, %v700
      %v702 = vpop.f32.mrb[0].mxu0
      %703 = vmatprep.mubr.f32.mxu0 0.0
      %704 = vmatmul.mubr.f32.gmra.mrb[0].mxu0 %v551
      %v705 = vpop.f32.mrb[0].mxu0
      %v706 = vadd.f32 0.0, %v705
      %v707 = vpop.f32.mrb[0].mxu0
      %708 = vmatprep.mubr.f32.mxu0 0.0
      %709 = vmatmul.mubr.f32.gmra.mrb[0].mxu0 %v552
      %v710 = vpop.f32.mrb[0].mxu0
      %v711 = vadd.f32 0.0, %v710
      %v712 = vpop.f32.mrb[0].mxu0
      %713 = vmatprep.mubr.f32.mxu0 0.0
      %714 = vmatmul.mubr.f32.gmra.mrb[0].mxu0 %v553
      %v715 = vpop.f32.mrb[0].mxu0
      %v716 = vadd.f32 0.0, %v715
      %v717 = vpop.f32.mrb[0].mxu0
      %718 = vmatprep.mubr.f32.mxu0 0.0
      %719 = vmatmul.mubr.f32.gmra.mrb[0].mxu0 %v554
      %v720 = vpop.f32.mrb[0].mxu0
      %v721 = vadd.f32 0.0, %v720
      %v722 = vpop.f32.mrb[0].mxu0
      %723 = vmatprep.mubr.f32.mxu0 0.0
      %724 = vmatmul.mubr.f32.gmra.mrb[0].mxu0 %v555
      %v725 = vpop.f32.mrb[0].mxu0
      %v726 = vadd.f32 0.0, %v725
      %v727 = vpop.f32.mrb[0].mxu0
      %728 = vmatprep.mubr.f32.mxu0 0.0
      %729 = vmatmul.mubr.f32.gmra.mrb[0].mxu0 %v556
      %v730 = vpop.f32.mrb[0].mxu0
      %v731 = vadd.f32 0.0, %v730
      %v732 = vpop.f32.mrb[0].mxu0
      %733 = vmatprep.mubr.f32.mxu0 0.0
      %734 = vmatmul.mubr.f32.gmra.mrb[0].mxu0 %v557
      %v735 = vpop.f32.mrb[0].mxu0
      %v736 = vadd.f32 0.0, %v735
      %v737 = vpop.f32.mrb[0].mxu0
      %738 = vmatprep.mubr.f32.mxu0 0.0
      %739 = vmatmul.mubr.f32.gmra.mrb[0].mxu0 %v558
      %v740 = vpop.f32.mrb[0].mxu0
      %v741 = vadd.f32 0.0, %v740
      %v742 = vpop.f32.mrb[0].mxu0
      %743 = vmatprep.mubr.f32.mxu0 0.0
      %744 = vmatmul.mubr.f32.gmra.mrb[0].mxu0 %v559
      %v745 = vpop.f32.mrb[0].mxu0
      %v746 = vadd.f32 0.0, %v745
      %v747 = vpop.f32.mrb[0].mxu0
      %748 = vmatprep.mubr.f32.mxu0 0.0
      %749 = vmatmul.mubr.f32.gmra.mrb[0].mxu0 %v560
      %v750 = vpop.f32.mrb[0].mxu0
      %v751 = vadd.f32 0.0, %v750
      %v752 = vpop.f32.mrb[0].mxu0
      %753 = vmatprep.mubr.f32.mxu0 0.0
      %754 = vmatmul.mubr.f32.gmra.mrb[0].mxu0 %v561
      %v755 = vpop.f32.mrb[0].mxu0
      %v756 = vadd.f32 0.0, %v755
      %v757 = vpop.f32.mrb[0].mxu0
      %758 = vmatprep.mubr.f32.mxu0 0.0
      %759 = vmatmul.mubr.f32.gmra.mrb[0].mxu0 %v562
      %v760 = vpop.f32.mrb[0].mxu0
      %v761 = vadd.f32 0.0, %v760
      %v762 = vpop.f32.mrb[0].mxu0
      %763 = vmatprep.mubr.f32.mxu0 0.0
      %764 = vmatmul.mubr.f32.gmra.mrb[0].mxu0 %v563
      %v765 = vpop.f32.mrb[0].mxu0
      %v766 = vadd.f32 0.0, %v765
      %v767 = vpop.f32.mrb[0].mxu0
      %768 = vmatprep.mubr.f32.mxu0 0.0
      %769 = vmatmul.mubr.f32.gmra.mrb[0].mxu0 %v564
      %v770 = vpop.f32.mrb[0].mxu0
      %v771 = vadd.f32 0.0, %v770
      %v772 = vpop.f32.mrb[0].mxu0
      %773 = vmatprep.mubr.f32.mxu0 0.0
      %774 = vmatmul.mubr.f32.gmra.mrb[0].mxu0 %v565
      %v775 = vpop.f32.mrb[0].mxu0
      %v776 = vadd.f32 0.0, %v775
      %v777 = vpop.f32.mrb[0].mxu0
      %778 = vmatprep.mubr.f32.mxu0 0.0
      %779 = vmatmul.mubr.f32.gmra.mrb[0].mxu0 %v566
      %v780 = vpop.f32.mrb[0].mxu0
      %v781 = vadd.f32 0.0, %v780
      %v782 = vpop.f32.mrb[0].mxu0
      %783 = vmatprep.mubr.f32.mxu0 0.0
      %784 = vmatmul.mubr.f32.gmra.mrb[0].mxu0 %v567
      %v785 = vpop.f32.mrb[0].mxu0
      %v786 = vadd.f32 0.0, %v785
      %v787 = vpop.f32.mrb[0].mxu0
      %788 = vmatprep.mubr.f32.mxu0 0.0
      %789 = vmatmul.mubr.f32.gmra.mrb[0].mxu0 %v568
      %v790 = vpop.f32.mrb[0].mxu0
      %v791 = vadd.f32 0.0, %v790
      %v792 = vpop.f32.mrb[0].mxu0
      %793 = vmatprep.mubr.f32.mxu0 0.0
      %794 = vmatmul.mubr.f32.gmra.mrb[0].mxu0 %v569
      %v795 = vpop.f32.mrb[0].mxu0
      %v796 = vadd.f32 0.0, %v795
      %v797 = vpop.f32.mrb[0].mxu0
      %798 = vmatprep.mubr.f32.mxu0 0.0
      %799 = vmatmul.mubr.f32.gmra.mrb[0].mxu0 %v570
      %v800 = vpop.f32.mrb[0].mxu0
      %v801 = vadd.f32 0.0, %v800
      %v802 = vpop.f32.mrb[0].mxu0
      %803 = vmatprep.mubr.f32.mxu0 0.0
      %804 = vmatmul.mubr.f32.gmra.mrb[0].mxu0 %v571
      %v805 = vpop.f32.mrb[0].mxu0
      %v806 = vadd.f32 0.0, %v805
      %v807 = vpop.f32.mrb[0].mxu0
      %808 = vmatprep.mubr.f32.mxu0 0.0
      %809 = vmatmul.mubr.f32.gmra.mrb[0].mxu0 %v572
      %v810 = vpop.f32.mrb[0].mxu0
      %v811 = vadd.f32 0.0, %v810
      %v812 = vpop.f32.mrb[0].mxu0
      %813 = vdwg.mxu0
      %v814 = vld [vmem:[%s3] sm:$0x1]
      %v816 = vlaneseq
      %v817 = vshrl.u32 %v816, 7
      %v818 = vsub.s32 0, %v817
      %v819 = vrot.slane %v814, %v818
      %v821 = vadd.f32 %v656, %v819
      %v822 = vadd.f32 %v661, %v819
      %v823 = vadd.f32 %v666, %v819
      %v824 = vadd.f32 %v671, %v819
      %v825 = vadd.f32 %v676, %v819
      %v826 = vadd.f32 %v681, %v819
      %v827 = vadd.f32 %v686, %v819
      %v828 = vadd.f32 %v691, %v819
      %v829 = vadd.f32 %v696, %v819
      %v830 = vadd.f32 %v701, %v819
      %v831 = vadd.f32 %v706, %v819
      %v832 = vadd.f32 %v711, %v819
      %v833 = vadd.f32 %v716, %v819
      %v834 = vadd.f32 %v721, %v819
      %v835 = vadd.f32 %v726, %v819
      %v836 = vadd.f32 %v731, %v819
      %v837 = vadd.f32 %v736, %v819
      %v838 = vadd.f32 %v741, %v819
      %v839 = vadd.f32 %v746, %v819
      %v840 = vadd.f32 %v751, %v819
      %v841 = vadd.f32 %v756, %v819
      %v842 = vadd.f32 %v761, %v819
      %v843 = vadd.f32 %v766, %v819
      %v844 = vadd.f32 %v771, %v819
      %v845 = vadd.f32 %v776, %v819
      %v846 = vadd.f32 %v781, %v819
      %v847 = vadd.f32 %v786, %v819
      %v848 = vadd.f32 %v791, %v819
      %v849 = vadd.f32 %v796, %v819
      %v850 = vadd.f32 %v801, %v819
      %v851 = vadd.f32 %v806, %v819
      %v852 = vadd.f32 %v811, %v819
      %v853 = vadd.f32 %v509, %v821
      %v854 = vadd.f32 %v510, %v822
      %v855 = vadd.f32 %v511, %v823
      %v856 = vadd.f32 %v512, %v824
      %v857 = vadd.f32 %v513, %v825
      %v858 = vadd.f32 %v514, %v826
      %v859 = vadd.f32 %v515, %v827
      %v860 = vadd.f32 %v516, %v828
      %v861 = vadd.f32 %v517, %v829
      %v862 = vadd.f32 %v518, %v830
      %v863 = vadd.f32 %v519, %v831
      %v864 = vadd.f32 %v520, %v832
      %v865 = vadd.f32 %v521, %v833
      %v866 = vadd.f32 %v522, %v834
      %v867 = vadd.f32 %v523, %v835
      %v868 = vadd.f32 %v524, %v836
      %v869 = vadd.f32 %v525, %v837
      %v870 = vadd.f32 %v526, %v838
      %v871 = vadd.f32 %v527, %v839
      %v872 = vadd.f32 %v528, %v840
      %v873 = vadd.f32 %v529, %v841
      %v874 = vadd.f32 %v530, %v842
      %v875 = vadd.f32 %v531, %v843
      %v876 = vadd.f32 %v532, %v844
      %v877 = vadd.f32 %v533, %v845
      %v878 = vadd.f32 %v534, %v846
      %v879 = vadd.f32 %v535, %v847
      %v880 = vadd.f32 %v536, %v848
      %v881 = vadd.f32 %v537, %v849
      %v882 = vadd.f32 %v538, %v850
      %v883 = vadd.f32 %v539, %v851
      %v884 = vadd.f32 %v540, %v852
      %vm885 = vcmp.ge.f32.partialorder %v853, 0.0
      %vm886 = vcmp.ge.f32.partialorder %v854, 0.0
      %vm887 = vcmp.ge.f32.partialorder %v855, 0.0
      %vm888 = vcmp.ge.f32.partialorder %v856, 0.0
      %vm889 = vcmp.ge.f32.partialorder %v857, 0.0
      %vm890 = vcmp.ge.f32.partialorder %v858, 0.0
      %vm891 = vcmp.ge.f32.partialorder %v859, 0.0
      %vm892 = vcmp.ge.f32.partialorder %v860, 0.0
      %vm893 = vcmp.ge.f32.partialorder %v861, 0.0
      %vm894 = vcmp.ge.f32.partialorder %v862, 0.0
      %vm895 = vcmp.ge.f32.partialorder %v863, 0.0
      %vm896 = vcmp.ge.f32.partialorder %v864, 0.0
      %vm897 = vcmp.ge.f32.partialorder %v865, 0.0
      %vm898 = vcmp.ge.f32.partialorder %v866, 0.0
      %vm899 = vcmp.ge.f32.partialorder %v867, 0.0
      %vm900 = vcmp.ge.f32.partialorder %v868, 0.0
      %vm901 = vcmp.ge.f32.partialorder %v869, 0.0
      %vm902 = vcmp.ge.f32.partialorder %v870, 0.0
      %vm903 = vcmp.ge.f32.partialorder %v871, 0.0
      %vm904 = vcmp.ge.f32.partialorder %v872, 0.0
      %vm905 = vcmp.ge.f32.partialorder %v873, 0.0
      %vm906 = vcmp.ge.f32.partialorder %v874, 0.0
      %vm907 = vcmp.ge.f32.partialorder %v875, 0.0
      %vm908 = vcmp.ge.f32.partialorder %v876, 0.0
      %vm909 = vcmp.ge.f32.partialorder %v877, 0.0
      %vm910 = vcmp.ge.f32.partialorder %v878, 0.0
      %vm911 = vcmp.ge.f32.partialorder %v879, 0.0
      %vm912 = vcmp.ge.f32.partialorder %v880, 0.0
      %vm913 = vcmp.ge.f32.partialorder %v881, 0.0
      %vm914 = vcmp.ge.f32.partialorder %v882, 0.0
      %vm915 = vcmp.ge.f32.partialorder %v883, 0.0
      %vm916 = vcmp.ge.f32.partialorder %v884, 0.0
      %v917 = vmul.f32 %v853, 0.1
      %v918 = vmul.f32 %v854, 0.1
      %v919 = vmul.f32 %v855, 0.1
      %v920 = vmul.f32 %v856, 0.1
      %v921 = vmul.f32 %v857, 0.1
      %v922 = vmul.f32 %v858, 0.1
      %v923 = vmul.f32 %v859, 0.1
      %v924 = vmul.f32 %v860, 0.1
      %v925 = vmul.f32 %v861, 0.1
      %v926 = vmul.f32 %v862, 0.1
      %v927 = vmul.f32 %v863, 0.1
      %v928 = vmul.f32 %v864, 0.1
      %v929 = vmul.f32 %v865, 0.1
      %v930 = vmul.f32 %v866, 0.1
      %v931 = vmul.f32 %v867, 0.1
      %v932 = vmul.f32 %v868, 0.1
      %v933 = vmul.f32 %v869, 0.1
      %v934 = vmul.f32 %v870, 0.1
      %v935 = vmul.f32 %v871, 0.1
      %v936 = vmul.f32 %v872, 0.1
      %v937 = vmul.f32 %v873, 0.1
      %v938 = vmul.f32 %v874, 0.1
      %v939 = vmul.f32 %v875, 0.1
      %v940 = vmul.f32 %v876, 0.1
      %v941 = vmul.f32 %v877, 0.1
      %v942 = vmul.f32 %v878, 0.1
      %v943 = vmul.f32 %v879, 0.1
      %v944 = vmul.f32 %v880, 0.1
      %v945 = vmul.f32 %v881, 0.1
      %v946 = vmul.f32 %v882, 0.1
      %v947 = vmul.f32 %v883, 0.1
      %v948 = vmul.f32 %v884, 0.1
      %v949 = vsel %vm885, %v853, %v917
      %v950 = vsel %vm886, %v854, %v918
      %v951 = vsel %vm887, %v855, %v919
      %v952 = vsel %vm888, %v856, %v920
      %v953 = vsel %vm889, %v857, %v921
      %v954 = vsel %vm890, %v858, %v922
      %v955 = vsel %vm891, %v859, %v923
      %v956 = vsel %vm892, %v860, %v924
      %v957 = vsel %vm893, %v861, %v925
      %v958 = vsel %vm894, %v862, %v926
      %v959 = vsel %vm895, %v863, %v927
      %v960 = vsel %vm896, %v864, %v928
      %v961 = vsel %vm897, %v865, %v929
      %v962 = vsel %vm898, %v866, %v930
      %v963 = vsel %vm899, %v867, %v931
      %v964 = vsel %vm900, %v868, %v932
      %v965 = vsel %vm901, %v869, %v933
      %v966 = vsel %vm902, %v870, %v934
      %v967 = vsel %vm903, %v871, %v935
      %v968 = vsel %vm904, %v872, %v936
      %v969 = vsel %vm905, %v873, %v937
      %v970 = vsel %vm906, %v874, %v938
      %v971 = vsel %vm907, %v875, %v939
      %v972 = vsel %vm908, %v876, %v940
      %v973 = vsel %vm909, %v877, %v941
      %v974 = vsel %vm910, %v878, %v942
      %v975 = vsel %vm911, %v879, %v943
      %v976 = vsel %vm912, %v880, %v944
      %v977 = vsel %vm913, %v881, %v945
      %v978 = vsel %vm914, %v882, %v946
      %v979 = vsel %vm915, %v883, %v947
      %v980 = vsel %vm916, %v884, %v948
      %981 = vst [vmem:[%s333] sm:$0xff] %v949
      %982 = vst [vmem:[%s333 + $0x8] sm:$0xff] %v950
      %983 = vst [vmem:[%s333 + $0x10] sm:$0xff] %v951
      %984 = vst [vmem:[%s333 + $0x18] sm:$0xff] %v952
      %985 = vst [vmem:[%s333 + $0x20] sm:$0xff] %v953
      %986 = vst [vmem:[%s333 + $0x28] sm:$0xff] %v954
      %987 = vst [vmem:[%s333 + $0x30] sm:$0xff] %v955
      %988 = vst [vmem:[%s333 + $0x38] sm:$0xff] %v956
      %989 = vst [vmem:[%s333 + $0x40] sm:$0xff] %v957
      %990 = vst [vmem:[%s333 + $0x48] sm:$0xff] %v958
      %991 = vst [vmem:[%s333 + $0x50] sm:$0xff] %v959
      %992 = vst [vmem:[%s333 + $0x58] sm:$0xff] %v960
      %993 = vst [vmem:[%s333 + $0x60] sm:$0xff] %v961
      %994 = vst [vmem:[%s333 + $0x68] sm:$0xff] %v962
      %995 = vst [vmem:[%s333 + $0x70] sm:$0xff] %v963
      %996 = vst [vmem:[%s333 + $0x78] sm:$0xff] %v964
      %997 = vst [vmem:[%s333 + $0x80] sm:$0xff] %v965
      %998 = vst [vmem:[%s333 + $0x88] sm:$0xff] %v966
      %999 = vst [vmem:[%s333 + $0x90] sm:$0xff] %v967
      %1000 = vst [vmem:[%s333 + $0x98] sm:$0xff] %v968
      %1001 = vst [vmem:[%s333 + $0xa0] sm:$0xff] %v969
      %1002 = vst [vmem:[%s333 + $0xa8] sm:$0xff] %v970
      %1003 = vst [vmem:[%s333 + $0xb0] sm:$0xff] %v971
      %1004 = vst [vmem:[%s333 + $0xb8] sm:$0xff] %v972
      %1005 = vst [vmem:[%s333 + $0xc0] sm:$0xff] %v973
      %1006 = vst [vmem:[%s333 + $0xc8] sm:$0xff] %v974
      %1007 = vst [vmem:[%s333 + $0xd0] sm:$0xff] %v975
      %1008 = vst [vmem:[%s333 + $0xd8] sm:$0xff] %v976
      %1009 = vst [vmem:[%s333 + $0xe0] sm:$0xff] %v977
      %1010 = vst [vmem:[%s333 + $0xe8] sm:$0xff] %v978
      %1011 = vst [vmem:[%s333 + $0xf0] sm:$0xff] %v979
      %1012 = vst [vmem:[%s333 + $0xf8] sm:$0xff] %v980
      %s1013 = smul.u32 16, %s22
      %p1014 = scmp.lt.s32.totalorder %s21, 1
      %s1015 = scalar_select %p1014, %s21, 1
      %p1016 = scmp.lt.s32.totalorder %s1013, 15
      %s1017 = scalar_select %p1016, %s1013, 15
      %s1018 = smul.addr %s1017, 2
      %s1019 = smul.addr %s1015, 32
      %s1020 = sadd.s32 %s1018, %s1019
      %s1021 = smul.addr %s1020, 8
      %s1022 = scalar_lea.vmem %s6, %s1021
      // Predicated region
      $region45: #{conv_block_forward.5} parent=43 // pred_check
        %p1023 = pneg %p189
      $region46: #{conv_block_forward.5} parent=43 // pred_check_branch
        %1025 = sbr.rel (%p1023) target = $region48
      $region47: #{conv_block_forward.5} parent=43 // pred_region
        %s1026 = smul.u32 16, %s22
      $region48: #{conv_block_forward.5} parent=43 // pred_fallthru
        _
    $region44: #{conv_block_forward.5} parent=5 // pred_fallthru
      _
    %p1027 = scmp.le.s32.totalorder 2, %s12
    // Predicated region
    $region49: #{conv_block_forward.5} parent=5 // pred_check
      %p1028 = pneg %p1027
    $region50: #{conv_block_forward.5} parent=5 // pred_check_branch
      %1030 = sbr.rel (%p1028) target = $region52
    $region51: #{conv_block_forward.5} parent=5 // pred_region
      %s1031 = ssub.s32 %s12, 2
      // Predicated region
      $region53: #{conv_block_forward.5} parent=51 // pred_check
        %p1032 = pneg %p195
      $region54: #{conv_block_forward.5} parent=51 // pred_check_branch
        %1034 = sbr.rel (%p1032) target = $region56
      $region55: #{conv_block_forward.5} parent=51 // pred_region
        %s1035 = smul.u32 16, %s24
        %p1036 = scmp.lt.s32.totalorder %s23, 1
        %s1037 = scalar_select %p1036, %s23, 1
        %p1038 = scmp.lt.s32.totalorder %s1035, 15
        %s1039 = scalar_select %p1038, %s1035, 15
        %s1040 = smul.addr %s1039, 2
        %s1041 = smul.addr %s1037, 32
        %s1042 = sadd.s32 %s1040, %s1041
        %s1043 = smul.addr %s1042, 8
        %s1044 = scalar_lea.vmem %s6, %s1043
      $region56: #{conv_block_forward.5} parent=51 // pred_fallthru
        _
    $region52: #{conv_block_forward.5} parent=5 // pred_fallthru
      _
  $region6: #{conv_block_forward.5} parent=0 // loop_footer
    %s16 = sadd.s32 1, %s12
  $region7: #{conv_block_forward.5} parent=0 // loop_footer_branch
    %11 = sbr.rel target = $region3
  $region8: #{conv_block_forward.5} parent=0 // loop_exit
    _

// kernel: conv_block_forward.3
$region0: #{conv_block_forward.3}
  #allocation0 [shape = 'u32[]', space=smem, size = 0x4, offset = 0x4, fixed_abs, tag = 'smem constant byte address 0x4 - core index']
  #allocation1 [shape = 'u32[144,128]{1,0:T(1,128)}', space=vmem, size = 0x12000, scoped, tag = 'internal scratch']
  %s0 = inlined_call_operand.vmem [shape: f32[2,16,16,128], index: 0, kind: input, shape index: {}, may-alias: {0,1,2}]
  %s1 = inlined_call_operand.vmem [shape: f32[2,16,16,128], index: 1, kind: input, shape index: {}, may-alias: {0,1,2}]
  %s2 = inlined_call_operand.vmem [shape: f32[2,16,16,128], index: 2, kind: input, shape index: {}, may-alias: {0,1,2}]
  %s3 = inlined_call_operand.vmem [shape: f32[9,128,128], index: 3, kind: input, shape index: {}]
  %s4 = inlined_call_operand.vmem [shape: f32[2,16,16,128], index: 4, kind: output, shape index: {0}]
  %s5 = inlined_call_operand.vmem [shape: f32[2,2,128], index: 5, kind: output, shape index: {1}]
  %6 = xla_tuple %s4, %s5
  %s7 = sld [smem:[#allocation0]]
  $region57: #{conv_block_forward.3} parent=0
    _
  %s9 = ssub.s32 1, %s7
  %s10 = scalar_select 0, %s9, %s7
  loop: start=0, step=1, limit=4
  $region2: #{conv_block_forward.3} parent=0 // loop_pre_header
    _
  $region3: #{conv_block_forward.3} parent=0 // loop_header
    %s12 = sphi 0, %s16
    %p13 = scmp.ge.s32.totalorder %s12, 4
    %s19 = sphi 0, %s31
    %s20 = sphi 0, %s27
    %s21 = sphi 0, %s19
    %s22 = sphi 0, %s20
    %s23 = sphi 0, %s21
    %s24 = sphi 0, %s22
    %s36 = sphi 0, %s38
    %s39 = sphi 0, %s36
    %s40 = sphi 0, %s39
    %s56 = sphi 0, %s40
    %s72 = sphi 0, %s74
    %s75 = sphi 0, %s72
    %s76 = sphi 0, %s75
    %s92 = sphi 0, %s76
    %s108 = sphi 0, %s110
    %s111 = sphi 0, %s108
    %s112 = sphi 0, %s111
    %s128 = sphi 0, %s112
    %s132 = sphi 0, %s132
    %s134 = sphi 0, %s132
    %s135 = sphi 0, %s134
    %s149 = sphi 0, %s135
    %s157 = sphi 0, %s159
    %s160 = sphi 0, %s157
    %s161 = sphi 0, %s160
    %s177 = sphi 0, %s161
    %s185 = sphi 0, %s187
    %s188 = sphi 0, %s185
    %s189 = sphi 0, %s188
    %s205 = sphi 0, %s189
  $region4: #{conv_block_forward.3} parent=0 // loop_header_branch
    %15 = sbr.rel (%p13) target = $region8
  $region5: #{conv_block_forward.3} parent=0 // loop_body
    %s17 = ssub.s32 %s12, 1
    %s18 = ssub.s32 %s12, 2
    %s25 = sadd.s32 1, %s20
    %p26 = scmp.ge.s32.totalorder %s25, 1
    %s27 = scalar_select %p26, 0, %s25
    %s28 = sadd.s32 1, %s19
    %s29 = scalar_select %p26, %s28, %s19
    %p30 = scmp.ge.s32.totalorder %s29, 2
    %s31 = scalar_select %p30, 0, %s29
    %s32 = ssub.s32 %s19, %s31
    %s33 = ssub.s32 %s20, %s27
    %s34 = sor.u32 %s32, %s33
    %p35 = scmp.eq.s32.totalorder %s34, 0
    %s37 = sadd.s32 %s36, 1
    %s38 = scalar_select %p35, %s36, %s37
    %p41 = pneg %p35
    %p42 = scmp.eq.s32.totalorder %s12, 1
    %p43 = por %p41, %p42
    %p44 = scmp.ne.s32.totalorder %s36, %s39
    %p45 = scmp.eq.s32.totalorder %s12, 0
    %p46 = por %p44, %p45
    %p47 = scmp.ne.s32.totalorder %s36, %s39
    %p48 = scmp.eq.s32.totalorder %s17, 1
    %p49 = por %p47, %p48
    %p50 = scmp.ne.s32.totalorder %s39, %s40
    %p51 = scmp.eq.s32.totalorder %s17, 0
    %p52 = por %p50, %p51
    %p53 = scmp.ne.s32.totalorder %s39, %s40
    %p54 = scmp.eq.s32.totalorder %s18, 1
    %p55 = por %p53, %p54
    %p57 = scmp.ne.s32.totalorder %s40, %s56
    %p58 = scmp.eq.s32.totalorder %s18, 0
    %p59 = por %p57, %p58
    %s60 = smul.u32 %s20, 16
    %s61 = ssub.s32 %s60, 1
    %p62 = scmp.gt.s32.totalorder %s61, 0
    %s63 = scalar_select %p62, %s61, 0
    %s64 = smul.u32 %s27, 16
    %s65 = ssub.s32 %s64, 1
    %p66 = scmp.gt.s32.totalorder %s65, 0
    %s67 = scalar_select %p66, %s65, 0
    %s68 = ssub.s32 %s19, %s31
    %s69 = ssub.s32 %s63, %s67
    %s70 = sor.u32 %s68, %s69
    %p71 = scmp.eq.s32.totalorder %s70, 0
    %s73 = sadd.s32 %s72, 1
    %s74 = scalar_select %p71, %s72, %s73
    %p77 = pneg %p71
    %p78 = scmp.eq.s32.totalorder %s12, 1
    %p79 = por %p77, %p78
    %p80 = scmp.ne.s32.totalorder %s72, %s75
    %p81 = scmp.eq.s32.totalorder %s12, 0
    %p82 = por %p80, %p81
    %p83 = scmp.ne.s32.totalorder %s72, %s75
    %p84 = scmp.eq.s32.totalorder %s17, 1
    %p85 = por %p83, %p84
    %p86 = scmp.ne.s32.totalorder %s75, %s76
    %p87 = scmp.eq.s32.totalorder %s17, 0
    %p88 = por %p86, %p87
    %p89 = scmp.ne.s32.totalorder %s75, %s76
    %p90 = scmp.eq.s32.totalorder %s18, 1
    %p91 = por %p89, %p90
    %p93 = scmp.ne.s32.totalorder %s76, %s92
    %p94 = scmp.eq.s32.totalorder %s18, 0
    %p95 = por %p93, %p94
    %s96 = smul.u32 %s20, 16
    %s97 = sadd.s32 %s96, 16
    %p98 = scmp.lt.s32.totalorder %s97, 15
    %s99 = scalar_select %p98, %s97, 15
    %s100 = smul.u32 %s27, 16
    %s101 = sadd.s32 %s100, 16
    %p102 = scmp.lt.s32.totalorder %s101, 15
    %s103 = scalar_select %p102, %s101, 15
    %s104 = ssub.s32 %s19, %s31
    %s105 = ssub.s32 %s99, %s103
    %s106 = sor.u32 %s104, %s105
    %p107 = scmp.eq.s32.totalorder %s106, 0
    %s109 = sadd.s32 %s108, 1
    %s110 = scalar_select %p107, %s108, %s109
    %p113 = pneg %p107
    %p114 = scmp.eq.s32.totalorder %s12, 1
    %p115 = por %p113, %p114
    %p116 = scmp.ne.s32.totalorder %s108, %s111
    %p117 = scmp.eq.s32.totalorder %s12, 0
    %p118 = por %p116, %p117
    %p119 = scmp.ne.s32.totalorder %s108, %s111
    %p120 = scmp.eq.s32.totalorder %s17, 1
    %p121 = por %p119, %p120
    %p122 = scmp.ne.s32.totalorder %s111, %s112
    %p123 = scmp.eq.s32.totalorder %s17, 0
    %p124 = por %p122, %p123
    %p125 = scmp.ne.s32.totalorder %s111, %s112
    %p126 = scmp.eq.s32.totalorder %s18, 1
    %p127 = por %p125, %p126
    %p129 = scmp.ne.s32.totalorder %s112, %s128
    %p130 = scmp.eq.s32.totalorder %s18, 0
    %p131 = por %p129, %p130
    %s133 = sadd.s32 %s132, 1
    %p136 = scmp.eq.s32.totalorder %s12, 1
    %p137 = scmp.ne.s32.totalorder %s132, %s134
    %p138 = scmp.eq.s32.totalorder %s12, 0
    %p139 = por %p137, %p138
    %p140 = scmp.ne.s32.totalorder %s132, %s134
    %p141 = scmp.eq.s32.totalorder %s17, 1
    %p142 = por %p140, %p141
    %p143 = scmp.ne.s32.totalorder %s134, %s135
    %p144 = scmp.eq.s32.totalorder %s17, 0
    %p145 = por %p143, %p144
    %p146 = scmp.ne.s32.totalorder %s134, %s135
    %p147 = scmp.eq.s32.totalorder %s18, 1
    %p148 = por %p146, %p147
    %p150 = scmp.ne.s32.totalorder %s135, %s149
    %p151 = scmp.eq.s32.totalorder %s18, 0
    %p152 = por %p150, %p151
    %s153 = ssub.s32 %s19, %s31
    %s154 = ssub.s32 %s20, %s27
    %s155 = sor.u32 %s153, %s154
    %p156 = scmp.eq.s32.totalorder %s155, 0
    %s158 = sadd.s32 %s157, 1
    %s159 = scalar_select %p156, %s157, %s158
    %p162 = pneg %p156
    %p163 = scmp.eq.s32.totalorder %s12, 1
    %p164 = por %p162, %p163
    %p165 = scmp.ne.s32.totalorder %s157, %s160
    %p166 = scmp.eq.s32.totalorder %s12, 0
    %p167 = por %p165, %p166
    %p168 = scmp.ne.s32.totalorder %s157, %s160
    %p169 = scmp.eq.s32.totalorder %s17, 1
    %p170 = por %p168, %p169
    %p171 = scmp.ne.s32.totalorder %s160, %s161
    %p172 = scmp.eq.s32.totalorder %s17, 0
    %p173 = por %p171, %p172
    %p174 = scmp.ne.s32.totalorder %s160, %s161
    %p175 = scmp.eq.s32.totalorder %s18, 1
    %p176 = por %p174, %p175
    %p178 = scmp.ne.s32.totalorder %s161, %s177
    %p179 = scmp.eq.s32.totalorder %s18, 0
    %p180 = por %p178, %p179
    %s181 = sadd.s32 %s19, %s20
    %s182 = sadd.s32 %s31, %s27
    %s183 = ssub.s32 %s181, %s182
    %p184 = scmp.eq.s32.totalorder %s183, 0
    %s186 = sadd.s32 %s185, 1
    %s187 = scalar_select %p184, %s185, %s186
    %p190 = pneg %p184
    %p191 = scmp.eq.s32.totalorder %s12, 1
    %p192 = por %p190, %p191
    %p193 = scmp.ne.s32.totalorder %s185, %s188
    %p194 = scmp.eq.s32.totalorder %s12, 0
    %p195 = por %p193, %p194
    %p196 = scmp.ne.s32.totalorder %s185, %s188
    %p197 = scmp.eq.s32.totalorder %s17, 1
    %p198 = por %p196, %p197
    %p199 = scmp.ne.s32.totalorder %s188, %s189
    %p200 = scmp.eq.s32.totalorder %s17, 0
    %p201 = por %p199, %p200
    %p202 = scmp.ne.s32.totalorder %s188, %s189
    %p203 = scmp.eq.s32.totalorder %s18, 1
    %p204 = por %p202, %p203
    %p206 = scmp.ne.s32.totalorder %s189, %s205
    %p207 = scmp.eq.s32.totalorder %s18, 0
    %p208 = por %p206, %p207
    %p209 = scmp.le.s32.totalorder 1, %s12
    %p210 = scmp.lt.s32.totalorder %s12, 3
    %p211 = pnand %p209, %p210
    %p212 = pneg %p211
    // Predicated region
    $region9: #{conv_block_forward.3} parent=5 // pred_check
      _
    $region10: #{conv_block_forward.3} parent=5 // pred_check_branch
      %214 = sbr.rel (%p211) target = $region12
    $region11: #{conv_block_forward.3} parent=5 // pred_region
      %s215 = ssub.s32 %s12, 1
      // Predicated region
      $region13: #{conv_block_forward.3} parent=11 // pred_check
        %p216 = pneg %p145
      $region14: #{conv_block_forward.3} parent=11 // pred_check_branch
        %218 = sbr.rel (%p216) target = $region16
      $region15: #{conv_block_forward.3} parent=11 // pred_region
        _
      $region16: #{conv_block_forward.3} parent=11 // pred_fallthru
        _
    $region12: #{conv_block_forward.3} parent=5 // pred_fallthru
      _
    %p219 = scmp.lt.s32.totalorder %s12, 2
    // Predicated region
    $region17: #{conv_block_forward.3} parent=5 // pred_check
      %p220 = pneg %p219
    $region18: #{conv_block_forward.3} parent=5 // pred_check_branch
      %222 = sbr.rel (%p220) target = $region20
    $region19: #{conv_block_forward.3} parent=5 // pred_region
      // Predicated region
      $region21: #{conv_block_forward.3} parent=19 // pred_check
        %p223 = pneg %p46
      $region22: #{conv_block_forward.3} parent=19 // pred_check_branch
        %225 = sbr.rel (%p223) target = $region24
      $region23: #{conv_block_forward.3} parent=19 // pred_region
        %s226 = smul.u32 16, %s20
        %p227 = scmp.lt.s32.totalorder %s19, 1
        %s228 = scalar_select %p227, %s19, 1
        %p229 = scmp.lt.s32.totalorder %s226, 15
        %s230 = scalar_select %p229, %s226, 15
        %s231 = smul.addr %s230, 2
        %s232 = smul.addr %s228, 32
        %s233 = sadd.s32 %s231, %s232
        %s234 = smul.addr %s233, 8
        %s235 = scalar_lea.vmem %s0, %s234
        %s236 = smul.u32 16, %s20
      $region24: #{conv_block_forward.3} parent=19 // pred_fallthru
        _
      // Predicated region
      $region25: #{conv_block_forward.3} parent=19 // pred_check
        %p237 = pneg %p82
      $region26: #{conv_block_forward.3} parent=19 // pred_check_branch
        %239 = sbr.rel (%p237) target = $region28
      $region27: #{conv_block_forward.3} parent=19 // pred_region
        %s240 = smul.u32 %s20, 16
        %s241 = ssub.s32 %s240, 1
        %p242 = scmp.gt.s32.totalorder %s241, 0
        %s243 = scalar_select %p242, %s241, 0
        %p244 = scmp.lt.s32.totalorder %s19, 1
        %s245 = scalar_select %p244, %s19, 1
        %p246 = scmp.lt.s32.totalorder %s243, 15
        %s247 = scalar_select %p246, %s243, 15
        %s248 = smul.addr %s247, 2
        %s249 = smul.addr %s245, 32
        %s250 = sadd.s32 %s248, %s249
        %s251 = smul.addr %s250, 8
        %s252 = scalar_lea.vmem %s1, %s251
        %s253 = smul.u32 %s20, 16
        %s254 = ssub.s32 %s253, 1
        %p255 = scmp.gt.s32.totalorder %s254, 0
        %s256 = scalar_select %p255, %s254, 0
      $region28: #{conv_block_forward.3} parent=19 // pred_fallthru
        _
      // Predicated region
      $region29: #{conv_block_forward.3} parent=19 // pred_check
        %p257 = pneg %p118
      $region30: #{conv_block_forward.3} parent=19 // pred_check_branch
        %259 = sbr.rel (%p257) target = $region32
      $region31: #{conv_block_forward.3} parent=19 // pred_region
        %s260 = smul.u32 %s20, 16
        %s261 = sadd.s32 %s260, 16
        %p262 = scmp.lt.s32.totalorder %s261, 15
        %s263 = scalar_select %p262, %s261, 15
        %p264 = scmp.lt.s32.totalorder %s19, 1
        %s265 = scalar_select %p264, %s19, 1
        %p266 = scmp.lt.s32.totalorder %s263, 15
        %s267 = scalar_select %p266, %s263, 15
        %s268 = smul.addr %s267, 2
        %s269 = smul.addr %s265, 32
        %s270 = sadd.s32 %s268, %s269
        %s271 = smul.addr %s270, 8
        %s272 = scalar_lea.vmem %s2, %s271
        %s273 = smul.u32 %s20, 16
        %s274 = sadd.s32 %s273, 16
        %p275 = scmp.lt.s32.totalorder %s274, 15
        %s276 = scalar_select %p275, %s274, 15
      $region32: #{conv_block_forward.3} parent=19 // pred_fallthru
        _
    $region20: #{conv_block_forward.3} parent=5 // pred_fallthru
      _
    %p277 = scmp.le.s32.totalorder 1, %s12
    %p278 = scmp.lt.s32.totalorder %s12, 3
    %p279 = pnand %p277, %p278
    %p280 = pneg %p279
    // Predicated region
    $region33: #{conv_block_forward.3} parent=5 // pred_check
      _
    $region34: #{conv_block_forward.3} parent=5 // pred_check_branch
      %282 = sbr.rel (%p279) target = $region36
    $region35: #{conv_block_forward.3} parent=5 // pred_region
      %s283 = ssub.s32 %s12, 1
      %s284 = smul.u32 16, %s22
      %p285 = scmp.lt.s32.totalorder %s21, 1
      %s286 = scalar_select %p285, %s21, 1
      %p287 = scmp.lt.s32.totalorder %s284, 15
      %s288 = scalar_select %p287, %s284, 15
      %s289 = smul.addr %s288, 2
      %s290 = smul.addr %s286, 32
      %s291 = sadd.s32 %s289, %s290
      %s292 = smul.addr %s291, 8
      %s293 = scalar_lea.vmem %s0, %s292
      %p294 = pneg %p52
      %p295 = pneg %p49
      %s296 = smul.u32 %s22, 16
      %s297 = ssub.s32 %s296, 1
      %p298 = scmp.gt.s32.totalorder %s297, 0
      %s299 = scalar_select %p298, %s297, 0
      %p300 = scmp.lt.s32.totalorder %s21, 1
      %s301 = scalar_select %p300, %s21, 1
      %p302 = scmp.lt.s32.totalorder %s299, 15
      %s303 = scalar_select %p302, %s299, 15
      %s304 = smul.addr %s303, 2
      %s305 = smul.addr %s301, 32
      %s306 = sadd.s32 %s304, %s305
      %s307 = smul.addr %s306, 8
      %s308 = scalar_lea.vmem %s1, %s307
      %p309 = pneg %p88
      %p310 = pneg %p85
      %s311 = smul.u32 %s22, 16
      %s312 = sadd.s32 %s311, 16
      %p313 = scmp.lt.s32.totalorder %s312, 15
      %s314 = scalar_select %p313, %s312, 15
      %p315 = scmp.lt.s32.totalorder %s21, 1
      %s316 = scalar_select %p315, %s21, 1
      %p317 = scmp.lt.s32.totalorder %s314, 15
      %s318 = scalar_select %p317, %s314, 15
      %s319 = smul.addr %s318, 2
      %s320 = smul.addr %s316, 32
      %s321 = sadd.s32 %s319, %s320
      %s322 = smul.addr %s321, 8
      %s323 = scalar_lea.vmem %s2, %s322
      %p324 = pneg %p124
      %p325 = pneg %p121
      %p326 = pneg %p145
      %p327 = pneg %p142
      %p328 = pneg %p173
      %p329 = pneg %p170
      %s330 = smul.u32 16, %s22
      %p331 = scmp.lt.s32.totalorder %s21, 1
      %s332 = scalar_select %p331, %s21, 1
      %p333 = scmp.lt.s32.totalorder %s330, 15
      %s334 = scalar_select %p333, %s330, 15
      %s335 = smul.addr %s334, 2
      %s336 = smul.addr %s332, 32
      %s337 = sadd.s32 %s335, %s336
      %s338 = smul.addr %s337, 8
      %s339 = scalar_lea.vmem %s4, %s338
      %p340 = pneg %p201
      %p341 = pneg %p198
      %s342 = sadd.s32 %s21, %s22
      %p343 = scmp.lt.s32.totalorder %s342, 1
      %s344 = scalar_select %p343, %s342, 1
      %s345 = smul.addr %s344, 2
      %s346 = scalar_lea.vmem %s5, %s345
      %s347 = smul.u32 16, %s22
      %p348 = scmp.lt.s32.totalorder %s21, 1
      %s349 = scalar_select %p348, %s21, 1
      %p350 = scmp.lt.s32.totalorder %s347, 15
      %s351 = scalar_select %p350, %s347, 15
      %s352 = smul.addr %s351, 2
      %s353 = smul.addr %s349, 32
      %s354 = sadd.s32 %s352, %s353
      %s355 = smul.addr %s354, 8
      %s356 = scalar_lea.vmem %s0, %s355
      %s357 = smul.u32 16, %s22
      %s358 = smul.u32 %s22, 16
      %s359 = ssub.s32 %s358, 1
      %p360 = scmp.gt.s32.totalorder %s359, 0
      %s361 = scalar_select %p360, %s359, 0
      %p362 = scmp.lt.s32.totalorder %s21, 1
      %s363 = scalar_select %p362, %s21, 1
      %p364 = scmp.lt.s32.totalorder %s361, 15
      %s365 = scalar_select %p364, %s361, 15
      %s366 = smul.addr %s365, 2
      %s367 = smul.addr %s363, 32
      %s368 = sadd.s32 %s366, %s367
      %s369 = smul.addr %s368, 8
      %s370 = scalar_lea.vmem %s1, %s369
      %s371 = smul.u32 %s22, 16
      %s372 = ssub.s32 %s371, 1
      %p373 = scmp.gt.s32.totalorder %s372, 0
      %s374 = scalar_select %p373, %s372, 0
      %s375 = smul.u32 %s22, 16
      %s376 = sadd.s32 %s375, 16
      %p377 = scmp.lt.s32.totalorder %s376, 15
      %s378 = scalar_select %p377, %s376, 15
      %p379 = scmp.lt.s32.totalorder %s21, 1
      %s380 = scalar_select %p379, %s21, 1
      %p381 = scmp.lt.s32.totalorder %s378, 15
      %s382 = scalar_select %p381, %s378, 15
      %s383 = smul.addr %s382, 2
      %s384 = smul.addr %s380, 32
      %s385 = sadd.s32 %s383, %s384
      %s386 = smul.addr %s385, 8
      %s387 = scalar_lea.vmem %s2, %s386
      %s388 = smul.u32 %s22, 16
      %s389 = sadd.s32 %s388, 16
      %p390 = scmp.lt.s32.totalorder %s389, 15
      %s391 = scalar_select %p390, %s389, 15
      %s392 = smul.u32 16, %s22
      %p393 = scmp.lt.s32.totalorder %s21, 1
      %s394 = scalar_select %p393, %s21, 1
      %p395 = scmp.lt.s32.totalorder %s392, 15
      %s396 = scalar_select %p395, %s392, 15
      %s397 = smul.addr %s396, 2
      %s398 = smul.addr %s394, 32
      %s399 = sadd.s32 %s397, %s398
      %s400 = smul.addr %s399, 8
      %s401 = scalar_lea.vmem %s4, %s400
      %s402 = smul.u32 16, %s22
      %s403 = sadd.s32 %s21, %s22
      %p404 = scmp.lt.s32.totalorder %s403, 1
      %s405 = scalar_select %p404, %s403, 1
      %s406 = smul.addr %s405, 2
      %s407 = scalar_lea.vmem %s5, %s406
      %s408 = sadd.s32 %s21, %s22
      %p409 = scmp.gt.s32.totalorder %s22, 0
      %s410 = scalar_select %p409, 1, 0
      %s411 = scvt.s32.f32 %s410
      %p412 = scmp.lt.s32.totalorder %s22, 0
      %s413 = scalar_select %p412, 1, 0
      %s414 = scvt.s32.f32 %s413
      %v415 = vld [vmem:[%s370] sm:$0xff]
      %v416 = vld [vmem:[%s370 + $0x8] sm:$0xff]
      %v417 = vstv %s411
      %v418 = vmul.f32 %v415, %v417
      %v419 = vmul.f32 %v416, %v417
      %v420 = vld [vmem:[%s387] sm:$0xff]
      %v421 = vld [vmem:[%s387 + $0x8] sm:$0xff]
      %v422 = vstv %s414
      %v423 = vmul.f32 %v420, %v422
      %v424 = vmul.f32 %v421, %v422
      %v425 = vld [vmem:[%s356] sm:$0xff]
      %v426 = vld [vmem:[%s356 + $0x8] sm:$0xff]
      %v427 = vld [vmem:[%s356 + $0x10] sm:$0xff]
      %v428 = vld [vmem:[%s356 + $0x18] sm:$0xff]
      %v429 = vld [vmem:[%s356 + $0x20] sm:$0xff]
      %v430 = vld [vmem:[%s356 + $0x28] sm:$0xff]
      %v431 = vld [vmem:[%s356 + $0x30] sm:$0xff]
      %v432 = vld [vmem:[%s356 + $0x38] sm:$0xff]
      %v433 = vld [vmem:[%s356 + $0x40] sm:$0xff]
      %v434 = vld [vmem:[%s356 + $0x48] sm:$0xff]
      %v435 = vld [vmem:[%s356 + $0x50] sm:$0xff]
      %v436 = vld [vmem:[%s356 + $0x58] sm:$0xff]
      %v437 = vld [vmem:[%s356 + $0x60] sm:$0xff]
      %v438 = vld [vmem:[%s356 + $0x68] sm:$0xff]
      %v439 = vld [vmem:[%s356 + $0x70] sm:$0xff]
      %v440 = vld [vmem:[%s356 + $0x78] sm:$0xff]
      %v441 = vld [vmem:[%s356 + $0x80] sm:$0xff]
      %v442 = vld [vmem:[%s356 + $0x88] sm:$0xff]
      %v443 = vld [vmem:[%s356 + $0x90] sm:$0xff]
      %v444 = vld [vmem:[%s356 + $0x98] sm:$0xff]
      %v445 = vld [vmem:[%s356 + $0xa0] sm:$0xff]
      %v446 = vld [vmem:[%s356 + $0xa8] sm:$0xff]
      %v447 = vld [vmem:[%s356 + $0xb0] sm:$0xff]
      %v448 = vld [vmem:[%s356 + $0xb8] sm:$0xff]
      %v449 = vld [vmem:[%s356 + $0xc0] sm:$0xff]
      %v450 = vld [vmem:[%s356 + $0xc8] sm:$0xff]
      %v451 = vld [vmem:[%s356 + $0xd0] sm:$0xff]
      %v452 = vld [vmem:[%s356 + $0xd8] sm:$0xff]
      %v453 = vld [vmem:[%s356 + $0xe0] sm:$0xff]
      %v454 = vld [vmem:[%s356 + $0xe8] sm:$0xff]
      %v455 = vld [vmem:[%s356 + $0xf0] sm:$0xff]
      %v456 = vld [vmem:[%s356 + $0xf8] sm:$0xff]
      %vm493 = vcmask 1040384
      %v494 = vrot.slane %v418, 7
      %v495 = vrot.slane %v419, 7
      %v496 = vsel %vm493, %v494, %v495
      %v497 = vrot.slane %v425, 7
      %v498 = vrot.slane %v426, 7
      %v499 = vsel %vm493, %v497, %v498
      %v500 = vrot.slane %v427, 7
      %v501 = vrot.slane %v428, 7
      %v502 = vsel %vm493, %v500, %v501
      %v503 = vrot.slane %v429, 7
      %v504 = vrot.slane %v430, 7
      %v505 = vsel %vm493, %v503, %v504
      %v506 = vrot.slane %v431, 7
      %v507 = vrot.slane %v432, 7
      %v508 = vsel %vm493, %v506, %v507
      %v509 = vrot.slane %v433, 7
      %v510 = vrot.slane %v434, 7
      %v511 = vsel %vm493, %v509, %v510
      %v512 = vrot.slane %v435, 7
      %v513 = vrot.slane %v436, 7
      %v514 = vsel %vm493, %v512, %v513
      %v515 = vrot.slane %v437, 7
      %v516 = vrot.slane %v438, 7
      %v517 = vsel %vm493, %v515, %v516
      %v518 = vrot.slane %v439, 7
      %v519 = vrot.slane %v440, 7
      %v520 = vsel %vm493, %v518, %v519
      %v521 = vrot.slane %v441, 7
      %v522 = vrot.slane %v442, 7
      %v523 = vsel %vm493, %v521, %v522
      %v524 = vrot.slane %v443, 7
      %v525 = vrot.slane %v444, 7
      %v526 = vsel %vm493, %v524, %v525
      %v527 = vrot.slane %v445, 7
      %v528 = vrot.slane %v446, 7
      %v529 = vsel %vm493, %v527, %v528
      %v530 = vrot.slane %v447, 7
      %v531 = vrot.slane %v448, 7
      %v532 = vsel %vm493, %v530, %v531
      %v533 = vrot.slane %v449, 7
      %v534 = vrot.slane %v450, 7
      %v535 = vsel %vm493, %v533, %v534
      %v536 = vrot.slane %v451, 7
      %v537 = vrot.slane %v452, 7
      %v538 = vsel %vm493, %v536, %v537
      %v539 = vrot.slane %v453, 7
      %v540 = vrot.slane %v454, 7
      %v541 = vsel %vm493, %v539, %v540
      %v542 = vrot.slane %v455, 7
      %v543 = vrot.slane %v456, 7
      %v544 = vsel %vm493, %v542, %v543
      %v545 = vrot.slane %v423, 7
      %v546 = vrot.slane %v424, 7
      %v547 = vsel %vm493, %v545, %v546
      %v584 = vsel %vm493, 0.0, %v494
      %v585 = vsel %vm493, 0.0, %v497
      %v586 = vsel %vm493, 0.0, %v500
      %v587 = vsel %vm493, 0.0, %v503
      %v588 = vsel %vm493, 0.0, %v506
      %v589 = vsel %vm493, 0.0, %v509
      %v590 = vsel %vm493, 0.0, %v512
      %v591 = vsel %vm493, 0.0, %v515
      %v592 = vsel %vm493, 0.0, %v518
      %v593 = vsel %vm493, 0.0, %v521
      %v594 = vsel %vm493, 0.0, %v524
      %v595 = vsel %vm493, 0.0, %v527
      %v596 = vsel %vm493, 0.0, %v530
      %v597 = vsel %vm493, 0.0, %v533
      %v598 = vsel %vm493, 0.0, %v536
      %v599 = vsel %vm493, 0.0, %v539
      %v600 = vsel %vm493, 0.0, %v542
      %v601 = vsel %vm493, 0.0, %v545
      %vm602 = vcmask 1046528
      %v603 = vrot.slane %v418, 1
      %v604 = vrot.slane %v419, 1
      %v605 = vsel %vm602, %v603, %v604
      %v606 = vrot.slane %v425, 1
      %v607 = vrot.slane %v426, 1
      %v608 = vsel %vm602, %v606, %v607
      %v609 = vrot.slane %v427, 1
      %v610 = vrot.slane %v428, 1
      %v611 = vsel %vm602, %v609, %v610
      %v612 = vrot.slane %v429, 1
      %v613 = vrot.slane %v430, 1
      %v614 = vsel %vm602, %v612, %v613
      %v615 = vrot.slane %v431, 1
      %v616 = vrot.slane %v432, 1
      %v617 = vsel %vm602, %v615, %v616
      %v618 = vrot.slane %v433, 1
      %v619 = vrot.slane %v434, 1
      %v620 = vsel %vm602, %v618, %v619
      %v621 = vrot.slane %v435, 1
      %v622 = vrot.slane %v436, 1
      %v623 = vsel %vm602, %v621, %v622
      %v624 = vrot.slane %v437, 1
      %v625 = vrot.slane %v438, 1
      %v626 = vsel %vm602, %v624, %v625
      %v627 = vrot.slane %v439, 1
      %v628 = vrot.slane %v440, 1
      %v629 = vsel %vm602, %v627, %v628
      %v630 = vrot.slane %v441, 1
      %v631 = vrot.slane %v442, 1
      %v632 = vsel %vm602, %v630, %v631
      %v633 = vrot.slane %v443, 1
      %v634 = vrot.slane %v444, 1
      %v635 = vsel %vm602, %v633, %v634
      %v636 = vrot.slane %v445, 1
      %v637 = vrot.slane %v446, 1
      %v638 = vsel %vm602, %v636, %v637
      %v639 = vrot.slane %v447, 1
      %v640 = vrot.slane %v448, 1
      %v641 = vsel %vm602, %v639, %v640
      %v642 = vrot.slane %v449, 1
      %v643 = vrot.slane %v450, 1
      %v644 = vsel %vm602, %v642, %v643
      %v645 = vrot.slane %v451, 1
      %v646 = vrot.slane %v452, 1
      %v647 = vsel %vm602, %v645, %v646
      %v648 = vrot.slane %v453, 1
      %v649 = vrot.slane %v454, 1
      %v650 = vsel %vm602, %v648, %v649
      %v651 = vrot.slane %v455, 1
      %v652 = vrot.slane %v456, 1
      %v653 = vsel %vm602, %v651, %v652
      %v654 = vrot.slane %v423, 1
      %v655 = vrot.slane %v424, 1
      %v656 = vsel %vm602, %v654, %v655
      %v693 = vsel %vm602, %v604, 0.0
      %v694 = vsel %vm602, %v607, 0.0
      %v695 = vsel %vm602, %v610, 0.0
      %v696 = vsel %vm602, %v613, 0.0
      %v697 = vsel %vm602, %v616, 0.0
      %v698 = vsel %vm602, %v619, 0.0
      %v699 = vsel %vm602, %v622, 0.0
      %v700 = vsel %vm602, %v625, 0.0
      %v701 = vsel %vm602, %v628, 0.0
      %v702 = vsel %vm602, %v631, 0.0
      %v703 = vsel %vm602, %v634, 0.0
      %v704 = vsel %vm602, %v637, 0.0
      %v705 = vsel %vm602, %v640, 0.0
      %v706 = vsel %vm602, %v643, 0.0
      %v707 = vsel %vm602, %v646, 0.0
      %v708 = vsel %vm602, %v649, 0.0
      %v709 = vsel %vm602, %v652, 0.0
      %v710 = vsel %vm602, %v655, 0.0
      %v711 = vld [vmem:[%s3] sm:$0xff]
      %v712 = vld [vmem:[%s3 + $0x8] sm:$0xff]
      %v713 = vld [vmem:[%s3 + $0x10] sm:$0xff]
      %v714 = vld [vmem:[%s3 + $0x18] sm:$0xff]
      %v715 = vld [vmem:[%s3 + $0x20] sm:$0xff]
      %v716 = vld [vmem:[%s3 + $0x28] sm:$0xff]
      %v717 = vld [vmem:[%s3 + $0x30] sm:$0xff]
      %v718 = vld [vmem:[%s3 + $0x38] sm:$0xff]
      %v719 = vld [vmem:[%s3 + $0x40] sm:$0xff]
      %v720 = vld [vmem:[%s3 + $0x48] sm:$0xff]
      %v721 = vld [vmem:[%s3 + $0x50] sm:$0xff]
      %v722 = vld [vmem:[%s3 + $0x58] sm:$0xff]
      %v723 = vld [vmem:[%s3 + $0x60] sm:$0xff]
      %v724 = vld [vmem:[%s3 + $0x68] sm:$0xff]
      %v725 = vld [vmem:[%s3 + $0x70] sm:$0xff]
      %v726 = vld [vmem:[%s3 + $0x78] sm:$0xff]
      %s727 = scalar_lea.vmem %s3, 128
      %v728 = vld [vmem:[%s727] sm:$0xff]
      %v729 = vld [vmem:[%s727 + $0x8] sm:$0xff]
      %v730 = vld [vmem:[%s727 + $0x10] sm:$0xff]
      %v731 = vld [vmem:[%s727 + $0x18] sm:$0xff]
      %v732 = vld [vmem:[%s727 + $0x20] sm:$0xff]
      %v733 = vld [vmem:[%s727 + $0x28] sm:$0xff]
      %v734 = vld [vmem:[%s727 + $0x30] sm:$0xff]
      %v735 = vld [vmem:[%s727 + $0x38] sm:$0xff]
      %v736 = vld [vmem:[%s727 + $0x40] sm:$0xff]
      %v737 = vld [vmem:[%s727 + $0x48] sm:$0xff]
      %v738 = vld [vmem:[%s727 + $0x50] sm:$0xff]
      %v739 = vld [vmem:[%s727 + $0x58] sm:$0xff]
      %v740 = vld [vmem:[%s727 + $0x60] sm:$0xff]
      %v741 = vld [vmem:[%s727 + $0x68] sm:$0xff]
      %v742 = vld [vmem:[%s727 + $0x70] sm:$0xff]
      %v743 = vld [vmem:[%s727 + $0x78] sm:$0xff]
      %744 = vmatprep.subr.mxu0 0.0
      %745 = vmatpush1.msra.mxu0 %v728
      %746 = vmatprep.subr.mxu0 0.0
      %747 = vmatpush1.msra.mxu0 %v729
      %748 = vmatprep.subr.mxu0 0.0
      %749 = vmatpush1.msra.mxu0 %v730
      %750 = vmatprep.subr.mxu0 0.0
      %751 = vmatpush1.msra.mxu0 %v731
      %752 = vmatprep.subr.mxu0 0.0
      %753 = vmatpush1.msra.mxu0 %v732
      %754 = vmatprep.subr.mxu0 0.0
      %755 = vmatpush1.msra.mxu0 %v733
      %756 = vmatprep.subr.mxu0 0.0
      %757 = vmatpush1.msra.mxu0 %v734
      %758 = vmatprep.subr.mxu0 0.0
      %759 = vmatpush1.msra.mxu0 %v735
      %760 = vmatprep.subr.mxu0 0.0
      %761 = vmatpush1.msra.mxu0 %v736
      %762 = vmatprep.subr.mxu0 0.0
      %763 = vmatpush1.msra.mxu0 %v737
      %764 = vmatprep.subr.mxu0 0.0
      %765 = vmatpush1.msra.mxu0 %v738
      %766 = vmatprep.subr.mxu0 0.0
      %767 = vmatpush1.msra.mxu0 %v739
      %768 = vmatprep.subr.mxu0 0.0
      %769 = vmatpush1.msra.mxu0 %v740
      %770 = vmatprep.subr.mxu0 0.0
      %771 = vmatpush1.msra.mxu0 %v741
      %772 = vmatprep.subr.mxu0 0.0
      %773 = vmatpush1.msra.mxu0 %v742
      %774 = vmatprep.subr.mxu0 0.0
      %775 = vmatpush1.msra.mxu0 %v743
      %776 = vmatprep.subr.mxu0 0.0
      %777 = vmatpush1.msra.mxu0 0.0
      %778 = vmatprep.subr.mxu0 0.0
      %779 = vmatpush1.msra.mxu0 0.0
      %780 = vmatprep.subr.mxu0 0.0
      %781 = vmatpush1.msra.mxu0 0.0
      %782 = vmatprep.subr.mxu0 0.0
      %783 = vmatpush1.msra.mxu0 0.0
      %784 = vmatprep.subr.mxu0 0.0
      %785 = vmatpush1.msra.mxu0 0.0
      %786 = vmatprep.subr.mxu0 0.0
      %787 = vmatpush1.msra.mxu0 0.0
      %788 = vmatprep.subr.mxu0 0.0
      %789 = vmatpush1.msra.mxu0 0.0
      %790 = vmatprep.subr.mxu0 0.0
      %791 = vmatpush1.msra.mxu0 0.0
      %792 = vmatprep.subr.mxu0 0.0
      %793 = vmatpush1.msra.mxu0 0.0
      %794 = vmatprep.subr.mxu0 0.0
      %795 = vmatpush1.msra.mxu0 0.0
      %796 = vmatprep.subr.mxu0 0.0
      %797 = vmatpush1.msra.mxu0 0.0
      %798 = vmatprep.subr.mxu0 0.0
      %799 = vmatpush1.msra.mxu0 0.0
      %800 = vmatprep.subr.mxu0 0.0
      %801 = vmatpush1.msra.mxu0 0.0
      %802 = vmatprep.subr.mxu0 0.0
      %803 = vmatpush1.msra.mxu0 0.0
      %804 = vmatprep.subr.mxu0 0.0
      %805 = vmatpush1.msra.mxu0 0.0
      %806 = vmatprep.subr.mxu0 0.0
      %807 = vmatpush1.msra.mxu0 0.0
      %808 = vmatprep.mubr.f32.mxu0 0.0
      %809 = vmatmul.mubr.f32.gmra.mrb[0].mxu0 %v418
      %v810 = vpop.f32.mrb[0].mxu0
      %v811 = vadd.f32 0.0, %v810
      %v812 = vpop.f32.mrb[0].mxu0
      %813 = vmatprep.mubr.f32.mxu0 0.0
      %814 = vmatmul.mubr.f32.gmra.mrb[0].mxu0 %v419
      %v815 = vpop.f32.mrb[0].mxu0
      %v816 = vadd.f32 0.0, %v815
      %v817 = vpop.f32.mrb[0].mxu0
      %818 = vmatprep.mubr.f32.mxu0 0.0
      %819 = vmatmul.mubr.f32.gmra.mrb[0].mxu0 %v425
      %v820 = vpop.f32.mrb[0].mxu0
      %v821 = vadd.f32 0.0, %v820
      %v822 = vpop.f32.mrb[0].mxu0
      %823 = vmatprep.mubr.f32.mxu0 0.0
      %824 = vmatmul.mubr.f32.gmra.mrb[0].mxu0 %v426
      %v825 = vpop.f32.mrb[0].mxu0
      %v826 = vadd.f32 0.0, %v825
      %v827 = vpop.f32.mrb[0].mxu0
      %828 = vmatprep.mubr.f32.mxu0 0.0
      %829 = vmatmul.mubr.f32.gmra.mrb[0].mxu0 %v427
      %v830 = vpop.f32.mrb[0].mxu0
      %v831 = vadd.f32 0.0, %v830
      %v832 = vpop.f32.mrb[0].mxu0
      %833 = vmatprep.mubr.f32.mxu0 0.0
      %834 = vmatmul.mubr.f32.gmra.mrb[0].mxu0 %v428
      %v835 = vpop.f32.mrb[0].mxu0
      %v836 = vadd.f32 0.0, %v835
      %v837 = vpop.f32.mrb[0].mxu0
      %838 = vmatprep.mubr.f32.mxu0 0.0
      %839 = vmatmul.mubr.f32.gmra.mrb[0].mxu0 %v429
      %v840 = vpop.f32.mrb[0].mxu0
      %v841 = vadd.f32 0.0, %v840
      %v842 = vpop.f32.mrb[0].mxu0
      %843 = vmatprep.mubr.f32.mxu0 0.0
      %844 = vmatmul.mubr.f32.gmra.mrb[0].mxu0 %v430
      %v845 = vpop.f32.mrb[0].mxu0
      %v846 = vadd.f32 0.0, %v845
      %v847 = vpop.f32.mrb[0].mxu0
      %848 = vmatprep.mubr.f32.mxu0 0.0
      %849 = vmatmul.mubr.f32.gmra.mrb[0].mxu0 %v431
      %v850 = vpop.f32.mrb[0].mxu0
      %v851 = vadd.f32 0.0, %v850
      %v852 = vpop.f32.mrb[0].mxu0
      %853 = vmatprep.mubr.f32.mxu0 0.0
      %854 = vmatmul.mubr.f32.gmra.mrb[0].mxu0 %v432
      %v855 = vpop.f32.mrb[0].mxu0
      %v856 = vadd.f32 0.0, %v855
      %v857 = vpop.f32.mrb[0].mxu0
      %858 = vmatprep.mubr.f32.mxu0 0.0
      %859 = vmatmul.mubr.f32.gmra.mrb[0].mxu0 %v433
      %v860 = vpop.f32.mrb[0].mxu0
      %v861 = vadd.f32 0.0, %v860
      %v862 = vpop.f32.mrb[0].mxu0
      %863 = vmatprep.mubr.f32.mxu0 0.0
      %864 = vmatmul.mubr.f32.gmra.mrb[0].mxu0 %v434
      %v865 = vpop.f32.mrb[0].mxu0
      %v866 = vadd.f32 0.0, %v865
      %v867 = vpop.f32.mrb[0].mxu0
      %868 = vmatprep.mubr.f32.mxu0 0.0
      %869 = vmatmul.mubr.f32.gmra.mrb[0].mxu0 %v435
      %v870 = vpop.f32.mrb[0].mxu0
      %v871 = vadd.f32 0.0, %v870
      %v872 = vpop.f32.mrb[0].mxu0
      %873 = vmatprep.mubr.f32.mxu0 0.0
      %874 = vmatmul.mubr.f32.gmra.mrb[0].mxu0 %v436
      %v875 = vpop.f32.mrb[0].mxu0
      %v876 = vadd.f32 0.0, %v875
      %v877 = vpop.f32.mrb[0].mxu0
      %878 = vmatprep.mubr.f32.mxu0 0.0
      %879 = vmatmul.mubr.f32.gmra.mrb[0].mxu0 %v437
      %v880 = vpop.f32.mrb[0].mxu0
      %v881 = vadd.f32 0.0, %v880
      %v882 = vpop.f32.mrb[0].mxu0
      %883 = vmatprep.mubr.f32.mxu0 0.0
      %884 = vmatmul.mubr.f32.gmra.mrb[0].mxu0 %v438
      %v885 = vpop.f32.mrb[0].mxu0
      %v886 = vadd.f32 0.0, %v885
      %v887 = vpop.f32.mrb[0].mxu0
      %888 = vmatprep.mubr.f32.mxu0 0.0
      %889 = vmatmul.mubr.f32.gmra.mrb[0].mxu0 %v439
      %v890 = vpop.f32.mrb[0].mxu0
      %v891 = vadd.f32 0.0, %v890
      %v892 = vpop.f32.mrb[0].mxu0
      %893 = vmatprep.mubr.f32.mxu0 0.0
      %894 = vmatmul.mubr.f32.gmra.mrb[0].mxu0 %v440
      %v895 = vpop.f32.mrb[0].mxu0
      %v896 = vadd.f32 0.0, %v895
      %v897 = vpop.f32.mrb[0].mxu0
      %898 = vmatprep.mubr.f32.mxu0 0.0
      %899 = vmatmul.mubr.f32.gmra.mrb[0].mxu0 %v441
      %v900 = vpop.f32.mrb[0].mxu0
      %v901 = vadd.f32 0.0, %v900
      %v902 = vpop.f32.mrb[0].mxu0
      %903 = vmatprep.mubr.f32.mxu0 0.0
      %904 = vmatmul.mubr.f32.gmra.mrb[0].mxu0 %v442
      %v905 = vpop.f32.mrb[0].mxu0
      %v906 = vadd.f32 0.0, %v905
      %v907 = vpop.f32.mrb[0].mxu0
      %908 = vmatprep.mubr.f32.mxu0 0.0
      %909 = vmatmul.mubr.f32.gmra.mrb[0].mxu0 %v443
      %v910 = vpop.f32.mrb[0].mxu0
      %v911 = vadd.f32 0.0, %v910
      %v912 = vpop.f32.mrb[0].mxu0
      %913 = vmatprep.mubr.f32.mxu0 0.0
      %914 = vmatmul.mubr.f32.gmra.mrb[0].mxu0 %v444
      %v915 = vpop.f32.mrb[0].mxu0
      %v916 = vadd.f32 0.0, %v915
      %v917 = vpop.f32.mrb[0].mxu0
      %918 = vmatprep.mubr.f32.mxu0 0.0
      %919 = vmatmul.mubr.f32.gmra.mrb[0].mxu0 %v445
      %v920 = vpop.f32.mrb[0].mxu0
      %v921 = vadd.f32 0.0, %v920
      %v922 = vpop.f32.mrb[0].mxu0
      %923 = vmatprep.mubr.f32.mxu0 0.0
      %924 = vmatmul.mubr.f32.gmra.mrb[0].mxu0 %v446
      %v925 = vpop.f32.mrb[0].mxu0
      %v926 = vadd.f32 0.0, %v925
      %v927 = vpop.f32.mrb[0].mxu0
      %928 = vmatprep.mubr.f32.mxu0 0.0
      %929 = vmatmul.mubr.f32.gmra.mrb[0].mxu0 %v447
      %v930 = vpop.f32.mrb[0].mxu0
      %v931 = vadd.f32 0.0, %v930
      %v932 = vpop.f32.mrb[0].mxu0
      %933 = vmatprep.mubr.f32.mxu0 0.0
      %934 = vmatmul.mubr.f32.gmra.mrb[0].mxu0 %v448
      %v935 = vpop.f32.mrb[0].mxu0
      %v936 = vadd.f32 0.0, %v935
      %v937 = vpop.f32.mrb[0].mxu0
      %938 = vmatprep.mubr.f32.mxu0 0.0
      %939 = vmatmul.mubr.f32.gmra.mrb[0].mxu0 %v449
      %v940 = vpop.f32.mrb[0].mxu0
      %v941 = vadd.f32 0.0, %v940
      %v942 = vpop.f32.mrb[0].mxu0
      %943 = vmatprep.mubr.f32.mxu0 0.0
      %944 = vmatmul.mubr.f32.gmra.mrb[0].mxu0 %v450
      %v945 = vpop.f32.mrb[0].mxu0
      %v946 = vadd.f32 0.0, %v945
      %v947 = vpop.f32.mrb[0].mxu0
      %948 = vmatprep.mubr.f32.mxu0 0.0
      %949 = vmatmul.mubr.f32.gmra.mrb[0].mxu0 %v451
      %v950 = vpop.f32.mrb[0].mxu0
      %v951 = vadd.f32 0.0, %v950
      %v952 = vpop.f32.mrb[0].mxu0
      %953 = vmatprep.mubr.f32.mxu0 0.0
      %954 = vmatmul.mubr.f32.gmra.mrb[0].mxu0 %v452
      %v955 = vpop.f32.mrb[0].mxu0
      %v956 = vadd.f32 0.0, %v955
      %v957 = vpop.f32.mrb[0].mxu0
      %958 = vmatprep.mubr.f32.mxu0 0.0
      %959 = vmatmul.mubr.f32.gmra.mrb[0].mxu0 %v453
      %v960 = vpop.f32.mrb[0].mxu0
      %v961 = vadd.f32 0.0, %v960
      %v962 = vpop.f32.mrb[0].mxu0
      %963 = vmatprep.mubr.f32.mxu0 0.0
      %964 = vmatmul.mubr.f32.gmra.mrb[0].mxu0 %v454
      %v965 = vpop.f32.mrb[0].mxu0
      %v966 = vadd.f32 0.0, %v965
      %v967 = vpop.f32.mrb[0].mxu0
      %968 = vdwg.mxu0
      %969 = vmatprep.subr.mxu0 0.0
      %970 = vmatpush1.msra.mxu0 %v711
      %971 = vmatprep.subr.mxu0 0.0
      %972 = vmatpush1.msra.mxu0 %v712
      %973 = vmatprep.subr.mxu0 0.0
      %974 = vmatpush1.msra.mxu0 %v713
      %975 = vmatprep.subr.mxu0 0.0
      %976 = vmatpush1.msra.mxu0 %v714
      %977 = vmatprep.subr.mxu0 0.0
      %978 = vmatpush1.msra.mxu0 %v715
      %979 = vmatprep.subr.mxu0 0.0
      %980 = vmatpush1.msra.mxu0 %v716
      %981 = vmatprep.subr.mxu0 0.0
      %982 = vmatpush1.msra.mxu0 %v717
      %983 = vmatprep.subr.mxu0 0.0
      %984 = vmatpush1.msra.mxu0 %v718
      %985 = vmatprep.subr.mxu0 0.0
      %986 = vmatpush1.msra.mxu0 %v719
      %987 = vmatprep.subr.mxu0 0.0
      %988 = vmatpush1.msra.mxu0 %v720
      %989 = vmatprep.subr.mxu0 0.0
      %990 = vmatpush1.msra.mxu0 %v721
      %991 = vmatprep.subr.mxu0 0.0
      %992 = vmatpush1.msra.mxu0 %v722
      %993 = vmatprep.subr.mxu0 0.0
      %994 = vmatpush1.msra.mxu0 %v723
      %995 = vmatprep.subr.mxu0 0.0
      %996 = vmatpush1.msra.mxu0 %v724
      %997 = vmatprep.subr.mxu0 0.0
      %998 = vmatpush1.msra.mxu0 %v725
      %999 = vmatprep.subr.mxu0 0.0
      %1000 = vmatpush1.msra.mxu0 %v726
      %1001 = vmatprep.subr.mxu0 0.0
      %1002 = vmatpush1.msra.mxu0 0.0
      %1003 = vmatprep.subr.mxu0 0.0
      %1004 = vmatpush1.msra.mxu0 0.0
      %1005 = vmatprep.subr.mxu0 0.0
      %1006 = vmatpush1.msra.mxu0 0.0
      %1007 = vmatprep.subr.mxu0 0.0
      %1008 = vmatpush1.msra.mxu0 0.0
      %1009 = vmatprep.subr.mxu0 0.0
      %1010 = vmatpush1.msra.mxu0 0.0
      %1011 = vmatprep.subr.mxu0 0.0
      %1012 = vmatpush1.msra.mxu0 0.0
      %1013 = vmatprep.subr.mxu0 0.0
      %1014 = vmatpush1.msra.mxu0 0.0
      %1015 = vmatprep.subr.mxu0 0.0
      %1016 = vmatpush1.msra.mxu0 0.0
      %1017 = vmatprep.subr.mxu0 0.0
      %1018 = vmatpush1.msra.mxu0 0.0
      %1019 = vmatprep.subr.mxu0 0.0
      %1020 = vmatpush1.msra.mxu0 0.0
      %1021 = vmatprep.subr.mxu0 0.0
      %1022 = vmatpush1.msra.mxu0 0.0
      %1023 = vmatprep.subr.mxu0 0.0
      %1024 = vmatpush1.msra.mxu0 0.0
      %1025 = vmatprep.subr.mxu0 0.0
      %1026 = vmatpush1.msra.mxu0 0.0
      %1027 = vmatprep.subr.mxu0 0.0
      %1028 = vmatpush1.msra.mxu0 0.0
      %1029 = vmatprep.subr.mxu0 0.0
      %1030 = vmatpush1.msra.mxu0 0.0
      %1031 = vmatprep.subr.mxu0 0.0
      %1032 = vmatpush1.msra.mxu0 0.0
      %1033 = vmatprep.mubr.f32.mxu0 0.0
      %1034 = vmatmul.mubr.f32.gmra.mrb[0].mxu0 %v584
      %v1035 = vpop.f32.mrb[0].mxu0
      %v1036 = vadd.f32 %v811, %v1035
      %v1037 = vpop.f32.mrb[0].mxu0
      %1038 = vmatprep.mubr.f32.mxu0 0.0
      %1039 = vmatmul.mubr.f32.gmra.mrb[0].mxu0 %v496
      %v1040 = vpop.f32.mrb[0].mxu0
      %v1041 = vadd.f32 %v816, %v1040
      %v1042 = vpop.f32.mrb[0].mxu0
      %1043 = vmatprep.mubr.f32.mxu0 0.0
      %1044 = vmatmul.mubr.f32.gmra.mrb[0].mxu0 %v585
      %v1045 = vpop.f32.mrb[0].mxu0
      %v1046 = vadd.f32 %v821, %v1045
      %v1047 = vpop.f32.mrb[0].mxu0
      %1048 = vmatprep.mubr.f32.mxu0 0.0
      %1049 = vmatmul.mubr.f32.gmra.mrb[0].mxu0 %v499
      %v1050 = vpop.f32.mrb[0].mxu0
      %v1051 = vadd.f32 %v826, %v1050
      %v1052 = vpop.f32.mrb[0].mxu0
      %1053 = vmatprep.mubr.f32.mxu0 0.0
      %1054 = vmatmul.mubr.f32.gmra.mrb[0].mxu0 %v586
      %v1055 = vpop.f32.mrb[0].mxu0
      %v1056 = vadd.f32 %v831, %v1055
      %v1057 = vpop.f32.mrb[0].mxu0
      %1058 = vmatprep.mubr.f32.mxu0 0.0
      %1059 = vmatmul.mubr.f32.gmra.mrb[0].mxu0 %v502
      %v1060 = vpop.f32.mrb[0].mxu0
      %v1061 = vadd.f32 %v836, %v1060
      %v1062 = vpop.f32.mrb[0].mxu0
      %1063 = vmatprep.mubr.f32.mxu0 0.0
      %1064 = vmatmul.mubr.f32.gmra.mrb[0].mxu0 %v587
      %v1065 = vpop.f32.mrb[0].mxu0
      %v1066 = vadd.f32 %v841, %v1065
      %v1067 = vpop.f32.mrb[0].mxu0
      %1068 = vmatprep.mubr.f32.mxu0 0.0
      %1069 = vmatmul.mubr.f32.gmra.mrb[0].mxu0 %v505
      %v1070 = vpop.f32.mrb[0].mxu0
      %v1071 = vadd.f32 %v846, %v1070
      %v1072 = vpop.f32.mrb[0].mxu0
      %1073 = vmatprep.mubr.f32.mxu0 0.0
      %1074 = vmatmul.mubr.f32.gmra.mrb[0].mxu0 %v588
      %v1075 = vpop.f32.mrb[0].mxu0
      %v1076 = vadd.f32 %v851, %v1075
      %v1077 = vpop.f32.mrb[0].mxu0
      %1078 = vmatprep.mubr.f32.mxu0 0.0
      %1079 = vmatmul.mubr.f32.gmra.mrb[0].mxu0 %v508
      %v1080 = vpop.f32.mrb[0].mxu0
      %v1081 = vadd.f32 %v856, %v1080
      %v1082 = vpop.f32.mrb[0].mxu0
      %1083 = vmatprep.mubr.f32.mxu0 0.0
      %1084 = vmatmul.mubr.f32.gmra.mrb[0].mxu0 %v589
      %v1085 = vpop.f32.mrb[0].mxu0
      %v1086 = vadd.f32 %v861, %v1085
      %v1087 = vpop.f32.mrb[0].mxu0
      %1088 = vmatprep.mubr.f32.mxu0 0.0
      %1089 = vmatmul.mubr.f32.gmra.mrb[0].mxu0 %v511
      %v1090 = vpop.f32.mrb[0].mxu0
      %v1091 = vadd.f32 %v866, %v1090
      %v1092 = vpop.f32.mrb[0].mxu0
      %1093 = vmatprep.mubr.f32.mxu0 0.0
      %1094 = vmatmul.mubr.f32.gmra.mrb[0].mxu0 %v590
      %v1095 = vpop.f32.mrb[0].mxu0
      %v1096 = vadd.f32 %v871, %v1095
      %v1097 = vpop.f32.mrb[0].mxu0
      %1098 = vmatprep.mubr.f32.mxu0 0.0
      %1099 = vmatmul.mubr.f32.gmra.mrb[0].mxu0 %v514
      %v1100 = vpop.f32.mrb[0].mxu0
      %v1101 = vadd.f32 %v876, %v1100
      %v1102 = vpop.f32.mrb[0].mxu0
      %1103 = vmatprep.mubr.f32.mxu0 0.0
      %1104 = vmatmul.mubr.f32.gmra.mrb[0].mxu0 %v591
      %v1105 = vpop.f32.mrb[0].mxu0
      %v1106 = vadd.f32 %v881, %v1105
      %v1107 = vpop.f32.mrb[0].mxu0
      %1108 = vmatprep.mubr.f32.mxu0 0.0
      %1109 = vmatmul.mubr.f32.gmra.mrb[0].mxu0 %v517
      %v1110 = vpop.f32.mrb[0].mxu0
      %v1111 = vadd.f32 %v886, %v1110
      %v1112 = vpop.f32.mrb[0].mxu0
      %1113 = vmatprep.mubr.f32.mxu0 0.0
      %1114 = vmatmul.mubr.f32.gmra.mrb[0].mxu0 %v592
      %v1115 = vpop.f32.mrb[0].mxu0
      %v1116 = vadd.f32 %v891, %v1115
      %v1117 = vpop.f32.mrb[0].mxu0
      %1118 = vmatprep.mubr.f32.mxu0 0.0
      %1119 = vmatmul.mubr.f32.gmra.mrb[0].mxu0 %v520
      %v1120 = vpop.f32.mrb[0].mxu0
      %v1121 = vadd.f32 %v896, %v1120
      %v1122 = vpop.f32.mrb[0].mxu0
      %1123 = vmatprep.mubr.f32.mxu0 0.0
      %1124 = vmatmul.mubr.f32.gmra.mrb[0].mxu0 %v593
      %v1125 = vpop.f32.mrb[0].mxu0
      %v1126 = vadd.f32 %v901, %v1125
      %v1127 = vpop.f32.mrb[0].mxu0
      %1128 = vmatprep.mubr.f32.mxu0 0.0
      %1129 = vmatmul.mubr.f32.gmra.mrb[0].mxu0 %v523
      %v1130 = vpop.f32.mrb[0].mxu0
      %v1131 = vadd.f32 %v906, %v1130
      %v1132 = vpop.f32.mrb[0].mxu0
      %1133 = vmatprep.mubr.f32.mxu0 0.0
      %1134 = vmatmul.mubr.f32.gmra.mrb[0].mxu0 %v594
      %v1135 = vpop.f32.mrb[0].mxu0
      %v1136 = vadd.f32 %v911, %v1135
      %v1137 = vpop.f32.mrb[0].mxu0
      %1138 = vmatprep.mubr.f32.mxu0 0.0
      %1139 = vmatmul.mubr.f32.gmra.mrb[0].mxu0 %v526
      %v1140 = vpop.f32.mrb[0].mxu0
      %v1141 = vadd.f32 %v916, %v1140
      %v1142 = vpop.f32.mrb[0].mxu0
      %1143 = vmatprep.mubr.f32.mxu0 0.0
      %1144 = vmatmul.mubr.f32.gmra.mrb[0].mxu0 %v595
      %v1145 = vpop.f32.mrb[0].mxu0
      %v1146 = vadd.f32 %v921, %v1145
      %v1147 = vpop.f32.mrb[0].mxu0
      %1148 = vmatprep.mubr.f32.mxu0 0.0
      %1149 = vmatmul.mubr.f32.gmra.mrb[0].mxu0 %v529
      %v1150 = vpop.f32.mrb[0].mxu0
      %v1151 = vadd.f32 %v926, %v1150
      %v1152 = vpop.f32.mrb[0].mxu0
      %1153 = vmatprep.mubr.f32.mxu0 0.0
      %1154 = vmatmul.mubr.f32.gmra.mrb[0].mxu0 %v596
      %v1155 = vpop.f32.mrb[0].mxu0
      %v1156 = vadd.f32 %v931, %v1155
      %v1157 = vpop.f32.mrb[0].mxu0
      %1158 = vmatprep.mubr.f32.mxu0 0.0
      %1159 = vmatmul.mubr.f32.gmra.mrb[0].mxu0 %v532
      %v1160 = vpop.f32.mrb[0].mxu0
      %v1161 = vadd.f32 %v936, %v1160
      %v1162 = vpop.f32.mrb[0].mxu0
      %1163 = vmatprep.mubr.f32.mxu0 0.0
      %1164 = vmatmul.mubr.f32.gmra.mrb[0].mxu0 %v597
      %v1165 = vpop.f32.mrb[0].mxu0
      %v1166 = vadd.f32 %v941, %v1165
      %v1167 = vpop.f32.mrb[0].mxu0
      %1168 = vmatprep.mubr.f32.mxu0 0.0
      %1169 = vmatmul.mubr.f32.gmra.mrb[0].mxu0 %v535
      %v1170 = vpop.f32.mrb[0].mxu0
      %v1171 = vadd.f32 %v946, %v1170
      %v1172 = vpop.f32.mrb[0].mxu0
      %1173 = vmatprep.mubr.f32.mxu0 0.0
      %1174 = vmatmul.mubr.f32.gmra.mrb[0].mxu0 %v598
      %v1175 = vpop.f32.mrb[0].mxu0
      %v1176 = vadd.f32 %v951, %v1175
      %v1177 = vpop.f32.mrb[0].mxu0
      %1178 = vmatprep.mubr.f32.mxu0 0.0
      %1179 = vmatmul.mubr.f32.gmra.mrb[0].mxu0 %v538
      %v1180 = vpop.f32.mrb[0].mxu0
      %v1181 = vadd.f32 %v956, %v1180
      %v1182 = vpop.f32.mrb[0].mxu0
      %1183 = vmatprep.mubr.f32.mxu0 0.0
      %1184 = vmatmul.mubr.f32.gmra.mrb[0].mxu0 %v599
      %v1185 = vpop.f32.mrb[0].mxu0
      %v1186 = vadd.f32 %v961, %v1185
      %v1187 = vpop.f32.mrb[0].mxu0
      %1188 = vmatprep.mubr.f32.mxu0 0.0
      %1189 = vmatmul.mubr.f32.gmra.mrb[0].mxu0 %v541
      %v1190 = vpop.f32.mrb[0].mxu0
      %v1191 = vadd.f32 %v966, %v1190
      %v1192 = vpop.f32.mrb[0].mxu0
      %1193 = vdwg.mxu0
      %s1194 = scalar_lea.vmem %s3, 256
      %v1195 = vld [vmem:[%s1194] sm:$0xff]
      %v1196 = vld [vmem:[%s1194 + $0x8] sm:$0xff]
      %v1197 = vld [vmem:[%s1194 + $0x10] sm:$0xff]
      %v1198 = vld [vmem:[%s1194 + $0x18] sm:$0xff]
      %v1199 = vld [vmem:[%s1194 + $0x20] sm:$0xff]
      %v1200 = vld [vmem:[%s1194 + $0x28] sm:$0xff]
      %v1201 = vld [vmem:[%s1194 + $0x30] sm:$0xff]
      %v1202 = vld [vmem:[%s1194 + $0x38] sm:$0xff]
      %v1203 = vld [vmem:[%s1194 + $0x40] sm:$0xff]
      %v1204 = vld [vmem:[%s1194 + $0x48] sm:$0xff]
      %v1205 = vld [vmem:[%s1194 + $0x50] sm:$0xff]
      %v1206 = vld [vmem:[%s1194 + $0x58] sm:$0xff]
      %v1207 = vld [vmem:[%s1194 + $0x60] sm:$0xff]
      %v1208 = vld [vmem:[%s1194 + $0x68] sm:$0xff]
      %v1209 = vld [vmem:[%s1194 + $0x70] sm:$0xff]
      %v1210 = vld [vmem:[%s1194 + $0x78] sm:$0xff]
      %1211 = vmatprep.subr.mxu0 0.0
      %1212 = vmatpush1.msra.mxu0 %v1195
      %1213 = vmatprep.subr.mxu0 0.0
      %1214 = vmatpush1.msra.mxu0 %v1196
      %1215 = vmatprep.subr.mxu0 0.0
      %1216 = vmatpush1.msra.mxu0 %v1197
      %1217 = vmatprep.subr.mxu0 0.0
      %1218 = vmatpush1.msra.mxu0 %v1198
      %1219 = vmatprep.subr.mxu0 0.0
      %1220 = vmatpush1.msra.mxu0 %v1199
      %1221 = vmatprep.subr.mxu0 0.0
      %1222 = vmatpush1.msra.mxu0 %v1200
      %1223 = vmatprep.subr.mxu0 0.0
      %1224 = vmatpush1.msra.mxu0 %v1201
      %1225 = vmatprep.subr.mxu0 0.0
      %1226 = vmatpush1.msra.mxu0 %v1202
      %1227 = vmatprep.subr.mxu0 0.0
      %1228 = vmatpush1.msra.mxu0 %v1203
      %1229 = vmatprep.subr.mxu0 0.0
      %1230 = vmatpush1.msra.mxu0 %v1204
      %1231 = vmatprep.subr.mxu0 0.0
      %1232 = vmatpush1.msra.mxu0 %v1205
      %1233 = vmatprep.subr.mxu0 0.0
      %1234 = vmatpush1.msra.mxu0 %v1206
      %1235 = vmatprep.subr.mxu0 0.0
      %1236 = vmatpush1.msra.mxu0 %v1207
      %1237 = vmatprep.subr.mxu0 0.0
      %1238 = vmatpush1.msra.mxu0 %v1208
      %1239 = vmatprep.subr.mxu0 0.0
      %1240 = vmatpush1.msra.mxu0 %v1209
      %1241 = vmatprep.subr.mxu0 0.0
      %1242 = vmatpush1.msra.mxu0 %v1210
      %1243 = vmatprep.subr.mxu0 0.0
      %1244 = vmatpush1.msra.mxu0 0.0
      %1245 = vmatprep.subr.mxu0 0.0
      %1246 = vmatpush1.msra.mxu0 0.0
      %1247 = vmatprep.subr.mxu0 0.0
      %1248 = vmatpush1.msra.mxu0 0.0
      %1249 = vmatprep.subr.mxu0 0.0
      %1250 = vmatpush1.msra.mxu0 0.0
      %1251 = vmatprep.subr.mxu0 0.0
      %1252 = vmatpush1.msra.mxu0 0.0
      %1253 = vmatprep.subr.mxu0 0.0
      %1254 = vmatpush1.msra.mxu0 0.0
      %1255 = vmatprep.subr.mxu0 0.0
      %1256 = vmatpush1.msra.mxu0 0.0
      %1257 = vmatprep.subr.mxu0 0.0
      %1258 = vmatpush1.msra.mxu0 0.0
      %1259 = vmatprep.subr.mxu0 0.0
      %1260 = vmatpush1.msra.mxu0 0.0
      %1261 = vmatprep.subr.mxu0 0.0
      %1262 = vmatpush1.msra.mxu0 0.0
      %1263 = vmatprep.subr.mxu0 0.0
      %1264 = vmatpush1.msra.mxu0 0.0
      %1265 = vmatprep.subr.mxu0 0.0
      %1266 = vmatpush1.msra.mxu0 0.0
      %1267 = vmatprep.subr.mxu0 0.0
      %1268 = vmatpush1.msra.mxu0 0.0
      %1269 = vmatprep.subr.mxu0 0.0
      %1270 = vmatpush1.msra.mxu0 0.0
      %1271 = vmatprep.subr.mxu0 0.0
      %1272 = vmatpush1.msra.mxu0 0.0
      %1273 = vmatprep.subr.mxu0 0.0
      %1274 = vmatpush1.msra.mxu0 0.0
      %1275 = vmatprep.mubr.f32.mxu0 0.0
      %1276 = vmatmul.mubr.f32.gmra.mrb[0].mxu0 %v605
      %v1277 = vpop.f32.mrb[0].mxu0
      %v1278 = vadd.f32 0.0, %v1277
      %v1279 = vpop.f32.mrb[0].mxu0
      %1280 = vmatprep.mubr.f32.mxu0 0.0
      %1281 = vmatmul.mubr.f32.gmra.mrb[0].mxu0 %v693
      %v1282 = vpop.f32.mrb[0].mxu0
      %v1283 = vadd.f32 0.0, %v1282
      %v1284 = vpop.f32.mrb[0].mxu0
      %1285 = vmatprep.mubr.f32.mxu0 0.0
      %1286 = vmatmul.mubr.f32.gmra.mrb[0].mxu0 %v608
      %v1287 = vpop.f32.mrb[0].mxu0
      %v1288 = vadd.f32 0.0, %v1287
      %v1289 = vpop.f32.mrb[0].mxu0
      %1290 = vmatprep.mubr.f32.mxu0 0.0
      %1291 = vmatmul.mubr.f32.gmra.mrb[0].mxu0 %v694
      %v1292 = vpop.f32.mrb[0].mxu0
      %v1293 = vadd.f32 0.0, %v1292
      %v1294 = vpop.f32.mrb[0].mxu0
      %1295 = vmatprep.mubr.f32.mxu0 0.0
      %1296 = vmatmul.mubr.f32.gmra.mrb[0].mxu0 %v611
      %v1297 = vpop.f32.mrb[0].mxu0
      %v1298 = vadd.f32 0.0, %v1297
      %v1299 = vpop.f32.mrb[0].mxu0
      %1300 = vmatprep.mubr.f32.mxu0 0.0
      %1301 = vmatmul.mubr.f32.gmra.mrb[0].mxu0 %v695
      %v1302 = vpop.f32.mrb[0].mxu0
      %v1303 = vadd.f32 0.0, %v1302
      %v1304 = vpop.f32.mrb[0].mxu0
      %1305 = vmatprep.mubr.f32.mxu0 0.0
      %1306 = vmatmul.mubr.f32.gmra.mrb[0].mxu0 %v614
      %v1307 = vpop.f32.mrb[0].mxu0
      %v1308 = vadd.f32 0.0, %v1307
      %v1309 = vpop.f32.mrb[0].mxu0
      %1310 = vmatprep.mubr.f32.mxu0 0.0
      %1311 = vmatmul.mubr.f32.gmra.mrb[0].mxu0 %v696
      %v1312 = vpop.f32.mrb[0].mxu0
      %v1313 = vadd.f32 0.0, %v1312
      %v1314 = vpop.f32.mrb[0].mxu0
      %1315 = vmatprep.mubr.f32.mxu0 0.0
      %1316 = vmatmul.mubr.f32.gmra.mrb[0].mxu0 %v617
      %v1317 = vpop.f32.mrb[0].mxu0
      %v1318 = vadd.f32 0.0, %v1317
      %v1319 = vpop.f32.mrb[0].mxu0
      %1320 = vmatprep.mubr.f32.mxu0 0.0
      %1321 = vmatmul.mubr.f32.gmra.mrb[0].mxu0 %v697
      %v1322 = vpop.f32.mrb[0].mxu0
      %v1323 = vadd.f32 0.0, %v1322
      %v1324 = vpop.f32.mrb[0].mxu0
      %1325 = vmatprep.mubr.f32.mxu0 0.0
      %1326 = vmatmul.mubr.f32.gmra.mrb[0].mxu0 %v620
      %v1327 = vpop.f32.mrb[0].mxu0
      %v1328 = vadd.f32 0.0, %v1327
      %v1329 = vpop.f32.mrb[0].mxu0
      %1330 = vmatprep.mubr.f32.mxu0 0.0
      %1331 = vmatmul.mubr.f32.gmra.mrb[0].mxu0 %v698
      %v1332 = vpop.f32.mrb[0].mxu0
      %v1333 = vadd.f32 0.0, %v1332
      %v1334 = vpop.f32.mrb[0].mxu0
      %1335 = vmatprep.mubr.f32.mxu0 0.0
      %1336 = vmatmul.mubr.f32.gmra.mrb[0].mxu0 %v623
      %v1337 = vpop.f32.mrb[0].mxu0
      %v1338 = vadd.f32 0.0, %v1337
      %v1339 = vpop.f32.mrb[0].mxu0
      %1340 = vmatprep.mubr.f32.mxu0 0.0
      %1341 = vmatmul.mubr.f32.gmra.mrb[0].mxu0 %v699
      %v1342 = vpop.f32.mrb[0].mxu0
      %v1343 = vadd.f32 0.0, %v1342
      %v1344 = vpop.f32.mrb[0].mxu0
      %1345 = vmatprep.mubr.f32.mxu0 0.0
      %1346 = vmatmul.mubr.f32.gmra.mrb[0].mxu0 %v626
      %v1347 = vpop.f32.mrb[0].mxu0
      %v1348 = vadd.f32 0.0, %v1347
      %v1349 = vpop.f32.mrb[0].mxu0
      %1350 = vmatprep.mubr.f32.mxu0 0.0
      %1351 = vmatmul.mubr.f32.gmra.mrb[0].mxu0 %v700
      %v1352 = vpop.f32.mrb[0].mxu0
      %v1353 = vadd.f32 0.0, %v1352
      %v1354 = vpop.f32.mrb[0].mxu0
      %1355 = vmatprep.mubr.f32.mxu0 0.0
      %1356 = vmatmul.mubr.f32.gmra.mrb[0].mxu0 %v629
      %v1357 = vpop.f32.mrb[0].mxu0
      %v1358 = vadd.f32 0.0, %v1357
      %v1359 = vpop.f32.mrb[0].mxu0
      %1360 = vmatprep.mubr.f32.mxu0 0.0
      %1361 = vmatmul.mubr.f32.gmra.mrb[0].mxu0 %v701
      %v1362 = vpop.f32.mrb[0].mxu0
      %v1363 = vadd.f32 0.0, %v1362
      %v1364 = vpop.f32.mrb[0].mxu0
      %1365 = vmatprep.mubr.f32.mxu0 0.0
      %1366 = vmatmul.mubr.f32.gmra.mrb[0].mxu0 %v632
      %v1367 = vpop.f32.mrb[0].mxu0
      %v1368 = vadd.f32 0.0, %v1367
      %v1369 = vpop.f32.mrb[0].mxu0
      %1370 = vmatprep.mubr.f32.mxu0 0.0
      %1371 = vmatmul.mubr.f32.gmra.mrb[0].mxu0 %v702
      %v1372 = vpop.f32.mrb[0].mxu0
      %v1373 = vadd.f32 0.0, %v1372
      %v1374 = vpop.f32.mrb[0].mxu0
      %1375 = vmatprep.mubr.f32.mxu0 0.0
      %1376 = vmatmul.mubr.f32.gmra.mrb[0].mxu0 %v635
      %v1377 = vpop.f32.mrb[0].mxu0
      %v1378 = vadd.f32 0.0, %v1377
      %v1379 = vpop.f32.mrb[0].mxu0
      %1380 = vmatprep.mubr.f32.mxu0 0.0
      %1381 = vmatmul.mubr.f32.gmra.mrb[0].mxu0 %v703
      %v1382 = vpop.f32.mrb[0].mxu0
      %v1383 = vadd.f32 0.0, %v1382
      %v1384 = vpop.f32.mrb[0].mxu0
      %1385 = vmatprep.mubr.f32.mxu0 0.0
      %1386 = vmatmul.mubr.f32.gmra.mrb[0].mxu0 %v638
      %v1387 = vpop.f32.mrb[0].mxu0
      %v1388 = vadd.f32 0.0, %v1387
      %v1389 = vpop.f32.mrb[0].mxu0
      %1390 = vmatprep.mubr.f32.mxu0 0.0
      %1391 = vmatmul.mubr.f32.gmra.mrb[0].mxu0 %v704
      %v1392 = vpop.f32.mrb[0].mxu0
      %v1393 = vadd.f32 0.0, %v1392
      %v1394 = vpop.f32.mrb[0].mxu0
      %1395 = vmatprep.mubr.f32.mxu0 0.0
      %1396 = vmatmul.mubr.f32.gmra.mrb[0].mxu0 %v641
      %v1397 = vpop.f32.mrb[0].mxu0
      %v1398 = vadd.f32 0.0, %v1397
      %v1399 = vpop.f32.mrb[0].mxu0
      %1400 = vmatprep.mubr.f32.mxu0 0.0
      %1401 = vmatmul.mubr.f32.gmra.mrb[0].mxu0 %v705
      %v1402 = vpop.f32.mrb[0].mxu0
      %v1403 = vadd.f32 0.0, %v1402
      %v1404 = vpop.f32.mrb[0].mxu0
      %1405 = vmatprep.mubr.f32.mxu0 0.0
      %1406 = vmatmul.mubr.f32.gmra.mrb[0].mxu0 %v644
      %v1407 = vpop.f32.mrb[0].mxu0
      %v1408 = vadd.f32 0.0, %v1407
      %v1409 = vpop.f32.mrb[0].mxu0
      %1410 = vmatprep.mubr.f32.mxu0 0.0
      %1411 = vmatmul.mubr.f32.gmra.mrb[0].mxu0 %v706
      %v1412 = vpop.f32.mrb[0].mxu0
      %v1413 = vadd.f32 0.0, %v1412
      %v1414 = vpop.f32.mrb[0].mxu0
      %1415 = vmatprep.mubr.f32.mxu0 0.0
      %1416 = vmatmul.mubr.f32.gmra.mrb[0].mxu0 %v647
      %v1417 = vpop.f32.mrb[0].mxu0
      %v1418 = vadd.f32 0.0, %v1417
      %v1419 = vpop.f32.mrb[0].mxu0
      %1420 = vmatprep.mubr.f32.mxu0 0.0
      %1421 = vmatmul.mubr.f32.gmra.mrb[0].mxu0 %v707
      %v1422 = vpop.f32.mrb[0].mxu0
      %v1423 = vadd.f32 0.0, %v1422
      %v1424 = vpop.f32.mrb[0].mxu0
      %1425 = vmatprep.mubr.f32.mxu0 0.0
      %1426 = vmatmul.mubr.f32.gmra.mrb[0].mxu0 %v650
      %v1427 = vpop.f32.mrb[0].mxu0
      %v1428 = vadd.f32 0.0, %v1427
      %v1429 = vpop.f32.mrb[0].mxu0
      %1430 = vmatprep.mubr.f32.mxu0 0.0
      %1431 = vmatmul.mubr.f32.gmra.mrb[0].mxu0 %v708
      %v1432 = vpop.f32.mrb[0].mxu0
      %v1433 = vadd.f32 0.0, %v1432
      %v1434 = vpop.f32.mrb[0].mxu0
      %1435 = vdwg.mxu0
      %v1436 = vadd.f32 %v1036, %v1278
      %v1437 = vadd.f32 %v1041, %v1283
      %v1438 = vadd.f32 %v1046, %v1288
      %v1439 = vadd.f32 %v1051, %v1293
      %v1440 = vadd.f32 %v1056, %v1298
      %v1441 = vadd.f32 %v1061, %v1303
      %v1442 = vadd.f32 %v1066, %v1308
      %v1443 = vadd.f32 %v1071, %v1313
      %v1444 = vadd.f32 %v1076, %v1318
      %v1445 = vadd.f32 %v1081, %v1323
      %v1446 = vadd.f32 %v1086, %v1328
      %v1447 = vadd.f32 %v1091, %v1333
      %v1448 = vadd.f32 %v1096, %v1338
      %v1449 = vadd.f32 %v1101, %v1343
      %v1450 = vadd.f32 %v1106, %v1348
      %v1451 = vadd.f32 %v1111, %v1353
      %v1452 = vadd.f32 %v1116, %v1358
      %v1453 = vadd.f32 %v1121, %v1363
      %v1454 = vadd.f32 %v1126, %v1368
      %v1455 = vadd.f32 %v1131, %v1373
      %v1456 = vadd.f32 %v1136, %v1378
      %v1457 = vadd.f32 %v1141, %v1383
      %v1458 = vadd.f32 %v1146, %v1388
      %v1459 = vadd.f32 %v1151, %v1393
      %v1460 = vadd.f32 %v1156, %v1398
      %v1461 = vadd.f32 %v1161, %v1403
      %v1462 = vadd.f32 %v1166, %v1408
      %v1463 = vadd.f32 %v1171, %v1413
      %v1464 = vadd.f32 %v1176, %v1418
      %v1465 = vadd.f32 %v1181, %v1423
      %v1466 = vadd.f32 %v1186, %v1428
      %v1467 = vadd.f32 %v1191, %v1433
      %s1468 = scalar_lea.vmem %s3, 384
      %v1469 = vld [vmem:[%s1468] sm:$0xff]
      %v1470 = vld [vmem:[%s1468 + $0x8] sm:$0xff]
      %v1471 = vld [vmem:[%s1468 + $0x10] sm:$0xff]
      %v1472 = vld [vmem:[%s1468 + $0x18] sm:$0xff]
      %v1473 = vld [vmem:[%s1468 + $0x20] sm:$0xff]
      %v1474 = vld [vmem:[%s1468 + $0x28] sm:$0xff]
      %v1475 = vld [vmem:[%s1468 + $0x30] sm:$0xff]
      %v1476 = vld [vmem:[%s1468 + $0x38] sm:$0xff]
      %v1477 = vld [vmem:[%s1468 + $0x40] sm:$0xff]
      %v1478 = vld [vmem:[%s1468 + $0x48] sm:$0xff]
      %v1479 = vld [vmem:[%s1468 + $0x50] sm:$0xff]
      %v1480 = vld [vmem:[%s1468 + $0x58] sm:$0xff]
      %v1481 = vld [vmem:[%s1468 + $0x60] sm:$0xff]
      %v1482 = vld [vmem:[%s1468 + $0x68] sm:$0xff]
      %v1483 = vld [vmem:[%s1468 + $0x70] sm:$0xff]
      %v1484 = vld [vmem:[%s1468 + $0x78] sm:$0xff]
      %1485 = vmatprep.subr.mxu0 0.0
      %1486 = vmatpush1.msra.mxu0 %v1469
      %1487 = vmatprep.subr.mxu0 0.0
      %1488 = vmatpush1.msra.mxu0 %v1470
      %1489 = vmatprep.subr.mxu0 0.0
      %1490 = vmatpush1.msra.mxu0 %v1471
      %1491 = vmatprep.subr.mxu0 0.0
      %1492 = vmatpush1.msra.mxu0 %v1472
      %1493 = vmatprep.subr.mxu0 0.0
      %1494 = vmatpush1.msra.mxu0 %v1473
      %1495 = vmatprep.subr.mxu0 0.0
      %1496 = vmatpush1.msra.mxu0 %v1474
      %1497 = vmatprep.subr.mxu0 0.0
      %1498 = vmatpush1.msra.mxu0 %v1475
      %1499 = vmatprep.subr.mxu0 0.0
      %1500 = vmatpush1.msra.mxu0 %v1476
      %1501 = vmatprep.subr.mxu0 0.0
      %1502 = vmatpush1.msra.mxu0 %v1477
      %1503 = vmatprep.subr.mxu0 0.0
      %1504 = vmatpush1.msra.mxu0 %v1478
      %1505 = vmatprep.subr.mxu0 0.0
      %1506 = vmatpush1.msra.mxu0 %v1479
      %1507 = vmatprep.subr.mxu0 0.0
      %1508 = vmatpush1.msra.mxu0 %v1480
      %1509 = vmatprep.subr.mxu0 0.0
      %1510 = vmatpush1.msra.mxu0 %v1481
      %1511 = vmatprep.subr.mxu0 0.0
      %1512 = vmatpush1.msra.mxu0 %v1482
      %1513 = vmatprep.subr.mxu0 0.0
      %1514 = vmatpush1.msra.mxu0 %v1483
      %1515 = vmatprep.subr.mxu0 0.0
      %1516 = vmatpush1.msra.mxu0 %v1484
      %1517 = vmatprep.subr.mxu0 0.0
      %1518 = vmatpush1.msra.mxu0 0.0
      %1519 = vmatprep.subr.mxu0 0.0
      %1520 = vmatpush1.msra.mxu0 0.0
      %1521 = vmatprep.subr.mxu0 0.0
      %1522 = vmatpush1.msra.mxu0 0.0
      %1523 = vmatprep.subr.mxu0 0.0
      %1524 = vmatpush1.msra.mxu0 0.0
      %1525 = vmatprep.subr.mxu0 0.0
      %1526 = vmatpush1.msra.mxu0 0.0
      %1527 = vmatprep.subr.mxu0 0.0
      %1528 = vmatpush1.msra.mxu0 0.0
      %1529 = vmatprep.subr.mxu0 0.0
      %1530 = vmatpush1.msra.mxu0 0.0
      %1531 = vmatprep.subr.mxu0 0.0
      %1532 = vmatpush1.msra.mxu0 0.0
      %1533 = vmatprep.subr.mxu0 0.0
      %1534 = vmatpush1.msra.mxu0 0.0
      %1535 = vmatprep.subr.mxu0 0.0
      %1536 = vmatpush1.msra.mxu0 0.0
      %1537 = vmatprep.subr.mxu0 0.0
      %1538 = vmatpush1.msra.mxu0 0.0
      %1539 = vmatprep.subr.mxu0 0.0
      %1540 = vmatpush1.msra.mxu0 0.0
      %1541 = vmatprep.subr.mxu0 0.0
      %1542 = vmatpush1.msra.mxu0 0.0
      %1543 = vmatprep.subr.mxu0 0.0
      %1544 = vmatpush1.msra.mxu0 0.0
      %1545 = vmatprep.subr.mxu0 0.0
      %1546 = vmatpush1.msra.mxu0 0.0
      %1547 = vmatprep.subr.mxu0 0.0
      %1548 = vmatpush1.msra.mxu0 0.0
      %1549 = vmatprep.mubr.f32.mxu0 0.0
      %1550 = vmatmul.mubr.f32.gmra.mrb[0].mxu0 %v585
      %v1551 = vpop.f32.mrb[0].mxu0
      %v1552 = vadd.f32 0.0, %v1551
      %v1553 = vpop.f32.mrb[0].mxu0
      %1554 = vmatprep.mubr.f32.mxu0 0.0
      %1555 = vmatmul.mubr.f32.gmra.mrb[0].mxu0 %v499
      %v1556 = vpop.f32.mrb[0].mxu0
      %v1557 = vadd.f32 0.0, %v1556
      %v1558 = vpop.f32.mrb[0].mxu0
      %1559 = vmatprep.mubr.f32.mxu0 0.0
      %1560 = vmatmul.mubr.f32.gmra.mrb[0].mxu0 %v586
      %v1561 = vpop.f32.mrb[0].mxu0
      %v1562 = vadd.f32 0.0, %v1561
      %v1563 = vpop.f32.mrb[0].mxu0
      %1564 = vmatprep.mubr.f32.mxu0 0.0
      %1565 = vmatmul.mubr.f32.gmra.mrb[0].mxu0 %v502
      %v1566 = vpop.f32.mrb[0].mxu0
      %v1567 = vadd.f32 0.0, %v1566
      %v1568 = vpop.f32.mrb[0].mxu0
      %1569 = vmatprep.mubr.f32.mxu0 0.0
      %1570 = vmatmul.mubr.f32.gmra.mrb[0].mxu0 %v587
      %v1571 = vpop.f32.mrb[0].mxu0
      %v1572 = vadd.f32 0.0, %v1571
      %v1573 = vpop.f32.mrb[0].mxu0
      %1574 = vmatprep.mubr.f32.mxu0 0.0
      %1575 = vmatmul.mubr.f32.gmra.mrb[0].mxu0 %v505
      %v1576 = vpop.f32.mrb[0].mxu0
      %v1577 = vadd.f32 0.0, %v1576
      %v1578 = vpop.f32.mrb[0].mxu0
      %1579 = vmatprep.mubr.f32.mxu0 0.0
      %1580 = vmatmul.mubr.f32.gmra.mrb[0].mxu0 %v588
      %v1581 = vpop.f32.mrb[0].mxu0
      %v1582 = vadd.f32 0.0, %v1581
      %v1583 = vpop.f32.mrb[0].mxu0
      %1584 = vmatprep.mubr.f32.mxu0 0.0
      %1585 = vmatmul.mubr.f32.gmra.mrb[0].mxu0 %v508
      %v1586 = vpop.f32.mrb[0].mxu0
      %v1587 = vadd.f32 0.0, %v1586
      %v1588 = vpop.f32.mrb[0].mxu0
      %1589 = vmatprep.mubr.f32.mxu0 0.0
      %1590 = vmatmul.mubr.f32.gmra.mrb[0].mxu0 %v589
      %v1591 = vpop.f32.mrb[0].mxu0
      %v1592 = vadd.f32 0.0, %v1591
      %v1593 = vpop.f32.mrb[0].mxu0
      %1594 = vmatprep.mubr.f32.mxu0 0.0
      %1595 = vmatmul.mubr.f32.gmra.mrb[0].mxu0 %v511
      %v1596 = vpop.f32.mrb[0].mxu0
      %v1597 = vadd.f32 0.0, %v1596
      %v1598 = vpop.f32.mrb[0].mxu0
      %1599 = vmatprep.mubr.f32.mxu0 0.0
      %1600 = vmatmul.mubr.f32.gmra.mrb[0].mxu0 %v590
      %v1601 = vpop.f32.mrb[0].mxu0
      %v1602 = vadd.f32 0.0, %v1601
      %v1603 = vpop.f32.mrb[0].mxu0
      %1604 = vmatprep.mubr.f32.mxu0 0.0
      %1605 = vmatmul.mubr.f32.gmra.mrb[0].mxu0 %v514
      %v1606 = vpop.f32.mrb[0].mxu0
      %v1607 = vadd.f32 0.0, %v1606
      %v1608 = vpop.f32.mrb[0].mxu0
      %1609 = vmatprep.mubr.f32.mxu0 0.0
      %1610 = vmatmul.mubr.f32.gmra.mrb[0].mxu0 %v591
      %v1611 = vpop.f32.mrb[0].mxu0
      %v1612 = vadd.f32 0.0, %v1611
      %v1613 = vpop.f32.mrb[0].mxu0
      %1614 = vmatprep.mubr.f32.mxu0 0.0
      %1615 = vmatmul.mubr.f32.gmra.mrb[0].mxu0 %v517
      %v1616 = vpop.f32.mrb[0].mxu0
      %v1617 = vadd.f32 0.0, %v1616
      %v1618 = vpop.f32.mrb[0].mxu0
      %1619 = vmatprep.mubr.f32.mxu0 0.0
      %1620 = vmatmul.mubr.f32.gmra.mrb[0].mxu0 %v592
      %v1621 = vpop.f32.mrb[0].mxu0
      %v1622 = vadd.f32 0.0, %v1621
      %v1623 = vpop.f32.mrb[0].mxu0
      %1624 = vmatprep.mubr.f32.mxu0 0.0
      %1625 = vmatmul.mubr.f32.gmra.mrb[0].mxu0 %v520
      %v1626 = vpop.f32.mrb[0].mxu0
      %v1627 = vadd.f32 0.0, %v1626
      %v1628 = vpop.f32.mrb[0].mxu0
      %1629 = vmatprep.mubr.f32.mxu0 0.0
      %1630 = vmatmul.mubr.f32.gmra.mrb[0].mxu0 %v593
      %v1631 = vpop.f32.mrb[0].mxu0
      %v1632 = vadd.f32 0.0, %v1631
      %v1633 = vpop.f32.mrb[0].mxu0
      %1634 = vmatprep.mubr.f32.mxu0 0.0
      %1635 = vmatmul.mubr.f32.gmra.mrb[0].mxu0 %v523
      %v1636 = vpop.f32.mrb[0].mxu0
      %v1637 = vadd.f32 0.0, %v1636
      %v1638 = vpop.f32.mrb[0].mxu0
      %1639 = vmatprep.mubr.f32.mxu0 0.0
      %1640 = vmatmul.mubr.f32.gmra.mrb[0].mxu0 %v594
      %v1641 = vpop.f32.mrb[0].mxu0
      %v1642 = vadd.f32 0.0, %v1641
      %v1643 = vpop.f32.mrb[0].mxu0
      %1644 = vmatprep.mubr.f32.mxu0 0.0
      %1645 = vmatmul.mubr.f32.gmra.mrb[0].mxu0 %v526
      %v1646 = vpop.f32.mrb[0].mxu0
      %v1647 = vadd.f32 0.0, %v1646
      %v1648 = vpop.f32.mrb[0].mxu0
      %1649 = vmatprep.mubr.f32.mxu0 0.0
      %1650 = vmatmul.mubr.f32.gmra.mrb[0].mxu0 %v595
      %v1651 = vpop.f32.mrb[0].mxu0
      %v1652 = vadd.f32 0.0, %v1651
      %v1653 = vpop.f32.mrb[0].mxu0
      %1654 = vmatprep.mubr.f32.mxu0 0.0
      %1655 = vmatmul.mubr.f32.gmra.mrb[0].mxu0 %v529
      %v1656 = vpop.f32.mrb[0].mxu0
      %v1657 = vadd.f32 0.0, %v1656
      %v1658 = vpop.f32.mrb[0].mxu0
      %1659 = vmatprep.mubr.f32.mxu0 0.0
      %1660 = vmatmul.mubr.f32.gmra.mrb[0].mxu0 %v596
      %v1661 = vpop.f32.mrb[0].mxu0
      %v1662 = vadd.f32 0.0, %v1661
      %v1663 = vpop.f32.mrb[0].mxu0
      %1664 = vmatprep.mubr.f32.mxu0 0.0
      %1665 = vmatmul.mubr.f32.gmra.mrb[0].mxu0 %v532
      %v1666 = vpop.f32.mrb[0].mxu0
      %v1667 = vadd.f32 0.0, %v1666
      %v1668 = vpop.f32.mrb[0].mxu0
      %1669 = vmatprep.mubr.f32.mxu0 0.0
      %1670 = vmatmul.mubr.f32.gmra.mrb[0].mxu0 %v597
      %v1671 = vpop.f32.mrb[0].mxu0
      %v1672 = vadd.f32 0.0, %v1671
      %v1673 = vpop.f32.mrb[0].mxu0
      %1674 = vmatprep.mubr.f32.mxu0 0.0
      %1675 = vmatmul.mubr.f32.gmra.mrb[0].mxu0 %v535
      %v1676 = vpop.f32.mrb[0].mxu0
      %v1677 = vadd.f32 0.0, %v1676
      %v1678 = vpop.f32.mrb[0].mxu0
      %1679 = vmatprep.mubr.f32.mxu0 0.0
      %1680 = vmatmul.mubr.f32.gmra.mrb[0].mxu0 %v598
      %v1681 = vpop.f32.mrb[0].mxu0
      %v1682 = vadd.f32 0.0, %v1681
      %v1683 = vpop.f32.mrb[0].mxu0
      %1684 = vmatprep.mubr.f32.mxu0 0.0
      %1685 = vmatmul.mubr.f32.gmra.mrb[0].mxu0 %v538
      %v1686 = vpop.f32.mrb[0].mxu0
      %v1687 = vadd.f32 0.0, %v1686
      %v1688 = vpop.f32.mrb[0].mxu0
      %1689 = vmatprep.mubr.f32.mxu0 0.0
      %1690 = vmatmul.mubr.f32.gmra.mrb[0].mxu0 %v599
      %v1691 = vpop.f32.mrb[0].mxu0
      %v1692 = vadd.f32 0.0, %v1691
      %v1693 = vpop.f32.mrb[0].mxu0
      %1694 = vmatprep.mubr.f32.mxu0 0.0
      %1695 = vmatmul.mubr.f32.gmra.mrb[0].mxu0 %v541
      %v1696 = vpop.f32.mrb[0].mxu0
      %v1697 = vadd.f32 0.0, %v1696
      %v1698 = vpop.f32.mrb[0].mxu0
      %1699 = vmatprep.mubr.f32.mxu0 0.0
      %1700 = vmatmul.mubr.f32.gmra.mrb[0].mxu0 %v600
      %v1701 = vpop.f32.mrb[0].mxu0
      %v1702 = vadd.f32 0.0, %v1701
      %v1703 = vpop.f32.mrb[0].mxu0
      %1704 = vmatprep.mubr.f32.mxu0 0.0
      %1705 = vmatmul.mubr.f32.gmra.mrb[0].mxu0 %v544
      %v1706 = vpop.f32.mrb[0].mxu0
      %v1707 = vadd.f32 0.0, %v1706
      %v1708 = vpop.f32.mrb[0].mxu0
      %1709 = vdwg.mxu0
      %v1710 = vadd.f32 %v1436, %v1552
      %v1711 = vadd.f32 %v1437, %v1557
      %v1712 = vadd.f32 %v1438, %v1562
      %v1713 = vadd.f32 %v1439, %v1567
      %v1714 = vadd.f32 %v1440, %v1572
      %v1715 = vadd.f32 %v1441, %v1577
      %v1716 = vadd.f32 %v1442, %v1582
      %v1717 = vadd.f32 %v1443, %v1587
      %v1718 = vadd.f32 %v1444, %v1592
      %v1719 = vadd.f32 %v1445, %v1597
      %v1720 = vadd.f32 %v1446, %v1602
      %v1721 = vadd.f32 %v1447, %v1607
      %v1722 = vadd.f32 %v1448, %v1612
      %v1723 = vadd.f32 %v1449, %v1617
      %v1724 = vadd.f32 %v1450, %v1622
      %v1725 = vadd.f32 %v1451, %v1627
      %v1726 = vadd.f32 %v1452, %v1632
      %v1727 = vadd.f32 %v1453, %v1637
      %v1728 = vadd.f32 %v1454, %v1642
      %v1729 = vadd.f32 %v1455, %v1647
      %v1730 = vadd.f32 %v1456, %v1652
      %v1731 = vadd.f32 %v1457, %v1657
      %v1732 = vadd.f32 %v1458, %v1662
      %v1733 = vadd.f32 %v1459, %v1667
      %v1734 = vadd.f32 %v1460, %v1672
      %v1735 = vadd.f32 %v1461, %v1677
      %v1736 = vadd.f32 %v1462, %v1682
      %v1737 = vadd.f32 %v1463, %v1687
      %v1738 = vadd.f32 %v1464, %v1692
      %v1739 = vadd.f32 %v1465, %v1697
      %v1740 = vadd.f32 %v1466, %v1702
      %v1741 = vadd.f32 %v1467, %v1707
      %s1742 = scalar_lea.vmem %s3, 512
      %v1743 = vld [vmem:[%s1742] sm:$0xff]
      %v1744 = vld [vmem:[%s1742 + $0x8] sm:$0xff]
      %v1745 = vld [vmem:[%s1742 + $0x10] sm:$0xff]
      %v1746 = vld [vmem:[%s1742 + $0x18] sm:$0xff]
      %v1747 = vld [vmem:[%s1742 + $0x20] sm:$0xff]
      %v1748 = vld [vmem:[%s1742 + $0x28] sm:$0xff]
      %v1749 = vld [vmem:[%s1742 + $0x30] sm:$0xff]
      %v1750 = vld [vmem:[%s1742 + $0x38] sm:$0xff]
      %v1751 = vld [vmem:[%s1742 + $0x40] sm:$0xff]
      %v1752 = vld [vmem:[%s1742 + $0x48] sm:$0xff]
      %v1753 = vld [vmem:[%s1742 + $0x50] sm:$0xff]
      %v1754 = vld [vmem:[%s1742 + $0x58] sm:$0xff]
      %v1755 = vld [vmem:[%s1742 + $0x60] sm:$0xff]
      %v1756 = vld [vmem:[%s1742 + $0x68] sm:$0xff]
      %v1757 = vld [vmem:[%s1742 + $0x70] sm:$0xff]
      %v1758 = vld [vmem:[%s1742 + $0x78] sm:$0xff]
      %1759 = vmatprep.subr.mxu0 0.0
      %1760 = vmatpush1.msra.mxu0 %v1743
      %1761 = vmatprep.subr.mxu0 0.0
      %1762 = vmatpush1.msra.mxu0 %v1744
      %1763 = vmatprep.subr.mxu0 0.0
      %1764 = vmatpush1.msra.mxu0 %v1745
      %1765 = vmatprep.subr.mxu0 0.0
      %1766 = vmatpush1.msra.mxu0 %v1746
      %1767 = vmatprep.subr.mxu0 0.0
      %1768 = vmatpush1.msra.mxu0 %v1747
      %1769 = vmatprep.subr.mxu0 0.0
      %1770 = vmatpush1.msra.mxu0 %v1748
      %1771 = vmatprep.subr.mxu0 0.0
      %1772 = vmatpush1.msra.mxu0 %v1749
      %1773 = vmatprep.subr.mxu0 0.0
      %1774 = vmatpush1.msra.mxu0 %v1750
      %1775 = vmatprep.subr.mxu0 0.0
      %1776 = vmatpush1.msra.mxu0 %v1751
      %1777 = vmatprep.subr.mxu0 0.0
      %1778 = vmatpush1.msra.mxu0 %v1752
      %1779 = vmatprep.subr.mxu0 0.0
      %1780 = vmatpush1.msra.mxu0 %v1753
      %1781 = vmatprep.subr.mxu0 0.0
      %1782 = vmatpush1.msra.mxu0 %v1754
      %1783 = vmatprep.subr.mxu0 0.0
      %1784 = vmatpush1.msra.mxu0 %v1755
      %1785 = vmatprep.subr.mxu0 0.0
      %1786 = vmatpush1.msra.mxu0 %v1756
      %1787 = vmatprep.subr.mxu0 0.0
      %1788 = vmatpush1.msra.mxu0 %v1757
      %1789 = vmatprep.subr.mxu0 0.0
      %1790 = vmatpush1.msra.mxu0 %v1758
      %1791 = vmatprep.subr.mxu0 0.0
      %1792 = vmatpush1.msra.mxu0 0.0
      %1793 = vmatprep.subr.mxu0 0.0
      %1794 = vmatpush1.msra.mxu0 0.0
      %1795 = vmatprep.subr.mxu0 0.0
      %1796 = vmatpush1.msra.mxu0 0.0
      %1797 = vmatprep.subr.mxu0 0.0
      %1798 = vmatpush1.msra.mxu0 0.0
      %1799 = vmatprep.subr.mxu0 0.0
      %1800 = vmatpush1.msra.mxu0 0.0
      %1801 = vmatprep.subr.mxu0 0.0
      %1802 = vmatpush1.msra.mxu0 0.0
      %1803 = vmatprep.subr.mxu0 0.0
      %1804 = vmatpush1.msra.mxu0 0.0
      %1805 = vmatprep.subr.mxu0 0.0
      %1806 = vmatpush1.msra.mxu0 0.0
      %1807 = vmatprep.subr.mxu0 0.0
      %1808 = vmatpush1.msra.mxu0 0.0
      %1809 = vmatprep.subr.mxu0 0.0
      %1810 = vmatpush1.msra.mxu0 0.0
      %1811 = vmatprep.subr.mxu0 0.0
      %1812 = vmatpush1.msra.mxu0 0.0
      %1813 = vmatprep.subr.mxu0 0.0
      %1814 = vmatpush1.msra.mxu0 0.0
      %1815 = vmatprep.subr.mxu0 0.0
      %1816 = vmatpush1.msra.mxu0 0.0
      %1817 = vmatprep.subr.mxu0 0.0
      %1818 = vmatpush1.msra.mxu0 0.0
      %1819 = vmatprep.subr.mxu0 0.0
      %1820 = vmatpush1.msra.mxu0 0.0
      %1821 = vmatprep.subr.mxu0 0.0
      %1822 = vmatpush1.msra.mxu0 0.0
      %1823 = vmatprep.mubr.f32.mxu0 0.0
      %1824 = vmatmul.mubr.f32.gmra.mrb[0].mxu0 %v425
      %v1825 = vpop.f32.mrb[0].mxu0
      %v1826 = vadd.f32 0.0, %v1825
      %v1827 = vpop.f32.mrb[0].mxu0
      %1828 = vmatprep.mubr.f32.mxu0 0.0
      %1829 = vmatmul.mubr.f32.gmra.mrb[0].mxu0 %v426
      %v1830 = vpop.f32.mrb[0].mxu0
      %v1831 = vadd.f32 0.0, %v1830
      %v1832 = vpop.f32.mrb[0].mxu0
      %1833 = vmatprep.mubr.f32.mxu0 0.0
      %1834 = vmatmul.mubr.f32.gmra.mrb[0].mxu0 %v427
      %v1835 = vpop.f32.mrb[0].mxu0
      %v1836 = vadd.f32 0.0, %v1835
      %v1837 = vpop.f32.mrb[0].mxu0
      %1838 = vmatprep.mubr.f32.mxu0 0.0
      %1839 = vmatmul.mubr.f32.gmra.mrb[0].mxu0 %v428
      %v1840 = vpop.f32.mrb[0].mxu0
      %v1841 = vadd.f32 0.0, %v1840
      %v1842 = vpop.f32.mrb[0].mxu0
      %1843 = vmatprep.mubr.f32.mxu0 0.0
      %1844 = vmatmul.mubr.f32.gmra.mrb[0].mxu0 %v429
      %v1845 = vpop.f32.mrb[0].mxu0
      %v1846 = vadd.f32 0.0, %v1845
      %v1847 = vpop.f32.mrb[0].mxu0
      %1848 = vmatprep.mubr.f32.mxu0 0.0
      %1849 = vmatmul.mubr.f32.gmra.mrb[0].mxu0 %v430
      %v1850 = vpop.f32.mrb[0].mxu0
      %v1851 = vadd.f32 0.0, %v1850
      %v1852 = vpop.f32.mrb[0].mxu0
      %1853 = vmatprep.mubr.f32.mxu0 0.0
      %1854 = vmatmul.mubr.f32.gmra.mrb[0].mxu0 %v431
      %v1855 = vpop.f32.mrb[0].mxu0
      %v1856 = vadd.f32 0.0, %v1855
      %v1857 = vpop.f32.mrb[0].mxu0
      %1858 = vmatprep.mubr.f32.mxu0 0.0
      %1859 = vmatmul.mubr.f32.gmra.mrb[0].mxu0 %v432
      %v1860 = vpop.f32.mrb[0].mxu0
      %v1861 = vadd.f32 0.0, %v1860
      %v1862 = vpop.f32.mrb[0].mxu0
      %1863 = vmatprep.mubr.f32.mxu0 0.0
      %1864 = vmatmul.mubr.f32.gmra.mrb[0].mxu0 %v433
      %v1865 = vpop.f32.mrb[0].mxu0
      %v1866 = vadd.f32 0.0, %v1865
      %v1867 = vpop.f32.mrb[0].mxu0
      %1868 = vmatprep.mubr.f32.mxu0 0.0
      %1869 = vmatmul.mubr.f32.gmra.mrb[0].mxu0 %v434
      %v1870 = vpop.f32.mrb[0].mxu0
      %v1871 = vadd.f32 0.0, %v1870
      %v1872 = vpop.f32.mrb[0].mxu0
      %1873 = vmatprep.mubr.f32.mxu0 0.0
      %1874 = vmatmul.mubr.f32.gmra.mrb[0].mxu0 %v435
      %v1875 = vpop.f32.mrb[0].mxu0
      %v1876 = vadd.f32 0.0, %v1875
      %v1877 = vpop.f32.mrb[0].mxu0
      %1878 = vmatprep.mubr.f32.mxu0 0.0
      %1879 = vmatmul.mubr.f32.gmra.mrb[0].mxu0 %v436
      %v1880 = vpop.f32.mrb[0].mxu0
      %v1881 = vadd.f32 0.0, %v1880
      %v1882 = vpop.f32.mrb[0].mxu0
      %1883 = vmatprep.mubr.f32.mxu0 0.0
      %1884 = vmatmul.mubr.f32.gmra.mrb[0].mxu0 %v437
      %v1885 = vpop.f32.mrb[0].mxu0
      %v1886 = vadd.f32 0.0, %v1885
      %v1887 = vpop.f32.mrb[0].mxu0
      %1888 = vmatprep.mubr.f32.mxu0 0.0
      %1889 = vmatmul.mubr.f32.gmra.mrb[0].mxu0 %v438
      %v1890 = vpop.f32.mrb[0].mxu0
      %v1891 = vadd.f32 0.0, %v1890
      %v1892 = vpop.f32.mrb[0].mxu0
      %1893 = vmatprep.mubr.f32.mxu0 0.0
      %1894 = vmatmul.mubr.f32.gmra.mrb[0].mxu0 %v439
      %v1895 = vpop.f32.mrb[0].mxu0
      %v1896 = vadd.f32 0.0, %v1895
      %v1897 = vpop.f32.mrb[0].mxu0
      %1898 = vmatprep.mubr.f32.mxu0 0.0
      %1899 = vmatmul.mubr.f32.gmra.mrb[0].mxu0 %v440
      %v1900 = vpop.f32.mrb[0].mxu0
      %v1901 = vadd.f32 0.0, %v1900
      %v1902 = vpop.f32.mrb[0].mxu0
      %1903 = vmatprep.mubr.f32.mxu0 0.0
      %1904 = vmatmul.mubr.f32.gmra.mrb[0].mxu0 %v441
      %v1905 = vpop.f32.mrb[0].mxu0
      %v1906 = vadd.f32 0.0, %v1905
      %v1907 = vpop.f32.mrb[0].mxu0
      %1908 = vmatprep.mubr.f32.mxu0 0.0
      %1909 = vmatmul.mubr.f32.gmra.mrb[0].mxu0 %v442
      %v1910 = vpop.f32.mrb[0].mxu0
      %v1911 = vadd.f32 0.0, %v1910
      %v1912 = vpop.f32.mrb[0].mxu0
      %1913 = vmatprep.mubr.f32.mxu0 0.0
      %1914 = vmatmul.mubr.f32.gmra.mrb[0].mxu0 %v443
      %v1915 = vpop.f32.mrb[0].mxu0
      %v1916 = vadd.f32 0.0, %v1915
      %v1917 = vpop.f32.mrb[0].mxu0
      %1918 = vmatprep.mubr.f32.mxu0 0.0
      %1919 = vmatmul.mubr.f32.gmra.mrb[0].mxu0 %v444
      %v1920 = vpop.f32.mrb[0].mxu0
      %v1921 = vadd.f32 0.0, %v1920
      %v1922 = vpop.f32.mrb[0].mxu0
      %1923 = vmatprep.mubr.f32.mxu0 0.0
      %1924 = vmatmul.mubr.f32.gmra.mrb[0].mxu0 %v445
      %v1925 = vpop.f32.mrb[0].mxu0
      %v1926 = vadd.f32 0.0, %v1925
      %v1927 = vpop.f32.mrb[0].mxu0
      %1928 = vmatprep.mubr.f32.mxu0 0.0
      %1929 = vmatmul.mubr.f32.gmra.mrb[0].mxu0 %v446
      %v1930 = vpop.f32.mrb[0].mxu0
      %v1931 = vadd.f32 0.0, %v1930
      %v1932 = vpop.f32.mrb[0].mxu0
      %1933 = vmatprep.mubr.f32.mxu0 0.0
      %1934 = vmatmul.mubr.f32.gmra.mrb[0].mxu0 %v447
      %v1935 = vpop.f32.mrb[0].mxu0
      %v1936 = vadd.f32 0.0, %v1935
      %v1937 = vpop.f32.mrb[0].mxu0
      %1938 = vmatprep.mubr.f32.mxu0 0.0
      %1939 = vmatmul.mubr.f32.gmra.mrb[0].mxu0 %v448
      %v1940 = vpop.f32.mrb[0].mxu0
      %v1941 = vadd.f32 0.0, %v1940
      %v1942 = vpop.f32.mrb[0].mxu0
      %1943 = vmatprep.mubr.f32.mxu0 0.0
      %1944 = vmatmul.mubr.f32.gmra.mrb[0].mxu0 %v449
      %v1945 = vpop.f32.mrb[0].mxu0
      %v1946 = vadd.f32 0.0, %v1945
      %v1947 = vpop.f32.mrb[0].mxu0
      %1948 = vmatprep.mubr.f32.mxu0 0.0
      %1949 = vmatmul.mubr.f32.gmra.mrb[0].mxu0 %v450
      %v1950 = vpop.f32.mrb[0].mxu0
      %v1951 = vadd.f32 0.0, %v1950
      %v1952 = vpop.f32.mrb[0].mxu0
      %1953 = vmatprep.mubr.f32.mxu0 0.0
      %1954 = vmatmul.mubr.f32.gmra.mrb[0].mxu0 %v451
      %v1955 = vpop.f32.mrb[0].mxu0
      %v1956 = vadd.f32 0.0, %v1955
      %v1957 = vpop.f32.mrb[0].mxu0
      %1958 = vmatprep.mubr.f32.mxu0 0.0
      %1959 = vmatmul.mubr.f32.gmra.mrb[0].mxu0 %v452
      %v1960 = vpop.f32.mrb[0].mxu0
      %v1961 = vadd.f32 0.0, %v1960
      %v1962 = vpop.f32.mrb[0].mxu0
      %1963 = vmatprep.mubr.f32.mxu0 0.0
      %1964 = vmatmul.mubr.f32.gmra.mrb[0].mxu0 %v453
      %v1965 = vpop.f32.mrb[0].mxu0
      %v1966 = vadd.f32 0.0, %v1965
      %v1967 = vpop.f32.mrb[0].mxu0
      %1968 = vmatprep.mubr.f32.mxu0 0.0
      %1969 = vmatmul.mubr.f32.gmra.mrb[0].mxu0 %v454
      %v1970 = vpop.f32.mrb[0].mxu0
      %v1971 = vadd.f32 0.0, %v1970
      %v1972 = vpop.f32.mrb[0].mxu0
      %1973 = vmatprep.mubr.f32.mxu0 0.0
      %1974 = vmatmul.mubr.f32.gmra.mrb[0].mxu0 %v455
      %v1975 = vpop.f32.mrb[0].mxu0
      %v1976 = vadd.f32 0.0, %v1975
      %v1977 = vpop.f32.mrb[0].mxu0
      %1978 = vmatprep.mubr.f32.mxu0 0.0
      %1979 = vmatmul.mubr.f32.gmra.mrb[0].mxu0 %v456
      %v1980 = vpop.f32.mrb[0].mxu0
      %v1981 = vadd.f32 0.0, %v1980
      %v1982 = vpop.f32.mrb[0].mxu0
      %1983 = vdwg.mxu0
      %v1984 = vadd.f32 %v1710, %v1826
      %v1985 = vadd.f32 %v1711, %v1831
      %v1986 = vadd.f32 %v1712, %v1836
      %v1987 = vadd.f32 %v1713, %v1841
      %v1988 = vadd.f32 %v1714, %v1846
      %v1989 = vadd.f32 %v1715, %v1851
      %v1990 = vadd.f32 %v1716, %v1856
      %v1991 = vadd.f32 %v1717, %v1861
      %v1992 = vadd.f32 %v1718, %v1866
      %v1993 = vadd.f32 %v1719, %v1871
      %v1994 = vadd.f32 %v1720, %v1876
      %v1995 = vadd.f32 %v1721, %v1881
      %v1996 = vadd.f32 %v1722, %v1886
      %v1997 = vadd.f32 %v1723, %v1891
      %v1998 = vadd.f32 %v1724, %v1896
      %v1999 = vadd.f32 %v1725, %v1901
      %v2000 = vadd.f32 %v1726, %v1906
      %v2001 = vadd.f32 %v1727, %v1911
      %v2002 = vadd.f32 %v1728, %v1916
      %v2003 = vadd.f32 %v1729, %v1921
      %v2004 = vadd.f32 %v1730, %v1926
      %v2005 = vadd.f32 %v1731, %v1931
      %v2006 = vadd.f32 %v1732, %v1936
      %v2007 = vadd.f32 %v1733, %v1941
      %v2008 = vadd.f32 %v1734, %v1946
      %v2009 = vadd.f32 %v1735, %v1951
      %v2010 = vadd.f32 %v1736, %v1956
      %v2011 = vadd.f32 %v1737, %v1961
      %v2012 = vadd.f32 %v1738, %v1966
      %v2013 = vadd.f32 %v1739, %v1971
      %v2014 = vadd.f32 %v1740, %v1976
      %v2015 = vadd.f32 %v1741, %v1981
      %s2016 = scalar_lea.vmem %s3, 640
      %v2017 = vld [vmem:[%s2016] sm:$0xff]
      %v2018 = vld [vmem:[%s2016 + $0x8] sm:$0xff]
      %v2019 = vld [vmem:[%s2016 + $0x10] sm:$0xff]
      %v2020 = vld [vmem:[%s2016 + $0x18] sm:$0xff]
      %v2021 = vld [vmem:[%s2016 + $0x20] sm:$0xff]
      %v2022 = vld [vmem:[%s2016 + $0x28] sm:$0xff]
      %v2023 = vld [vmem:[%s2016 + $0x30] sm:$0xff]
      %v2024 = vld [vmem:[%s2016 + $0x38] sm:$0xff]
      %v2025 = vld [vmem:[%s2016 + $0x40] sm:$0xff]
      %v2026 = vld [vmem:[%s2016 + $0x48] sm:$0xff]
      %v2027 = vld [vmem:[%s2016 + $0x50] sm:$0xff]
      %v2028 = vld [vmem:[%s2016 + $0x58] sm:$0xff]
      %v2029 = vld [vmem:[%s2016 + $0x60] sm:$0xff]
      %v2030 = vld [vmem:[%s2016 + $0x68] sm:$0xff]
      %v2031 = vld [vmem:[%s2016 + $0x70] sm:$0xff]
      %v2032 = vld [vmem:[%s2016 + $0x78] sm:$0xff]
      %2033 = vmatprep.subr.mxu0 0.0
      %2034 = vmatpush1.msra.mxu0 %v2017
      %2035 = vmatprep.subr.mxu0 0.0
      %2036 = vmatpush1.msra.mxu0 %v2018
      %2037 = vmatprep.subr.mxu0 0.0
      %2038 = vmatpush1.msra.mxu0 %v2019
      %2039 = vmatprep.subr.mxu0 0.0
      %2040 = vmatpush1.msra.mxu0 %v2020
      %2041 = vmatprep.subr.mxu0 0.0
      %2042 = vmatpush1.msra.mxu0 %v2021
      %2043 = vmatprep.subr.mxu0 0.0
      %2044 = vmatpush1.msra.mxu0 %v2022
      %2045 = vmatprep.subr.mxu0 0.0
      %2046 = vmatpush1.msra.mxu0 %v2023
      %2047 = vmatprep.subr.mxu0 0.0
      %2048 = vmatpush1.msra.mxu0 %v2024
      %2049 = vmatprep.subr.mxu0 0.0
      %2050 = vmatpush1.msra.mxu0 %v2025
      %2051 = vmatprep.subr.mxu0 0.0
      %2052 = vmatpush1.msra.mxu0 %v2026
      %2053 = vmatprep.subr.mxu0 0.0
      %2054 = vmatpush1.msra.mxu0 %v2027
      %2055 = vmatprep.subr.mxu0 0.0
      %2056 = vmatpush1.msra.mxu0 %v2028
      %2057 = vmatprep.subr.mxu0 0.0
      %2058 = vmatpush1.msra.mxu0 %v2029
      %2059 = vmatprep.subr.mxu0 0.0
      %2060 = vmatpush1.msra.mxu0 %v2030
      %2061 = vmatprep.subr.mxu0 0.0
      %2062 = vmatpush1.msra.mxu0 %v2031
      %2063 = vmatprep.subr.mxu0 0.0
      %2064 = vmatpush1.msra.mxu0 %v2032
      %2065 = vmatprep.subr.mxu0 0.0
      %2066 = vmatpush1.msra.mxu0 0.0
      %2067 = vmatprep.subr.mxu0 0.0
      %2068 = vmatpush1.msra.mxu0 0.0
      %2069 = vmatprep.subr.mxu0 0.0
      %2070 = vmatpush1.msra.mxu0 0.0
      %2071 = vmatprep.subr.mxu0 0.0
      %2072 = vmatpush1.msra.mxu0 0.0
      %2073 = vmatprep.subr.mxu0 0.0
      %2074 = vmatpush1.msra.mxu0 0.0
      %2075 = vmatprep.subr.mxu0 0.0
      %2076 = vmatpush1.msra.mxu0 0.0
      %2077 = vmatprep.subr.mxu0 0.0
      %2078 = vmatpush1.msra.mxu0 0.0
      %2079 = vmatprep.subr.mxu0 0.0
      %2080 = vmatpush1.msra.mxu0 0.0
      %2081 = vmatprep.subr.mxu0 0.0
      %2082 = vmatpush1.msra.mxu0 0.0
      %2083 = vmatprep.subr.mxu0 0.0
      %2084 = vmatpush1.msra.mxu0 0.0
      %2085 = vmatprep.subr.mxu0 0.0
      %2086 = vmatpush1.msra.mxu0 0.0
      %2087 = vmatprep.subr.mxu0 0.0
      %2088 = vmatpush1.msra.mxu0 0.0
      %2089 = vmatprep.subr.mxu0 0.0
      %2090 = vmatpush1.msra.mxu0 0.0
      %2091 = vmatprep.subr.mxu0 0.0
      %2092 = vmatpush1.msra.mxu0 0.0
      %2093 = vmatprep.subr.mxu0 0.0
      %2094 = vmatpush1.msra.mxu0 0.0
      %2095 = vmatprep.subr.mxu0 0.0
      %2096 = vmatpush1.msra.mxu0 0.0
      %2097 = vmatprep.mubr.f32.mxu0 0.0
      %2098 = vmatmul.mubr.f32.gmra.mrb[0].mxu0 %v608
      %v2099 = vpop.f32.mrb[0].mxu0
      %v2100 = vadd.f32 0.0, %v2099
      %v2101 = vpop.f32.mrb[0].mxu0
      %2102 = vmatprep.mubr.f32.mxu0 0.0
      %2103 = vmatmul.mubr.f32.gmra.mrb[0].mxu0 %v694
      %v2104 = vpop.f32.mrb[0].mxu0
      %v2105 = vadd.f32 0.0, %v2104
      %v2106 = vpop.f32.mrb[0].mxu0
      %2107 = vmatprep.mubr.f32.mxu0 0.0
      %2108 = vmatmul.mubr.f32.gmra.mrb[0].mxu0 %v611
      %v2109 = vpop.f32.mrb[0].mxu0
      %v2110 = vadd.f32 0.0, %v2109
      %v2111 = vpop.f32.mrb[0].mxu0
      %2112 = vmatprep.mubr.f32.mxu0 0.0
      %2113 = vmatmul.mubr.f32.gmra.mrb[0].mxu0 %v695
      %v2114 = vpop.f32.mrb[0].mxu0
      %v2115 = vadd.f32 0.0, %v2114
      %v2116 = vpop.f32.mrb[0].mxu0
      %2117 = vmatprep.mubr.f32.mxu0 0.0
      %2118 = vmatmul.mubr.f32.gmra.mrb[0].mxu0 %v614
      %v2119 = vpop.f32.mrb[0].mxu0
      %v2120 = vadd.f32 0.0, %v2119
      %v2121 = vpop.f32.mrb[0].mxu0
      %2122 = vmatprep.mubr.f32.mxu0 0.0
      %2123 = vmatmul.mubr.f32.gmra.mrb[0].mxu0 %v696
      %v2124 = vpop.f32.mrb[0].mxu0
      %v2125 = vadd.f32 0.0, %v2124
      %v2126 = vpop.f32.mrb[0].mxu0
      %2127 = vmatprep.mubr.f32.mxu0 0.0
      %2128 = vmatmul.mubr.f32.gmra.mrb[0].mxu0 %v617
      %v2129 = vpop.f32.mrb[0].mxu0
      %v2130 = vadd.f32 0.0, %v2129
      %v2131 = vpop.f32.mrb[0].mxu0
      %2132 = vmatprep.mubr.f32.mxu0 0.0
      %2133 = vmatmul.mubr.f32.gmra.mrb[0].mxu0 %v697
      %v2134 = vpop.f32.mrb[0].mxu0
      %v2135 = vadd.f32 0.0, %v2134
      %v2136 = vpop.f32.mrb[0].mxu0
      %2137 = vmatprep.mubr.f32.mxu0 0.0
      %2138 = vmatmul.mubr.f32.gmra.mrb[0].mxu0 %v620
      %v2139 = vpop.f32.mrb[0].mxu0
      %v2140 = vadd.f32 0.0, %v2139
      %v2141 = vpop.f32.mrb[0].mxu0
      %2142 = vmatprep.mubr.f32.mxu0 0.0
      %2143 = vmatmul.mubr.f32.gmra.mrb[0].mxu0 %v698
      %v2144 = vpop.f32.mrb[0].mxu0
      %v2145 = vadd.f32 0.0, %v2144
      %v2146 = vpop.f32.mrb[0].mxu0
      %2147 = vmatprep.mubr.f32.mxu0 0.0
      %2148 = vmatmul.mubr.f32.gmra.mrb[0].mxu0 %v623
      %v2149 = vpop.f32.mrb[0].mxu0
      %v2150 = vadd.f32 0.0, %v2149
      %v2151 = vpop.f32.mrb[0].mxu0
      %2152 = vmatprep.mubr.f32.mxu0 0.0
      %2153 = vmatmul.mubr.f32.gmra.mrb[0].mxu0 %v699
      %v2154 = vpop.f32.mrb[0].mxu0
      %v2155 = vadd.f32 0.0, %v2154
      %v2156 = vpop.f32.mrb[0].mxu0
      %2157 = vmatprep.mubr.f32.mxu0 0.0
      %2158 = vmatmul.mubr.f32.gmra.mrb[0].mxu0 %v626
      %v2159 = vpop.f32.mrb[0].mxu0
      %v2160 = vadd.f32 0.0, %v2159
      %v2161 = vpop.f32.mrb[0].mxu0
      %2162 = vmatprep.mubr.f32.mxu0 0.0
      %2163 = vmatmul.mubr.f32.gmra.mrb[0].mxu0 %v700
      %v2164 = vpop.f32.mrb[0].mxu0
      %v2165 = vadd.f32 0.0, %v2164
      %v2166 = vpop.f32.mrb[0].mxu0
      %2167 = vmatprep.mubr.f32.mxu0 0.0
      %2168 = vmatmul.mubr.f32.gmra.mrb[0].mxu0 %v629
      %v2169 = vpop.f32.mrb[0].mxu0
      %v2170 = vadd.f32 0.0, %v2169
      %v2171 = vpop.f32.mrb[0].mxu0
      %2172 = vmatprep.mubr.f32.mxu0 0.0
      %2173 = vmatmul.mubr.f32.gmra.mrb[0].mxu0 %v701
      %v2174 = vpop.f32.mrb[0].mxu0
      %v2175 = vadd.f32 0.0, %v2174
      %v2176 = vpop.f32.mrb[0].mxu0
      %2177 = vmatprep.mubr.f32.mxu0 0.0
      %2178 = vmatmul.mubr.f32.gmra.mrb[0].mxu0 %v632
      %v2179 = vpop.f32.mrb[0].mxu0
      %v2180 = vadd.f32 0.0, %v2179
      %v2181 = vpop.f32.mrb[0].mxu0
      %2182 = vmatprep.mubr.f32.mxu0 0.0
      %2183 = vmatmul.mubr.f32.gmra.mrb[0].mxu0 %v702
      %v2184 = vpop.f32.mrb[0].mxu0
      %v2185 = vadd.f32 0.0, %v2184
      %v2186 = vpop.f32.mrb[0].mxu0
      %2187 = vmatprep.mubr.f32.mxu0 0.0
      %2188 = vmatmul.mubr.f32.gmra.mrb[0].mxu0 %v635
      %v2189 = vpop.f32.mrb[0].mxu0
      %v2190 = vadd.f32 0.0, %v2189
      %v2191 = vpop.f32.mrb[0].mxu0
      %2192 = vmatprep.mubr.f32.mxu0 0.0
      %2193 = vmatmul.mubr.f32.gmra.mrb[0].mxu0 %v703
      %v2194 = vpop.f32.mrb[0].mxu0
      %v2195 = vadd.f32 0.0, %v2194
      %v2196 = vpop.f32.mrb[0].mxu0
      %2197 = vmatprep.mubr.f32.mxu0 0.0
      %2198 = vmatmul.mubr.f32.gmra.mrb[0].mxu0 %v638
      %v2199 = vpop.f32.mrb[0].mxu0
      %v2200 = vadd.f32 0.0, %v2199
      %v2201 = vpop.f32.mrb[0].mxu0
      %2202 = vmatprep.mubr.f32.mxu0 0.0
      %2203 = vmatmul.mubr.f32.gmra.mrb[0].mxu0 %v704
      %v2204 = vpop.f32.mrb[0].mxu0
      %v2205 = vadd.f32 0.0, %v2204
      %v2206 = vpop.f32.mrb[0].mxu0
      %2207 = vmatprep.mubr.f32.mxu0 0.0
      %2208 = vmatmul.mubr.f32.gmra.mrb[0].mxu0 %v641
      %v2209 = vpop.f32.mrb[0].mxu0
      %v2210 = vadd.f32 0.0, %v2209
      %v2211 = vpop.f32.mrb[0].mxu0
      %2212 = vmatprep.mubr.f32.mxu0 0.0
      %2213 = vmatmul.mubr.f32.gmra.mrb[0].mxu0 %v705
      %v2214 = vpop.f32.mrb[0].mxu0
      %v2215 = vadd.f32 0.0, %v2214
      %v2216 = vpop.f32.mrb[0].mxu0
      %2217 = vmatprep.mubr.f32.mxu0 0.0
      %2218 = vmatmul.mubr.f32.gmra.mrb[0].mxu0 %v644
      %v2219 = vpop.f32.mrb[0].mxu0
      %v2220 = vadd.f32 0.0, %v2219
      %v2221 = vpop.f32.mrb[0].mxu0
      %2222 = vmatprep.mubr.f32.mxu0 0.0
      %2223 = vmatmul.mubr.f32.gmra.mrb[0].mxu0 %v706
      %v2224 = vpop.f32.mrb[0].mxu0
      %v2225 = vadd.f32 0.0, %v2224
      %v2226 = vpop.f32.mrb[0].mxu0
      %2227 = vmatprep.mubr.f32.mxu0 0.0
      %2228 = vmatmul.mubr.f32.gmra.mrb[0].mxu0 %v647
      %v2229 = vpop.f32.mrb[0].mxu0
      %v2230 = vadd.f32 0.0, %v2229
      %v2231 = vpop.f32.mrb[0].mxu0
      %2232 = vmatprep.mubr.f32.mxu0 0.0
      %2233 = vmatmul.mubr.f32.gmra.mrb[0].mxu0 %v707
      %v2234 = vpop.f32.mrb[0].mxu0
      %v2235 = vadd.f32 0.0, %v2234
      %v2236 = vpop.f32.mrb[0].mxu0
      %2237 = vmatprep.mubr.f32.mxu0 0.0
      %2238 = vmatmul.mubr.f32.gmra.mrb[0].mxu0 %v650
      %v2239 = vpop.f32.mrb[0].mxu0
      %v2240 = vadd.f32 0.0, %v2239
      %v2241 = vpop.f32.mrb[0].mxu0
      %2242 = vmatprep.mubr.f32.mxu0 0.0
      %2243 = vmatmul.mubr.f32.gmra.mrb[0].mxu0 %v708
      %v2244 = vpop.f32.mrb[0].mxu0
      %v2245 = vadd.f32 0.0, %v2244
      %v2246 = vpop.f32.mrb[0].mxu0
      %2247 = vmatprep.mubr.f32.mxu0 0.0
      %2248 = vmatmul.mubr.f32.gmra.mrb[0].mxu0 %v653
      %v2249 = vpop.f32.mrb[0].mxu0
      %v2250 = vadd.f32 0.0, %v2249
      %v2251 = vpop.f32.mrb[0].mxu0
      %2252 = vmatprep.mubr.f32.mxu0 0.0
      %2253 = vmatmul.mubr.f32.gmra.mrb[0].mxu0 %v709
      %v2254 = vpop.f32.mrb[0].mxu0
      %v2255 = vadd.f32 0.0, %v2254
      %v2256 = vpop.f32.mrb[0].mxu0
      %2257 = vdwg.mxu0
      %v2258 = vadd.f32 %v1984, %v2100
      %v2259 = vadd.f32 %v1985, %v2105
      %v2260 = vadd.f32 %v1986, %v2110
      %v2261 = vadd.f32 %v1987, %v2115
      %v2262 = vadd.f32 %v1988, %v2120
      %v2263 = vadd.f32 %v1989, %v2125
      %v2264 = vadd.f32 %v1990, %v2130
      %v2265 = vadd.f32 %v1991, %v2135
      %v2266 = vadd.f32 %v1992, %v2140
      %v2267 = vadd.f32 %v1993, %v2145
      %v2268 = vadd.f32 %v1994, %v2150
      %v2269 = vadd.f32 %v1995, %v2155
      %v2270 = vadd.f32 %v1996, %v2160
      %v2271 = vadd.f32 %v1997, %v2165
      %v2272 = vadd.f32 %v1998, %v2170
      %v2273 = vadd.f32 %v1999, %v2175
      %v2274 = vadd.f32 %v2000, %v2180
      %v2275 = vadd.f32 %v2001, %v2185
      %v2276 = vadd.f32 %v2002, %v2190
      %v2277 = vadd.f32 %v2003, %v2195
      %v2278 = vadd.f32 %v2004, %v2200
      %v2279 = vadd.f32 %v2005, %v2205
      %v2280 = vadd.f32 %v2006, %v2210
      %v2281 = vadd.f32 %v2007, %v2215
      %v2282 = vadd.f32 %v2008, %v2220
      %v2283 = vadd.f32 %v2009, %v2225
      %v2284 = vadd.f32 %v2010, %v2230
      %v2285 = vadd.f32 %v2011, %v2235
      %v2286 = vadd.f32 %v2012, %v2240
      %v2287 = vadd.f32 %v2013, %v2245
      %v2288 = vadd.f32 %v2014, %v2250
      %v2289 = vadd.f32 %v2015, %v2255
      %s2290 = scalar_lea.vmem %s3, 768
      %v2291 = vld [vmem:[%s2290] sm:$0xff]
      %v2292 = vld [vmem:[%s2290 + $0x8] sm:$0xff]
      %v2293 = vld [vmem:[%s2290 + $0x10] sm:$0xff]
      %v2294 = vld [vmem:[%s2290 + $0x18] sm:$0xff]
      %v2295 = vld [vmem:[%s2290 + $0x20] sm:$0xff]
      %v2296 = vld [vmem:[%s2290 + $0x28] sm:$0xff]
      %v2297 = vld [vmem:[%s2290 + $0x30] sm:$0xff]
      %v2298 = vld [vmem:[%s2290 + $0x38] sm:$0xff]
      %v2299 = vld [vmem:[%s2290 + $0x40] sm:$0xff]
      %v2300 = vld [vmem:[%s2290 + $0x48] sm:$0xff]
      %v2301 = vld [vmem:[%s2290 + $0x50] sm:$0xff]
      %v2302 = vld [vmem:[%s2290 + $0x58] sm:$0xff]
      %v2303 = vld [vmem:[%s2290 + $0x60] sm:$0xff]
      %v2304 = vld [vmem:[%s2290 + $0x68] sm:$0xff]
      %v2305 = vld [vmem:[%s2290 + $0x70] sm:$0xff]
      %v2306 = vld [vmem:[%s2290 + $0x78] sm:$0xff]
      %2307 = vmatprep.subr.mxu0 0.0
      %2308 = vmatpush1.msra.mxu0 %v2291
      %2309 = vmatprep.subr.mxu0 0.0
      %2310 = vmatpush1.msra.mxu0 %v2292
      %2311 = vmatprep.subr.mxu0 0.0
      %2312 = vmatpush1.msra.mxu0 %v2293
      %2313 = vmatprep.subr.mxu0 0.0
      %2314 = vmatpush1.msra.mxu0 %v2294
      %2315 = vmatprep.subr.mxu0 0.0
      %2316 = vmatpush1.msra.mxu0 %v2295
      %2317 = vmatprep.subr.mxu0 0.0
      %2318 = vmatpush1.msra.mxu0 %v2296
      %2319 = vmatprep.subr.mxu0 0.0
      %2320 = vmatpush1.msra.mxu0 %v2297
      %2321 = vmatprep.subr.mxu0 0.0
      %2322 = vmatpush1.msra.mxu0 %v2298
      %2323 = vmatprep.subr.mxu0 0.0
      %2324 = vmatpush1.msra.mxu0 %v2299
      %2325 = vmatprep.subr.mxu0 0.0
      %2326 = vmatpush1.msra.mxu0 %v2300
      %2327 = vmatprep.subr.mxu0 0.0
      %2328 = vmatpush1.msra.mxu0 %v2301
      %2329 = vmatprep.subr.mxu0 0.0
      %2330 = vmatpush1.msra.mxu0 %v2302
      %2331 = vmatprep.subr.mxu0 0.0
      %2332 = vmatpush1.msra.mxu0 %v2303
      %2333 = vmatprep.subr.mxu0 0.0
      %2334 = vmatpush1.msra.mxu0 %v2304
      %2335 = vmatprep.subr.mxu0 0.0
      %2336 = vmatpush1.msra.mxu0 %v2305
      %2337 = vmatprep.subr.mxu0 0.0
      %2338 = vmatpush1.msra.mxu0 %v2306
      %2339 = vmatprep.subr.mxu0 0.0
      %2340 = vmatpush1.msra.mxu0 0.0
      %2341 = vmatprep.subr.mxu0 0.0
      %2342 = vmatpush1.msra.mxu0 0.0
      %2343 = vmatprep.subr.mxu0 0.0
      %2344 = vmatpush1.msra.mxu0 0.0
      %2345 = vmatprep.subr.mxu0 0.0
      %2346 = vmatpush1.msra.mxu0 0.0
      %2347 = vmatprep.subr.mxu0 0.0
      %2348 = vmatpush1.msra.mxu0 0.0
      %2349 = vmatprep.subr.mxu0 0.0
      %2350 = vmatpush1.msra.mxu0 0.0
      %2351 = vmatprep.subr.mxu0 0.0
      %2352 = vmatpush1.msra.mxu0 0.0
      %2353 = vmatprep.subr.mxu0 0.0
      %2354 = vmatpush1.msra.mxu0 0.0
      %2355 = vmatprep.subr.mxu0 0.0
      %2356 = vmatpush1.msra.mxu0 0.0
      %2357 = vmatprep.subr.mxu0 0.0
      %2358 = vmatpush1.msra.mxu0 0.0
      %2359 = vmatprep.subr.mxu0 0.0
      %2360 = vmatpush1.msra.mxu0 0.0
      %2361 = vmatprep.subr.mxu0 0.0
      %2362 = vmatpush1.msra.mxu0 0.0
      %2363 = vmatprep.subr.mxu0 0.0
      %2364 = vmatpush1.msra.mxu0 0.0
      %2365 = vmatprep.subr.mxu0 0.0
      %2366 = vmatpush1.msra.mxu0 0.0
      %2367 = vmatprep.subr.mxu0 0.0
      %2368 = vmatpush1.msra.mxu0 0.0
      %2369 = vmatprep.subr.mxu0 0.0
      %2370 = vmatpush1.msra.mxu0 0.0
      %2371 = vmatprep.mubr.f32.mxu0 0.0
      %2372 = vmatmul.mubr.f32.gmra.mrb[0].mxu0 %v586
      %v2373 = vpop.f32.mrb[0].mxu0
      %v2374 = vadd.f32 0.0, %v2373
      %v2375 = vpop.f32.mrb[0].mxu0
      %2376 = vmatprep.mubr.f32.mxu0 0.0
      %2377 = vmatmul.mubr.f32.gmra.mrb[0].mxu0 %v502
      %v2378 = vpop.f32.mrb[0].mxu0
      %v2379 = vadd.f32 0.0, %v2378
      %v2380 = vpop.f32.mrb[0].mxu0
      %2381 = vmatprep.mubr.f32.mxu0 0.0
      %2382 = vmatmul.mubr.f32.gmra.mrb[0].mxu0 %v587
      %v2383 = vpop.f32.mrb[0].mxu0
      %v2384 = vadd.f32 0.0, %v2383
      %v2385 = vpop.f32.mrb[0].mxu0
      %2386 = vmatprep.mubr.f32.mxu0 0.0
      %2387 = vmatmul.mubr.f32.gmra.mrb[0].mxu0 %v505
      %v2388 = vpop.f32.mrb[0].mxu0
      %v2389 = vadd.f32 0.0, %v2388
      %v2390 = vpop.f32.mrb[0].mxu0
      %2391 = vmatprep.mubr.f32.mxu0 0.0
      %2392 = vmatmul.mubr.f32.gmra.mrb[0].mxu0 %v588
      %v2393 = vpop.f32.mrb[0].mxu0
      %v2394 = vadd.f32 0.0, %v2393
      %v2395 = vpop.f32.mrb[0].mxu0
      %2396 = vmatprep.mubr.f32.mxu0 0.0
      %2397 = vmatmul.mubr.f32.gmra.mrb[0].mxu0 %v508
      %v2398 = vpop.f32.mrb[0].mxu0
      %v2399 = vadd.f32 0.0, %v2398
      %v2400 = vpop.f32.mrb[0].mxu0
      %2401 = vmatprep.mubr.f32.mxu0 0.0
      %2402 = vmatmul.mubr.f32.gmra.mrb[0].mxu0 %v589
      %v2403 = vpop.f32.mrb[0].mxu0
      %v2404 = vadd.f32 0.0, %v2403
      %v2405 = vpop.f32.mrb[0].mxu0
      %2406 = vmatprep.mubr.f32.mxu0 0.0
      %2407 = vmatmul.mubr.f32.gmra.mrb[0].mxu0 %v511
      %v2408 = vpop.f32.mrb[0].mxu0
      %v2409 = vadd.f32 0.0, %v2408
      %v2410 = vpop.f32.mrb[0].mxu0
      %2411 = vmatprep.mubr.f32.mxu0 0.0
      %2412 = vmatmul.mubr.f32.gmra.mrb[0].mxu0 %v590
      %v2413 = vpop.f32.mrb[0].mxu0
      %v2414 = vadd.f32 0.0, %v2413
      %v2415 = vpop.f32.mrb[0].mxu0
      %2416 = vmatprep.mubr.f32.mxu0 0.0
      %2417 = vmatmul.mubr.f32.gmra.mrb[0].mxu0 %v514
      %v2418 = vpop.f32.mrb[0].mxu0
      %v2419 = vadd.f32 0.0, %v2418
      %v2420 = vpop.f32.mrb[0].mxu0
      %2421 = vmatprep.mubr.f32.mxu0 0.0
      %2422 = vmatmul.mubr.f32.gmra.mrb[0].mxu0 %v591
      %v2423 = vpop.f32.mrb[0].mxu0
      %v2424 = vadd.f32 0.0, %v2423
      %v2425 = vpop.f32.mrb[0].mxu0
      %2426 = vmatprep.mubr.f32.mxu0 0.0
      %2427 = vmatmul.mubr.f32.gmra.mrb[0].mxu0 %v517
      %v2428 = vpop.f32.mrb[0].mxu0
      %v2429 = vadd.f32 0.0, %v2428
      %v2430 = vpop.f32.mrb[0].mxu0
      %2431 = vmatprep.mubr.f32.mxu0 0.0
      %2432 = vmatmul.mubr.f32.gmra.mrb[0].mxu0 %v592
      %v2433 = vpop.f32.mrb[0].mxu0
      %v2434 = vadd.f32 0.0, %v2433
      %v2435 = vpop.f32.mrb[0].mxu0
      %2436 = vmatprep.mubr.f32.mxu0 0.0
      %2437 = vmatmul.mubr.f32.gmra.mrb[0].mxu0 %v520
      %v2438 = vpop.f32.mrb[0].mxu0
      %v2439 = vadd.f32 0.0, %v2438
      %v2440 = vpop.f32.mrb[0].mxu0
      %2441 = vmatprep.mubr.f32.mxu0 0.0
      %2442 = vmatmul.mubr.f32.gmra.mrb[0].mxu0 %v593
      %v2443 = vpop.f32.mrb[0].mxu0
      %v2444 = vadd.f32 0.0, %v2443
      %v2445 = vpop.f32.mrb[0].mxu0
      %2446 = vmatprep.mubr.f32.mxu0 0.0
      %2447 = vmatmul.mubr.f32.gmra.mrb[0].mxu0 %v523
      %v2448 = vpop.f32.mrb[0].mxu0
      %v2449 = vadd.f32 0.0, %v2448
      %v2450 = vpop.f32.mrb[0].mxu0
      %2451 = vmatprep.mubr.f32.mxu0 0.0
      %2452 = vmatmul.mubr.f32.gmra.mrb[0].mxu0 %v594
      %v2453 = vpop.f32.mrb[0].mxu0
      %v2454 = vadd.f32 0.0, %v2453
      %v2455 = vpop.f32.mrb[0].mxu0
      %2456 = vmatprep.mubr.f32.mxu0 0.0
      %2457 = vmatmul.mubr.f32.gmra.mrb[0].mxu0 %v526
      %v2458 = vpop.f32.mrb[0].mxu0
      %v2459 = vadd.f32 0.0, %v2458
      %v2460 = vpop.f32.mrb[0].mxu0
      %2461 = vmatprep.mubr.f32.mxu0 0.0
      %2462 = vmatmul.mubr.f32.gmra.mrb[0].mxu0 %v595
      %v2463 = vpop.f32.mrb[0].mxu0
      %v2464 = vadd.f32 0.0, %v2463
      %v2465 = vpop.f32.mrb[0].mxu0
      %2466 = vmatprep.mubr.f32.mxu0 0.0
      %2467 = vmatmul.mubr.f32.gmra.mrb[0].mxu0 %v529
      %v2468 = vpop.f32.mrb[0].mxu0
      %v2469 = vadd.f32 0.0, %v2468
      %v2470 = vpop.f32.mrb[0].mxu0
      %2471 = vmatprep.mubr.f32.mxu0 0.0
      %2472 = vmatmul.mubr.f32.gmra.mrb[0].mxu0 %v596
      %v2473 = vpop.f32.mrb[0].mxu0
      %v2474 = vadd.f32 0.0, %v2473
      %v2475 = vpop.f32.mrb[0].mxu0
      %2476 = vmatprep.mubr.f32.mxu0 0.0
      %2477 = vmatmul.mubr.f32.gmra.mrb[0].mxu0 %v532
      %v2478 = vpop.f32.mrb[0].mxu0
      %v2479 = vadd.f32 0.0, %v2478
      %v2480 = vpop.f32.mrb[0].mxu0
      %2481 = vmatprep.mubr.f32.mxu0 0.0
      %2482 = vmatmul.mubr.f32.gmra.mrb[0].mxu0 %v597
      %v2483 = vpop.f32.mrb[0].mxu0
      %v2484 = vadd.f32 0.0, %v2483
      %v2485 = vpop.f32.mrb[0].mxu0
      %2486 = vmatprep.mubr.f32.mxu0 0.0
      %2487 = vmatmul.mubr.f32.gmra.mrb[0].mxu0 %v535
      %v2488 = vpop.f32.mrb[0].mxu0
      %v2489 = vadd.f32 0.0, %v2488
      %v2490 = vpop.f32.mrb[0].mxu0
      %2491 = vmatprep.mubr.f32.mxu0 0.0
      %2492 = vmatmul.mubr.f32.gmra.mrb[0].mxu0 %v598
      %v2493 = vpop.f32.mrb[0].mxu0
      %v2494 = vadd.f32 0.0, %v2493
      %v2495 = vpop.f32.mrb[0].mxu0
      %2496 = vmatprep.mubr.f32.mxu0 0.0
      %2497 = vmatmul.mubr.f32.gmra.mrb[0].mxu0 %v538
      %v2498 = vpop.f32.mrb[0].mxu0
      %v2499 = vadd.f32 0.0, %v2498
      %v2500 = vpop.f32.mrb[0].mxu0
      %2501 = vmatprep.mubr.f32.mxu0 0.0
      %2502 = vmatmul.mubr.f32.gmra.mrb[0].mxu0 %v599
      %v2503 = vpop.f32.mrb[0].mxu0
      %v2504 = vadd.f32 0.0, %v2503
      %v2505 = vpop.f32.mrb[0].mxu0
      %2506 = vmatprep.mubr.f32.mxu0 0.0
      %2507 = vmatmul.mubr.f32.gmra.mrb[0].mxu0 %v541
      %v2508 = vpop.f32.mrb[0].mxu0
      %v2509 = vadd.f32 0.0, %v2508
      %v2510 = vpop.f32.mrb[0].mxu0
      %2511 = vmatprep.mubr.f32.mxu0 0.0
      %2512 = vmatmul.mubr.f32.gmra.mrb[0].mxu0 %v600
      %v2513 = vpop.f32.mrb[0].mxu0
      %v2514 = vadd.f32 0.0, %v2513
      %v2515 = vpop.f32.mrb[0].mxu0
      %2516 = vmatprep.mubr.f32.mxu0 0.0
      %2517 = vmatmul.mubr.f32.gmra.mrb[0].mxu0 %v544
      %v2518 = vpop.f32.mrb[0].mxu0
      %v2519 = vadd.f32 0.0, %v2518
      %v2520 = vpop.f32.mrb[0].mxu0
      %2521 = vmatprep.mubr.f32.mxu0 0.0
      %2522 = vmatmul.mubr.f32.gmra.mrb[0].mxu0 %v601
      %v2523 = vpop.f32.mrb[0].mxu0
      %v2524 = vadd.f32 0.0, %v2523
      %v2525 = vpop.f32.mrb[0].mxu0
      %2526 = vmatprep.mubr.f32.mxu0 0.0
      %2527 = vmatmul.mubr.f32.gmra.mrb[0].mxu0 %v547
      %v2528 = vpop.f32.mrb[0].mxu0
      %v2529 = vadd.f32 0.0, %v2528
      %v2530 = vpop.f32.mrb[0].mxu0
      %2531 = vdwg.mxu0
      %v2532 = vadd.f32 %v2258, %v2374
      %v2533 = vadd.f32 %v2259, %v2379
      %v2534 = vadd.f32 %v2260, %v2384
      %v2535 = vadd.f32 %v2261, %v2389
      %v2536 = vadd.f32 %v2262, %v2394
      %v2537 = vadd.f32 %v2263, %v2399
      %v2538 = vadd.f32 %v2264, %v2404
      %v2539 = vadd.f32 %v2265, %v2409
      %v2540 = vadd.f32 %v2266, %v2414
      %v2541 = vadd.f32 %v2267, %v2419
      %v2542 = vadd.f32 %v2268, %v2424
      %v2543 = vadd.f32 %v2269, %v2429
      %v2544 = vadd.f32 %v2270, %v2434
      %v2545 = vadd.f32 %v2271, %v2439
      %v2546 = vadd.f32 %v2272, %v2444
      %v2547 = vadd.f32 %v2273, %v2449
      %v2548 = vadd.f32 %v2274, %v2454
      %v2549 = vadd.f32 %v2275, %v2459
      %v2550 = vadd.f32 %v2276, %v2464
      %v2551 = vadd.f32 %v2277, %v2469
      %v2552 = vadd.f32 %v2278, %v2474
      %v2553 = vadd.f32 %v2279, %v2479
      %v2554 = vadd.f32 %v2280, %v2484
      %v2555 = vadd.f32 %v2281, %v2489
      %v2556 = vadd.f32 %v2282, %v2494
      %v2557 = vadd.f32 %v2283, %v2499
      %v2558 = vadd.f32 %v2284, %v2504
      %v2559 = vadd.f32 %v2285, %v2509
      %v2560 = vadd.f32 %v2286, %v2514
      %v2561 = vadd.f32 %v2287, %v2519
      %v2562 = vadd.f32 %v2288, %v2524
      %v2563 = vadd.f32 %v2289, %v2529
      %s2564 = scalar_lea.vmem %s3, 896
      %v2565 = vld [vmem:[%s2564] sm:$0xff]
      %v2566 = vld [vmem:[%s2564 + $0x8] sm:$0xff]
      %v2567 = vld [vmem:[%s2564 + $0x10] sm:$0xff]
      %v2568 = vld [vmem:[%s2564 + $0x18] sm:$0xff]
      %v2569 = vld [vmem:[%s2564 + $0x20] sm:$0xff]
      %v2570 = vld [vmem:[%s2564 + $0x28] sm:$0xff]
      %v2571 = vld [vmem:[%s2564 + $0x30] sm:$0xff]
      %v2572 = vld [vmem:[%s2564 + $0x38] sm:$0xff]
      %v2573 = vld [vmem:[%s2564 + $0x40] sm:$0xff]
      %v2574 = vld [vmem:[%s2564 + $0x48] sm:$0xff]
      %v2575 = vld [vmem:[%s2564 + $0x50] sm:$0xff]
      %v2576 = vld [vmem:[%s2564 + $0x58] sm:$0xff]
      %v2577 = vld [vmem:[%s2564 + $0x60] sm:$0xff]
      %v2578 = vld [vmem:[%s2564 + $0x68] sm:$0xff]
      %v2579 = vld [vmem:[%s2564 + $0x70] sm:$0xff]
      %v2580 = vld [vmem:[%s2564 + $0x78] sm:$0xff]
      %2581 = vmatprep.subr.mxu0 0.0
      %2582 = vmatpush1.msra.mxu0 %v2565
      %2583 = vmatprep.subr.mxu0 0.0
      %2584 = vmatpush1.msra.mxu0 %v2566
      %2585 = vmatprep.subr.mxu0 0.0
      %2586 = vmatpush1.msra.mxu0 %v2567
      %2587 = vmatprep.subr.mxu0 0.0
      %2588 = vmatpush1.msra.mxu0 %v2568
      %2589 = vmatprep.subr.mxu0 0.0
      %2590 = vmatpush1.msra.mxu0 %v2569
      %2591 = vmatprep.subr.mxu0 0.0
      %2592 = vmatpush1.msra.mxu0 %v2570
      %2593 = vmatprep.subr.mxu0 0.0
      %2594 = vmatpush1.msra.mxu0 %v2571
      %2595 = vmatprep.subr.mxu0 0.0
      %2596 = vmatpush1.msra.mxu0 %v2572
      %2597 = vmatprep.subr.mxu0 0.0
      %2598 = vmatpush1.msra.mxu0 %v2573
      %2599 = vmatprep.subr.mxu0 0.0
      %2600 = vmatpush1.msra.mxu0 %v2574
      %2601 = vmatprep.subr.mxu0 0.0
      %2602 = vmatpush1.msra.mxu0 %v2575
      %2603 = vmatprep.subr.mxu0 0.0
      %2604 = vmatpush1.msra.mxu0 %v2576
      %2605 = vmatprep.subr.mxu0 0.0
      %2606 = vmatpush1.msra.mxu0 %v2577
      %2607 = vmatprep.subr.mxu0 0.0
      %2608 = vmatpush1.msra.mxu0 %v2578
      %2609 = vmatprep.subr.mxu0 0.0
      %2610 = vmatpush1.msra.mxu0 %v2579
      %2611 = vmatprep.subr.mxu0 0.0
      %2612 = vmatpush1.msra.mxu0 %v2580
      %2613 = vmatprep.subr.mxu0 0.0
      %2614 = vmatpush1.msra.mxu0 0.0
      %2615 = vmatprep.subr.mxu0 0.0
      %2616 = vmatpush1.msra.mxu0 0.0
      %2617 = vmatprep.subr.mxu0 0.0
      %2618 = vmatpush1.msra.mxu0 0.0
      %2619 = vmatprep.subr.mxu0 0.0
      %2620 = vmatpush1.msra.mxu0 0.0
      %2621 = vmatprep.subr.mxu0 0.0
      %2622 = vmatpush1.msra.mxu0 0.0
      %2623 = vmatprep.subr.mxu0 0.0
      %2624 = vmatpush1.msra.mxu0 0.0
      %2625 = vmatprep.subr.mxu0 0.0
      %2626 = vmatpush1.msra.mxu0 0.0
      %2627 = vmatprep.subr.mxu0 0.0
      %2628 = vmatpush1.msra.mxu0 0.0
      %2629 = vmatprep.subr.mxu0 0.0
      %2630 = vmatpush1.msra.mxu0 0.0
      %2631 = vmatprep.subr.mxu0 0.0
      %2632 = vmatpush1.msra.mxu0 0.0
      %2633 = vmatprep.subr.mxu0 0.0
      %2634 = vmatpush1.msra.mxu0 0.0
      %2635 = vmatprep.subr.mxu0 0.0
      %2636 = vmatpush1.msra.mxu0 0.0
      %2637 = vmatprep.subr.mxu0 0.0
      %2638 = vmatpush1.msra.mxu0 0.0
      %2639 = vmatprep.subr.mxu0 0.0
      %2640 = vmatpush1.msra.mxu0 0.0
      %2641 = vmatprep.subr.mxu0 0.0
      %2642 = vmatpush1.msra.mxu0 0.0
      %2643 = vmatprep.subr.mxu0 0.0
      %2644 = vmatpush1.msra.mxu0 0.0
      %2645 = vmatprep.mubr.f32.mxu0 0.0
      %2646 = vmatmul.mubr.f32.gmra.mrb[0].mxu0 %v427
      %v2647 = vpop.f32.mrb[0].mxu0
      %v2648 = vadd.f32 0.0, %v2647
      %v2649 = vpop.f32.mrb[0].mxu0
      %2650 = vmatprep.mubr.f32.mxu0 0.0
      %2651 = vmatmul.mubr.f32.gmra.mrb[0].mxu0 %v428
      %v2652 = vpop.f32.mrb[0].mxu0
      %v2653 = vadd.f32 0.0, %v2652
      %v2654 = vpop.f32.mrb[0].mxu0
      %2655 = vmatprep.mubr.f32.mxu0 0.0
      %2656 = vmatmul.mubr.f32.gmra.mrb[0].mxu0 %v429
      %v2657 = vpop.f32.mrb[0].mxu0
      %v2658 = vadd.f32 0.0, %v2657
      %v2659 = vpop.f32.mrb[0].mxu0
      %2660 = vmatprep.mubr.f32.mxu0 0.0
      %2661 = vmatmul.mubr.f32.gmra.mrb[0].mxu0 %v430
      %v2662 = vpop.f32.mrb[0].mxu0
      %v2663 = vadd.f32 0.0, %v2662
      %v2664 = vpop.f32.mrb[0].mxu0
      %2665 = vmatprep.mubr.f32.mxu0 0.0
      %2666 = vmatmul.mubr.f32.gmra.mrb[0].mxu0 %v431
      %v2667 = vpop.f32.mrb[0].mxu0
      %v2668 = vadd.f32 0.0, %v2667
      %v2669 = vpop.f32.mrb[0].mxu0
      %2670 = vmatprep.mubr.f32.mxu0 0.0
      %2671 = vmatmul.mubr.f32.gmra.mrb[0].mxu0 %v432
      %v2672 = vpop.f32.mrb[0].mxu0
      %v2673 = vadd.f32 0.0, %v2672
      %v2674 = vpop.f32.mrb[0].mxu0
      %2675 = vmatprep.mubr.f32.mxu0 0.0
      %2676 = vmatmul.mubr.f32.gmra.mrb[0].mxu0 %v433
      %v2677 = vpop.f32.mrb[0].mxu0
      %v2678 = vadd.f32 0.0, %v2677
      %v2679 = vpop.f32.mrb[0].mxu0
      %2680 = vmatprep.mubr.f32.mxu0 0.0
      %2681 = vmatmul.mubr.f32.gmra.mrb[0].mxu0 %v434
      %v2682 = vpop.f32.mrb[0].mxu0
      %v2683 = vadd.f32 0.0, %v2682
      %v2684 = vpop.f32.mrb[0].mxu0
      %2685 = vmatprep.mubr.f32.mxu0 0.0
      %2686 = vmatmul.mubr.f32.gmra.mrb[0].mxu0 %v435
      %v2687 = vpop.f32.mrb[0].mxu0
      %v2688 = vadd.f32 0.0, %v2687
      %v2689 = vpop.f32.mrb[0].mxu0
      %2690 = vmatprep.mubr.f32.mxu0 0.0
      %2691 = vmatmul.mubr.f32.gmra.mrb[0].mxu0 %v436
      %v2692 = vpop.f32.mrb[0].mxu0
      %v2693 = vadd.f32 0.0, %v2692
      %v2694 = vpop.f32.mrb[0].mxu0
      %2695 = vmatprep.mubr.f32.mxu0 0.0
      %2696 = vmatmul.mubr.f32.gmra.mrb[0].mxu0 %v437
      %v2697 = vpop.f32.mrb[0].mxu0
      %v2698 = vadd.f32 0.0, %v2697
      %v2699 = vpop.f32.mrb[0].mxu0
      %2700 = vmatprep.mubr.f32.mxu0 0.0
      %2701 = vmatmul.mubr.f32.gmra.mrb[0].mxu0 %v438
      %v2702 = vpop.f32.mrb[0].mxu0
      %v2703 = vadd.f32 0.0, %v2702
      %v2704 = vpop.f32.mrb[0].mxu0
      %2705 = vmatprep.mubr.f32.mxu0 0.0
      %2706 = vmatmul.mubr.f32.gmra.mrb[0].mxu0 %v439
      %v2707 = vpop.f32.mrb[0].mxu0
      %v2708 = vadd.f32 0.0, %v2707
      %v2709 = vpop.f32.mrb[0].mxu0
      %2710 = vmatprep.mubr.f32.mxu0 0.0
      %2711 = vmatmul.mubr.f32.gmra.mrb[0].mxu0 %v440
      %v2712 = vpop.f32.mrb[0].mxu0
      %v2713 = vadd.f32 0.0, %v2712
      %v2714 = vpop.f32.mrb[0].mxu0
      %2715 = vmatprep.mubr.f32.mxu0 0.0
      %2716 = vmatmul.mubr.f32.gmra.mrb[0].mxu0 %v441
      %v2717 = vpop.f32.mrb[0].mxu0
      %v2718 = vadd.f32 0.0, %v2717
      %v2719 = vpop.f32.mrb[0].mxu0
      %2720 = vmatprep.mubr.f32.mxu0 0.0
      %2721 = vmatmul.mubr.f32.gmra.mrb[0].mxu0 %v442
      %v2722 = vpop.f32.mrb[0].mxu0
      %v2723 = vadd.f32 0.0, %v2722
      %v2724 = vpop.f32.mrb[0].mxu0
      %2725 = vmatprep.mubr.f32.mxu0 0.0
      %2726 = vmatmul.mubr.f32.gmra.mrb[0].mxu0 %v443
      %v2727 = vpop.f32.mrb[0].mxu0
      %v2728 = vadd.f32 0.0, %v2727
      %v2729 = vpop.f32.mrb[0].mxu0
      %2730 = vmatprep.mubr.f32.mxu0 0.0
      %2731 = vmatmul.mubr.f32.gmra.mrb[0].mxu0 %v444
      %v2732 = vpop.f32.mrb[0].mxu0
      %v2733 = vadd.f32 0.0, %v2732
      %v2734 = vpop.f32.mrb[0].mxu0
      %2735 = vmatprep.mubr.f32.mxu0 0.0
      %2736 = vmatmul.mubr.f32.gmra.mrb[0].mxu0 %v445
      %v2737 = vpop.f32.mrb[0].mxu0
      %v2738 = vadd.f32 0.0, %v2737
      %v2739 = vpop.f32.mrb[0].mxu0
      %2740 = vmatprep.mubr.f32.mxu0 0.0
      %2741 = vmatmul.mubr.f32.gmra.mrb[0].mxu0 %v446
      %v2742 = vpop.f32.mrb[0].mxu0
      %v2743 = vadd.f32 0.0, %v2742
      %v2744 = vpop.f32.mrb[0].mxu0
      %2745 = vmatprep.mubr.f32.mxu0 0.0
      %2746 = vmatmul.mubr.f32.gmra.mrb[0].mxu0 %v447
      %v2747 = vpop.f32.mrb[0].mxu0
      %v2748 = vadd.f32 0.0, %v2747
      %v2749 = vpop.f32.mrb[0].mxu0
      %2750 = vmatprep.mubr.f32.mxu0 0.0
      %2751 = vmatmul.mubr.f32.gmra.mrb[0].mxu0 %v448
      %v2752 = vpop.f32.mrb[0].mxu0
      %v2753 = vadd.f32 0.0, %v2752
      %v2754 = vpop.f32.mrb[0].mxu0
      %2755 = vmatprep.mubr.f32.mxu0 0.0
      %2756 = vmatmul.mubr.f32.gmra.mrb[0].mxu0 %v449
      %v2757 = vpop.f32.mrb[0].mxu0
      %v2758 = vadd.f32 0.0, %v2757
      %v2759 = vpop.f32.mrb[0].mxu0
      %2760 = vmatprep.mubr.f32.mxu0 0.0
      %2761 = vmatmul.mubr.f32.gmra.mrb[0].mxu0 %v450
      %v2762 = vpop.f32.mrb[0].mxu0
      %v2763 = vadd.f32 0.0, %v2762
      %v2764 = vpop.f32.mrb[0].mxu0
      %2765 = vmatprep.mubr.f32.mxu0 0.0
      %2766 = vmatmul.mubr.f32.gmra.mrb[0].mxu0 %v451
      %v2767 = vpop.f32.mrb[0].mxu0
      %v2768 = vadd.f32 0.0, %v2767
      %v2769 = vpop.f32.mrb[0].mxu0
      %2770 = vmatprep.mubr.f32.mxu0 0.0
      %2771 = vmatmul.mubr.f32.gmra.mrb[0].mxu0 %v452
      %v2772 = vpop.f32.mrb[0].mxu0
      %v2773 = vadd.f32 0.0, %v2772
      %v2774 = vpop.f32.mrb[0].mxu0
      %2775 = vmatprep.mubr.f32.mxu0 0.0
      %2776 = vmatmul.mubr.f32.gmra.mrb[0].mxu0 %v453
      %v2777 = vpop.f32.mrb[0].mxu0
      %v2778 = vadd.f32 0.0, %v2777
      %v2779 = vpop.f32.mrb[0].mxu0
      %2780 = vmatprep.mubr.f32.mxu0 0.0
      %2781 = vmatmul.mubr.f32.gmra.mrb[0].mxu0 %v454
      %v2782 = vpop.f32.mrb[0].mxu0
      %v2783 = vadd.f32 0.0, %v2782
      %v2784 = vpop.f32.mrb[0].mxu0
      %2785 = vmatprep.mubr.f32.mxu0 0.0
      %2786 = vmatmul.mubr.f32.gmra.mrb[0].mxu0 %v455
      %v2787 = vpop.f32.mrb[0].mxu0
      %v2788 = vadd.f32 0.0, %v2787
      %v2789 = vpop.f32.mrb[0].mxu0
      %2790 = vmatprep.mubr.f32.mxu0 0.0
      %2791 = vmatmul.mubr.f32.gmra.mrb[0].mxu0 %v456
      %v2792 = vpop.f32.mrb[0].mxu0
      %v2793 = vadd.f32 0.0, %v2792
      %v2794 = vpop.f32.mrb[0].mxu0
      %2795 = vmatprep.mubr.f32.mxu0 0.0
      %2796 = vmatmul.mubr.f32.gmra.mrb[0].mxu0 %v423
      %v2797 = vpop.f32.mrb[0].mxu0
      %v2798 = vadd.f32 0.0, %v2797
      %v2799 = vpop.f32.mrb[0].mxu0
      %2800 = vmatprep.mubr.f32.mxu0 0.0
      %2801 = vmatmul.mubr.f32.gmra.mrb[0].mxu0 %v424
      %v2802 = vpop.f32.mrb[0].mxu0
      %v2803 = vadd.f32 0.0, %v2802
      %v2804 = vpop.f32.mrb[0].mxu0
      %2805 = vdwg.mxu0
      %v2806 = vadd.f32 %v2532, %v2648
      %v2807 = vadd.f32 %v2533, %v2653
      %v2808 = vadd.f32 %v2534, %v2658
      %v2809 = vadd.f32 %v2535, %v2663
      %v2810 = vadd.f32 %v2536, %v2668
      %v2811 = vadd.f32 %v2537, %v2673
      %v2812 = vadd.f32 %v2538, %v2678
      %v2813 = vadd.f32 %v2539, %v2683
      %v2814 = vadd.f32 %v2540, %v2688
      %v2815 = vadd.f32 %v2541, %v2693
      %v2816 = vadd.f32 %v2542, %v2698
      %v2817 = vadd.f32 %v2543, %v2703
      %v2818 = vadd.f32 %v2544, %v2708
      %v2819 = vadd.f32 %v2545, %v2713
      %v2820 = vadd.f32 %v2546, %v2718
      %v2821 = vadd.f32 %v2547, %v2723
      %v2822 = vadd.f32 %v2548, %v2728
      %v2823 = vadd.f32 %v2549, %v2733
      %v2824 = vadd.f32 %v2550, %v2738
      %v2825 = vadd.f32 %v2551, %v2743
      %v2826 = vadd.f32 %v2552, %v2748
      %v2827 = vadd.f32 %v2553, %v2753
      %v2828 = vadd.f32 %v2554, %v2758
      %v2829 = vadd.f32 %v2555, %v2763
      %v2830 = vadd.f32 %v2556, %v2768
      %v2831 = vadd.f32 %v2557, %v2773
      %v2832 = vadd.f32 %v2558, %v2778
      %v2833 = vadd.f32 %v2559, %v2783
      %v2834 = vadd.f32 %v2560, %v2788
      %v2835 = vadd.f32 %v2561, %v2793
      %v2836 = vadd.f32 %v2562, %v2798
      %v2837 = vadd.f32 %v2563, %v2803
      %s2838 = scalar_lea.vmem %s3, 1024
      %v2839 = vld [vmem:[%s2838] sm:$0xff]
      %v2840 = vld [vmem:[%s2838 + $0x8] sm:$0xff]
      %v2841 = vld [vmem:[%s2838 + $0x10] sm:$0xff]
      %v2842 = vld [vmem:[%s2838 + $0x18] sm:$0xff]
      %v2843 = vld [vmem:[%s2838 + $0x20] sm:$0xff]
      %v2844 = vld [vmem:[%s2838 + $0x28] sm:$0xff]
      %v2845 = vld [vmem:[%s2838 + $0x30] sm:$0xff]
      %v2846 = vld [vmem:[%s2838 + $0x38] sm:$0xff]
      %v2847 = vld [vmem:[%s2838 + $0x40] sm:$0xff]
      %v2848 = vld [vmem:[%s2838 + $0x48] sm:$0xff]
      %v2849 = vld [vmem:[%s2838 + $0x50] sm:$0xff]
      %v2850 = vld [vmem:[%s2838 + $0x58] sm:$0xff]
      %v2851 = vld [vmem:[%s2838 + $0x60] sm:$0xff]
      %v2852 = vld [vmem:[%s2838 + $0x68] sm:$0xff]
      %v2853 = vld [vmem:[%s2838 + $0x70] sm:$0xff]
      %v2854 = vld [vmem:[%s2838 + $0x78] sm:$0xff]
      %2855 = vmatprep.subr.mxu0 0.0
      %2856 = vmatpush1.msra.mxu0 %v2839
      %2857 = vmatprep.subr.mxu0 0.0
      %2858 = vmatpush1.msra.mxu0 %v2840
      %2859 = vmatprep.subr.mxu0 0.0
      %2860 = vmatpush1.msra.mxu0 %v2841
      %2861 = vmatprep.subr.mxu0 0.0
      %2862 = vmatpush1.msra.mxu0 %v2842
      %2863 = vmatprep.subr.mxu0 0.0
      %2864 = vmatpush1.msra.mxu0 %v2843
      %2865 = vmatprep.subr.mxu0 0.0
      %2866 = vmatpush1.msra.mxu0 %v2844
      %2867 = vmatprep.subr.mxu0 0.0
      %2868 = vmatpush1.msra.mxu0 %v2845
      %2869 = vmatprep.subr.mxu0 0.0
      %2870 = vmatpush1.msra.mxu0 %v2846
      %2871 = vmatprep.subr.mxu0 0.0
      %2872 = vmatpush1.msra.mxu0 %v2847
      %2873 = vmatprep.subr.mxu0 0.0
      %2874 = vmatpush1.msra.mxu0 %v2848
      %2875 = vmatprep.subr.mxu0 0.0
      %2876 = vmatpush1.msra.mxu0 %v2849
      %2877 = vmatprep.subr.mxu0 0.0
      %2878 = vmatpush1.msra.mxu0 %v2850
      %2879 = vmatprep.subr.mxu0 0.0
      %2880 = vmatpush1.msra.mxu0 %v2851
      %2881 = vmatprep.subr.mxu0 0.0
      %2882 = vmatpush1.msra.mxu0 %v2852
      %2883 = vmatprep.subr.mxu0 0.0
      %2884 = vmatpush1.msra.mxu0 %v2853
      %2885 = vmatprep.subr.mxu0 0.0
      %2886 = vmatpush1.msra.mxu0 %v2854
      %2887 = vmatprep.subr.mxu0 0.0
      %2888 = vmatpush1.msra.mxu0 0.0
      %2889 = vmatprep.subr.mxu0 0.0
      %2890 = vmatpush1.msra.mxu0 0.0
      %2891 = vmatprep.subr.mxu0 0.0
      %2892 = vmatpush1.msra.mxu0 0.0
      %2893 = vmatprep.subr.mxu0 0.0
      %2894 = vmatpush1.msra.mxu0 0.0
      %2895 = vmatprep.subr.mxu0 0.0
      %2896 = vmatpush1.msra.mxu0 0.0
      %2897 = vmatprep.subr.mxu0 0.0
      %2898 = vmatpush1.msra.mxu0 0.0
      %2899 = vmatprep.subr.mxu0 0.0
      %2900 = vmatpush1.msra.mxu0 0.0
      %2901 = vmatprep.subr.mxu0 0.0
      %2902 = vmatpush1.msra.mxu0 0.0
      %2903 = vmatprep.subr.mxu0 0.0
      %2904 = vmatpush1.msra.mxu0 0.0
      %2905 = vmatprep.subr.mxu0 0.0
      %2906 = vmatpush1.msra.mxu0 0.0
      %2907 = vmatprep.subr.mxu0 0.0
      %2908 = vmatpush1.msra.mxu0 0.0
      %2909 = vmatprep.subr.mxu0 0.0
      %2910 = vmatpush1.msra.mxu0 0.0
      %2911 = vmatprep.subr.mxu0 0.0
      %2912 = vmatpush1.msra.mxu0 0.0
      %2913 = vmatprep.subr.mxu0 0.0
      %2914 = vmatpush1.msra.mxu0 0.0
      %2915 = vmatprep.subr.mxu0 0.0
      %2916 = vmatpush1.msra.mxu0 0.0
      %2917 = vmatprep.subr.mxu0 0.0
      %2918 = vmatpush1.msra.mxu0 0.0
      %2919 = vmatprep.mubr.f32.mxu0 0.0
      %2920 = vmatmul.mubr.f32.gmra.mrb[0].mxu0 %v611
      %v2921 = vpop.f32.mrb[0].mxu0
      %v2922 = vadd.f32 0.0, %v2921
      %v2923 = vpop.f32.mrb[0].mxu0
      %2924 = vmatprep.mubr.f32.mxu0 0.0
      %2925 = vmatmul.mubr.f32.gmra.mrb[0].mxu0 %v695
      %v2926 = vpop.f32.mrb[0].mxu0
      %v2927 = vadd.f32 0.0, %v2926
      %v2928 = vpop.f32.mrb[0].mxu0
      %2929 = vmatprep.mubr.f32.mxu0 0.0
      %2930 = vmatmul.mubr.f32.gmra.mrb[0].mxu0 %v614
      %v2931 = vpop.f32.mrb[0].mxu0
      %v2932 = vadd.f32 0.0, %v2931
      %v2933 = vpop.f32.mrb[0].mxu0
      %2934 = vmatprep.mubr.f32.mxu0 0.0
      %2935 = vmatmul.mubr.f32.gmra.mrb[0].mxu0 %v696
      %v2936 = vpop.f32.mrb[0].mxu0
      %v2937 = vadd.f32 0.0, %v2936
      %v2938 = vpop.f32.mrb[0].mxu0
      %2939 = vmatprep.mubr.f32.mxu0 0.0
      %2940 = vmatmul.mubr.f32.gmra.mrb[0].mxu0 %v617
      %v2941 = vpop.f32.mrb[0].mxu0
      %v2942 = vadd.f32 0.0, %v2941
      %v2943 = vpop.f32.mrb[0].mxu0
      %2944 = vmatprep.mubr.f32.mxu0 0.0
      %2945 = vmatmul.mubr.f32.gmra.mrb[0].mxu0 %v697
      %v2946 = vpop.f32.mrb[0].mxu0
      %v2947 = vadd.f32 0.0, %v2946
      %v2948 = vpop.f32.mrb[0].mxu0
      %2949 = vmatprep.mubr.f32.mxu0 0.0
      %2950 = vmatmul.mubr.f32.gmra.mrb[0].mxu0 %v620
      %v2951 = vpop.f32.mrb[0].mxu0
      %v2952 = vadd.f32 0.0, %v2951
      %v2953 = vpop.f32.mrb[0].mxu0
      %2954 = vmatprep.mubr.f32.mxu0 0.0
      %2955 = vmatmul.mubr.f32.gmra.mrb[0].mxu0 %v698
      %v2956 = vpop.f32.mrb[0].mxu0
      %v2957 = vadd.f32 0.0, %v2956
      %v2958 = vpop.f32.mrb[0].mxu0
      %2959 = vmatprep.mubr.f32.mxu0 0.0
      %2960 = vmatmul.mubr.f32.gmra.mrb[0].mxu0 %v623
      %v2961 = vpop.f32.mrb[0].mxu0
      %v2962 = vadd.f32 0.0, %v2961
      %v2963 = vpop.f32.mrb[0].mxu0
      %2964 = vmatprep.mubr.f32.mxu0 0.0
      %2965 = vmatmul.mubr.f32.gmra.mrb[0].mxu0 %v699
      %v2966 = vpop.f32.mrb[0].mxu0
      %v2967 = vadd.f32 0.0, %v2966
      %v2968 = vpop.f32.mrb[0].mxu0
      %2969 = vmatprep.mubr.f32.mxu0 0.0
      %2970 = vmatmul.mubr.f32.gmra.mrb[0].mxu0 %v626
      %v2971 = vpop.f32.mrb[0].mxu0
      %v2972 = vadd.f32 0.0, %v2971
      %v2973 = vpop.f32.mrb[0].mxu0
      %2974 = vmatprep.mubr.f32.mxu0 0.0
      %2975 = vmatmul.mubr.f32.gmra.mrb[0].mxu0 %v700
      %v2976 = vpop.f32.mrb[0].mxu0
      %v2977 = vadd.f32 0.0, %v2976
      %v2978 = vpop.f32.mrb[0].mxu0
      %2979 = vmatprep.mubr.f32.mxu0 0.0
      %2980 = vmatmul.mubr.f32.gmra.mrb[0].mxu0 %v629
      %v2981 = vpop.f32.mrb[0].mxu0
      %v2982 = vadd.f32 0.0, %v2981
      %v2983 = vpop.f32.mrb[0].mxu0
      %2984 = vmatprep.mubr.f32.mxu0 0.0
      %2985 = vmatmul.mubr.f32.gmra.mrb[0].mxu0 %v701
      %v2986 = vpop.f32.mrb[0].mxu0
      %v2987 = vadd.f32 0.0, %v2986
      %v2988 = vpop.f32.mrb[0].mxu0
      %2989 = vmatprep.mubr.f32.mxu0 0.0
      %2990 = vmatmul.mubr.f32.gmra.mrb[0].mxu0 %v632
      %v2991 = vpop.f32.mrb[0].mxu0
      %v2992 = vadd.f32 0.0, %v2991
      %v2993 = vpop.f32.mrb[0].mxu0
      %2994 = vmatprep.mubr.f32.mxu0 0.0
      %2995 = vmatmul.mubr.f32.gmra.mrb[0].mxu0 %v702
      %v2996 = vpop.f32.mrb[0].mxu0
      %v2997 = vadd.f32 0.0, %v2996
      %v2998 = vpop.f32.mrb[0].mxu0
      %2999 = vmatprep.mubr.f32.mxu0 0.0
      %3000 = vmatmul.mubr.f32.gmra.mrb[0].mxu0 %v635
      %v3001 = vpop.f32.mrb[0].mxu0
      %v3002 = vadd.f32 0.0, %v3001
      %v3003 = vpop.f32.mrb[0].mxu0
      %3004 = vmatprep.mubr.f32.mxu0 0.0
      %3005 = vmatmul.mubr.f32.gmra.mrb[0].mxu0 %v703
      %v3006 = vpop.f32.mrb[0].mxu0
      %v3007 = vadd.f32 0.0, %v3006
      %v3008 = vpop.f32.mrb[0].mxu0
      %3009 = vmatprep.mubr.f32.mxu0 0.0
      %3010 = vmatmul.mubr.f32.gmra.mrb[0].mxu0 %v638
      %v3011 = vpop.f32.mrb[0].mxu0
      %v3012 = vadd.f32 0.0, %v3011
      %v3013 = vpop.f32.mrb[0].mxu0
      %3014 = vmatprep.mubr.f32.mxu0 0.0
      %3015 = vmatmul.mubr.f32.gmra.mrb[0].mxu0 %v704
      %v3016 = vpop.f32.mrb[0].mxu0
      %v3017 = vadd.f32 0.0, %v3016
      %v3018 = vpop.f32.mrb[0].mxu0
      %3019 = vmatprep.mubr.f32.mxu0 0.0
      %3020 = vmatmul.mubr.f32.gmra.mrb[0].mxu0 %v641
      %v3021 = vpop.f32.mrb[0].mxu0
      %v3022 = vadd.f32 0.0, %v3021
      %v3023 = vpop.f32.mrb[0].mxu0
      %3024 = vmatprep.mubr.f32.mxu0 0.0
      %3025 = vmatmul.mubr.f32.gmra.mrb[0].mxu0 %v705
      %v3026 = vpop.f32.mrb[0].mxu0
      %v3027 = vadd.f32 0.0, %v3026
      %v3028 = vpop.f32.mrb[0].mxu0
      %3029 = vmatprep.mubr.f32.mxu0 0.0
      %3030 = vmatmul.mubr.f32.gmra.mrb[0].mxu0 %v644
      %v3031 = vpop.f32.mrb[0].mxu0
      %v3032 = vadd.f32 0.0, %v3031
      %v3033 = vpop.f32.mrb[0].mxu0
      %3034 = vmatprep.mubr.f32.mxu0 0.0
      %3035 = vmatmul.mubr.f32.gmra.mrb[0].mxu0 %v706
      %v3036 = vpop.f32.mrb[0].mxu0
      %v3037 = vadd.f32 0.0, %v3036
      %v3038 = vpop.f32.mrb[0].mxu0
      %3039 = vmatprep.mubr.f32.mxu0 0.0
      %3040 = vmatmul.mubr.f32.gmra.mrb[0].mxu0 %v647
      %v3041 = vpop.f32.mrb[0].mxu0
      %v3042 = vadd.f32 0.0, %v3041
      %v3043 = vpop.f32.mrb[0].mxu0
      %3044 = vmatprep.mubr.f32.mxu0 0.0
      %3045 = vmatmul.mubr.f32.gmra.mrb[0].mxu0 %v707
      %v3046 = vpop.f32.mrb[0].mxu0
      %v3047 = vadd.f32 0.0, %v3046
      %v3048 = vpop.f32.mrb[0].mxu0
      %3049 = vmatprep.mubr.f32.mxu0 0.0
      %3050 = vmatmul.mubr.f32.gmra.mrb[0].mxu0 %v650
      %v3051 = vpop.f32.mrb[0].mxu0
      %v3052 = vadd.f32 0.0, %v3051
      %v3053 = vpop.f32.mrb[0].mxu0
      %3054 = vmatprep.mubr.f32.mxu0 0.0
      %3055 = vmatmul.mubr.f32.gmra.mrb[0].mxu0 %v708
      %v3056 = vpop.f32.mrb[0].mxu0
      %v3057 = vadd.f32 0.0, %v3056
      %v3058 = vpop.f32.mrb[0].mxu0
      %3059 = vmatprep.mubr.f32.mxu0 0.0
      %3060 = vmatmul.mubr.f32.gmra.mrb[0].mxu0 %v653
      %v3061 = vpop.f32.mrb[0].mxu0
      %v3062 = vadd.f32 0.0, %v3061
      %v3063 = vpop.f32.mrb[0].mxu0
      %3064 = vmatprep.mubr.f32.mxu0 0.0
      %3065 = vmatmul.mubr.f32.gmra.mrb[0].mxu0 %v709
      %v3066 = vpop.f32.mrb[0].mxu0
      %v3067 = vadd.f32 0.0, %v3066
      %v3068 = vpop.f32.mrb[0].mxu0
      %3069 = vmatprep.mubr.f32.mxu0 0.0
      %3070 = vmatmul.mubr.f32.gmra.mrb[0].mxu0 %v656
      %v3071 = vpop.f32.mrb[0].mxu0
      %v3072 = vadd.f32 0.0, %v3071
      %v3073 = vpop.f32.mrb[0].mxu0
      %3074 = vmatprep.mubr.f32.mxu0 0.0
      %3075 = vmatmul.mubr.f32.gmra.mrb[0].mxu0 %v710
      %v3076 = vpop.f32.mrb[0].mxu0
      %v3077 = vadd.f32 0.0, %v3076
      %v3078 = vpop.f32.mrb[0].mxu0
      %3079 = vdwg.mxu0
      %v3080 = vadd.f32 %v2806, %v2922
      %v3081 = vadd.f32 %v2807, %v2927
      %v3082 = vadd.f32 %v2808, %v2932
      %v3083 = vadd.f32 %v2809, %v2937
      %v3084 = vadd.f32 %v2810, %v2942
      %v3085 = vadd.f32 %v2811, %v2947
      %v3086 = vadd.f32 %v2812, %v2952
      %v3087 = vadd.f32 %v2813, %v2957
      %v3088 = vadd.f32 %v2814, %v2962
      %v3089 = vadd.f32 %v2815, %v2967
      %v3090 = vadd.f32 %v2816, %v2972
      %v3091 = vadd.f32 %v2817, %v2977
      %v3092 = vadd.f32 %v2818, %v2982
      %v3093 = vadd.f32 %v2819, %v2987
      %v3094 = vadd.f32 %v2820, %v2992
      %v3095 = vadd.f32 %v2821, %v2997
      %v3096 = vadd.f32 %v2822, %v3002
      %v3097 = vadd.f32 %v2823, %v3007
      %v3098 = vadd.f32 %v2824, %v3012
      %v3099 = vadd.f32 %v2825, %v3017
      %v3100 = vadd.f32 %v2826, %v3022
      %v3101 = vadd.f32 %v2827, %v3027
      %v3102 = vadd.f32 %v2828, %v3032
      %v3103 = vadd.f32 %v2829, %v3037
      %v3104 = vadd.f32 %v2830, %v3042
      %v3105 = vadd.f32 %v2831, %v3047
      %v3106 = vadd.f32 %v2832, %v3052
      %v3107 = vadd.f32 %v2833, %v3057
      %v3108 = vadd.f32 %v2834, %v3062
      %v3109 = vadd.f32 %v2835, %v3067
      %v3110 = vadd.f32 %v2836, %v3072
      %v3111 = vadd.f32 %v2837, %v3077
      %3112 = vst [vmem:[%s401] sm:$0xff] %v3080
      %3113 = vst [vmem:[%s401 + $0x8] sm:$0xff] %v3081
      %3114 = vst [vmem:[%s401 + $0x10] sm:$0xff] %v3082
      %3115 = vst [vmem:[%s401 + $0x18] sm:$0xff] %v3083
      %3116 = vst [vmem:[%s401 + $0x20] sm:$0xff] %v3084
      %3117 = vst [vmem:[%s401 + $0x28] sm:$0xff] %v3085
      %3118 = vst [vmem:[%s401 + $0x30] sm:$0xff] %v3086
      %3119 = vst [vmem:[%s401 + $0x38] sm:$0xff] %v3087
      %3120 = vst [vmem:[%s401 + $0x40] sm:$0xff] %v3088
      %3121 = vst [vmem:[%s401 + $0x48] sm:$0xff] %v3089
      %3122 = vst [vmem:[%s401 + $0x50] sm:$0xff] %v3090
      %3123 = vst [vmem:[%s401 + $0x58] sm:$0xff] %v3091
      %3124 = vst [vmem:[%s401 + $0x60] sm:$0xff] %v3092
      %3125 = vst [vmem:[%s401 + $0x68] sm:$0xff] %v3093
      %3126 = vst [vmem:[%s401 + $0x70] sm:$0xff] %v3094
      %3127 = vst [vmem:[%s401 + $0x78] sm:$0xff] %v3095
      %3128 = vst [vmem:[%s401 + $0x80] sm:$0xff] %v3096
      %3129 = vst [vmem:[%s401 + $0x88] sm:$0xff] %v3097
      %3130 = vst [vmem:[%s401 + $0x90] sm:$0xff] %v3098
      %3131 = vst [vmem:[%s401 + $0x98] sm:$0xff] %v3099
      %3132 = vst [vmem:[%s401 + $0xa0] sm:$0xff] %v3100
      %3133 = vst [vmem:[%s401 + $0xa8] sm:$0xff] %v3101
      %3134 = vst [vmem:[%s401 + $0xb0] sm:$0xff] %v3102
      %3135 = vst [vmem:[%s401 + $0xb8] sm:$0xff] %v3103
      %3136 = vst [vmem:[%s401 + $0xc0] sm:$0xff] %v3104
      %3137 = vst [vmem:[%s401 + $0xc8] sm:$0xff] %v3105
      %3138 = vst [vmem:[%s401 + $0xd0] sm:$0xff] %v3106
      %3139 = vst [vmem:[%s401 + $0xd8] sm:$0xff] %v3107
      %3140 = vst [vmem:[%s401 + $0xe0] sm:$0xff] %v3108
      %3141 = vst [vmem:[%s401 + $0xe8] sm:$0xff] %v3109
      %3142 = vst [vmem:[%s401 + $0xf0] sm:$0xff] %v3110
      %3143 = vst [vmem:[%s401 + $0xf8] sm:$0xff] %v3111
      %v3144 = vadd.f32 %v3080, %v3081
      %v3145 = vadd.f32 %v3144, %v3082
      %v3146 = vadd.f32 %v3145, %v3083
      %v3147 = vadd.f32 %v3146, %v3084
      %v3148 = vadd.f32 %v3147, %v3085
      %v3149 = vadd.f32 %v3148, %v3086
      %v3150 = vadd.f32 %v3149, %v3087
      %v3151 = vadd.f32 %v3150, %v3088
      %v3152 = vadd.f32 %v3151, %v3089
      %v3153 = vadd.f32 %v3152, %v3090
      %v3154 = vadd.f32 %v3153, %v3091
      %v3155 = vadd.f32 %v3154, %v3092
      %v3156 = vadd.f32 %v3155, %v3093
      %v3157 = vadd.f32 %v3156, %v3094
      %v3158 = vadd.f32 %v3157, %v3095
      %v3159 = vadd.f32 %v3158, %v3096
      %v3160 = vadd.f32 %v3159, %v3097
      %v3161 = vadd.f32 %v3160, %v3098
      %v3162 = vadd.f32 %v3161, %v3099
      %v3163 = vadd.f32 %v3162, %v3100
      %v3164 = vadd.f32 %v3163, %v3101
      %v3165 = vadd.f32 %v3164, %v3102
      %v3166 = vadd.f32 %v3165, %v3103
      %v3167 = vadd.f32 %v3166, %v3104
      %v3168 = vadd.f32 %v3167, %v3105
      %v3169 = vadd.f32 %v3168, %v3106
      %v3170 = vadd.f32 %v3169, %v3107
      %v3171 = vadd.f32 %v3170, %v3108
      %v3172 = vadd.f32 %v3171, %v3109
      %v3173 = vadd.f32 %v3172, %v3110
      %v3174 = vadd.f32 %v3173, %v3111
      %v3175 = vrot.slane %v3174, 4
      %v3176 = vadd.f32 %v3174, %v3175
      %v3177 = vrot.slane %v3176, 2
      %v3178 = vadd.f32 %v3176, %v3177
      %v3179 = vrot.slane %v3178, 1
      %v3180 = vadd.f32 %v3178, %v3179
      %v3181 = vmul.f32 %v3080, %v3080
      %v3182 = vmul.f32 %v3081, %v3081
      %v3183 = vmul.f32 %v3082, %v3082
      %v3184 = vmul.f32 %v3083, %v3083
      %v3185 = vmul.f32 %v3084, %v3084
      %v3186 = vmul.f32 %v3085, %v3085
      %v3187 = vmul.f32 %v3086, %v3086
      %v3188 = vmul.f32 %v3087, %v3087
      %v3189 = vmul.f32 %v3088, %v3088
      %v3190 = vmul.f32 %v3089, %v3089
      %v3191 = vmul.f32 %v3090, %v3090
      %v3192 = vmul.f32 %v3091, %v3091
      %v3193 = vmul.f32 %v3092, %v3092
      %v3194 = vmul.f32 %v3093, %v3093
      %v3195 = vmul.f32 %v3094, %v3094
      %v3196 = vmul.f32 %v3095, %v3095
      %v3197 = vmul.f32 %v3096, %v3096
      %v3198 = vmul.f32 %v3097, %v3097
      %v3199 = vmul.f32 %v3098, %v3098
      %v3200 = vmul.f32 %v3099, %v3099
      %v3201 = vmul.f32 %v3100, %v3100
      %v3202 = vmul.f32 %v3101, %v3101
      %v3203 = vmul.f32 %v3102, %v3102
      %v3204 = vmul.f32 %v3103, %v3103
      %v3205 = vmul.f32 %v3104, %v3104
      %v3206 = vmul.f32 %v3105, %v3105
      %v3207 = vmul.f32 %v3106, %v3106
      %v3208 = vmul.f32 %v3107, %v3107
      %v3209 = vmul.f32 %v3108, %v3108
      %v3210 = vmul.f32 %v3109, %v3109
      %v3211 = vmul.f32 %v3110, %v3110
      %v3212 = vmul.f32 %v3111, %v3111
      %v3213 = vadd.f32 %v3181, %v3182
      %v3214 = vadd.f32 %v3213, %v3183
      %v3215 = vadd.f32 %v3214, %v3184
      %v3216 = vadd.f32 %v3215, %v3185
      %v3217 = vadd.f32 %v3216, %v3186
      %v3218 = vadd.f32 %v3217, %v3187
      %v3219 = vadd.f32 %v3218, %v3188
      %v3220 = vadd.f32 %v3219, %v3189
      %v3221 = vadd.f32 %v3220, %v3190
      %v3222 = vadd.f32 %v3221, %v3191
      %v3223 = vadd.f32 %v3222, %v3192
      %v3224 = vadd.f32 %v3223, %v3193
      %v3225 = vadd.f32 %v3224, %v3194
      %v3226 = vadd.f32 %v3225, %v3195
      %v3227 = vadd.f32 %v3226, %v3196
      %v3228 = vadd.f32 %v3227, %v3197
      %v3229 = vadd.f32 %v3228, %v3198
      %v3230 = vadd.f32 %v3229, %v3199
      %v3231 = vadd.f32 %v3230, %v3200
      %v3232 = vadd.f32 %v3231, %v3201
      %v3233 = vadd.f32 %v3232, %v3202
      %v3234 = vadd.f32 %v3233, %v3203
      %v3235 = vadd.f32 %v3234, %v3204
      %v3236 = vadd.f32 %v3235, %v3205
      %v3237 = vadd.f32 %v3236, %v3206
      %v3238 = vadd.f32 %v3237, %v3207
      %v3239 = vadd.f32 %v3238, %v3208
      %v3240 = vadd.f32 %v3239, %v3209
      %v3241 = vadd.f32 %v3240, %v3210
      %v3242 = vadd.f32 %v3241, %v3211
      %v3243 = vadd.f32 %v3242, %v3212
      %v3244 = vrot.slane %v3243, 4
      %v3245 = vadd.f32 %v3243, %v3244
      %v3246 = vrot.slane %v3245, 2
      %v3247 = vadd.f32 %v3245, %v3246
      %v3248 = vrot.slane %v3247, 1
      %v3249 = vadd.f32 %v3247, %v3248
      %v3250 = vsel %vm493, %v3180, %v3249
      %3251 = vst [vmem:[%s407] sm:$0x3] %v3250
      %s3252 = smul.u32 16, %s22
      %p3253 = scmp.lt.s32.totalorder %s21, 1
      %s3254 = scalar_select %p3253, %s21, 1
      %p3255 = scmp.lt.s32.totalorder %s3252, 15
      %s3256 = scalar_select %p3255, %s3252, 15
      %s3257 = smul.addr %s3256, 2
      %s3258 = smul.addr %s3254, 32
      %s3259 = sadd.s32 %s3257, %s3258
      %s3260 = smul.addr %s3259, 8
      %s3261 = scalar_lea.vmem %s4, %s3260
      %s3262 = sadd.s32 %s21, %s22
      %p3263 = scmp.lt.s32.totalorder %s3262, 1
      %s3264 = scalar_select %p3263, %s3262, 1
      %s3265 = smul.addr %s3264, 2
      %s3266 = scalar_lea.vmem %s5, %s3265
      // Predicated region
      $region37: #{conv_block_forward.3} parent=35 // pred_check
        %p3267 = pneg %p170
      $region38: #{conv_block_forward.3} parent=35 // pred_check_branch
        %3269 = sbr.rel (%p3267) target = $region40
      $region39: #{conv_block_forward.3} parent=35 // pred_region
        %s3270 = smul.u32 16, %s22
      $region40: #{conv_block_forward.3} parent=35 // pred_fallthru
        _
      // Predicated region
      $region41: #{conv_block_forward.3} parent=35 // pred_check
        %p3271 = pneg %p198
      $region42: #{conv_block_forward.3} parent=35 // pred_check_branch
        %3273 = sbr.rel (%p3271) target = $region44
      $region43: #{conv_block_forward.3} parent=35 // pred_region
        %s3274 = sadd.s32 %s21, %s22
      $region44: #{conv_block_forward.3} parent=35 // pred_fallthru
        _
    $region36: #{conv_block_forward.3} parent=5 // pred_fallthru
      _
    %p3275 = scmp.le.s32.totalorder 2, %s12
    // Predicated region
    $region45: #{conv_block_forward.3} parent=5 // pred_check
      %p3276 = pneg %p3275
    $region46: #{conv_block_forward.3} parent=5 // pred_check_branch
      %3278 = sbr.rel (%p3276) target = $region48
    $region47: #{conv_block_forward.3} parent=5 // pred_region
      %s3279 = ssub.s32 %s12, 2
      // Predicated region
      $region49: #{conv_block_forward.3} parent=47 // pred_check
        %p3280 = pneg %p176
      $region50: #{conv_block_forward.3} parent=47 // pred_check_branch
        %3282 = sbr.rel (%p3280) target = $region52
      $region51: #{conv_block_forward.3} parent=47 // pred_region
        %s3283 = smul.u32 16, %s24
        %p3284 = scmp.lt.s32.totalorder %s23, 1
        %s3285 = scalar_select %p3284, %s23, 1
        %p3286 = scmp.lt.s32.totalorder %s3283, 15
        %s3287 = scalar_select %p3286, %s3283, 15
        %s3288 = smul.addr %s3287, 2
        %s3289 = smul.addr %s3285, 32
        %s3290 = sadd.s32 %s3288, %s3289
        %s3291 = smul.addr %s3290, 8
        %s3292 = scalar_lea.vmem %s4, %s3291
      $region52: #{conv_block_forward.3} parent=47 // pred_fallthru
        _
      // Predicated region
      $region53: #{conv_block_forward.3} parent=47 // pred_check
        %p3293 = pneg %p204
      $region54: #{conv_block_forward.3} parent=47 // pred_check_branch
        %3295 = sbr.rel (%p3293) target = $region56
      $region55: #{conv_block_forward.3} parent=47 // pred_region
        %s3296 = sadd.s32 %s23, %s24
        %p3297 = scmp.lt.s32.totalorder %s3296, 1
        %s3298 = scalar_select %p3297, %s3296, 1
        %s3299 = smul.addr %s3298, 2
        %s3300 = scalar_lea.vmem %s5, %s3299
      $region56: #{conv_block_forward.3} parent=47 // pred_fallthru
        _
    $region48: #{conv_block_forward.3} parent=5 // pred_fallthru
      _
  $region6: #{conv_block_forward.3} parent=0 // loop_footer
    %s16 = sadd.s32 1, %s12
  $region7: #{conv_block_forward.3} parent=0 // loop_footer_branch
    %11 = sbr.rel target = $region3
  $region8: #{conv_block_forward.3} parent=0 // loop_exit
    _

// kernel: conv_block_forward.4
$region0: #{conv_block_forward.4}
  #allocation0 [shape = 'u32[]', space=smem, size = 0x4, offset = 0x4, fixed_abs, tag = 'smem constant byte address 0x4 - core index']
  #allocation1 [shape = 'u32[144,128]{1,0:T(1,128)}', space=vmem, size = 0x12000, scoped, tag = 'internal scratch']
  %s0 = inlined_call_operand.vmem [shape: f32[2,16,16,128], index: 0, kind: input, shape index: {}, may-alias: {0,1,2}]
  %s1 = inlined_call_operand.vmem [shape: f32[2,16,16,128], index: 1, kind: input, shape index: {}, may-alias: {0,1,2}]
  %s2 = inlined_call_operand.vmem [shape: f32[2,16,16,128], index: 2, kind: input, shape index: {}, may-alias: {0,1,2}]
  %s3 = inlined_call_operand.vmem [shape: f32[9,128,128], index: 3, kind: input, shape index: {}]
  %s4 = inlined_call_operand.vmem [shape: f32[1,128], index: 4, kind: input, shape index: {}]
  %s5 = inlined_call_operand.vmem [shape: f32[1,128], index: 5, kind: input, shape index: {}]
  %s6 = inlined_call_operand.vmem [shape: f32[2,16,16,128], index: 6, kind: output, shape index: {0}]
  %s7 = inlined_call_operand.vmem [shape: f32[2,2,128], index: 7, kind: output, shape index: {1}]
  %8 = xla_tuple %s6, %s7
  %s9 = sld [smem:[#allocation0]]
  $region65: #{conv_block_forward.4} parent=0
    _
  %s11 = ssub.s32 1, %s9
  %s12 = scalar_select 0, %s11, %s9
  loop: start=0, step=1, limit=4
  $region2: #{conv_block_forward.4} parent=0 // loop_pre_header
    _
  $region3: #{conv_block_forward.4} parent=0 // loop_header
    %s14 = sphi 0, %s18
    %p15 = scmp.ge.s32.totalorder %s14, 4
    %s21 = sphi 0, %s33
    %s22 = sphi 0, %s29
    %s23 = sphi 0, %s21
    %s24 = sphi 0, %s22
    %s25 = sphi 0, %s23
    %s26 = sphi 0, %s24
    %s38 = sphi 0, %s40
    %s41 = sphi 0, %s38
    %s42 = sphi 0, %s41
    %s58 = sphi 0, %s42
    %s74 = sphi 0, %s76
    %s77 = sphi 0, %s74
    %s78 = sphi 0, %s77
    %s94 = sphi 0, %s78
    %s110 = sphi 0, %s112
    %s113 = sphi 0, %s110
    %s114 = sphi 0, %s113
    %s130 = sphi 0, %s114
    %s134 = sphi 0, %s134
    %s136 = sphi 0, %s134
    %s137 = sphi 0, %s136
    %s151 = sphi 0, %s137
    %s155 = sphi 0, %s155
    %s157 = sphi 0, %s155
    %s158 = sphi 0, %s157
    %s172 = sphi 0, %s158
    %s176 = sphi 0, %s176
    %s178 = sphi 0, %s176
    %s179 = sphi 0, %s178
    %s193 = sphi 0, %s179
    %s201 = sphi 0, %s203
    %s204 = sphi 0, %s201
    %s205 = sphi 0, %s204
    %s221 = sphi 0, %s205
    %s229 = sphi 0, %s231
    %s232 = sphi 0, %s229
    %s233 = sphi 0, %s232
    %s249 = sphi 0, %s233
  $region4: #{conv_block_forward.4} parent=0 // loop_header_branch
    %17 = sbr.rel (%p15) target = $region8
  $region5: #{conv_block_forward.4} parent=0 // loop_body
    %s19 = ssub.s32 %s14, 1
    %s20 = ssub.s32 %s14, 2
    %s27 = sadd.s32 1, %s22
    %p28 = scmp.ge.s32.totalorder %s27, 1
    %s29 = scalar_select %p28, 0, %s27
    %s30 = sadd.s32 1, %s21
    %s31 = scalar_select %p28, %s30, %s21
    %p32 = scmp.ge.s32.totalorder %s31, 2
    %s33 = scalar_select %p32, 0, %s31
    %s34 = ssub.s32 %s21, %s33
    %s35 = ssub.s32 %s22, %s29
    %s36 = sor.u32 %s34, %s35
    %p37 = scmp.eq.s32.totalorder %s36, 0
    %s39 = sadd.s32 %s38, 1
    %s40 = scalar_select %p37, %s38, %s39
    %p43 = pneg %p37
    %p44 = scmp.eq.s32.totalorder %s14, 1
    %p45 = por %p43, %p44
    %p46 = scmp.ne.s32.totalorder %s38, %s41
    %p47 = scmp.eq.s32.totalorder %s14, 0
    %p48 = por %p46, %p47
    %p49 = scmp.ne.s32.totalorder %s38, %s41
    %p50 = scmp.eq.s32.totalorder %s19, 1
    %p51 = por %p49, %p50
    %p52 = scmp.ne.s32.totalorder %s41, %s42
    %p53 = scmp.eq.s32.totalorder %s19, 0
    %p54 = por %p52, %p53
    %p55 = scmp.ne.s32.totalorder %s41, %s42
    %p56 = scmp.eq.s32.totalorder %s20, 1
    %p57 = por %p55, %p56
    %p59 = scmp.ne.s32.totalorder %s42, %s58
    %p60 = scmp.eq.s32.totalorder %s20, 0
    %p61 = por %p59, %p60
    %s62 = smul.u32 %s22, 16
    %s63 = ssub.s32 %s62, 1
    %p64 = scmp.gt.s32.totalorder %s63, 0
    %s65 = scalar_select %p64, %s63, 0
    %s66 = smul.u32 %s29, 16
    %s67 = ssub.s32 %s66, 1
    %p68 = scmp.gt.s32.totalorder %s67, 0
    %s69 = scalar_select %p68, %s67, 0
    %s70 = ssub.s32 %s21, %s33
    %s71 = ssub.s32 %s65, %s69
    %s72 = sor.u32 %s70, %s71
    %p73 = scmp.eq.s32.totalorder %s72, 0
    %s75 = sadd.s32 %s74, 1
    %s76 = scalar_select %p73, %s74, %s75
    %p79 = pneg %p73
    %p80 = scmp.eq.s32.totalorder %s14, 1
    %p81 = por %p79, %p80
    %p82 = scmp.ne.s32.totalorder %s74, %s77
    %p83 = scmp.eq.s32.totalorder %s14, 0
    %p84 = por %p82, %p83
    %p85 = scmp.ne.s32.totalorder %s74, %s77
    %p86 = scmp.eq.s32.totalorder %s19, 1
    %p87 = por %p85, %p86
    %p88 = scmp.ne.s32.totalorder %s77, %s78
    %p89 = scmp.eq.s32.totalorder %s19, 0
    %p90 = por %p88, %p89
    %p91 = scmp.ne.s32.totalorder %s77, %s78
    %p92 = scmp.eq.s32.totalorder %s20, 1
    %p93 = por %p91, %p92
    %p95 = scmp.ne.s32.totalorder %s78, %s94
    %p96 = scmp.eq.s32.totalorder %s20, 0
    %p97 = por %p95, %p96
    %s98 = smul.u32 %s22, 16
    %s99 = sadd.s32 %s98, 16
    %p100 = scmp.lt.s32.totalorder %s99, 15
    %s101 = scalar_select %p100, %s99, 15
    %s102 = smul.u32 %s29, 16
    %s103 = sadd.s32 %s102, 16
    %p104 = scmp.lt.s32.totalorder %s103, 15
    %s105 = scalar_select %p104, %s103, 15
    %s106 = ssub.s32 %s21, %s33
    %s107 = ssub.s32 %s101, %s105
    %s108 = sor.u32 %s106, %s107
    %p109 = scmp.eq.s32.totalorder %s108, 0
    %s111 = sadd.s32 %s110, 1
    %s112 = scalar_select %p109, %s110, %s111
    %p115 = pneg %p109
    %p116 = scmp.eq.s32.totalorder %s14, 1
    %p117 = por %p115, %p116
    %p118 = scmp.ne.s32.totalorder %s110, %s113
    %p119 = scmp.eq.s32.totalorder %s14, 0
    %p120 = por %p118, %p119
    %p121 = scmp.ne.s32.totalorder %s110, %s113
    %p122 = scmp.eq.s32.totalorder %s19, 1
    %p123 = por %p121, %p122
    %p124 = scmp.ne.s32.totalorder %s113, %s114
    %p125 = scmp.eq.s32.totalorder %s19, 0
    %p126 = por %p124, %p125
    %p127 = scmp.ne.s32.totalorder %s113, %s114
    %p128 = scmp.eq.s32.totalorder %s20, 1
    %p129 = por %p127, %p128
    %p131 = scmp.ne.s32.totalorder %s114, %s130
    %p132 = scmp.eq.s32.totalorder %s20, 0
    %p133 = por %p131, %p132
    %s135 = sadd.s32 %s134, 1
    %p138 = scmp.eq.s32.totalorder %s14, 1
    %p139 = scmp.ne.s32.totalorder %s134, %s136
    %p140 = scmp.eq.s32.totalorder %s14, 0
    %p141 = por %p139, %p140
    %p142 = scmp.ne.s32.totalorder %s134, %s136
    %p143 = scmp.eq.s32.totalorder %s19, 1
    %p144 = por %p142, %p143
    %p145 = scmp.ne.s32.totalorder %s136, %s137
    %p146 = scmp.eq.s32.totalorder %s19, 0
    %p147 = por %p145, %p146
    %p148 = scmp.ne.s32.totalorder %s136, %s137
    %p149 = scmp.eq.s32.totalorder %s20, 1
    %p150 = por %p148, %p149
    %p152 = scmp.ne.s32.totalorder %s137, %s151
    %p153 = scmp.eq.s32.totalorder %s20, 0
    %p154 = por %p152, %p153
    %s156 = sadd.s32 %s155, 1
    %p159 = scmp.eq.s32.totalorder %s14, 1
    %p160 = scmp.ne.s32.totalorder %s155, %s157
    %p161 = scmp.eq.s32.totalorder %s14, 0
    %p162 = por %p160, %p161
    %p163 = scmp.ne.s32.totalorder %s155, %s157
    %p164 = scmp.eq.s32.totalorder %s19, 1
    %p165 = por %p163, %p164
    %p166 = scmp.ne.s32.totalorder %s157, %s158
    %p167 = scmp.eq.s32.totalorder %s19, 0
    %p168 = por %p166, %p167
    %p169 = scmp.ne.s32.totalorder %s157, %s158
    %p170 = scmp.eq.s32.totalorder %s20, 1
    %p171 = por %p169, %p170
    %p173 = scmp.ne.s32.totalorder %s158, %s172
    %p174 = scmp.eq.s32.totalorder %s20, 0
    %p175 = por %p173, %p174
    %s177 = sadd.s32 %s176, 1
    %p180 = scmp.eq.s32.totalorder %s14, 1
    %p181 = scmp.ne.s32.totalorder %s176, %s178
    %p182 = scmp.eq.s32.totalorder %s14, 0
    %p183 = por %p181, %p182
    %p184 = scmp.ne.s32.totalorder %s176, %s178
    %p185 = scmp.eq.s32.totalorder %s19, 1
    %p186 = por %p184, %p185
    %p187 = scmp.ne.s32.totalorder %s178, %s179
    %p188 = scmp.eq.s32.totalorder %s19, 0
    %p189 = por %p187, %p188
    %p190 = scmp.ne.s32.totalorder %s178, %s179
    %p191 = scmp.eq.s32.totalorder %s20, 1
    %p192 = por %p190, %p191
    %p194 = scmp.ne.s32.totalorder %s179, %s193
    %p195 = scmp.eq.s32.totalorder %s20, 0
    %p196 = por %p194, %p195
    %s197 = ssub.s32 %s21, %s33
    %s198 = ssub.s32 %s22, %s29
    %s199 = sor.u32 %s197, %s198
    %p200 = scmp.eq.s32.totalorder %s199, 0
    %s202 = sadd.s32 %s201, 1
    %s203 = scalar_select %p200, %s201, %s202
    %p206 = pneg %p200
    %p207 = scmp.eq.s32.totalorder %s14, 1
    %p208 = por %p206, %p207
    %p209 = scmp.ne.s32.totalorder %s201, %s204
    %p210 = scmp.eq.s32.totalorder %s14, 0
    %p211 = por %p209, %p210
    %p212 = scmp.ne.s32.totalorder %s201, %s204
    %p213 = scmp.eq.s32.totalorder %s19, 1
    %p214 = por %p212, %p213
    %p215 = scmp.ne.s32.totalorder %s204, %s205
    %p216 = scmp.eq.s32.totalorder %s19, 0
    %p217 = por %p215, %p216
    %p218 = scmp.ne.s32.totalorder %s204, %s205
    %p219 = scmp.eq.s32.totalorder %s20, 1
    %p220 = por %p218, %p219
    %p222 = scmp.ne.s32.totalorder %s205, %s221
    %p223 = scmp.eq.s32.totalorder %s20, 0
    %p224 = por %p222, %p223
    %s225 = sadd.s32 %s21, %s22
    %s226 = sadd.s32 %s33, %s29
    %s227 = ssub.s32 %s225, %s226
    %p228 = scmp.eq.s32.totalorder %s227, 0
    %s230 = sadd.s32 %s229, 1
    %s231 = scalar_select %p228, %s229, %s230
    %p234 = pneg %p228
    %p235 = scmp.eq.s32.totalorder %s14, 1
    %p236 = por %p234, %p235
    %p237 = scmp.ne.s32.totalorder %s229, %s232
    %p238 = scmp.eq.s32.totalorder %s14, 0
    %p239 = por %p237, %p238
    %p240 = scmp.ne.s32.totalorder %s229, %s232
    %p241 = scmp.eq.s32.totalorder %s19, 1
    %p242 = por %p240, %p241
    %p243 = scmp.ne.s32.totalorder %s232, %s233
    %p244 = scmp.eq.s32.totalorder %s19, 0
    %p245 = por %p243, %p244
    %p246 = scmp.ne.s32.totalorder %s232, %s233
    %p247 = scmp.eq.s32.totalorder %s20, 1
    %p248 = por %p246, %p247
    %p250 = scmp.ne.s32.totalorder %s233, %s249
    %p251 = scmp.eq.s32.totalorder %s20, 0
    %p252 = por %p250, %p251
    %p253 = scmp.le.s32.totalorder 1, %s14
    %p254 = scmp.lt.s32.totalorder %s14, 3
    %p255 = pnand %p253, %p254
    %p256 = pneg %p255
    // Predicated region
    $region9: #{conv_block_forward.4} parent=5 // pred_check
      _
    $region10: #{conv_block_forward.4} parent=5 // pred_check_branch
      %258 = sbr.rel (%p255) target = $region12
    $region11: #{conv_block_forward.4} parent=5 // pred_region
      %s259 = ssub.s32 %s14, 1
      // Predicated region
      $region13: #{conv_block_forward.4} parent=11 // pred_check
        %p260 = pneg %p147
      $region14: #{conv_block_forward.4} parent=11 // pred_check_branch
        %262 = sbr.rel (%p260) target = $region16
      $region15: #{conv_block_forward.4} parent=11 // pred_region
        _
      $region16: #{conv_block_forward.4} parent=11 // pred_fallthru
        _
      // Predicated region
      $region17: #{conv_block_forward.4} parent=11 // pred_check
        %p263 = pneg %p168
      $region18: #{conv_block_forward.4} parent=11 // pred_check_branch
        %265 = sbr.rel (%p263) target = $region20
      $region19: #{conv_block_forward.4} parent=11 // pred_region
        _
      $region20: #{conv_block_forward.4} parent=11 // pred_fallthru
        _
      // Predicated region
      $region21: #{conv_block_forward.4} parent=11 // pred_check
        %p266 = pneg %p189
      $region22: #{conv_block_forward.4} parent=11 // pred_check_branch
        %268 = sbr.rel (%p266) target = $region24
      $region23: #{conv_block_forward.4} parent=11 // pred_region
        _
      $region24: #{conv_block_forward.4} parent=11 // pred_fallthru
        _
    $region12: #{conv_block_forward.4} parent=5 // pred_fallthru
      _
    %p269 = scmp.lt.s32.totalorder %s14, 2
    // Predicated region
    $region25: #{conv_block_forward.4} parent=5 // pred_check
      %p270 = pneg %p269
    $region26: #{conv_block_forward.4} parent=5 // pred_check_branch
      %272 = sbr.rel (%p270) target = $region28
    $region27: #{conv_block_forward.4} parent=5 // pred_region
      // Predicated region
      $region29: #{conv_block_forward.4} parent=27 // pred_check
        %p273 = pneg %p48
      $region30: #{conv_block_forward.4} parent=27 // pred_check_branch
        %275 = sbr.rel (%p273) target = $region32
      $region31: #{conv_block_forward.4} parent=27 // pred_region
        %s276 = smul.u32 16, %s22
        %p277 = scmp.lt.s32.totalorder %s21, 1
        %s278 = scalar_select %p277, %s21, 1
        %p279 = scmp.lt.s32.totalorder %s276, 15
        %s280 = scalar_select %p279, %s276, 15
        %s281 = smul.addr %s280, 2
        %s282 = smul.addr %s278, 32
        %s283 = sadd.s32 %s281, %s282
        %s284 = smul.addr %s283, 8
        %s285 = scalar_lea.vmem %s0, %s284
        %s286 = smul.u32 16, %s22
      $region32: #{conv_block_forward.4} parent=27 // pred_fallthru
        _
      // Predicated region
      $region33: #{conv_block_forward.4} parent=27 // pred_check
        %p287 = pneg %p84
      $region34: #{conv_block_forward.4} parent=27 // pred_check_branch
        %289 = sbr.rel (%p287) target = $region36
      $region35: #{conv_block_forward.4} parent=27 // pred_region
        %s290 = smul.u32 %s22, 16
        %s291 = ssub.s32 %s290, 1
        %p292 = scmp.gt.s32.totalorder %s291, 0
        %s293 = scalar_select %p292, %s291, 0
        %p294 = scmp.lt.s32.totalorder %s21, 1
        %s295 = scalar_select %p294, %s21, 1
        %p296 = scmp.lt.s32.totalorder %s293, 15
        %s297 = scalar_select %p296, %s293, 15
        %s298 = smul.addr %s297, 2
        %s299 = smul.addr %s295, 32
        %s300 = sadd.s32 %s298, %s299
        %s301 = smul.addr %s300, 8
        %s302 = scalar_lea.vmem %s1, %s301
        %s303 = smul.u32 %s22, 16
        %s304 = ssub.s32 %s303, 1
        %p305 = scmp.gt.s32.totalorder %s304, 0
        %s306 = scalar_select %p305, %s304, 0
      $region36: #{conv_block_forward.4} parent=27 // pred_fallthru
        _
      // Predicated region
      $region37: #{conv_block_forward.4} parent=27 // pred_check
        %p307 = pneg %p120
      $region38: #{conv_block_forward.4} parent=27 // pred_check_branch
        %309 = sbr.rel (%p307) target = $region40
      $region39: #{conv_block_forward.4} parent=27 // pred_region
        %s310 = smul.u32 %s22, 16
        %s311 = sadd.s32 %s310, 16
        %p312 = scmp.lt.s32.totalorder %s311, 15
        %s313 = scalar_select %p312, %s311, 15
        %p314 = scmp.lt.s32.totalorder %s21, 1
        %s315 = scalar_select %p314, %s21, 1
        %p316 = scmp.lt.s32.totalorder %s313, 15
        %s317 = scalar_select %p316, %s313, 15
        %s318 = smul.addr %s317, 2
        %s319 = smul.addr %s315, 32
        %s320 = sadd.s32 %s318, %s319
        %s321 = smul.addr %s320, 8
        %s322 = scalar_lea.vmem %s2, %s321
        %s323 = smul.u32 %s22, 16
        %s324 = sadd.s32 %s323, 16
        %p325 = scmp.lt.s32.totalorder %s324, 15
        %s326 = scalar_select %p325, %s324, 15
      $region40: #{conv_block_forward.4} parent=27 // pred_fallthru
        _
    $region28: #{conv_block_forward.4} parent=5 // pred_fallthru
      _
    %p327 = scmp.le.s32.totalorder 1, %s14
    %p328 = scmp.lt.s32.totalorder %s14, 3
    %p329 = pnand %p327, %p328
    %p330 = pneg %p329
    // Predicated region
    $region41: #{conv_block_forward.4} parent=5 // pred_check
      _
    $region42: #{conv_block_forward.4} parent=5 // pred_check_branch
      %332 = sbr.rel (%p329) target = $region44
    $region43: #{conv_block_forward.4} parent=5 // pred_region
      %s333 = ssub.s32 %s14, 1
      %s334 = smul.u32 16, %s24
      %p335 = scmp.lt.s32.totalorder %s23, 1
      %s336 = scalar_select %p335, %s23, 1
      %p337 = scmp.lt.s32.totalorder %s334, 15
      %s338 = scalar_select %p337, %s334, 15
      %s339 = smul.addr %s338, 2
      %s340 = smul.addr %s336, 32
      %s341 = sadd.s32 %s339, %s340
      %s342 = smul.addr %s341, 8
      %s343 = scalar_lea.vmem %s0, %s342
      %p344 = pneg %p54
      %p345 = pneg %p51
      %s346 = smul.u32 %s24, 16
      %s347 = ssub.s32 %s346, 1
      %p348 = scmp.gt.s32.totalorder %s347, 0
      %s349 = scalar_select %p348, %s347, 0
      %p350 = scmp.lt.s32.totalorder %s23, 1
      %s351 = scalar_select %p350, %s23, 1
      %p352 = scmp.lt.s32.totalorder %s349, 15
      %s353 = scalar_select %p352, %s349, 15
      %s354 = smul.addr %s353, 2
      %s355 = smul.addr %s351, 32
      %s356 = sadd.s32 %s354, %s355
      %s357 = smul.addr %s356, 8
      %s358 = scalar_lea.vmem %s1, %s357
      %p359 = pneg %p90
      %p360 = pneg %p87
      %s361 = smul.u32 %s24, 16
      %s362 = sadd.s32 %s361, 16
      %p363 = scmp.lt.s32.totalorder %s362, 15
      %s364 = scalar_select %p363, %s362, 15
      %p365 = scmp.lt.s32.totalorder %s23, 1
      %s366 = scalar_select %p365, %s23, 1
      %p367 = scmp.lt.s32.totalorder %s364, 15
      %s368 = scalar_select %p367, %s364, 15
      %s369 = smul.addr %s368, 2
      %s370 = smul.addr %s366, 32
      %s371 = sadd.s32 %s369, %s370
      %s372 = smul.addr %s371, 8
      %s373 = scalar_lea.vmem %s2, %s372
      %p374 = pneg %p126
      %p375 = pneg %p123
      %p376 = pneg %p147
      %p377 = pneg %p144
      %p378 = pneg %p168
      %p379 = pneg %p165
      %p380 = pneg %p189
      %p381 = pneg %p186
      %p382 = pneg %p217
      %p383 = pneg %p214
      %s384 = smul.u32 16, %s24
      %p385 = scmp.lt.s32.totalorder %s23, 1
      %s386 = scalar_select %p385, %s23, 1
      %p387 = scmp.lt.s32.totalorder %s384, 15
      %s388 = scalar_select %p387, %s384, 15
      %s389 = smul.addr %s388, 2
      %s390 = smul.addr %s386, 32
      %s391 = sadd.s32 %s389, %s390
      %s392 = smul.addr %s391, 8
      %s393 = scalar_lea.vmem %s6, %s392
      %p394 = pneg %p245
      %p395 = pneg %p242
      %s396 = sadd.s32 %s23, %s24
      %p397 = scmp.lt.s32.totalorder %s396, 1
      %s398 = scalar_select %p397, %s396, 1
      %s399 = smul.addr %s398, 2
      %s400 = scalar_lea.vmem %s7, %s399
      %s401 = smul.u32 16, %s24
      %p402 = scmp.lt.s32.totalorder %s23, 1
      %s403 = scalar_select %p402, %s23, 1
      %p404 = scmp.lt.s32.totalorder %s401, 15
      %s405 = scalar_select %p404, %s401, 15
      %s406 = smul.addr %s405, 2
      %s407 = smul.addr %s403, 32
      %s408 = sadd.s32 %s406, %s407
      %s409 = smul.addr %s408, 8
      %s410 = scalar_lea.vmem %s0, %s409
      %s411 = smul.u32 16, %s24
      %s412 = smul.u32 %s24, 16
      %s413 = ssub.s32 %s412, 1
      %p414 = scmp.gt.s32.totalorder %s413, 0
      %s415 = scalar_select %p414, %s413, 0
      %p416 = scmp.lt.s32.totalorder %s23, 1
      %s417 = scalar_select %p416, %s23, 1
      %p418 = scmp.lt.s32.totalorder %s415, 15
      %s419 = scalar_select %p418, %s415, 15
      %s420 = smul.addr %s419, 2
      %s421 = smul.addr %s417, 32
      %s422 = sadd.s32 %s420, %s421
      %s423 = smul.addr %s422, 8
      %s424 = scalar_lea.vmem %s1, %s423
      %s425 = smul.u32 %s24, 16
      %s426 = ssub.s32 %s425, 1
      %p427 = scmp.gt.s32.totalorder %s426, 0
      %s428 = scalar_select %p427, %s426, 0
      %s429 = smul.u32 %s24, 16
      %s430 = sadd.s32 %s429, 16
      %p431 = scmp.lt.s32.totalorder %s430, 15
      %s432 = scalar_select %p431, %s430, 15
      %p433 = scmp.lt.s32.totalorder %s23, 1
      %s434 = scalar_select %p433, %s23, 1
      %p435 = scmp.lt.s32.totalorder %s432, 15
      %s436 = scalar_select %p435, %s432, 15
      %s437 = smul.addr %s436, 2
      %s438 = smul.addr %s434, 32
      %s439 = sadd.s32 %s437, %s438
      %s440 = smul.addr %s439, 8
      %s441 = scalar_lea.vmem %s2, %s440
      %s442 = smul.u32 %s24, 16
      %s443 = sadd.s32 %s442, 16
      %p444 = scmp.lt.s32.totalorder %s443, 15
      %s445 = scalar_select %p444, %s443, 15
      %s446 = smul.u32 16, %s24
      %p447 = scmp.lt.s32.totalorder %s23, 1
      %s448 = scalar_select %p447, %s23, 1
      %p449 = scmp.lt.s32.totalorder %s446, 15
      %s450 = scalar_select %p449, %s446, 15
      %s451 = smul.addr %s450, 2
      %s452 = smul.addr %s448, 32
      %s453 = sadd.s32 %s451, %s452
      %s454 = smul.addr %s453, 8
      %s455 = scalar_lea.vmem %s6, %s454
      %s456 = smul.u32 16, %s24
      %s457 = sadd.s32 %s23, %s24
      %p458 = scmp.lt.s32.totalorder %s457, 1
      %s459 = scalar_select %p458, %s457, 1
      %s460 = smul.addr %s459, 2
      %s461 = scalar_lea.vmem %s7, %s460
      %s462 = sadd.s32 %s23, %s24
      %v463 = vld [vmem:[%s4] sm:$0x1]
      %v464 = vld [vmem:[%s5] sm:$0x1]
      %p465 = scmp.gt.s32.totalorder %s24, 0
      %s466 = scalar_select %p465, 1, 0
      %s467 = scvt.s32.f32 %s466
      %p468 = scmp.lt.s32.totalorder %s24, 0
      %s469 = scalar_select %p468, 1, 0
      %s470 = scvt.s32.f32 %s469
      %v471 = vld [vmem:[%s424] sm:$0xff]
      %v472 = vld [vmem:[%s424 + $0x8] sm:$0xff]
      %v474 = vlaneseq
      %v475 = vshrl.u32 %v474, 7
      %v476 = vsub.s32 0, %v475
      %v477 = vrot.slane %v463, %v476
      %v479 = vmul.f32 %v471, %v477
      %v480 = vmul.f32 %v472, %v477
      %v482 = vlaneseq
      %v483 = vshrl.u32 %v482, 7
      %v484 = vsub.s32 0, %v483
      %v485 = vrot.slane %v464, %v484
      %v487 = vadd.f32 %v479, %v485
      %v488 = vadd.f32 %v480, %v485
      %v489 = vstv %s467
      %v490 = vmul.f32 %v487, %v489
      %v491 = vmul.f32 %v488, %v489
      %v492 = vld [vmem:[%s441] sm:$0xff]
      %v493 = vld [vmem:[%s441 + $0x8] sm:$0xff]
      %v494 = vmul.f32 %v492, %v477
      %v495 = vmul.f32 %v493, %v477
      %v496 = vadd.f32 %v494, %v485
      %v497 = vadd.f32 %v495, %v485
      %v498 = vstv %s470
      %v499 = vmul.f32 %v496, %v498
      %v500 = vmul.f32 %v497, %v498
      %v501 = vld [vmem:[%s410] sm:$0xff]
      %v502 = vld [vmem:[%s410 + $0x8] sm:$0xff]
      %v503 = vld [vmem:[%s410 + $0x10] sm:$0xff]
      %v504 = vld [vmem:[%s410 + $0x18] sm:$0xff]
      %v505 = vld [vmem:[%s410 + $0x20] sm:$0xff]
      %v506 = vld [vmem:[%s410 + $0x28] sm:$0xff]
      %v507 = vld [vmem:[%s410 + $0x30] sm:$0xff]
      %v508 = vld [vmem:[%s410 + $0x38] sm:$0xff]
      %v509 = vld [vmem:[%s410 + $0x40] sm:$0xff]
      %v510 = vld [vmem:[%s410 + $0x48] sm:$0xff]
      %v511 = vld [vmem:[%s410 + $0x50] sm:$0xff]
      %v512 = vld [vmem:[%s410 + $0x58] sm:$0xff]
      %v513 = vld [vmem:[%s410 + $0x60] sm:$0xff]
      %v514 = vld [vmem:[%s410 + $0x68] sm:$0xff]
      %v515 = vld [vmem:[%s410 + $0x70] sm:$0xff]
      %v516 = vld [vmem:[%s410 + $0x78] sm:$0xff]
      %v517 = vld [vmem:[%s410 + $0x80] sm:$0xff]
      %v518 = vld [vmem:[%s410 + $0x88] sm:$0xff]
      %v519 = vld [vmem:[%s410 + $0x90] sm:$0xff]
      %v520 = vld [vmem:[%s410 + $0x98] sm:$0xff]
      %v521 = vld [vmem:[%s410 + $0xa0] sm:$0xff]
      %v522 = vld [vmem:[%s410 + $0xa8] sm:$0xff]
      %v523 = vld [vmem:[%s410 + $0xb0] sm:$0xff]
      %v524 = vld [vmem:[%s410 + $0xb8] sm:$0xff]
      %v525 = vld [vmem:[%s410 + $0xc0] sm:$0xff]
      %v526 = vld [vmem:[%s410 + $0xc8] sm:$0xff]
      %v527 = vld [vmem:[%s410 + $0xd0] sm:$0xff]
      %v528 = vld [vmem:[%s410 + $0xd8] sm:$0xff]
      %v529 = vld [vmem:[%s410 + $0xe0] sm:$0xff]
      %v530 = vld [vmem:[%s410 + $0xe8] sm:$0xff]
      %v531 = vld [vmem:[%s410 + $0xf0] sm:$0xff]
      %v532 = vld [vmem:[%s410 + $0xf8] sm:$0xff]
      %v533 = vmul.f32 %v501, %v477
      %v534 = vmul.f32 %v502, %v477
      %v535 = vmul.f32 %v503, %v477
      %v536 = vmul.f32 %v504, %v477
      %v537 = vmul.f32 %v505, %v477
      %v538 = vmul.f32 %v506, %v477
      %v539 = vmul.f32 %v507, %v477
      %v540 = vmul.f32 %v508, %v477
      %v541 = vmul.f32 %v509, %v477
      %v542 = vmul.f32 %v510, %v477
      %v543 = vmul.f32 %v511, %v477
      %v544 = vmul.f32 %v512, %v477
      %v545 = vmul.f32 %v513, %v477
      %v546 = vmul.f32 %v514, %v477
      %v547 = vmul.f32 %v515, %v477
      %v548 = vmul.f32 %v516, %v477
      %v549 = vmul.f32 %v517, %v477
      %v550 = vmul.f32 %v518, %v477
      %v551 = vmul.f32 %v519, %v477
      %v552 = vmul.f32 %v520, %v477
      %v553 = vmul.f32 %v521, %v477
      %v554 = vmul.f32 %v522, %v477
      %v555 = vmul.f32 %v523, %v477
      %v556 = vmul.f32 %v524, %v477
      %v557 = vmul.f32 %v525, %v477
      %v558 = vmul.f32 %v526, %v477
      %v559 = vmul.f32 %v527, %v477
      %v560 = vmul.f32 %v528, %v477
      %v561 = vmul.f32 %v529, %v477
      %v562 = vmul.f32 %v530, %v477
      %v563 = vmul.f32 %v531, %v477
      %v564 = vmul.f32 %v532, %v477
      %v565 = vadd.f32 %v533, %v485
      %v566 = vadd.f32 %v534, %v485
      %v567 = vadd.f32 %v535, %v485
      %v568 = vadd.f32 %v536, %v485
      %v569 = vadd.f32 %v537, %v485
      %v570 = vadd.f32 %v538, %v485
      %v571 = vadd.f32 %v539, %v485
      %v572 = vadd.f32 %v540, %v485
      %v573 = vadd.f32 %v541, %v485
      %v574 = vadd.f32 %v542, %v485
      %v575 = vadd.f32 %v543, %v485
      %v576 = vadd.f32 %v544, %v485
      %v577 = vadd.f32 %v545, %v485
      %v578 = vadd.f32 %v546, %v485
      %v579 = vadd.f32 %v547, %v485
      %v580 = vadd.f32 %v548, %v485
      %v581 = vadd.f32 %v549, %v485
      %v582 = vadd.f32 %v550, %v485
      %v583 = vadd.f32 %v551, %v485
      %v584 = vadd.f32 %v552, %v485
      %v585 = vadd.f32 %v553, %v485
      %v586 = vadd.f32 %v554, %v485
      %v587 = vadd.f32 %v555, %v485
      %v588 = vadd.f32 %v556, %v485
      %v589 = vadd.f32 %v557, %v485
      %v590 = vadd.f32 %v558, %v485
      %v591 = vadd.f32 %v559, %v485
      %v592 = vadd.f32 %v560, %v485
      %v593 = vadd.f32 %v561, %v485
      %v594 = vadd.f32 %v562, %v485
      %v595 = vadd.f32 %v563, %v485
      %v596 = vadd.f32 %v564, %v485
      %vm633 = vcmask 1040384
      %v634 = vrot.slane %v490, 7
      %v635 = vrot.slane %v491, 7
      %v636 = vsel %vm633, %v634, %v635
      %v637 = vrot.slane %v565, 7
      %v638 = vrot.slane %v566, 7
      %v639 = vsel %vm633, %v637, %v638
      %v640 = vrot.slane %v567, 7
      %v641 = vrot.slane %v568, 7
      %v642 = vsel %vm633, %v640, %v641
      %v643 = vrot.slane %v569, 7
      %v644 = vrot.slane %v570, 7
      %v645 = vsel %vm633, %v643, %v644
      %v646 = vrot.slane %v571, 7
      %v647 = vrot.slane %v572, 7
      %v648 = vsel %vm633, %v646, %v647
      %v649 = vrot.slane %v573, 7
      %v650 = vrot.slane %v574, 7
      %v651 = vsel %vm633, %v649, %v650
      %v652 = vrot.slane %v575, 7
      %v653 = vrot.slane %v576, 7
      %v654 = vsel %vm633, %v652, %v653
      %v655 = vrot.slane %v577, 7
      %v656 = vrot.slane %v578, 7
      %v657 = vsel %vm633, %v655, %v656
      %v658 = vrot.slane %v579, 7
      %v659 = vrot.slane %v580, 7
      %v660 = vsel %vm633, %v658, %v659
      %v661 = vrot.slane %v581, 7
      %v662 = vrot.slane %v582, 7
      %v663 = vsel %vm633, %v661, %v662
      %v664 = vrot.slane %v583, 7
      %v665 = vrot.slane %v584, 7
      %v666 = vsel %vm633, %v664, %v665
      %v667 = vrot.slane %v585, 7
      %v668 = vrot.slane %v586, 7
      %v669 = vsel %vm633, %v667, %v668
      %v670 = vrot.slane %v587, 7
      %v671 = vrot.slane %v588, 7
      %v672 = vsel %vm633, %v670, %v671
      %v673 = vrot.slane %v589, 7
      %v674 = vrot.slane %v590, 7
      %v675 = vsel %vm633, %v673, %v674
      %v676 = vrot.slane %v591, 7
      %v677 = vrot.slane %v592, 7
      %v678 = vsel %vm633, %v676, %v677
      %v679 = vrot.slane %v593, 7
      %v680 = vrot.slane %v594, 7
      %v681 = vsel %vm633, %v679, %v680
      %v682 = vrot.slane %v595, 7
      %v683 = vrot.slane %v596, 7
      %v684 = vsel %vm633, %v682, %v683
      %v685 = vrot.slane %v499, 7
      %v686 = vrot.slane %v500, 7
      %v687 = vsel %vm633, %v685, %v686
      %v724 = vsel %vm633, 0.0, %v634
      %v725 = vsel %vm633, 0.0, %v637
      %v726 = vsel %vm633, 0.0, %v640
      %v727 = vsel %vm633, 0.0, %v643
      %v728 = vsel %vm633, 0.0, %v646
      %v729 = vsel %vm633, 0.0, %v649
      %v730 = vsel %vm633, 0.0, %v652
      %v731 = vsel %vm633, 0.0, %v655
      %v732 = vsel %vm633, 0.0, %v658
      %v733 = vsel %vm633, 0.0, %v661
      %v734 = vsel %vm633, 0.0, %v664
      %v735 = vsel %vm633, 0.0, %v667
      %v736 = vsel %vm633, 0.0, %v670
      %v737 = vsel %vm633, 0.0, %v673
      %v738 = vsel %vm633, 0.0, %v676
      %v739 = vsel %vm633, 0.0, %v679
      %v740 = vsel %vm633, 0.0, %v682
      %v741 = vsel %vm633, 0.0, %v685
      %vm742 = vcmask 1046528
      %v743 = vrot.slane %v490, 1
      %v744 = vrot.slane %v491, 1
      %v745 = vsel %vm742, %v743, %v744
      %v746 = vrot.slane %v565, 1
      %v747 = vrot.slane %v566, 1
      %v748 = vsel %vm742, %v746, %v747
      %v749 = vrot.slane %v567, 1
      %v750 = vrot.slane %v568, 1
      %v751 = vsel %vm742, %v749, %v750
      %v752 = vrot.slane %v569, 1
      %v753 = vrot.slane %v570, 1
      %v754 = vsel %vm742, %v752, %v753
      %v755 = vrot.slane %v571, 1
      %v756 = vrot.slane %v572, 1
      %v757 = vsel %vm742, %v755, %v756
      %v758 = vrot.slane %v573, 1
      %v759 = vrot.slane %v574, 1
      %v760 = vsel %vm742, %v758, %v759
      %v761 = vrot.slane %v575, 1
      %v762 = vrot.slane %v576, 1
      %v763 = vsel %vm742, %v761, %v762
      %v764 = vrot.slane %v577, 1
      %v765 = vrot.slane %v578, 1
      %v766 = vsel %vm742, %v764, %v765
      %v767 = vrot.slane %v579, 1
      %v768 = vrot.slane %v580, 1
      %v769 = vsel %vm742, %v767, %v768
      %v770 = vrot.slane %v581, 1
      %v771 = vrot.slane %v582, 1
      %v772 = vsel %vm742, %v770, %v771
      %v773 = vrot.slane %v583, 1
      %v774 = vrot.slane %v584, 1
      %v775 = vsel %vm742, %v773, %v774
      %v776 = vrot.slane %v585, 1
      %v777 = vrot.slane %v586, 1
      %v778 = vsel %vm742, %v776, %v777
      %v779 = vrot.slane %v587, 1
      %v780 = vrot.slane %v588, 1
      %v781 = vsel %vm742, %v779, %v780
      %v782 = vrot.slane %v589, 1
      %v783 = vrot.slane %v590, 1
      %v784 = vsel %vm742, %v782, %v783
      %v785 = vrot.slane %v591, 1
      %v786 = vrot.slane %v592, 1
      %v787 = vsel %vm742, %v785, %v786
      %v788 = vrot.slane %v593, 1
      %v789 = vrot.slane %v594, 1
      %v790 = vsel %vm742, %v788, %v789
      %v791 = vrot.slane %v595, 1
      %v792 = vrot.slane %v596, 1
      %v793 = vsel %vm742, %v791, %v792
      %v794 = vrot.slane %v499, 1
      %v795 = vrot.slane %v500, 1
      %v796 = vsel %vm742, %v794, %v795
      %v833 = vsel %vm742, %v744, 0.0
      %v834 = vsel %vm742, %v747, 0.0
      %v835 = vsel %vm742, %v750, 0.0
      %v836 = vsel %vm742, %v753, 0.0
      %v837 = vsel %vm742, %v756, 0.0
      %v838 = vsel %vm742, %v759, 0.0
      %v839 = vsel %vm742, %v762, 0.0
      %v840 = vsel %vm742, %v765, 0.0
      %v841 = vsel %vm742, %v768, 0.0
      %v842 = vsel %vm742, %v771, 0.0
      %v843 = vsel %vm742, %v774, 0.0
      %v844 = vsel %vm742, %v777, 0.0
      %v845 = vsel %vm742, %v780, 0.0
      %v846 = vsel %vm742, %v783, 0.0
      %v847 = vsel %vm742, %v786, 0.0
      %v848 = vsel %vm742, %v789, 0.0
      %v849 = vsel %vm742, %v792, 0.0
      %v850 = vsel %vm742, %v795, 0.0
      %v851 = vld [vmem:[%s3] sm:$0xff]
      %v852 = vld [vmem:[%s3 + $0x8] sm:$0xff]
      %v853 = vld [vmem:[%s3 + $0x10] sm:$0xff]
      %v854 = vld [vmem:[%s3 + $0x18] sm:$0xff]
      %v855 = vld [vmem:[%s3 + $0x20] sm:$0xff]
      %v856 = vld [vmem:[%s3 + $0x28] sm:$0xff]
      %v857 = vld [vmem:[%s3 + $0x30] sm:$0xff]
      %v858 = vld [vmem:[%s3 + $0x38] sm:$0xff]
      %v859 = vld [vmem:[%s3 + $0x40] sm:$0xff]
      %v860 = vld [vmem:[%s3 + $0x48] sm:$0xff]
      %v861 = vld [vmem:[%s3 + $0x50] sm:$0xff]
      %v862 = vld [vmem:[%s3 + $0x58] sm:$0xff]
      %v863 = vld [vmem:[%s3 + $0x60] sm:$0xff]
      %v864 = vld [vmem:[%s3 + $0x68] sm:$0xff]
      %v865 = vld [vmem:[%s3 + $0x70] sm:$0xff]
      %v866 = vld [vmem:[%s3 + $0x78] sm:$0xff]
      %s867 = scalar_lea.vmem %s3, 128
      %v868 = vld [vmem:[%s867] sm:$0xff]
      %v869 = vld [vmem:[%s867 + $0x8] sm:$0xff]
      %v870 = vld [vmem:[%s867 + $0x10] sm:$0xff]
      %v871 = vld [vmem:[%s867 + $0x18] sm:$0xff]
      %v872 = vld [vmem:[%s867 + $0x20] sm:$0xff]
      %v873 = vld [vmem:[%s867 + $0x28] sm:$0xff]
      %v874 = vld [vmem:[%s867 + $0x30] sm:$0xff]
      %v875 = vld [vmem:[%s867 + $0x38] sm:$0xff]
      %v876 = vld [vmem:[%s867 + $0x40] sm:$0xff]
      %v877 = vld [vmem:[%s867 + $0x48] sm:$0xff]
      %v878 = vld [vmem:[%s867 + $0x50] sm:$0xff]
      %v879 = vld [vmem:[%s867 + $0x58] sm:$0xff]
      %v880 = vld [vmem:[%s867 + $0x60] sm:$0xff]
      %v881 = vld [vmem:[%s867 + $0x68] sm:$0xff]
      %v882 = vld [vmem:[%s867 + $0x70] sm:$0xff]
      %v883 = vld [vmem:[%s867 + $0x78] sm:$0xff]
      %884 = vmatprep.subr.mxu0 0.0
      %885 = vmatpush1.msra.mxu0 %v868
      %886 = vmatprep.subr.mxu0 0.0
      %887 = vmatpush1.msra.mxu0 %v869
      %888 = vmatprep.subr.mxu0 0.0
      %889 = vmatpush1.msra.mxu0 %v870
      %890 = vmatprep.subr.mxu0 0.0
      %891 = vmatpush1.msra.mxu0 %v871
      %892 = vmatprep.subr.mxu0 0.0
      %893 = vmatpush1.msra.mxu0 %v872
      %894 = vmatprep.subr.mxu0 0.0
      %895 = vmatpush1.msra.mxu0 %v873
      %896 = vmatprep.subr.mxu0 0.0
      %897 = vmatpush1.msra.mxu0 %v874
      %898 = vmatprep.subr.mxu0 0.0
      %899 = vmatpush1.msra.mxu0 %v875
      %900 = vmatprep.subr.mxu0 0.0
      %901 = vmatpush1.msra.mxu0 %v876
      %902 = vmatprep.subr.mxu0 0.0
      %903 = vmatpush1.msra.mxu0 %v877
      %904 = vmatprep.subr.mxu0 0.0
      %905 = vmatpush1.msra.mxu0 %v878
      %906 = vmatprep.subr.mxu0 0.0
      %907 = vmatpush1.msra.mxu0 %v879
      %908 = vmatprep.subr.mxu0 0.0
      %909 = vmatpush1.msra.mxu0 %v880
      %910 = vmatprep.subr.mxu0 0.0
      %911 = vmatpush1.msra.mxu0 %v881
      %912 = vmatprep.subr.mxu0 0.0
      %913 = vmatpush1.msra.mxu0 %v882
      %914 = vmatprep.subr.mxu0 0.0
      %915 = vmatpush1.msra.mxu0 %v883
      %916 = vmatprep.subr.mxu0 0.0
      %917 = vmatpush1.msra.mxu0 0.0
      %918 = vmatprep.subr.mxu0 0.0
      %919 = vmatpush1.msra.mxu0 0.0
      %920 = vmatprep.subr.mxu0 0.0
      %921 = vmatpush1.msra.mxu0 0.0
      %922 = vmatprep.subr.mxu0 0.0
      %923 = vmatpush1.msra.mxu0 0.0
      %924 = vmatprep.subr.mxu0 0.0
      %925 = vmatpush1.msra.mxu0 0.0
      %926 = vmatprep.subr.mxu0 0.0
      %927 = vmatpush1.msra.mxu0 0.0
      %928 = vmatprep.subr.mxu0 0.0
      %929 = vmatpush1.msra.mxu0 0.0
      %930 = vmatprep.subr.mxu0 0.0
      %931 = vmatpush1.msra.mxu0 0.0
      %932 = vmatprep.subr.mxu0 0.0
      %933 = vmatpush1.msra.mxu0 0.0
      %934 = vmatprep.subr.mxu0 0.0
      %935 = vmatpush1.msra.mxu0 0.0
      %936 = vmatprep.subr.mxu0 0.0
      %937 = vmatpush1.msra.mxu0 0.0
      %938 = vmatprep.subr.mxu0 0.0
      %939 = vmatpush1.msra.mxu0 0.0
      %940 = vmatprep.subr.mxu0 0.0
      %941 = vmatpush1.msra.mxu0 0.0
      %942 = vmatprep.subr.mxu0 0.0
      %943 = vmatpush1.msra.mxu0 0.0
      %944 = vmatprep.subr.mxu0 0.0
      %945 = vmatpush1.msra.mxu0 0.0
      %946 = vmatprep.subr.mxu0 0.0
      %947 = vmatpush1.msra.mxu0 0.0
      %948 = vmatprep.mubr.f32.mxu0 0.0
      %949 = vmatmul.mubr.f32.gmra.mrb[0].mxu0 %v490
      %v950 = vpop.f32.mrb[0].mxu0
      %v951 = vadd.f32 0.0, %v950
      %v952 = vpop.f32.mrb[0].mxu0
      %953 = vmatprep.mubr.f32.mxu0 0.0
      %954 = vmatmul.mubr.f32.gmra.mrb[0].mxu0 %v491
      %v955 = vpop.f32.mrb[0].mxu0
      %v956 = vadd.f32 0.0, %v955
      %v957 = vpop.f32.mrb[0].mxu0
      %958 = vmatprep.mubr.f32.mxu0 0.0
      %959 = vmatmul.mubr.f32.gmra.mrb[0].mxu0 %v565
      %v960 = vpop.f32.mrb[0].mxu0
      %v961 = vadd.f32 0.0, %v960
      %v962 = vpop.f32.mrb[0].mxu0
      %963 = vmatprep.mubr.f32.mxu0 0.0
      %964 = vmatmul.mubr.f32.gmra.mrb[0].mxu0 %v566
      %v965 = vpop.f32.mrb[0].mxu0
      %v966 = vadd.f32 0.0, %v965
      %v967 = vpop.f32.mrb[0].mxu0
      %968 = vmatprep.mubr.f32.mxu0 0.0
      %969 = vmatmul.mubr.f32.gmra.mrb[0].mxu0 %v567
      %v970 = vpop.f32.mrb[0].mxu0
      %v971 = vadd.f32 0.0, %v970
      %v972 = vpop.f32.mrb[0].mxu0
      %973 = vmatprep.mubr.f32.mxu0 0.0
      %974 = vmatmul.mubr.f32.gmra.mrb[0].mxu0 %v568
      %v975 = vpop.f32.mrb[0].mxu0
      %v976 = vadd.f32 0.0, %v975
      %v977 = vpop.f32.mrb[0].mxu0
      %978 = vmatprep.mubr.f32.mxu0 0.0
      %979 = vmatmul.mubr.f32.gmra.mrb[0].mxu0 %v569
      %v980 = vpop.f32.mrb[0].mxu0
      %v981 = vadd.f32 0.0, %v980
      %v982 = vpop.f32.mrb[0].mxu0
      %983 = vmatprep.mubr.f32.mxu0 0.0
      %984 = vmatmul.mubr.f32.gmra.mrb[0].mxu0 %v570
      %v985 = vpop.f32.mrb[0].mxu0
      %v986 = vadd.f32 0.0, %v985
      %v987 = vpop.f32.mrb[0].mxu0
      %988 = vmatprep.mubr.f32.mxu0 0.0
      %989 = vmatmul.mubr.f32.gmra.mrb[0].mxu0 %v571
      %v990 = vpop.f32.mrb[0].mxu0
      %v991 = vadd.f32 0.0, %v990
      %v992 = vpop.f32.mrb[0].mxu0
      %993 = vmatprep.mubr.f32.mxu0 0.0
      %994 = vmatmul.mubr.f32.gmra.mrb[0].mxu0 %v572
      %v995 = vpop.f32.mrb[0].mxu0
      %v996 = vadd.f32 0.0, %v995
      %v997 = vpop.f32.mrb[0].mxu0
      %998 = vmatprep.mubr.f32.mxu0 0.0
      %999 = vmatmul.mubr.f32.gmra.mrb[0].mxu0 %v573
      %v1000 = vpop.f32.mrb[0].mxu0
      %v1001 = vadd.f32 0.0, %v1000
      %v1002 = vpop.f32.mrb[0].mxu0
      %1003 = vmatprep.mubr.f32.mxu0 0.0
      %1004 = vmatmul.mubr.f32.gmra.mrb[0].mxu0 %v574
      %v1005 = vpop.f32.mrb[0].mxu0
      %v1006 = vadd.f32 0.0, %v1005
      %v1007 = vpop.f32.mrb[0].mxu0
      %1008 = vmatprep.mubr.f32.mxu0 0.0
      %1009 = vmatmul.mubr.f32.gmra.mrb[0].mxu0 %v575
      %v1010 = vpop.f32.mrb[0].mxu0
      %v1011 = vadd.f32 0.0, %v1010
      %v1012 = vpop.f32.mrb[0].mxu0
      %1013 = vmatprep.mubr.f32.mxu0 0.0
      %1014 = vmatmul.mubr.f32.gmra.mrb[0].mxu0 %v576
      %v1015 = vpop.f32.mrb[0].mxu0
      %v1016 = vadd.f32 0.0, %v1015
      %v1017 = vpop.f32.mrb[0].mxu0
      %1018 = vmatprep.mubr.f32.mxu0 0.0
      %1019 = vmatmul.mubr.f32.gmra.mrb[0].mxu0 %v577
      %v1020 = vpop.f32.mrb[0].mxu0
      %v1021 = vadd.f32 0.0, %v1020
      %v1022 = vpop.f32.mrb[0].mxu0
      %1023 = vmatprep.mubr.f32.mxu0 0.0
      %1024 = vmatmul.mubr.f32.gmra.mrb[0].mxu0 %v578
      %v1025 = vpop.f32.mrb[0].mxu0
      %v1026 = vadd.f32 0.0, %v1025
      %v1027 = vpop.f32.mrb[0].mxu0
      %1028 = vmatprep.mubr.f32.mxu0 0.0
      %1029 = vmatmul.mubr.f32.gmra.mrb[0].mxu0 %v579
      %v1030 = vpop.f32.mrb[0].mxu0
      %v1031 = vadd.f32 0.0, %v1030
      %v1032 = vpop.f32.mrb[0].mxu0
      %1033 = vmatprep.mubr.f32.mxu0 0.0
      %1034 = vmatmul.mubr.f32.gmra.mrb[0].mxu0 %v580
      %v1035 = vpop.f32.mrb[0].mxu0
      %v1036 = vadd.f32 0.0, %v1035
      %v1037 = vpop.f32.mrb[0].mxu0
      %1038 = vmatprep.mubr.f32.mxu0 0.0
      %1039 = vmatmul.mubr.f32.gmra.mrb[0].mxu0 %v581
      %v1040 = vpop.f32.mrb[0].mxu0
      %v1041 = vadd.f32 0.0, %v1040
      %v1042 = vpop.f32.mrb[0].mxu0
      %1043 = vmatprep.mubr.f32.mxu0 0.0
      %1044 = vmatmul.mubr.f32.gmra.mrb[0].mxu0 %v582
      %v1045 = vpop.f32.mrb[0].mxu0
      %v1046 = vadd.f32 0.0, %v1045
      %v1047 = vpop.f32.mrb[0].mxu0
      %1048 = vmatprep.mubr.f32.mxu0 0.0
      %1049 = vmatmul.mubr.f32.gmra.mrb[0].mxu0 %v583
      %v1050 = vpop.f32.mrb[0].mxu0
      %v1051 = vadd.f32 0.0, %v1050
      %v1052 = vpop.f32.mrb[0].mxu0
      %1053 = vmatprep.mubr.f32.mxu0 0.0
      %1054 = vmatmul.mubr.f32.gmra.mrb[0].mxu0 %v584
      %v1055 = vpop.f32.mrb[0].mxu0
      %v1056 = vadd.f32 0.0, %v1055
      %v1057 = vpop.f32.mrb[0].mxu0
      %1058 = vmatprep.mubr.f32.mxu0 0.0
      %1059 = vmatmul.mubr.f32.gmra.mrb[0].mxu0 %v585
      %v1060 = vpop.f32.mrb[0].mxu0
      %v1061 = vadd.f32 0.0, %v1060
      %v1062 = vpop.f32.mrb[0].mxu0
      %1063 = vmatprep.mubr.f32.mxu0 0.0
      %1064 = vmatmul.mubr.f32.gmra.mrb[0].mxu0 %v586
      %v1065 = vpop.f32.mrb[0].mxu0
      %v1066 = vadd.f32 0.0, %v1065
      %v1067 = vpop.f32.mrb[0].mxu0
      %1068 = vmatprep.mubr.f32.mxu0 0.0
      %1069 = vmatmul.mubr.f32.gmra.mrb[0].mxu0 %v587
      %v1070 = vpop.f32.mrb[0].mxu0
      %v1071 = vadd.f32 0.0, %v1070
      %v1072 = vpop.f32.mrb[0].mxu0
      %1073 = vmatprep.mubr.f32.mxu0 0.0
      %1074 = vmatmul.mubr.f32.gmra.mrb[0].mxu0 %v588
      %v1075 = vpop.f32.mrb[0].mxu0
      %v1076 = vadd.f32 0.0, %v1075
      %v1077 = vpop.f32.mrb[0].mxu0
      %1078 = vmatprep.mubr.f32.mxu0 0.0
      %1079 = vmatmul.mubr.f32.gmra.mrb[0].mxu0 %v589
      %v1080 = vpop.f32.mrb[0].mxu0
      %v1081 = vadd.f32 0.0, %v1080
      %v1082 = vpop.f32.mrb[0].mxu0
      %1083 = vmatprep.mubr.f32.mxu0 0.0
      %1084 = vmatmul.mubr.f32.gmra.mrb[0].mxu0 %v590
      %v1085 = vpop.f32.mrb[0].mxu0
      %v1086 = vadd.f32 0.0, %v1085
      %v1087 = vpop.f32.mrb[0].mxu0
      %1088 = vmatprep.mubr.f32.mxu0 0.0
      %1089 = vmatmul.mubr.f32.gmra.mrb[0].mxu0 %v591
      %v1090 = vpop.f32.mrb[0].mxu0
      %v1091 = vadd.f32 0.0, %v1090
      %v1092 = vpop.f32.mrb[0].mxu0
      %1093 = vmatprep.mubr.f32.mxu0 0.0
      %1094 = vmatmul.mubr.f32.gmra.mrb[0].mxu0 %v592
      %v1095 = vpop.f32.mrb[0].mxu0
      %v1096 = vadd.f32 0.0, %v1095
      %v1097 = vpop.f32.mrb[0].mxu0
      %1098 = vmatprep.mubr.f32.mxu0 0.0
      %1099 = vmatmul.mubr.f32.gmra.mrb[0].mxu0 %v593
      %v1100 = vpop.f32.mrb[0].mxu0
      %v1101 = vadd.f32 0.0, %v1100
      %v1102 = vpop.f32.mrb[0].mxu0
      %1103 = vmatprep.mubr.f32.mxu0 0.0
      %1104 = vmatmul.mubr.f32.gmra.mrb[0].mxu0 %v594
      %v1105 = vpop.f32.mrb[0].mxu0
      %v1106 = vadd.f32 0.0, %v1105
      %v1107 = vpop.f32.mrb[0].mxu0
      %1108 = vdwg.mxu0
      %1109 = vmatprep.subr.mxu0 0.0
      %1110 = vmatpush1.msra.mxu0 %v851
      %1111 = vmatprep.subr.mxu0 0.0
      %1112 = vmatpush1.msra.mxu0 %v852
      %1113 = vmatprep.subr.mxu0 0.0
      %1114 = vmatpush1.msra.mxu0 %v853
      %1115 = vmatprep.subr.mxu0 0.0
      %1116 = vmatpush1.msra.mxu0 %v854
      %1117 = vmatprep.subr.mxu0 0.0
      %1118 = vmatpush1.msra.mxu0 %v855
      %1119 = vmatprep.subr.mxu0 0.0
      %1120 = vmatpush1.msra.mxu0 %v856
      %1121 = vmatprep.subr.mxu0 0.0
      %1122 = vmatpush1.msra.mxu0 %v857
      %1123 = vmatprep.subr.mxu0 0.0
      %1124 = vmatpush1.msra.mxu0 %v858
      %1125 = vmatprep.subr.mxu0 0.0
      %1126 = vmatpush1.msra.mxu0 %v859
      %1127 = vmatprep.subr.mxu0 0.0
      %1128 = vmatpush1.msra.mxu0 %v860
      %1129 = vmatprep.subr.mxu0 0.0
      %1130 = vmatpush1.msra.mxu0 %v861
      %1131 = vmatprep.subr.mxu0 0.0
      %1132 = vmatpush1.msra.mxu0 %v862
      %1133 = vmatprep.subr.mxu0 0.0
      %1134 = vmatpush1.msra.mxu0 %v863
      %1135 = vmatprep.subr.mxu0 0.0
      %1136 = vmatpush1.msra.mxu0 %v864
      %1137 = vmatprep.subr.mxu0 0.0
      %1138 = vmatpush1.msra.mxu0 %v865
      %1139 = vmatprep.subr.mxu0 0.0
      %1140 = vmatpush1.msra.mxu0 %v866
      %1141 = vmatprep.subr.mxu0 0.0
      %1142 = vmatpush1.msra.mxu0 0.0
      %1143 = vmatprep.subr.mxu0 0.0
      %1144 = vmatpush1.msra.mxu0 0.0
      %1145 = vmatprep.subr.mxu0 0.0
      %1146 = vmatpush1.msra.mxu0 0.0
      %1147 = vmatprep.subr.mxu0 0.0
      %1148 = vmatpush1.msra.mxu0 0.0
      %1149 = vmatprep.subr.mxu0 0.0
      %1150 = vmatpush1.msra.mxu0 0.0
      %1151 = vmatprep.subr.mxu0 0.0
      %1152 = vmatpush1.msra.mxu0 0.0
      %1153 = vmatprep.subr.mxu0 0.0
      %1154 = vmatpush1.msra.mxu0 0.0
      %1155 = vmatprep.subr.mxu0 0.0
      %1156 = vmatpush1.msra.mxu0 0.0
      %1157 = vmatprep.subr.mxu0 0.0
      %1158 = vmatpush1.msra.mxu0 0.0
      %1159 = vmatprep.subr.mxu0 0.0
      %1160 = vmatpush1.msra.mxu0 0.0
      %1161 = vmatprep.subr.mxu0 0.0
      %1162 = vmatpush1.msra.mxu0 0.0
      %1163 = vmatprep.subr.mxu0 0.0
      %1164 = vmatpush1.msra.mxu0 0.0
      %1165 = vmatprep.subr.mxu0 0.0
      %1166 = vmatpush1.msra.mxu0 0.0
      %1167 = vmatprep.subr.mxu0 0.0
      %1168 = vmatpush1.msra.mxu0 0.0
      %1169 = vmatprep.subr.mxu0 0.0
      %1170 = vmatpush1.msra.mxu0 0.0
      %1171 = vmatprep.subr.mxu0 0.0
      %1172 = vmatpush1.msra.mxu0 0.0
      %1173 = vmatprep.mubr.f32.mxu0 0.0
      %1174 = vmatmul.mubr.f32.gmra.mrb[0].mxu0 %v724
      %v1175 = vpop.f32.mrb[0].mxu0
      %v1176 = vadd.f32 %v951, %v1175
      %v1177 = vpop.f32.mrb[0].mxu0
      %1178 = vmatprep.mubr.f32.mxu0 0.0
      %1179 = vmatmul.mubr.f32.gmra.mrb[0].mxu0 %v636
      %v1180 = vpop.f32.mrb[0].mxu0
      %v1181 = vadd.f32 %v956, %v1180
      %v1182 = vpop.f32.mrb[0].mxu0
      %1183 = vmatprep.mubr.f32.mxu0 0.0
      %1184 = vmatmul.mubr.f32.gmra.mrb[0].mxu0 %v725
      %v1185 = vpop.f32.mrb[0].mxu0
      %v1186 = vadd.f32 %v961, %v1185
      %v1187 = vpop.f32.mrb[0].mxu0
      %1188 = vmatprep.mubr.f32.mxu0 0.0
      %1189 = vmatmul.mubr.f32.gmra.mrb[0].mxu0 %v639
      %v1190 = vpop.f32.mrb[0].mxu0
      %v1191 = vadd.f32 %v966, %v1190
      %v1192 = vpop.f32.mrb[0].mxu0
      %1193 = vmatprep.mubr.f32.mxu0 0.0
      %1194 = vmatmul.mubr.f32.gmra.mrb[0].mxu0 %v726
      %v1195 = vpop.f32.mrb[0].mxu0
      %v1196 = vadd.f32 %v971, %v1195
      %v1197 = vpop.f32.mrb[0].mxu0
      %1198 = vmatprep.mubr.f32.mxu0 0.0
      %1199 = vmatmul.mubr.f32.gmra.mrb[0].mxu0 %v642
      %v1200 = vpop.f32.mrb[0].mxu0
      %v1201 = vadd.f32 %v976, %v1200
      %v1202 = vpop.f32.mrb[0].mxu0
      %1203 = vmatprep.mubr.f32.mxu0 0.0
      %1204 = vmatmul.mubr.f32.gmra.mrb[0].mxu0 %v727
      %v1205 = vpop.f32.mrb[0].mxu0
      %v1206 = vadd.f32 %v981, %v1205
      %v1207 = vpop.f32.mrb[0].mxu0
      %1208 = vmatprep.mubr.f32.mxu0 0.0
      %1209 = vmatmul.mubr.f32.gmra.mrb[0].mxu0 %v645
      %v1210 = vpop.f32.mrb[0].mxu0
      %v1211 = vadd.f32 %v986, %v1210
      %v1212 = vpop.f32.mrb[0].mxu0
      %1213 = vmatprep.mubr.f32.mxu0 0.0
      %1214 = vmatmul.mubr.f32.gmra.mrb[0].mxu0 %v728
      %v1215 = vpop.f32.mrb[0].mxu0
      %v1216 = vadd.f32 %v991, %v1215
      %v1217 = vpop.f32.mrb[0].mxu0
      %1218 = vmatprep.mubr.f32.mxu0 0.0
      %1219 = vmatmul.mubr.f32.gmra.mrb[0].mxu0 %v648
      %v1220 = vpop.f32.mrb[0].mxu0
      %v1221 = vadd.f32 %v996, %v1220
      %v1222 = vpop.f32.mrb[0].mxu0
      %1223 = vmatprep.mubr.f32.mxu0 0.0
      %1224 = vmatmul.mubr.f32.gmra.mrb[0].mxu0 %v729
      %v1225 = vpop.f32.mrb[0].mxu0
      %v1226 = vadd.f32 %v1001, %v1225
      %v1227 = vpop.f32.mrb[0].mxu0
      %1228 = vmatprep.mubr.f32.mxu0 0.0
      %1229 = vmatmul.mubr.f32.gmra.mrb[0].mxu0 %v651
      %v1230 = vpop.f32.mrb[0].mxu0
      %v1231 = vadd.f32 %v1006, %v1230
      %v1232 = vpop.f32.mrb[0].mxu0
      %1233 = vmatprep.mubr.f32.mxu0 0.0
      %1234 = vmatmul.mubr.f32.gmra.mrb[0].mxu0 %v730
      %v1235 = vpop.f32.mrb[0].mxu0
      %v1236 = vadd.f32 %v1011, %v1235
      %v1237 = vpop.f32.mrb[0].mxu0
      %1238 = vmatprep.mubr.f32.mxu0 0.0
      %1239 = vmatmul.mubr.f32.gmra.mrb[0].mxu0 %v654
      %v1240 = vpop.f32.mrb[0].mxu0
      %v1241 = vadd.f32 %v1016, %v1240
      %v1242 = vpop.f32.mrb[0].mxu0
      %1243 = vmatprep.mubr.f32.mxu0 0.0
      %1244 = vmatmul.mubr.f32.gmra.mrb[0].mxu0 %v731
      %v1245 = vpop.f32.mrb[0].mxu0
      %v1246 = vadd.f32 %v1021, %v1245
      %v1247 = vpop.f32.mrb[0].mxu0
      %1248 = vmatprep.mubr.f32.mxu0 0.0
      %1249 = vmatmul.mubr.f32.gmra.mrb[0].mxu0 %v657
      %v1250 = vpop.f32.mrb[0].mxu0
      %v1251 = vadd.f32 %v1026, %v1250
      %v1252 = vpop.f32.mrb[0].mxu0
      %1253 = vmatprep.mubr.f32.mxu0 0.0
      %1254 = vmatmul.mubr.f32.gmra.mrb[0].mxu0 %v732
      %v1255 = vpop.f32.mrb[0].mxu0
      %v1256 = vadd.f32 %v1031, %v1255
      %v1257 = vpop.f32.mrb[0].mxu0
      %1258 = vmatprep.mubr.f32.mxu0 0.0
      %1259 = vmatmul.mubr.f32.gmra.mrb[0].mxu0 %v660
      %v1260 = vpop.f32.mrb[0].mxu0
      %v1261 = vadd.f32 %v1036, %v1260
      %v1262 = vpop.f32.mrb[0].mxu0
      %1263 = vmatprep.mubr.f32.mxu0 0.0
      %1264 = vmatmul.mubr.f32.gmra.mrb[0].mxu0 %v733
      %v1265 = vpop.f32.mrb[0].mxu0
      %v1266 = vadd.f32 %v1041, %v1265
      %v1267 = vpop.f32.mrb[0].mxu0
      %1268 = vmatprep.mubr.f32.mxu0 0.0
      %1269 = vmatmul.mubr.f32.gmra.mrb[0].mxu0 %v663
      %v1270 = vpop.f32.mrb[0].mxu0
      %v1271 = vadd.f32 %v1046, %v1270
      %v1272 = vpop.f32.mrb[0].mxu0
      %1273 = vmatprep.mubr.f32.mxu0 0.0
      %1274 = vmatmul.mubr.f32.gmra.mrb[0].mxu0 %v734
      %v1275 = vpop.f32.mrb[0].mxu0
      %v1276 = vadd.f32 %v1051, %v1275
      %v1277 = vpop.f32.mrb[0].mxu0
      %1278 = vmatprep.mubr.f32.mxu0 0.0
      %1279 = vmatmul.mubr.f32.gmra.mrb[0].mxu0 %v666
      %v1280 = vpop.f32.mrb[0].mxu0
      %v1281 = vadd.f32 %v1056, %v1280
      %v1282 = vpop.f32.mrb[0].mxu0
      %1283 = vmatprep.mubr.f32.mxu0 0.0
      %1284 = vmatmul.mubr.f32.gmra.mrb[0].mxu0 %v735
      %v1285 = vpop.f32.mrb[0].mxu0
      %v1286 = vadd.f32 %v1061, %v1285
      %v1287 = vpop.f32.mrb[0].mxu0
      %1288 = vmatprep.mubr.f32.mxu0 0.0
      %1289 = vmatmul.mubr.f32.gmra.mrb[0].mxu0 %v669
      %v1290 = vpop.f32.mrb[0].mxu0
      %v1291 = vadd.f32 %v1066, %v1290
      %v1292 = vpop.f32.mrb[0].mxu0
      %1293 = vmatprep.mubr.f32.mxu0 0.0
      %1294 = vmatmul.mubr.f32.gmra.mrb[0].mxu0 %v736
      %v1295 = vpop.f32.mrb[0].mxu0
      %v1296 = vadd.f32 %v1071, %v1295
      %v1297 = vpop.f32.mrb[0].mxu0
      %1298 = vmatprep.mubr.f32.mxu0 0.0
      %1299 = vmatmul.mubr.f32.gmra.mrb[0].mxu0 %v672
      %v1300 = vpop.f32.mrb[0].mxu0
      %v1301 = vadd.f32 %v1076, %v1300
      %v1302 = vpop.f32.mrb[0].mxu0
      %1303 = vmatprep.mubr.f32.mxu0 0.0
      %1304 = vmatmul.mubr.f32.gmra.mrb[0].mxu0 %v737
      %v1305 = vpop.f32.mrb[0].mxu0
      %v1306 = vadd.f32 %v1081, %v1305
      %v1307 = vpop.f32.mrb[0].mxu0
      %1308 = vmatprep.mubr.f32.mxu0 0.0
      %1309 = vmatmul.mubr.f32.gmra.mrb[0].mxu0 %v675
      %v1310 = vpop.f32.mrb[0].mxu0
      %v1311 = vadd.f32 %v1086, %v1310
      %v1312 = vpop.f32.mrb[0].mxu0
      %1313 = vmatprep.mubr.f32.mxu0 0.0
      %1314 = vmatmul.mubr.f32.gmra.mrb[0].mxu0 %v738
      %v1315 = vpop.f32.mrb[0].mxu0
      %v1316 = vadd.f32 %v1091, %v1315
      %v1317 = vpop.f32.mrb[0].mxu0
      %1318 = vmatprep.mubr.f32.mxu0 0.0
      %1319 = vmatmul.mubr.f32.gmra.mrb[0].mxu0 %v678
      %v1320 = vpop.f32.mrb[0].mxu0
      %v1321 = vadd.f32 %v1096, %v1320
      %v1322 = vpop.f32.mrb[0].mxu0
      %1323 = vmatprep.mubr.f32.mxu0 0.0
      %1324 = vmatmul.mubr.f32.gmra.mrb[0].mxu0 %v739
      %v1325 = vpop.f32.mrb[0].mxu0
      %v1326 = vadd.f32 %v1101, %v1325
      %v1327 = vpop.f32.mrb[0].mxu0
      %1328 = vmatprep.mubr.f32.mxu0 0.0
      %1329 = vmatmul.mubr.f32.gmra.mrb[0].mxu0 %v681
      %v1330 = vpop.f32.mrb[0].mxu0
      %v1331 = vadd.f32 %v1106, %v1330
      %v1332 = vpop.f32.mrb[0].mxu0
      %1333 = vdwg.mxu0
      %s1334 = scalar_lea.vmem %s3, 256
      %v1335 = vld [vmem:[%s1334] sm:$0xff]
      %v1336 = vld [vmem:[%s1334 + $0x8] sm:$0xff]
      %v1337 = vld [vmem:[%s1334 + $0x10] sm:$0xff]
      %v1338 = vld [vmem:[%s1334 + $0x18] sm:$0xff]
      %v1339 = vld [vmem:[%s1334 + $0x20] sm:$0xff]
      %v1340 = vld [vmem:[%s1334 + $0x28] sm:$0xff]
      %v1341 = vld [vmem:[%s1334 + $0x30] sm:$0xff]
      %v1342 = vld [vmem:[%s1334 + $0x38] sm:$0xff]
      %v1343 = vld [vmem:[%s1334 + $0x40] sm:$0xff]
      %v1344 = vld [vmem:[%s1334 + $0x48] sm:$0xff]
      %v1345 = vld [vmem:[%s1334 + $0x50] sm:$0xff]
      %v1346 = vld [vmem:[%s1334 + $0x58] sm:$0xff]
      %v1347 = vld [vmem:[%s1334 + $0x60] sm:$0xff]
      %v1348 = vld [vmem:[%s1334 + $0x68] sm:$0xff]
      %v1349 = vld [vmem:[%s1334 + $0x70] sm:$0xff]
      %v1350 = vld [vmem:[%s1334 + $0x78] sm:$0xff]
      %1351 = vmatprep.subr.mxu0 0.0
      %1352 = vmatpush1.msra.mxu0 %v1335
      %1353 = vmatprep.subr.mxu0 0.0
      %1354 = vmatpush1.msra.mxu0 %v1336
      %1355 = vmatprep.subr.mxu0 0.0
      %1356 = vmatpush1.msra.mxu0 %v1337
      %1357 = vmatprep.subr.mxu0 0.0
      %1358 = vmatpush1.msra.mxu0 %v1338
      %1359 = vmatprep.subr.mxu0 0.0
      %1360 = vmatpush1.msra.mxu0 %v1339
      %1361 = vmatprep.subr.mxu0 0.0
      %1362 = vmatpush1.msra.mxu0 %v1340
      %1363 = vmatprep.subr.mxu0 0.0
      %1364 = vmatpush1.msra.mxu0 %v1341
      %1365 = vmatprep.subr.mxu0 0.0
      %1366 = vmatpush1.msra.mxu0 %v1342
      %1367 = vmatprep.subr.mxu0 0.0
      %1368 = vmatpush1.msra.mxu0 %v1343
      %1369 = vmatprep.subr.mxu0 0.0
      %1370 = vmatpush1.msra.mxu0 %v1344
      %1371 = vmatprep.subr.mxu0 0.0
      %1372 = vmatpush1.msra.mxu0 %v1345
      %1373 = vmatprep.subr.mxu0 0.0
      %1374 = vmatpush1.msra.mxu0 %v1346
      %1375 = vmatprep.subr.mxu0 0.0
      %1376 = vmatpush1.msra.mxu0 %v1347
      %1377 = vmatprep.subr.mxu0 0.0
      %1378 = vmatpush1.msra.mxu0 %v1348
      %1379 = vmatprep.subr.mxu0 0.0
      %1380 = vmatpush1.msra.mxu0 %v1349
      %1381 = vmatprep.subr.mxu0 0.0
      %1382 = vmatpush1.msra.mxu0 %v1350
      %1383 = vmatprep.subr.mxu0 0.0
      %1384 = vmatpush1.msra.mxu0 0.0
      %1385 = vmatprep.subr.mxu0 0.0
      %1386 = vmatpush1.msra.mxu0 0.0
      %1387 = vmatprep.subr.mxu0 0.0
      %1388 = vmatpush1.msra.mxu0 0.0
      %1389 = vmatprep.subr.mxu0 0.0
      %1390 = vmatpush1.msra.mxu0 0.0
      %1391 = vmatprep.subr.mxu0 0.0
      %1392 = vmatpush1.msra.mxu0 0.0
      %1393 = vmatprep.subr.mxu0 0.0
      %1394 = vmatpush1.msra.mxu0 0.0
      %1395 = vmatprep.subr.mxu0 0.0
      %1396 = vmatpush1.msra.mxu0 0.0
      %1397 = vmatprep.subr.mxu0 0.0
      %1398 = vmatpush1.msra.mxu0 0.0
      %1399 = vmatprep.subr.mxu0 0.0
      %1400 = vmatpush1.msra.mxu0 0.0
      %1401 = vmatprep.subr.mxu0 0.0
      %1402 = vmatpush1.msra.mxu0 0.0
      %1403 = vmatprep.subr.mxu0 0.0
      %1404 = vmatpush1.msra.mxu0 0.0
      %1405 = vmatprep.subr.mxu0 0.0
      %1406 = vmatpush1.msra.mxu0 0.0
      %1407 = vmatprep.subr.mxu0 0.0
      %1408 = vmatpush1.msra.mxu0 0.0
      %1409 = vmatprep.subr.mxu0 0.0
      %1410 = vmatpush1.msra.mxu0 0.0
      %1411 = vmatprep.subr.mxu0 0.0
      %1412 = vmatpush1.msra.mxu0 0.0
      %1413 = vmatprep.subr.mxu0 0.0
      %1414 = vmatpush1.msra.mxu0 0.0
      %1415 = vmatprep.mubr.f32.mxu0 0.0
      %1416 = vmatmul.mubr.f32.gmra.mrb[0].mxu0 %v745
      %v1417 = vpop.f32.mrb[0].mxu0
      %v1418 = vadd.f32 0.0, %v1417
      %v1419 = vpop.f32.mrb[0].mxu0
      %1420 = vmatprep.mubr.f32.mxu0 0.0
      %1421 = vmatmul.mubr.f32.gmra.mrb[0].mxu0 %v833
      %v1422 = vpop.f32.mrb[0].mxu0
      %v1423 = vadd.f32 0.0, %v1422
      %v1424 = vpop.f32.mrb[0].mxu0
      %1425 = vmatprep.mubr.f32.mxu0 0.0
      %1426 = vmatmul.mubr.f32.gmra.mrb[0].mxu0 %v748
      %v1427 = vpop.f32.mrb[0].mxu0
      %v1428 = vadd.f32 0.0, %v1427
      %v1429 = vpop.f32.mrb[0].mxu0
      %1430 = vmatprep.mubr.f32.mxu0 0.0
      %1431 = vmatmul.mubr.f32.gmra.mrb[0].mxu0 %v834
      %v1432 = vpop.f32.mrb[0].mxu0
      %v1433 = vadd.f32 0.0, %v1432
      %v1434 = vpop.f32.mrb[0].mxu0
      %1435 = vmatprep.mubr.f32.mxu0 0.0
      %1436 = vmatmul.mubr.f32.gmra.mrb[0].mxu0 %v751
      %v1437 = vpop.f32.mrb[0].mxu0
      %v1438 = vadd.f32 0.0, %v1437
      %v1439 = vpop.f32.mrb[0].mxu0
      %1440 = vmatprep.mubr.f32.mxu0 0.0
      %1441 = vmatmul.mubr.f32.gmra.mrb[0].mxu0 %v835
      %v1442 = vpop.f32.mrb[0].mxu0
      %v1443 = vadd.f32 0.0, %v1442
      %v1444 = vpop.f32.mrb[0].mxu0
      %1445 = vmatprep.mubr.f32.mxu0 0.0
      %1446 = vmatmul.mubr.f32.gmra.mrb[0].mxu0 %v754
      %v1447 = vpop.f32.mrb[0].mxu0
      %v1448 = vadd.f32 0.0, %v1447
      %v1449 = vpop.f32.mrb[0].mxu0
      %1450 = vmatprep.mubr.f32.mxu0 0.0
      %1451 = vmatmul.mubr.f32.gmra.mrb[0].mxu0 %v836
      %v1452 = vpop.f32.mrb[0].mxu0
      %v1453 = vadd.f32 0.0, %v1452
      %v1454 = vpop.f32.mrb[0].mxu0
      %1455 = vmatprep.mubr.f32.mxu0 0.0
      %1456 = vmatmul.mubr.f32.gmra.mrb[0].mxu0 %v757
      %v1457 = vpop.f32.mrb[0].mxu0
      %v1458 = vadd.f32 0.0, %v1457
      %v1459 = vpop.f32.mrb[0].mxu0
      %1460 = vmatprep.mubr.f32.mxu0 0.0
      %1461 = vmatmul.mubr.f32.gmra.mrb[0].mxu0 %v837
      %v1462 = vpop.f32.mrb[0].mxu0
      %v1463 = vadd.f32 0.0, %v1462
      %v1464 = vpop.f32.mrb[0].mxu0
      %1465 = vmatprep.mubr.f32.mxu0 0.0
      %1466 = vmatmul.mubr.f32.gmra.mrb[0].mxu0 %v760
      %v1467 = vpop.f32.mrb[0].mxu0
      %v1468 = vadd.f32 0.0, %v1467
      %v1469 = vpop.f32.mrb[0].mxu0
      %1470 = vmatprep.mubr.f32.mxu0 0.0
      %1471 = vmatmul.mubr.f32.gmra.mrb[0].mxu0 %v838
      %v1472 = vpop.f32.mrb[0].mxu0
      %v1473 = vadd.f32 0.0, %v1472
      %v1474 = vpop.f32.mrb[0].mxu0
      %1475 = vmatprep.mubr.f32.mxu0 0.0
      %1476 = vmatmul.mubr.f32.gmra.mrb[0].mxu0 %v763
      %v1477 = vpop.f32.mrb[0].mxu0
      %v1478 = vadd.f32 0.0, %v1477
      %v1479 = vpop.f32.mrb[0].mxu0
      %1480 = vmatprep.mubr.f32.mxu0 0.0
      %1481 = vmatmul.mubr.f32.gmra.mrb[0].mxu0 %v839
      %v1482 = vpop.f32.mrb[0].mxu0
      %v1483 = vadd.f32 0.0, %v1482
      %v1484 = vpop.f32.mrb[0].mxu0
      %1485 = vmatprep.mubr.f32.mxu0 0.0
      %1486 = vmatmul.mubr.f32.gmra.mrb[0].mxu0 %v766
      %v1487 = vpop.f32.mrb[0].mxu0
      %v1488 = vadd.f32 0.0, %v1487
      %v1489 = vpop.f32.mrb[0].mxu0
      %1490 = vmatprep.mubr.f32.mxu0 0.0
      %1491 = vmatmul.mubr.f32.gmra.mrb[0].mxu0 %v840
      %v1492 = vpop.f32.mrb[0].mxu0
      %v1493 = vadd.f32 0.0, %v1492
      %v1494 = vpop.f32.mrb[0].mxu0
      %1495 = vmatprep.mubr.f32.mxu0 0.0
      %1496 = vmatmul.mubr.f32.gmra.mrb[0].mxu0 %v769
      %v1497 = vpop.f32.mrb[0].mxu0
      %v1498 = vadd.f32 0.0, %v1497
      %v1499 = vpop.f32.mrb[0].mxu0
      %1500 = vmatprep.mubr.f32.mxu0 0.0
      %1501 = vmatmul.mubr.f32.gmra.mrb[0].mxu0 %v841
      %v1502 = vpop.f32.mrb[0].mxu0
      %v1503 = vadd.f32 0.0, %v1502
      %v1504 = vpop.f32.mrb[0].mxu0
      %1505 = vmatprep.mubr.f32.mxu0 0.0
      %1506 = vmatmul.mubr.f32.gmra.mrb[0].mxu0 %v772
      %v1507 = vpop.f32.mrb[0].mxu0
      %v1508 = vadd.f32 0.0, %v1507
      %v1509 = vpop.f32.mrb[0].mxu0
      %1510 = vmatprep.mubr.f32.mxu0 0.0
      %1511 = vmatmul.mubr.f32.gmra.mrb[0].mxu0 %v842
      %v1512 = vpop.f32.mrb[0].mxu0
      %v1513 = vadd.f32 0.0, %v1512
      %v1514 = vpop.f32.mrb[0].mxu0
      %1515 = vmatprep.mubr.f32.mxu0 0.0
      %1516 = vmatmul.mubr.f32.gmra.mrb[0].mxu0 %v775
      %v1517 = vpop.f32.mrb[0].mxu0
      %v1518 = vadd.f32 0.0, %v1517
      %v1519 = vpop.f32.mrb[0].mxu0
      %1520 = vmatprep.mubr.f32.mxu0 0.0
      %1521 = vmatmul.mubr.f32.gmra.mrb[0].mxu0 %v843
      %v1522 = vpop.f32.mrb[0].mxu0
      %v1523 = vadd.f32 0.0, %v1522
      %v1524 = vpop.f32.mrb[0].mxu0
      %1525 = vmatprep.mubr.f32.mxu0 0.0
      %1526 = vmatmul.mubr.f32.gmra.mrb[0].mxu0 %v778
      %v1527 = vpop.f32.mrb[0].mxu0
      %v1528 = vadd.f32 0.0, %v1527
      %v1529 = vpop.f32.mrb[0].mxu0
      %1530 = vmatprep.mubr.f32.mxu0 0.0
      %1531 = vmatmul.mubr.f32.gmra.mrb[0].mxu0 %v844
      %v1532 = vpop.f32.mrb[0].mxu0
      %v1533 = vadd.f32 0.0, %v1532
      %v1534 = vpop.f32.mrb[0].mxu0
      %1535 = vmatprep.mubr.f32.mxu0 0.0
      %1536 = vmatmul.mubr.f32.gmra.mrb[0].mxu0 %v781
      %v1537 = vpop.f32.mrb[0].mxu0
      %v1538 = vadd.f32 0.0, %v1537
      %v1539 = vpop.f32.mrb[0].mxu0
      %1540 = vmatprep.mubr.f32.mxu0 0.0
      %1541 = vmatmul.mubr.f32.gmra.mrb[0].mxu0 %v845
      %v1542 = vpop.f32.mrb[0].mxu0
      %v1543 = vadd.f32 0.0, %v1542
      %v1544 = vpop.f32.mrb[0].mxu0
      %1545 = vmatprep.mubr.f32.mxu0 0.0
      %1546 = vmatmul.mubr.f32.gmra.mrb[0].mxu0 %v784
      %v1547 = vpop.f32.mrb[0].mxu0
      %v1548 = vadd.f32 0.0, %v1547
      %v1549 = vpop.f32.mrb[0].mxu0
      %1550 = vmatprep.mubr.f32.mxu0 0.0
      %1551 = vmatmul.mubr.f32.gmra.mrb[0].mxu0 %v846
      %v1552 = vpop.f32.mrb[0].mxu0
      %v1553 = vadd.f32 0.0, %v1552
      %v1554 = vpop.f32.mrb[0].mxu0
      %1555 = vmatprep.mubr.f32.mxu0 0.0
      %1556 = vmatmul.mubr.f32.gmra.mrb[0].mxu0 %v787
      %v1557 = vpop.f32.mrb[0].mxu0
      %v1558 = vadd.f32 0.0, %v1557
      %v1559 = vpop.f32.mrb[0].mxu0
      %1560 = vmatprep.mubr.f32.mxu0 0.0
      %1561 = vmatmul.mubr.f32.gmra.mrb[0].mxu0 %v847
      %v1562 = vpop.f32.mrb[0].mxu0
      %v1563 = vadd.f32 0.0, %v1562
      %v1564 = vpop.f32.mrb[0].mxu0
      %1565 = vmatprep.mubr.f32.mxu0 0.0
      %1566 = vmatmul.mubr.f32.gmra.mrb[0].mxu0 %v790
      %v1567 = vpop.f32.mrb[0].mxu0
      %v1568 = vadd.f32 0.0, %v1567
      %v1569 = vpop.f32.mrb[0].mxu0
      %1570 = vmatprep.mubr.f32.mxu0 0.0
      %1571 = vmatmul.mubr.f32.gmra.mrb[0].mxu0 %v848
      %v1572 = vpop.f32.mrb[0].mxu0
      %v1573 = vadd.f32 0.0, %v1572
      %v1574 = vpop.f32.mrb[0].mxu0
      %1575 = vdwg.mxu0
      %v1576 = vadd.f32 %v1176, %v1418
      %v1577 = vadd.f32 %v1181, %v1423
      %v1578 = vadd.f32 %v1186, %v1428
      %v1579 = vadd.f32 %v1191, %v1433
      %v1580 = vadd.f32 %v1196, %v1438
      %v1581 = vadd.f32 %v1201, %v1443
      %v1582 = vadd.f32 %v1206, %v1448
      %v1583 = vadd.f32 %v1211, %v1453
      %v1584 = vadd.f32 %v1216, %v1458
      %v1585 = vadd.f32 %v1221, %v1463
      %v1586 = vadd.f32 %v1226, %v1468
      %v1587 = vadd.f32 %v1231, %v1473
      %v1588 = vadd.f32 %v1236, %v1478
      %v1589 = vadd.f32 %v1241, %v1483
      %v1590 = vadd.f32 %v1246, %v1488
      %v1591 = vadd.f32 %v1251, %v1493
      %v1592 = vadd.f32 %v1256, %v1498
      %v1593 = vadd.f32 %v1261, %v1503
      %v1594 = vadd.f32 %v1266, %v1508
      %v1595 = vadd.f32 %v1271, %v1513
      %v1596 = vadd.f32 %v1276, %v1518
      %v1597 = vadd.f32 %v1281, %v1523
      %v1598 = vadd.f32 %v1286, %v1528
      %v1599 = vadd.f32 %v1291, %v1533
      %v1600 = vadd.f32 %v1296, %v1538
      %v1601 = vadd.f32 %v1301, %v1543
      %v1602 = vadd.f32 %v1306, %v1548
      %v1603 = vadd.f32 %v1311, %v1553
      %v1604 = vadd.f32 %v1316, %v1558
      %v1605 = vadd.f32 %v1321, %v1563
      %v1606 = vadd.f32 %v1326, %v1568
      %v1607 = vadd.f32 %v1331, %v1573
      %s1608 = scalar_lea.vmem %s3, 384
      %v1609 = vld [vmem:[%s1608] sm:$0xff]
      %v1610 = vld [vmem:[%s1608 + $0x8] sm:$0xff]
      %v1611 = vld [vmem:[%s1608 + $0x10] sm:$0xff]
      %v1612 = vld [vmem:[%s1608 + $0x18] sm:$0xff]
      %v1613 = vld [vmem:[%s1608 + $0x20] sm:$0xff]
      %v1614 = vld [vmem:[%s1608 + $0x28] sm:$0xff]
      %v1615 = vld [vmem:[%s1608 + $0x30] sm:$0xff]
      %v1616 = vld [vmem:[%s1608 + $0x38] sm:$0xff]
      %v1617 = vld [vmem:[%s1608 + $0x40] sm:$0xff]
      %v1618 = vld [vmem:[%s1608 + $0x48] sm:$0xff]
      %v1619 = vld [vmem:[%s1608 + $0x50] sm:$0xff]
      %v1620 = vld [vmem:[%s1608 + $0x58] sm:$0xff]
      %v1621 = vld [vmem:[%s1608 + $0x60] sm:$0xff]
      %v1622 = vld [vmem:[%s1608 + $0x68] sm:$0xff]
      %v1623 = vld [vmem:[%s1608 + $0x70] sm:$0xff]
      %v1624 = vld [vmem:[%s1608 + $0x78] sm:$0xff]
      %1625 = vmatprep.subr.mxu0 0.0
      %1626 = vmatpush1.msra.mxu0 %v1609
      %1627 = vmatprep.subr.mxu0 0.0
      %1628 = vmatpush1.msra.mxu0 %v1610
      %1629 = vmatprep.subr.mxu0 0.0
      %1630 = vmatpush1.msra.mxu0 %v1611
      %1631 = vmatprep.subr.mxu0 0.0
      %1632 = vmatpush1.msra.mxu0 %v1612
      %1633 = vmatprep.subr.mxu0 0.0
      %1634 = vmatpush1.msra.mxu0 %v1613
      %1635 = vmatprep.subr.mxu0 0.0
      %1636 = vmatpush1.msra.mxu0 %v1614
      %1637 = vmatprep.subr.mxu0 0.0
      %1638 = vmatpush1.msra.mxu0 %v1615
      %1639 = vmatprep.subr.mxu0 0.0
      %1640 = vmatpush1.msra.mxu0 %v1616
      %1641 = vmatprep.subr.mxu0 0.0
      %1642 = vmatpush1.msra.mxu0 %v1617
      %1643 = vmatprep.subr.mxu0 0.0
      %1644 = vmatpush1.msra.mxu0 %v1618
      %1645 = vmatprep.subr.mxu0 0.0
      %1646 = vmatpush1.msra.mxu0 %v1619
      %1647 = vmatprep.subr.mxu0 0.0
      %1648 = vmatpush1.msra.mxu0 %v1620
      %1649 = vmatprep.subr.mxu0 0.0
      %1650 = vmatpush1.msra.mxu0 %v1621
      %1651 = vmatprep.subr.mxu0 0.0
      %1652 = vmatpush1.msra.mxu0 %v1622
      %1653 = vmatprep.subr.mxu0 0.0
      %1654 = vmatpush1.msra.mxu0 %v1623
      %1655 = vmatprep.subr.mxu0 0.0
      %1656 = vmatpush1.msra.mxu0 %v1624
      %1657 = vmatprep.subr.mxu0 0.0
      %1658 = vmatpush1.msra.mxu0 0.0
      %1659 = vmatprep.subr.mxu0 0.0
      %1660 = vmatpush1.msra.mxu0 0.0
      %1661 = vmatprep.subr.mxu0 0.0
      %1662 = vmatpush1.msra.mxu0 0.0
      %1663 = vmatprep.subr.mxu0 0.0
      %1664 = vmatpush1.msra.mxu0 0.0
      %1665 = vmatprep.subr.mxu0 0.0
      %1666 = vmatpush1.msra.mxu0 0.0
      %1667 = vmatprep.subr.mxu0 0.0
      %1668 = vmatpush1.msra.mxu0 0.0
      %1669 = vmatprep.subr.mxu0 0.0
      %1670 = vmatpush1.msra.mxu0 0.0
      %1671 = vmatprep.subr.mxu0 0.0
      %1672 = vmatpush1.msra.mxu0 0.0
      %1673 = vmatprep.subr.mxu0 0.0
      %1674 = vmatpush1.msra.mxu0 0.0
      %1675 = vmatprep.subr.mxu0 0.0
      %1676 = vmatpush1.msra.mxu0 0.0
      %1677 = vmatprep.subr.mxu0 0.0
      %1678 = vmatpush1.msra.mxu0 0.0
      %1679 = vmatprep.subr.mxu0 0.0
      %1680 = vmatpush1.msra.mxu0 0.0
      %1681 = vmatprep.subr.mxu0 0.0
      %1682 = vmatpush1.msra.mxu0 0.0
      %1683 = vmatprep.subr.mxu0 0.0
      %1684 = vmatpush1.msra.mxu0 0.0
      %1685 = vmatprep.subr.mxu0 0.0
      %1686 = vmatpush1.msra.mxu0 0.0
      %1687 = vmatprep.subr.mxu0 0.0
      %1688 = vmatpush1.msra.mxu0 0.0
      %1689 = vmatprep.mubr.f32.mxu0 0.0
      %1690 = vmatmul.mubr.f32.gmra.mrb[0].mxu0 %v725
      %v1691 = vpop.f32.mrb[0].mxu0
      %v1692 = vadd.f32 0.0, %v1691
      %v1693 = vpop.f32.mrb[0].mxu0
      %1694 = vmatprep.mubr.f32.mxu0 0.0
      %1695 = vmatmul.mubr.f32.gmra.mrb[0].mxu0 %v639
      %v1696 = vpop.f32.mrb[0].mxu0
      %v1697 = vadd.f32 0.0, %v1696
      %v1698 = vpop.f32.mrb[0].mxu0
      %1699 = vmatprep.mubr.f32.mxu0 0.0
      %1700 = vmatmul.mubr.f32.gmra.mrb[0].mxu0 %v726
      %v1701 = vpop.f32.mrb[0].mxu0
      %v1702 = vadd.f32 0.0, %v1701
      %v1703 = vpop.f32.mrb[0].mxu0
      %1704 = vmatprep.mubr.f32.mxu0 0.0
      %1705 = vmatmul.mubr.f32.gmra.mrb[0].mxu0 %v642
      %v1706 = vpop.f32.mrb[0].mxu0
      %v1707 = vadd.f32 0.0, %v1706
      %v1708 = vpop.f32.mrb[0].mxu0
      %1709 = vmatprep.mubr.f32.mxu0 0.0
      %1710 = vmatmul.mubr.f32.gmra.mrb[0].mxu0 %v727
      %v1711 = vpop.f32.mrb[0].mxu0
      %v1712 = vadd.f32 0.0, %v1711
      %v1713 = vpop.f32.mrb[0].mxu0
      %1714 = vmatprep.mubr.f32.mxu0 0.0
      %1715 = vmatmul.mubr.f32.gmra.mrb[0].mxu0 %v645
      %v1716 = vpop.f32.mrb[0].mxu0
      %v1717 = vadd.f32 0.0, %v1716
      %v1718 = vpop.f32.mrb[0].mxu0
      %1719 = vmatprep.mubr.f32.mxu0 0.0
      %1720 = vmatmul.mubr.f32.gmra.mrb[0].mxu0 %v728
      %v1721 = vpop.f32.mrb[0].mxu0
      %v1722 = vadd.f32 0.0, %v1721
      %v1723 = vpop.f32.mrb[0].mxu0
      %1724 = vmatprep.mubr.f32.mxu0 0.0
      %1725 = vmatmul.mubr.f32.gmra.mrb[0].mxu0 %v648
      %v1726 = vpop.f32.mrb[0].mxu0
      %v1727 = vadd.f32 0.0, %v1726
      %v1728 = vpop.f32.mrb[0].mxu0
      %1729 = vmatprep.mubr.f32.mxu0 0.0
      %1730 = vmatmul.mubr.f32.gmra.mrb[0].mxu0 %v729
      %v1731 = vpop.f32.mrb[0].mxu0
      %v1732 = vadd.f32 0.0, %v1731
      %v1733 = vpop.f32.mrb[0].mxu0
      %1734 = vmatprep.mubr.f32.mxu0 0.0
      %1735 = vmatmul.mubr.f32.gmra.mrb[0].mxu0 %v651
      %v1736 = vpop.f32.mrb[0].mxu0
      %v1737 = vadd.f32 0.0, %v1736
      %v1738 = vpop.f32.mrb[0].mxu0
      %1739 = vmatprep.mubr.f32.mxu0 0.0
      %1740 = vmatmul.mubr.f32.gmra.mrb[0].mxu0 %v730
      %v1741 = vpop.f32.mrb[0].mxu0
      %v1742 = vadd.f32 0.0, %v1741
      %v1743 = vpop.f32.mrb[0].mxu0
      %1744 = vmatprep.mubr.f32.mxu0 0.0
      %1745 = vmatmul.mubr.f32.gmra.mrb[0].mxu0 %v654
      %v1746 = vpop.f32.mrb[0].mxu0
      %v1747 = vadd.f32 0.0, %v1746
      %v1748 = vpop.f32.mrb[0].mxu0
      %1749 = vmatprep.mubr.f32.mxu0 0.0
      %1750 = vmatmul.mubr.f32.gmra.mrb[0].mxu0 %v731
      %v1751 = vpop.f32.mrb[0].mxu0
      %v1752 = vadd.f32 0.0, %v1751
      %v1753 = vpop.f32.mrb[0].mxu0
      %1754 = vmatprep.mubr.f32.mxu0 0.0
      %1755 = vmatmul.mubr.f32.gmra.mrb[0].mxu0 %v657
      %v1756 = vpop.f32.mrb[0].mxu0
      %v1757 = vadd.f32 0.0, %v1756
      %v1758 = vpop.f32.mrb[0].mxu0
      %1759 = vmatprep.mubr.f32.mxu0 0.0
      %1760 = vmatmul.mubr.f32.gmra.mrb[0].mxu0 %v732
      %v1761 = vpop.f32.mrb[0].mxu0
      %v1762 = vadd.f32 0.0, %v1761
      %v1763 = vpop.f32.mrb[0].mxu0
      %1764 = vmatprep.mubr.f32.mxu0 0.0
      %1765 = vmatmul.mubr.f32.gmra.mrb[0].mxu0 %v660
      %v1766 = vpop.f32.mrb[0].mxu0
      %v1767 = vadd.f32 0.0, %v1766
      %v1768 = vpop.f32.mrb[0].mxu0
      %1769 = vmatprep.mubr.f32.mxu0 0.0
      %1770 = vmatmul.mubr.f32.gmra.mrb[0].mxu0 %v733
      %v1771 = vpop.f32.mrb[0].mxu0
      %v1772 = vadd.f32 0.0, %v1771
      %v1773 = vpop.f32.mrb[0].mxu0
      %1774 = vmatprep.mubr.f32.mxu0 0.0
      %1775 = vmatmul.mubr.f32.gmra.mrb[0].mxu0 %v663
      %v1776 = vpop.f32.mrb[0].mxu0
      %v1777 = vadd.f32 0.0, %v1776
      %v1778 = vpop.f32.mrb[0].mxu0
      %1779 = vmatprep.mubr.f32.mxu0 0.0
      %1780 = vmatmul.mubr.f32.gmra.mrb[0].mxu0 %v734
      %v1781 = vpop.f32.mrb[0].mxu0
      %v1782 = vadd.f32 0.0, %v1781
      %v1783 = vpop.f32.mrb[0].mxu0
      %1784 = vmatprep.mubr.f32.mxu0 0.0
      %1785 = vmatmul.mubr.f32.gmra.mrb[0].mxu0 %v666
      %v1786 = vpop.f32.mrb[0].mxu0
      %v1787 = vadd.f32 0.0, %v1786
      %v1788 = vpop.f32.mrb[0].mxu0
      %1789 = vmatprep.mubr.f32.mxu0 0.0
      %1790 = vmatmul.mubr.f32.gmra.mrb[0].mxu0 %v735
      %v1791 = vpop.f32.mrb[0].mxu0
      %v1792 = vadd.f32 0.0, %v1791
      %v1793 = vpop.f32.mrb[0].mxu0
      %1794 = vmatprep.mubr.f32.mxu0 0.0
      %1795 = vmatmul.mubr.f32.gmra.mrb[0].mxu0 %v669
      %v1796 = vpop.f32.mrb[0].mxu0
      %v1797 = vadd.f32 0.0, %v1796
      %v1798 = vpop.f32.mrb[0].mxu0
      %1799 = vmatprep.mubr.f32.mxu0 0.0
      %1800 = vmatmul.mubr.f32.gmra.mrb[0].mxu0 %v736
      %v1801 = vpop.f32.mrb[0].mxu0
      %v1802 = vadd.f32 0.0, %v1801
      %v1803 = vpop.f32.mrb[0].mxu0
      %1804 = vmatprep.mubr.f32.mxu0 0.0
      %1805 = vmatmul.mubr.f32.gmra.mrb[0].mxu0 %v672
      %v1806 = vpop.f32.mrb[0].mxu0
      %v1807 = vadd.f32 0.0, %v1806
      %v1808 = vpop.f32.mrb[0].mxu0
      %1809 = vmatprep.mubr.f32.mxu0 0.0
      %1810 = vmatmul.mubr.f32.gmra.mrb[0].mxu0 %v737
      %v1811 = vpop.f32.mrb[0].mxu0
      %v1812 = vadd.f32 0.0, %v1811
      %v1813 = vpop.f32.mrb[0].mxu0
      %1814 = vmatprep.mubr.f32.mxu0 0.0
      %1815 = vmatmul.mubr.f32.gmra.mrb[0].mxu0 %v675
      %v1816 = vpop.f32.mrb[0].mxu0
      %v1817 = vadd.f32 0.0, %v1816
      %v1818 = vpop.f32.mrb[0].mxu0
      %1819 = vmatprep.mubr.f32.mxu0 0.0
      %1820 = vmatmul.mubr.f32.gmra.mrb[0].mxu0 %v738
      %v1821 = vpop.f32.mrb[0].mxu0
      %v1822 = vadd.f32 0.0, %v1821
      %v1823 = vpop.f32.mrb[0].mxu0
      %1824 = vmatprep.mubr.f32.mxu0 0.0
      %1825 = vmatmul.mubr.f32.gmra.mrb[0].mxu0 %v678
      %v1826 = vpop.f32.mrb[0].mxu0
      %v1827 = vadd.f32 0.0, %v1826
      %v1828 = vpop.f32.mrb[0].mxu0
      %1829 = vmatprep.mubr.f32.mxu0 0.0
      %1830 = vmatmul.mubr.f32.gmra.mrb[0].mxu0 %v739
      %v1831 = vpop.f32.mrb[0].mxu0
      %v1832 = vadd.f32 0.0, %v1831
      %v1833 = vpop.f32.mrb[0].mxu0
      %1834 = vmatprep.mubr.f32.mxu0 0.0
      %1835 = vmatmul.mubr.f32.gmra.mrb[0].mxu0 %v681
      %v1836 = vpop.f32.mrb[0].mxu0
      %v1837 = vadd.f32 0.0, %v1836
      %v1838 = vpop.f32.mrb[0].mxu0
      %1839 = vmatprep.mubr.f32.mxu0 0.0
      %1840 = vmatmul.mubr.f32.gmra.mrb[0].mxu0 %v740
      %v1841 = vpop.f32.mrb[0].mxu0
      %v1842 = vadd.f32 0.0, %v1841
      %v1843 = vpop.f32.mrb[0].mxu0
      %1844 = vmatprep.mubr.f32.mxu0 0.0
      %1845 = vmatmul.mubr.f32.gmra.mrb[0].mxu0 %v684
      %v1846 = vpop.f32.mrb[0].mxu0
      %v1847 = vadd.f32 0.0, %v1846
      %v1848 = vpop.f32.mrb[0].mxu0
      %1849 = vdwg.mxu0
      %v1850 = vadd.f32 %v1576, %v1692
      %v1851 = vadd.f32 %v1577, %v1697
      %v1852 = vadd.f32 %v1578, %v1702
      %v1853 = vadd.f32 %v1579, %v1707
      %v1854 = vadd.f32 %v1580, %v1712
      %v1855 = vadd.f32 %v1581, %v1717
      %v1856 = vadd.f32 %v1582, %v1722
      %v1857 = vadd.f32 %v1583, %v1727
      %v1858 = vadd.f32 %v1584, %v1732
      %v1859 = vadd.f32 %v1585, %v1737
      %v1860 = vadd.f32 %v1586, %v1742
      %v1861 = vadd.f32 %v1587, %v1747
      %v1862 = vadd.f32 %v1588, %v1752
      %v1863 = vadd.f32 %v1589, %v1757
      %v1864 = vadd.f32 %v1590, %v1762
      %v1865 = vadd.f32 %v1591, %v1767
      %v1866 = vadd.f32 %v1592, %v1772
      %v1867 = vadd.f32 %v1593, %v1777
      %v1868 = vadd.f32 %v1594, %v1782
      %v1869 = vadd.f32 %v1595, %v1787
      %v1870 = vadd.f32 %v1596, %v1792
      %v1871 = vadd.f32 %v1597, %v1797
      %v1872 = vadd.f32 %v1598, %v1802
      %v1873 = vadd.f32 %v1599, %v1807
      %v1874 = vadd.f32 %v1600, %v1812
      %v1875 = vadd.f32 %v1601, %v1817
      %v1876 = vadd.f32 %v1602, %v1822
      %v1877 = vadd.f32 %v1603, %v1827
      %v1878 = vadd.f32 %v1604, %v1832
      %v1879 = vadd.f32 %v1605, %v1837
      %v1880 = vadd.f32 %v1606, %v1842
      %v1881 = vadd.f32 %v1607, %v1847
      %s1882 = scalar_lea.vmem %s3, 512
      %v1883 = vld [vmem:[%s1882] sm:$0xff]
      %v1884 = vld [vmem:[%s1882 + $0x8] sm:$0xff]
      %v1885 = vld [vmem:[%s1882 + $0x10] sm:$0xff]
      %v1886 = vld [vmem:[%s1882 + $0x18] sm:$0xff]
      %v1887 = vld [vmem:[%s1882 + $0x20] sm:$0xff]
      %v1888 = vld [vmem:[%s1882 + $0x28] sm:$0xff]
      %v1889 = vld [vmem:[%s1882 + $0x30] sm:$0xff]
      %v1890 = vld [vmem:[%s1882 + $0x38] sm:$0xff]
      %v1891 = vld [vmem:[%s1882 + $0x40] sm:$0xff]
      %v1892 = vld [vmem:[%s1882 + $0x48] sm:$0xff]
      %v1893 = vld [vmem:[%s1882 + $0x50] sm:$0xff]
      %v1894 = vld [vmem:[%s1882 + $0x58] sm:$0xff]
      %v1895 = vld [vmem:[%s1882 + $0x60] sm:$0xff]
      %v1896 = vld [vmem:[%s1882 + $0x68] sm:$0xff]
      %v1897 = vld [vmem:[%s1882 + $0x70] sm:$0xff]
      %v1898 = vld [vmem:[%s1882 + $0x78] sm:$0xff]
      %1899 = vmatprep.subr.mxu0 0.0
      %1900 = vmatpush1.msra.mxu0 %v1883
      %1901 = vmatprep.subr.mxu0 0.0
      %1902 = vmatpush1.msra.mxu0 %v1884
      %1903 = vmatprep.subr.mxu0 0.0
      %1904 = vmatpush1.msra.mxu0 %v1885
      %1905 = vmatprep.subr.mxu0 0.0
      %1906 = vmatpush1.msra.mxu0 %v1886
      %1907 = vmatprep.subr.mxu0 0.0
      %1908 = vmatpush1.msra.mxu0 %v1887
      %1909 = vmatprep.subr.mxu0 0.0
      %1910 = vmatpush1.msra.mxu0 %v1888
      %1911 = vmatprep.subr.mxu0 0.0
      %1912 = vmatpush1.msra.mxu0 %v1889
      %1913 = vmatprep.subr.mxu0 0.0
      %1914 = vmatpush1.msra.mxu0 %v1890
      %1915 = vmatprep.subr.mxu0 0.0
      %1916 = vmatpush1.msra.mxu0 %v1891
      %1917 = vmatprep.subr.mxu0 0.0
      %1918 = vmatpush1.msra.mxu0 %v1892
      %1919 = vmatprep.subr.mxu0 0.0
      %1920 = vmatpush1.msra.mxu0 %v1893
      %1921 = vmatprep.subr.mxu0 0.0
      %1922 = vmatpush1.msra.mxu0 %v1894
      %1923 = vmatprep.subr.mxu0 0.0
      %1924 = vmatpush1.msra.mxu0 %v1895
      %1925 = vmatprep.subr.mxu0 0.0
      %1926 = vmatpush1.msra.mxu0 %v1896
      %1927 = vmatprep.subr.mxu0 0.0
      %1928 = vmatpush1.msra.mxu0 %v1897
      %1929 = vmatprep.subr.mxu0 0.0
      %1930 = vmatpush1.msra.mxu0 %v1898
      %1931 = vmatprep.subr.mxu0 0.0
      %1932 = vmatpush1.msra.mxu0 0.0
      %1933 = vmatprep.subr.mxu0 0.0
      %1934 = vmatpush1.msra.mxu0 0.0
      %1935 = vmatprep.subr.mxu0 0.0
      %1936 = vmatpush1.msra.mxu0 0.0
      %1937 = vmatprep.subr.mxu0 0.0
      %1938 = vmatpush1.msra.mxu0 0.0
      %1939 = vmatprep.subr.mxu0 0.0
      %1940 = vmatpush1.msra.mxu0 0.0
      %1941 = vmatprep.subr.mxu0 0.0
      %1942 = vmatpush1.msra.mxu0 0.0
      %1943 = vmatprep.subr.mxu0 0.0
      %1944 = vmatpush1.msra.mxu0 0.0
      %1945 = vmatprep.subr.mxu0 0.0
      %1946 = vmatpush1.msra.mxu0 0.0
      %1947 = vmatprep.subr.mxu0 0.0
      %1948 = vmatpush1.msra.mxu0 0.0
      %1949 = vmatprep.subr.mxu0 0.0
      %1950 = vmatpush1.msra.mxu0 0.0
      %1951 = vmatprep.subr.mxu0 0.0
      %1952 = vmatpush1.msra.mxu0 0.0
      %1953 = vmatprep.subr.mxu0 0.0
      %1954 = vmatpush1.msra.mxu0 0.0
      %1955 = vmatprep.subr.mxu0 0.0
      %1956 = vmatpush1.msra.mxu0 0.0
      %1957 = vmatprep.subr.mxu0 0.0
      %1958 = vmatpush1.msra.mxu0 0.0
      %1959 = vmatprep.subr.mxu0 0.0
      %1960 = vmatpush1.msra.mxu0 0.0
      %1961 = vmatprep.subr.mxu0 0.0
      %1962 = vmatpush1.msra.mxu0 0.0
      %1963 = vmatprep.mubr.f32.mxu0 0.0
      %1964 = vmatmul.mubr.f32.gmra.mrb[0].mxu0 %v565
      %v1965 = vpop.f32.mrb[0].mxu0
      %v1966 = vadd.f32 0.0, %v1965
      %v1967 = vpop.f32.mrb[0].mxu0
      %1968 = vmatprep.mubr.f32.mxu0 0.0
      %1969 = vmatmul.mubr.f32.gmra.mrb[0].mxu0 %v566
      %v1970 = vpop.f32.mrb[0].mxu0
      %v1971 = vadd.f32 0.0, %v1970
      %v1972 = vpop.f32.mrb[0].mxu0
      %1973 = vmatprep.mubr.f32.mxu0 0.0
      %1974 = vmatmul.mubr.f32.gmra.mrb[0].mxu0 %v567
      %v1975 = vpop.f32.mrb[0].mxu0
      %v1976 = vadd.f32 0.0, %v1975
      %v1977 = vpop.f32.mrb[0].mxu0
      %1978 = vmatprep.mubr.f32.mxu0 0.0
      %1979 = vmatmul.mubr.f32.gmra.mrb[0].mxu0 %v568
      %v1980 = vpop.f32.mrb[0].mxu0
      %v1981 = vadd.f32 0.0, %v1980
      %v1982 = vpop.f32.mrb[0].mxu0
      %1983 = vmatprep.mubr.f32.mxu0 0.0
      %1984 = vmatmul.mubr.f32.gmra.mrb[0].mxu0 %v569
      %v1985 = vpop.f32.mrb[0].mxu0
      %v1986 = vadd.f32 0.0, %v1985
      %v1987 = vpop.f32.mrb[0].mxu0
      %1988 = vmatprep.mubr.f32.mxu0 0.0
      %1989 = vmatmul.mubr.f32.gmra.mrb[0].mxu0 %v570
      %v1990 = vpop.f32.mrb[0].mxu0
      %v1991 = vadd.f32 0.0, %v1990
      %v1992 = vpop.f32.mrb[0].mxu0
      %1993 = vmatprep.mubr.f32.mxu0 0.0
      %1994 = vmatmul.mubr.f32.gmra.mrb[0].mxu0 %v571
      %v1995 = vpop.f32.mrb[0].mxu0
      %v1996 = vadd.f32 0.0, %v1995
      %v1997 = vpop.f32.mrb[0].mxu0
      %1998 = vmatprep.mubr.f32.mxu0 0.0
      %1999 = vmatmul.mubr.f32.gmra.mrb[0].mxu0 %v572
      %v2000 = vpop.f32.mrb[0].mxu0
      %v2001 = vadd.f32 0.0, %v2000
      %v2002 = vpop.f32.mrb[0].mxu0
      %2003 = vmatprep.mubr.f32.mxu0 0.0
      %2004 = vmatmul.mubr.f32.gmra.mrb[0].mxu0 %v573
      %v2005 = vpop.f32.mrb[0].mxu0
      %v2006 = vadd.f32 0.0, %v2005
      %v2007 = vpop.f32.mrb[0].mxu0
      %2008 = vmatprep.mubr.f32.mxu0 0.0
      %2009 = vmatmul.mubr.f32.gmra.mrb[0].mxu0 %v574
      %v2010 = vpop.f32.mrb[0].mxu0
      %v2011 = vadd.f32 0.0, %v2010
      %v2012 = vpop.f32.mrb[0].mxu0
      %2013 = vmatprep.mubr.f32.mxu0 0.0
      %2014 = vmatmul.mubr.f32.gmra.mrb[0].mxu0 %v575
      %v2015 = vpop.f32.mrb[0].mxu0
      %v2016 = vadd.f32 0.0, %v2015
      %v2017 = vpop.f32.mrb[0].mxu0
      %2018 = vmatprep.mubr.f32.mxu0 0.0
      %2019 = vmatmul.mubr.f32.gmra.mrb[0].mxu0 %v576
      %v2020 = vpop.f32.mrb[0].mxu0
      %v2021 = vadd.f32 0.0, %v2020
      %v2022 = vpop.f32.mrb[0].mxu0
      %2023 = vmatprep.mubr.f32.mxu0 0.0
      %2024 = vmatmul.mubr.f32.gmra.mrb[0].mxu0 %v577
      %v2025 = vpop.f32.mrb[0].mxu0
      %v2026 = vadd.f32 0.0, %v2025
      %v2027 = vpop.f32.mrb[0].mxu0
      %2028 = vmatprep.mubr.f32.mxu0 0.0
      %2029 = vmatmul.mubr.f32.gmra.mrb[0].mxu0 %v578
      %v2030 = vpop.f32.mrb[0].mxu0
      %v2031 = vadd.f32 0.0, %v2030
      %v2032 = vpop.f32.mrb[0].mxu0
      %2033 = vmatprep.mubr.f32.mxu0 0.0
      %2034 = vmatmul.mubr.f32.gmra.mrb[0].mxu0 %v579
      %v2035 = vpop.f32.mrb[0].mxu0
      %v2036 = vadd.f32 0.0, %v2035
      %v2037 = vpop.f32.mrb[0].mxu0
      %2038 = vmatprep.mubr.f32.mxu0 0.0
      %2039 = vmatmul.mubr.f32.gmra.mrb[0].mxu0 %v580
      %v2040 = vpop.f32.mrb[0].mxu0
      %v2041 = vadd.f32 0.0, %v2040
      %v2042 = vpop.f32.mrb[0].mxu0
      %2043 = vmatprep.mubr.f32.mxu0 0.0
      %2044 = vmatmul.mubr.f32.gmra.mrb[0].mxu0 %v581
      %v2045 = vpop.f32.mrb[0].mxu0
      %v2046 = vadd.f32 0.0, %v2045
      %v2047 = vpop.f32.mrb[0].mxu0
      %2048 = vmatprep.mubr.f32.mxu0 0.0
      %2049 = vmatmul.mubr.f32.gmra.mrb[0].mxu0 %v582
      %v2050 = vpop.f32.mrb[0].mxu0
      %v2051 = vadd.f32 0.0, %v2050
      %v2052 = vpop.f32.mrb[0].mxu0
      %2053 = vmatprep.mubr.f32.mxu0 0.0
      %2054 = vmatmul.mubr.f32.gmra.mrb[0].mxu0 %v583
      %v2055 = vpop.f32.mrb[0].mxu0
      %v2056 = vadd.f32 0.0, %v2055
      %v2057 = vpop.f32.mrb[0].mxu0
      %2058 = vmatprep.mubr.f32.mxu0 0.0
      %2059 = vmatmul.mubr.f32.gmra.mrb[0].mxu0 %v584
      %v2060 = vpop.f32.mrb[0].mxu0
      %v2061 = vadd.f32 0.0, %v2060
      %v2062 = vpop.f32.mrb[0].mxu0
      %2063 = vmatprep.mubr.f32.mxu0 0.0
      %2064 = vmatmul.mubr.f32.gmra.mrb[0].mxu0 %v585
      %v2065 = vpop.f32.mrb[0].mxu0
      %v2066 = vadd.f32 0.0, %v2065
      %v2067 = vpop.f32.mrb[0].mxu0
      %2068 = vmatprep.mubr.f32.mxu0 0.0
      %2069 = vmatmul.mubr.f32.gmra.mrb[0].mxu0 %v586
      %v2070 = vpop.f32.mrb[0].mxu0
      %v2071 = vadd.f32 0.0, %v2070
      %v2072 = vpop.f32.mrb[0].mxu0
      %2073 = vmatprep.mubr.f32.mxu0 0.0
      %2074 = vmatmul.mubr.f32.gmra.mrb[0].mxu0 %v587
      %v2075 = vpop.f32.mrb[0].mxu0
      %v2076 = vadd.f32 0.0, %v2075
      %v2077 = vpop.f32.mrb[0].mxu0
      %2078 = vmatprep.mubr.f32.mxu0 0.0
      %2079 = vmatmul.mubr.f32.gmra.mrb[0].mxu0 %v588
      %v2080 = vpop.f32.mrb[0].mxu0
      %v2081 = vadd.f32 0.0, %v2080
      %v2082 = vpop.f32.mrb[0].mxu0
      %2083 = vmatprep.mubr.f32.mxu0 0.0
      %2084 = vmatmul.mubr.f32.gmra.mrb[0].mxu0 %v589
      %v2085 = vpop.f32.mrb[0].mxu0
      %v2086 = vadd.f32 0.0, %v2085
      %v2087 = vpop.f32.mrb[0].mxu0
      %2088 = vmatprep.mubr.f32.mxu0 0.0
      %2089 = vmatmul.mubr.f32.gmra.mrb[0].mxu0 %v590
      %v2090 = vpop.f32.mrb[0].mxu0
      %v2091 = vadd.f32 0.0, %v2090
      %v2092 = vpop.f32.mrb[0].mxu0
      %2093 = vmatprep.mubr.f32.mxu0 0.0
      %2094 = vmatmul.mubr.f32.gmra.mrb[0].mxu0 %v591
      %v2095 = vpop.f32.mrb[0].mxu0
      %v2096 = vadd.f32 0.0, %v2095
      %v2097 = vpop.f32.mrb[0].mxu0
      %2098 = vmatprep.mubr.f32.mxu0 0.0
      %2099 = vmatmul.mubr.f32.gmra.mrb[0].mxu0 %v592
      %v2100 = vpop.f32.mrb[0].mxu0
      %v2101 = vadd.f32 0.0, %v2100
      %v2102 = vpop.f32.mrb[0].mxu0
      %2103 = vmatprep.mubr.f32.mxu0 0.0
      %2104 = vmatmul.mubr.f32.gmra.mrb[0].mxu0 %v593
      %v2105 = vpop.f32.mrb[0].mxu0
      %v2106 = vadd.f32 0.0, %v2105
      %v2107 = vpop.f32.mrb[0].mxu0
      %2108 = vmatprep.mubr.f32.mxu0 0.0
      %2109 = vmatmul.mubr.f32.gmra.mrb[0].mxu0 %v594
      %v2110 = vpop.f32.mrb[0].mxu0
      %v2111 = vadd.f32 0.0, %v2110
      %v2112 = vpop.f32.mrb[0].mxu0
      %2113 = vmatprep.mubr.f32.mxu0 0.0
      %2114 = vmatmul.mubr.f32.gmra.mrb[0].mxu0 %v595
      %v2115 = vpop.f32.mrb[0].mxu0
      %v2116 = vadd.f32 0.0, %v2115
      %v2117 = vpop.f32.mrb[0].mxu0
      %2118 = vmatprep.mubr.f32.mxu0 0.0
      %2119 = vmatmul.mubr.f32.gmra.mrb[0].mxu0 %v596
      %v2120 = vpop.f32.mrb[0].mxu0
      %v2121 = vadd.f32 0.0, %v2120
      %v2122 = vpop.f32.mrb[0].mxu0
      %2123 = vdwg.mxu0
      %v2124 = vadd.f32 %v1850, %v1966
      %v2125 = vadd.f32 %v1851, %v1971
      %v2126 = vadd.f32 %v1852, %v1976
      %v2127 = vadd.f32 %v1853, %v1981
      %v2128 = vadd.f32 %v1854, %v1986
      %v2129 = vadd.f32 %v1855, %v1991
      %v2130 = vadd.f32 %v1856, %v1996
      %v2131 = vadd.f32 %v1857, %v2001
      %v2132 = vadd.f32 %v1858, %v2006
      %v2133 = vadd.f32 %v1859, %v2011
      %v2134 = vadd.f32 %v1860, %v2016
      %v2135 = vadd.f32 %v1861, %v2021
      %v2136 = vadd.f32 %v1862, %v2026
      %v2137 = vadd.f32 %v1863, %v2031
      %v2138 = vadd.f32 %v1864, %v2036
      %v2139 = vadd.f32 %v1865, %v2041
      %v2140 = vadd.f32 %v1866, %v2046
      %v2141 = vadd.f32 %v1867, %v2051
      %v2142 = vadd.f32 %v1868, %v2056
      %v2143 = vadd.f32 %v1869, %v2061
      %v2144 = vadd.f32 %v1870, %v2066
      %v2145 = vadd.f32 %v1871, %v2071
      %v2146 = vadd.f32 %v1872, %v2076
      %v2147 = vadd.f32 %v1873, %v2081
      %v2148 = vadd.f32 %v1874, %v2086
      %v2149 = vadd.f32 %v1875, %v2091
      %v2150 = vadd.f32 %v1876, %v2096
      %v2151 = vadd.f32 %v1877, %v2101
      %v2152 = vadd.f32 %v1878, %v2106
      %v2153 = vadd.f32 %v1879, %v2111
      %v2154 = vadd.f32 %v1880, %v2116
      %v2155 = vadd.f32 %v1881, %v2121
      %s2156 = scalar_lea.vmem %s3, 640
      %v2157 = vld [vmem:[%s2156] sm:$0xff]
      %v2158 = vld [vmem:[%s2156 + $0x8] sm:$0xff]
      %v2159 = vld [vmem:[%s2156 + $0x10] sm:$0xff]
      %v2160 = vld [vmem:[%s2156 + $0x18] sm:$0xff]
      %v2161 = vld [vmem:[%s2156 + $0x20] sm:$0xff]
      %v2162 = vld [vmem:[%s2156 + $0x28] sm:$0xff]
      %v2163 = vld [vmem:[%s2156 + $0x30] sm:$0xff]
      %v2164 = vld [vmem:[%s2156 + $0x38] sm:$0xff]
      %v2165 = vld [vmem:[%s2156 + $0x40] sm:$0xff]
      %v2166 = vld [vmem:[%s2156 + $0x48] sm:$0xff]
      %v2167 = vld [vmem:[%s2156 + $0x50] sm:$0xff]
      %v2168 = vld [vmem:[%s2156 + $0x58] sm:$0xff]
      %v2169 = vld [vmem:[%s2156 + $0x60] sm:$0xff]
      %v2170 = vld [vmem:[%s2156 + $0x68] sm:$0xff]
      %v2171 = vld [vmem:[%s2156 + $0x70] sm:$0xff]
      %v2172 = vld [vmem:[%s2156 + $0x78] sm:$0xff]
      %2173 = vmatprep.subr.mxu0 0.0
      %2174 = vmatpush1.msra.mxu0 %v2157
      %2175 = vmatprep.subr.mxu0 0.0
      %2176 = vmatpush1.msra.mxu0 %v2158
      %2177 = vmatprep.subr.mxu0 0.0
      %2178 = vmatpush1.msra.mxu0 %v2159
      %2179 = vmatprep.subr.mxu0 0.0
      %2180 = vmatpush1.msra.mxu0 %v2160
      %2181 = vmatprep.subr.mxu0 0.0
      %2182 = vmatpush1.msra.mxu0 %v2161
      %2183 = vmatprep.subr.mxu0 0.0
      %2184 = vmatpush1.msra.mxu0 %v2162
      %2185 = vmatprep.subr.mxu0 0.0
      %2186 = vmatpush1.msra.mxu0 %v2163
      %2187 = vmatprep.subr.mxu0 0.0
      %2188 = vmatpush1.msra.mxu0 %v2164
      %2189 = vmatprep.subr.mxu0 0.0
      %2190 = vmatpush1.msra.mxu0 %v2165
      %2191 = vmatprep.subr.mxu0 0.0
      %2192 = vmatpush1.msra.mxu0 %v2166
      %2193 = vmatprep.subr.mxu0 0.0
      %2194 = vmatpush1.msra.mxu0 %v2167
      %2195 = vmatprep.subr.mxu0 0.0
      %2196 = vmatpush1.msra.mxu0 %v2168
      %2197 = vmatprep.subr.mxu0 0.0
      %2198 = vmatpush1.msra.mxu0 %v2169
      %2199 = vmatprep.subr.mxu0 0.0
      %2200 = vmatpush1.msra.mxu0 %v2170
      %2201 = vmatprep.subr.mxu0 0.0
      %2202 = vmatpush1.msra.mxu0 %v2171
      %2203 = vmatprep.subr.mxu0 0.0
      %2204 = vmatpush1.msra.mxu0 %v2172
      %2205 = vmatprep.subr.mxu0 0.0
      %2206 = vmatpush1.msra.mxu0 0.0
      %2207 = vmatprep.subr.mxu0 0.0
      %2208 = vmatpush1.msra.mxu0 0.0
      %2209 = vmatprep.subr.mxu0 0.0
      %2210 = vmatpush1.msra.mxu0 0.0
      %2211 = vmatprep.subr.mxu0 0.0
      %2212 = vmatpush1.msra.mxu0 0.0
      %2213 = vmatprep.subr.mxu0 0.0
      %2214 = vmatpush1.msra.mxu0 0.0
      %2215 = vmatprep.subr.mxu0 0.0
      %2216 = vmatpush1.msra.mxu0 0.0
      %2217 = vmatprep.subr.mxu0 0.0
      %2218 = vmatpush1.msra.mxu0 0.0
      %2219 = vmatprep.subr.mxu0 0.0
      %2220 = vmatpush1.msra.mxu0 0.0
      %2221 = vmatprep.subr.mxu0 0.0
      %2222 = vmatpush1.msra.mxu0 0.0
      %2223 = vmatprep.subr.mxu0 0.0
      %2224 = vmatpush1.msra.mxu0 0.0
      %2225 = vmatprep.subr.mxu0 0.0
      %2226 = vmatpush1.msra.mxu0 0.0
      %2227 = vmatprep.subr.mxu0 0.0
      %2228 = vmatpush1.msra.mxu0 0.0
      %2229 = vmatprep.subr.mxu0 0.0
      %2230 = vmatpush1.msra.mxu0 0.0
      %2231 = vmatprep.subr.mxu0 0.0
      %2232 = vmatpush1.msra.mxu0 0.0
      %2233 = vmatprep.subr.mxu0 0.0
      %2234 = vmatpush1.msra.mxu0 0.0
      %2235 = vmatprep.subr.mxu0 0.0
      %2236 = vmatpush1.msra.mxu0 0.0
      %2237 = vmatprep.mubr.f32.mxu0 0.0
      %2238 = vmatmul.mubr.f32.gmra.mrb[0].mxu0 %v748
      %v2239 = vpop.f32.mrb[0].mxu0
      %v2240 = vadd.f32 0.0, %v2239
      %v2241 = vpop.f32.mrb[0].mxu0
      %2242 = vmatprep.mubr.f32.mxu0 0.0
      %2243 = vmatmul.mubr.f32.gmra.mrb[0].mxu0 %v834
      %v2244 = vpop.f32.mrb[0].mxu0
      %v2245 = vadd.f32 0.0, %v2244
      %v2246 = vpop.f32.mrb[0].mxu0
      %2247 = vmatprep.mubr.f32.mxu0 0.0
      %2248 = vmatmul.mubr.f32.gmra.mrb[0].mxu0 %v751
      %v2249 = vpop.f32.mrb[0].mxu0
      %v2250 = vadd.f32 0.0, %v2249
      %v2251 = vpop.f32.mrb[0].mxu0
      %2252 = vmatprep.mubr.f32.mxu0 0.0
      %2253 = vmatmul.mubr.f32.gmra.mrb[0].mxu0 %v835
      %v2254 = vpop.f32.mrb[0].mxu0
      %v2255 = vadd.f32 0.0, %v2254
      %v2256 = vpop.f32.mrb[0].mxu0
      %2257 = vmatprep.mubr.f32.mxu0 0.0
      %2258 = vmatmul.mubr.f32.gmra.mrb[0].mxu0 %v754
      %v2259 = vpop.f32.mrb[0].mxu0
      %v2260 = vadd.f32 0.0, %v2259
      %v2261 = vpop.f32.mrb[0].mxu0
      %2262 = vmatprep.mubr.f32.mxu0 0.0
      %2263 = vmatmul.mubr.f32.gmra.mrb[0].mxu0 %v836
      %v2264 = vpop.f32.mrb[0].mxu0
      %v2265 = vadd.f32 0.0, %v2264
      %v2266 = vpop.f32.mrb[0].mxu0
      %2267 = vmatprep.mubr.f32.mxu0 0.0
      %2268 = vmatmul.mubr.f32.gmra.mrb[0].mxu0 %v757
      %v2269 = vpop.f32.mrb[0].mxu0
      %v2270 = vadd.f32 0.0, %v2269
      %v2271 = vpop.f32.mrb[0].mxu0
      %2272 = vmatprep.mubr.f32.mxu0 0.0
      %2273 = vmatmul.mubr.f32.gmra.mrb[0].mxu0 %v837
      %v2274 = vpop.f32.mrb[0].mxu0
      %v2275 = vadd.f32 0.0, %v2274
      %v2276 = vpop.f32.mrb[0].mxu0
      %2277 = vmatprep.mubr.f32.mxu0 0.0
      %2278 = vmatmul.mubr.f32.gmra.mrb[0].mxu0 %v760
      %v2279 = vpop.f32.mrb[0].mxu0
      %v2280 = vadd.f32 0.0, %v2279
      %v2281 = vpop.f32.mrb[0].mxu0
      %2282 = vmatprep.mubr.f32.mxu0 0.0
      %2283 = vmatmul.mubr.f32.gmra.mrb[0].mxu0 %v838
      %v2284 = vpop.f32.mrb[0].mxu0
      %v2285 = vadd.f32 0.0, %v2284
      %v2286 = vpop.f32.mrb[0].mxu0
      %2287 = vmatprep.mubr.f32.mxu0 0.0
      %2288 = vmatmul.mubr.f32.gmra.mrb[0].mxu0 %v763
      %v2289 = vpop.f32.mrb[0].mxu0
      %v2290 = vadd.f32 0.0, %v2289
      %v2291 = vpop.f32.mrb[0].mxu0
      %2292 = vmatprep.mubr.f32.mxu0 0.0
      %2293 = vmatmul.mubr.f32.gmra.mrb[0].mxu0 %v839
      %v2294 = vpop.f32.mrb[0].mxu0
      %v2295 = vadd.f32 0.0, %v2294
      %v2296 = vpop.f32.mrb[0].mxu0
      %2297 = vmatprep.mubr.f32.mxu0 0.0
      %2298 = vmatmul.mubr.f32.gmra.mrb[0].mxu0 %v766
      %v2299 = vpop.f32.mrb[0].mxu0
      %v2300 = vadd.f32 0.0, %v2299
      %v2301 = vpop.f32.mrb[0].mxu0
      %2302 = vmatprep.mubr.f32.mxu0 0.0
      %2303 = vmatmul.mubr.f32.gmra.mrb[0].mxu0 %v840
      %v2304 = vpop.f32.mrb[0].mxu0
      %v2305 = vadd.f32 0.0, %v2304
      %v2306 = vpop.f32.mrb[0].mxu0
      %2307 = vmatprep.mubr.f32.mxu0 0.0
      %2308 = vmatmul.mubr.f32.gmra.mrb[0].mxu0 %v769
      %v2309 = vpop.f32.mrb[0].mxu0
      %v2310 = vadd.f32 0.0, %v2309
      %v2311 = vpop.f32.mrb[0].mxu0
      %2312 = vmatprep.mubr.f32.mxu0 0.0
      %2313 = vmatmul.mubr.f32.gmra.mrb[0].mxu0 %v841
      %v2314 = vpop.f32.mrb[0].mxu0
      %v2315 = vadd.f32 0.0, %v2314
      %v2316 = vpop.f32.mrb[0].mxu0
      %2317 = vmatprep.mubr.f32.mxu0 0.0
      %2318 = vmatmul.mubr.f32.gmra.mrb[0].mxu0 %v772
      %v2319 = vpop.f32.mrb[0].mxu0
      %v2320 = vadd.f32 0.0, %v2319
      %v2321 = vpop.f32.mrb[0].mxu0
      %2322 = vmatprep.mubr.f32.mxu0 0.0
      %2323 = vmatmul.mubr.f32.gmra.mrb[0].mxu0 %v842
      %v2324 = vpop.f32.mrb[0].mxu0
      %v2325 = vadd.f32 0.0, %v2324
      %v2326 = vpop.f32.mrb[0].mxu0
      %2327 = vmatprep.mubr.f32.mxu0 0.0
      %2328 = vmatmul.mubr.f32.gmra.mrb[0].mxu0 %v775
      %v2329 = vpop.f32.mrb[0].mxu0
      %v2330 = vadd.f32 0.0, %v2329
      %v2331 = vpop.f32.mrb[0].mxu0
      %2332 = vmatprep.mubr.f32.mxu0 0.0
      %2333 = vmatmul.mubr.f32.gmra.mrb[0].mxu0 %v843
      %v2334 = vpop.f32.mrb[0].mxu0
      %v2335 = vadd.f32 0.0, %v2334
      %v2336 = vpop.f32.mrb[0].mxu0
      %2337 = vmatprep.mubr.f32.mxu0 0.0
      %2338 = vmatmul.mubr.f32.gmra.mrb[0].mxu0 %v778
      %v2339 = vpop.f32.mrb[0].mxu0
      %v2340 = vadd.f32 0.0, %v2339
      %v2341 = vpop.f32.mrb[0].mxu0
      %2342 = vmatprep.mubr.f32.mxu0 0.0
      %2343 = vmatmul.mubr.f32.gmra.mrb[0].mxu0 %v844
      %v2344 = vpop.f32.mrb[0].mxu0
      %v2345 = vadd.f32 0.0, %v2344
      %v2346 = vpop.f32.mrb[0].mxu0
      %2347 = vmatprep.mubr.f32.mxu0 0.0
      %2348 = vmatmul.mubr.f32.gmra.mrb[0].mxu0 %v781
      %v2349 = vpop.f32.mrb[0].mxu0
      %v2350 = vadd.f32 0.0, %v2349
      %v2351 = vpop.f32.mrb[0].mxu0
      %2352 = vmatprep.mubr.f32.mxu0 0.0
      %2353 = vmatmul.mubr.f32.gmra.mrb[0].mxu0 %v845
      %v2354 = vpop.f32.mrb[0].mxu0
      %v2355 = vadd.f32 0.0, %v2354
      %v2356 = vpop.f32.mrb[0].mxu0
      %2357 = vmatprep.mubr.f32.mxu0 0.0
      %2358 = vmatmul.mubr.f32.gmra.mrb[0].mxu0 %v784
      %v2359 = vpop.f32.mrb[0].mxu0
      %v2360 = vadd.f32 0.0, %v2359
      %v2361 = vpop.f32.mrb[0].mxu0
      %2362 = vmatprep.mubr.f32.mxu0 0.0
      %2363 = vmatmul.mubr.f32.gmra.mrb[0].mxu0 %v846
      %v2364 = vpop.f32.mrb[0].mxu0
      %v2365 = vadd.f32 0.0, %v2364
      %v2366 = vpop.f32.mrb[0].mxu0
      %2367 = vmatprep.mubr.f32.mxu0 0.0
      %2368 = vmatmul.mubr.f32.gmra.mrb[0].mxu0 %v787
      %v2369 = vpop.f32.mrb[0].mxu0
      %v2370 = vadd.f32 0.0, %v2369
      %v2371 = vpop.f32.mrb[0].mxu0
      %2372 = vmatprep.mubr.f32.mxu0 0.0
      %2373 = vmatmul.mubr.f32.gmra.mrb[0].mxu0 %v847
      %v2374 = vpop.f32.mrb[0].mxu0
      %v2375 = vadd.f32 0.0, %v2374
      %v2376 = vpop.f32.mrb[0].mxu0
      %2377 = vmatprep.mubr.f32.mxu0 0.0
      %2378 = vmatmul.mubr.f32.gmra.mrb[0].mxu0 %v790
      %v2379 = vpop.f32.mrb[0].mxu0
      %v2380 = vadd.f32 0.0, %v2379
      %v2381 = vpop.f32.mrb[0].mxu0
      %2382 = vmatprep.mubr.f32.mxu0 0.0
      %2383 = vmatmul.mubr.f32.gmra.mrb[0].mxu0 %v848
      %v2384 = vpop.f32.mrb[0].mxu0
      %v2385 = vadd.f32 0.0, %v2384
      %v2386 = vpop.f32.mrb[0].mxu0
      %2387 = vmatprep.mubr.f32.mxu0 0.0
      %2388 = vmatmul.mubr.f32.gmra.mrb[0].mxu0 %v793
      %v2389 = vpop.f32.mrb[0].mxu0
      %v2390 = vadd.f32 0.0, %v2389
      %v2391 = vpop.f32.mrb[0].mxu0
      %2392 = vmatprep.mubr.f32.mxu0 0.0
      %2393 = vmatmul.mubr.f32.gmra.mrb[0].mxu0 %v849
      %v2394 = vpop.f32.mrb[0].mxu0
      %v2395 = vadd.f32 0.0, %v2394
      %v2396 = vpop.f32.mrb[0].mxu0
      %2397 = vdwg.mxu0
      %v2398 = vadd.f32 %v2124, %v2240
      %v2399 = vadd.f32 %v2125, %v2245
      %v2400 = vadd.f32 %v2126, %v2250
      %v2401 = vadd.f32 %v2127, %v2255
      %v2402 = vadd.f32 %v2128, %v2260
      %v2403 = vadd.f32 %v2129, %v2265
      %v2404 = vadd.f32 %v2130, %v2270
      %v2405 = vadd.f32 %v2131, %v2275
      %v2406 = vadd.f32 %v2132, %v2280
      %v2407 = vadd.f32 %v2133, %v2285
      %v2408 = vadd.f32 %v2134, %v2290
      %v2409 = vadd.f32 %v2135, %v2295
      %v2410 = vadd.f32 %v2136, %v2300
      %v2411 = vadd.f32 %v2137, %v2305
      %v2412 = vadd.f32 %v2138, %v2310
      %v2413 = vadd.f32 %v2139, %v2315
      %v2414 = vadd.f32 %v2140, %v2320
      %v2415 = vadd.f32 %v2141, %v2325
      %v2416 = vadd.f32 %v2142, %v2330
      %v2417 = vadd.f32 %v2143, %v2335
      %v2418 = vadd.f32 %v2144, %v2340
      %v2419 = vadd.f32 %v2145, %v2345
      %v2420 = vadd.f32 %v2146, %v2350
      %v2421 = vadd.f32 %v2147, %v2355
      %v2422 = vadd.f32 %v2148, %v2360
      %v2423 = vadd.f32 %v2149, %v2365
      %v2424 = vadd.f32 %v2150, %v2370
      %v2425 = vadd.f32 %v2151, %v2375
      %v2426 = vadd.f32 %v2152, %v2380
      %v2427 = vadd.f32 %v2153, %v2385
      %v2428 = vadd.f32 %v2154, %v2390
      %v2429 = vadd.f32 %v2155, %v2395
      %s2430 = scalar_lea.vmem %s3, 768
      %v2431 = vld [vmem:[%s2430] sm:$0xff]
      %v2432 = vld [vmem:[%s2430 + $0x8] sm:$0xff]
      %v2433 = vld [vmem:[%s2430 + $0x10] sm:$0xff]
      %v2434 = vld [vmem:[%s2430 + $0x18] sm:$0xff]
      %v2435 = vld [vmem:[%s2430 + $0x20] sm:$0xff]
      %v2436 = vld [vmem:[%s2430 + $0x28] sm:$0xff]
      %v2437 = vld [vmem:[%s2430 + $0x30] sm:$0xff]
      %v2438 = vld [vmem:[%s2430 + $0x38] sm:$0xff]
      %v2439 = vld [vmem:[%s2430 + $0x40] sm:$0xff]
      %v2440 = vld [vmem:[%s2430 + $0x48] sm:$0xff]
      %v2441 = vld [vmem:[%s2430 + $0x50] sm:$0xff]
      %v2442 = vld [vmem:[%s2430 + $0x58] sm:$0xff]
      %v2443 = vld [vmem:[%s2430 + $0x60] sm:$0xff]
      %v2444 = vld [vmem:[%s2430 + $0x68] sm:$0xff]
      %v2445 = vld [vmem:[%s2430 + $0x70] sm:$0xff]
      %v2446 = vld [vmem:[%s2430 + $0x78] sm:$0xff]
      %2447 = vmatprep.subr.mxu0 0.0
      %2448 = vmatpush1.msra.mxu0 %v2431
      %2449 = vmatprep.subr.mxu0 0.0
      %2450 = vmatpush1.msra.mxu0 %v2432
      %2451 = vmatprep.subr.mxu0 0.0
      %2452 = vmatpush1.msra.mxu0 %v2433
      %2453 = vmatprep.subr.mxu0 0.0
      %2454 = vmatpush1.msra.mxu0 %v2434
      %2455 = vmatprep.subr.mxu0 0.0
      %2456 = vmatpush1.msra.mxu0 %v2435
      %2457 = vmatprep.subr.mxu0 0.0
      %2458 = vmatpush1.msra.mxu0 %v2436
      %2459 = vmatprep.subr.mxu0 0.0
      %2460 = vmatpush1.msra.mxu0 %v2437
      %2461 = vmatprep.subr.mxu0 0.0
      %2462 = vmatpush1.msra.mxu0 %v2438
      %2463 = vmatprep.subr.mxu0 0.0
      %2464 = vmatpush1.msra.mxu0 %v2439
      %2465 = vmatprep.subr.mxu0 0.0
      %2466 = vmatpush1.msra.mxu0 %v2440
      %2467 = vmatprep.subr.mxu0 0.0
      %2468 = vmatpush1.msra.mxu0 %v2441
      %2469 = vmatprep.subr.mxu0 0.0
      %2470 = vmatpush1.msra.mxu0 %v2442
      %2471 = vmatprep.subr.mxu0 0.0
      %2472 = vmatpush1.msra.mxu0 %v2443
      %2473 = vmatprep.subr.mxu0 0.0
      %2474 = vmatpush1.msra.mxu0 %v2444
      %2475 = vmatprep.subr.mxu0 0.0
      %2476 = vmatpush1.msra.mxu0 %v2445
      %2477 = vmatprep.subr.mxu0 0.0
      %2478 = vmatpush1.msra.mxu0 %v2446
      %2479 = vmatprep.subr.mxu0 0.0
      %2480 = vmatpush1.msra.mxu0 0.0
      %2481 = vmatprep.subr.mxu0 0.0
      %2482 = vmatpush1.msra.mxu0 0.0
      %2483 = vmatprep.subr.mxu0 0.0
      %2484 = vmatpush1.msra.mxu0 0.0
      %2485 = vmatprep.subr.mxu0 0.0
      %2486 = vmatpush1.msra.mxu0 0.0
      %2487 = vmatprep.subr.mxu0 0.0
      %2488 = vmatpush1.msra.mxu0 0.0
      %2489 = vmatprep.subr.mxu0 0.0
      %2490 = vmatpush1.msra.mxu0 0.0
      %2491 = vmatprep.subr.mxu0 0.0
      %2492 = vmatpush1.msra.mxu0 0.0
      %2493 = vmatprep.subr.mxu0 0.0
      %2494 = vmatpush1.msra.mxu0 0.0
      %2495 = vmatprep.subr.mxu0 0.0
      %2496 = vmatpush1.msra.mxu0 0.0
      %2497 = vmatprep.subr.mxu0 0.0
      %2498 = vmatpush1.msra.mxu0 0.0
      %2499 = vmatprep.subr.mxu0 0.0
      %2500 = vmatpush1.msra.mxu0 0.0
      %2501 = vmatprep.subr.mxu0 0.0
      %2502 = vmatpush1.msra.mxu0 0.0
      %2503 = vmatprep.subr.mxu0 0.0
      %2504 = vmatpush1.msra.mxu0 0.0
      %2505 = vmatprep.subr.mxu0 0.0
      %2506 = vmatpush1.msra.mxu0 0.0
      %2507 = vmatprep.subr.mxu0 0.0
      %2508 = vmatpush1.msra.mxu0 0.0
      %2509 = vmatprep.subr.mxu0 0.0
      %2510 = vmatpush1.msra.mxu0 0.0
      %2511 = vmatprep.mubr.f32.mxu0 0.0
      %2512 = vmatmul.mubr.f32.gmra.mrb[0].mxu0 %v726
      %v2513 = vpop.f32.mrb[0].mxu0
      %v2514 = vadd.f32 0.0, %v2513
      %v2515 = vpop.f32.mrb[0].mxu0
      %2516 = vmatprep.mubr.f32.mxu0 0.0
      %2517 = vmatmul.mubr.f32.gmra.mrb[0].mxu0 %v642
      %v2518 = vpop.f32.mrb[0].mxu0
      %v2519 = vadd.f32 0.0, %v2518
      %v2520 = vpop.f32.mrb[0].mxu0
      %2521 = vmatprep.mubr.f32.mxu0 0.0
      %2522 = vmatmul.mubr.f32.gmra.mrb[0].mxu0 %v727
      %v2523 = vpop.f32.mrb[0].mxu0
      %v2524 = vadd.f32 0.0, %v2523
      %v2525 = vpop.f32.mrb[0].mxu0
      %2526 = vmatprep.mubr.f32.mxu0 0.0
      %2527 = vmatmul.mubr.f32.gmra.mrb[0].mxu0 %v645
      %v2528 = vpop.f32.mrb[0].mxu0
      %v2529 = vadd.f32 0.0, %v2528
      %v2530 = vpop.f32.mrb[0].mxu0
      %2531 = vmatprep.mubr.f32.mxu0 0.0
      %2532 = vmatmul.mubr.f32.gmra.mrb[0].mxu0 %v728
      %v2533 = vpop.f32.mrb[0].mxu0
      %v2534 = vadd.f32 0.0, %v2533
      %v2535 = vpop.f32.mrb[0].mxu0
      %2536 = vmatprep.mubr.f32.mxu0 0.0
      %2537 = vmatmul.mubr.f32.gmra.mrb[0].mxu0 %v648
      %v2538 = vpop.f32.mrb[0].mxu0
      %v2539 = vadd.f32 0.0, %v2538
      %v2540 = vpop.f32.mrb[0].mxu0
      %2541 = vmatprep.mubr.f32.mxu0 0.0
      %2542 = vmatmul.mubr.f32.gmra.mrb[0].mxu0 %v729
      %v2543 = vpop.f32.mrb[0].mxu0
      %v2544 = vadd.f32 0.0, %v2543
      %v2545 = vpop.f32.mrb[0].mxu0
      %2546 = vmatprep.mubr.f32.mxu0 0.0
      %2547 = vmatmul.mubr.f32.gmra.mrb[0].mxu0 %v651
      %v2548 = vpop.f32.mrb[0].mxu0
      %v2549 = vadd.f32 0.0, %v2548
      %v2550 = vpop.f32.mrb[0].mxu0
      %2551 = vmatprep.mubr.f32.mxu0 0.0
      %2552 = vmatmul.mubr.f32.gmra.mrb[0].mxu0 %v730
      %v2553 = vpop.f32.mrb[0].mxu0
      %v2554 = vadd.f32 0.0, %v2553
      %v2555 = vpop.f32.mrb[0].mxu0
      %2556 = vmatprep.mubr.f32.mxu0 0.0
      %2557 = vmatmul.mubr.f32.gmra.mrb[0].mxu0 %v654
      %v2558 = vpop.f32.mrb[0].mxu0
      %v2559 = vadd.f32 0.0, %v2558
      %v2560 = vpop.f32.mrb[0].mxu0
      %2561 = vmatprep.mubr.f32.mxu0 0.0
      %2562 = vmatmul.mubr.f32.gmra.mrb[0].mxu0 %v731
      %v2563 = vpop.f32.mrb[0].mxu0
      %v2564 = vadd.f32 0.0, %v2563
      %v2565 = vpop.f32.mrb[0].mxu0
      %2566 = vmatprep.mubr.f32.mxu0 0.0
      %2567 = vmatmul.mubr.f32.gmra.mrb[0].mxu0 %v657
      %v2568 = vpop.f32.mrb[0].mxu0
      %v2569 = vadd.f32 0.0, %v2568
      %v2570 = vpop.f32.mrb[0].mxu0
      %2571 = vmatprep.mubr.f32.mxu0 0.0
      %2572 = vmatmul.mubr.f32.gmra.mrb[0].mxu0 %v732
      %v2573 = vpop.f32.mrb[0].mxu0
      %v2574 = vadd.f32 0.0, %v2573
      %v2575 = vpop.f32.mrb[0].mxu0
      %2576 = vmatprep.mubr.f32.mxu0 0.0
      %2577 = vmatmul.mubr.f32.gmra.mrb[0].mxu0 %v660
      %v2578 = vpop.f32.mrb[0].mxu0
      %v2579 = vadd.f32 0.0, %v2578
      %v2580 = vpop.f32.mrb[0].mxu0
      %2581 = vmatprep.mubr.f32.mxu0 0.0
      %2582 = vmatmul.mubr.f32.gmra.mrb[0].mxu0 %v733
      %v2583 = vpop.f32.mrb[0].mxu0
      %v2584 = vadd.f32 0.0, %v2583
      %v2585 = vpop.f32.mrb[0].mxu0
      %2586 = vmatprep.mubr.f32.mxu0 0.0
      %2587 = vmatmul.mubr.f32.gmra.mrb[0].mxu0 %v663
      %v2588 = vpop.f32.mrb[0].mxu0
      %v2589 = vadd.f32 0.0, %v2588
      %v2590 = vpop.f32.mrb[0].mxu0
      %2591 = vmatprep.mubr.f32.mxu0 0.0
      %2592 = vmatmul.mubr.f32.gmra.mrb[0].mxu0 %v734
      %v2593 = vpop.f32.mrb[0].mxu0
      %v2594 = vadd.f32 0.0, %v2593
      %v2595 = vpop.f32.mrb[0].mxu0
      %2596 = vmatprep.mubr.f32.mxu0 0.0
      %2597 = vmatmul.mubr.f32.gmra.mrb[0].mxu0 %v666
      %v2598 = vpop.f32.mrb[0].mxu0
      %v2599 = vadd.f32 0.0, %v2598
      %v2600 = vpop.f32.mrb[0].mxu0
      %2601 = vmatprep.mubr.f32.mxu0 0.0
      %2602 = vmatmul.mubr.f32.gmra.mrb[0].mxu0 %v735
      %v2603 = vpop.f32.mrb[0].mxu0
      %v2604 = vadd.f32 0.0, %v2603
      %v2605 = vpop.f32.mrb[0].mxu0
      %2606 = vmatprep.mubr.f32.mxu0 0.0
      %2607 = vmatmul.mubr.f32.gmra.mrb[0].mxu0 %v669
      %v2608 = vpop.f32.mrb[0].mxu0
      %v2609 = vadd.f32 0.0, %v2608
      %v2610 = vpop.f32.mrb[0].mxu0
      %2611 = vmatprep.mubr.f32.mxu0 0.0
      %2612 = vmatmul.mubr.f32.gmra.mrb[0].mxu0 %v736
      %v2613 = vpop.f32.mrb[0].mxu0
      %v2614 = vadd.f32 0.0, %v2613
      %v2615 = vpop.f32.mrb[0].mxu0
      %2616 = vmatprep.mubr.f32.mxu0 0.0
      %2617 = vmatmul.mubr.f32.gmra.mrb[0].mxu0 %v672
      %v2618 = vpop.f32.mrb[0].mxu0
      %v2619 = vadd.f32 0.0, %v2618
      %v2620 = vpop.f32.mrb[0].mxu0
      %2621 = vmatprep.mubr.f32.mxu0 0.0
      %2622 = vmatmul.mubr.f32.gmra.mrb[0].mxu0 %v737
      %v2623 = vpop.f32.mrb[0].mxu0
      %v2624 = vadd.f32 0.0, %v2623
      %v2625 = vpop.f32.mrb[0].mxu0
      %2626 = vmatprep.mubr.f32.mxu0 0.0
      %2627 = vmatmul.mubr.f32.gmra.mrb[0].mxu0 %v675
      %v2628 = vpop.f32.mrb[0].mxu0
      %v2629 = vadd.f32 0.0, %v2628
      %v2630 = vpop.f32.mrb[0].mxu0
      %2631 = vmatprep.mubr.f32.mxu0 0.0
      %2632 = vmatmul.mubr.f32.gmra.mrb[0].mxu0 %v738
      %v2633 = vpop.f32.mrb[0].mxu0
      %v2634 = vadd.f32 0.0, %v2633
      %v2635 = vpop.f32.mrb[0].mxu0
      %2636 = vmatprep.mubr.f32.mxu0 0.0
      %2637 = vmatmul.mubr.f32.gmra.mrb[0].mxu0 %v678
      %v2638 = vpop.f32.mrb[0].mxu0
      %v2639 = vadd.f32 0.0, %v2638
      %v2640 = vpop.f32.mrb[0].mxu0
      %2641 = vmatprep.mubr.f32.mxu0 0.0
      %2642 = vmatmul.mubr.f32.gmra.mrb[0].mxu0 %v739
      %v2643 = vpop.f32.mrb[0].mxu0
      %v2644 = vadd.f32 0.0, %v2643
      %v2645 = vpop.f32.mrb[0].mxu0
      %2646 = vmatprep.mubr.f32.mxu0 0.0
      %2647 = vmatmul.mubr.f32.gmra.mrb[0].mxu0 %v681
      %v2648 = vpop.f32.mrb[0].mxu0
      %v2649 = vadd.f32 0.0, %v2648
      %v2650 = vpop.f32.mrb[0].mxu0
      %2651 = vmatprep.mubr.f32.mxu0 0.0
      %2652 = vmatmul.mubr.f32.gmra.mrb[0].mxu0 %v740
      %v2653 = vpop.f32.mrb[0].mxu0
      %v2654 = vadd.f32 0.0, %v2653
      %v2655 = vpop.f32.mrb[0].mxu0
      %2656 = vmatprep.mubr.f32.mxu0 0.0
      %2657 = vmatmul.mubr.f32.gmra.mrb[0].mxu0 %v684
      %v2658 = vpop.f32.mrb[0].mxu0
      %v2659 = vadd.f32 0.0, %v2658
      %v2660 = vpop.f32.mrb[0].mxu0
      %2661 = vmatprep.mubr.f32.mxu0 0.0
      %2662 = vmatmul.mubr.f32.gmra.mrb[0].mxu0 %v741
      %v2663 = vpop.f32.mrb[0].mxu0
      %v2664 = vadd.f32 0.0, %v2663
      %v2665 = vpop.f32.mrb[0].mxu0
      %2666 = vmatprep.mubr.f32.mxu0 0.0
      %2667 = vmatmul.mubr.f32.gmra.mrb[0].mxu0 %v687
      %v2668 = vpop.f32.mrb[0].mxu0
      %v2669 = vadd.f32 0.0, %v2668
      %v2670 = vpop.f32.mrb[0].mxu0
      %2671 = vdwg.mxu0
      %v2672 = vadd.f32 %v2398, %v2514
      %v2673 = vadd.f32 %v2399, %v2519
      %v2674 = vadd.f32 %v2400, %v2524
      %v2675 = vadd.f32 %v2401, %v2529
      %v2676 = vadd.f32 %v2402, %v2534
      %v2677 = vadd.f32 %v2403, %v2539
      %v2678 = vadd.f32 %v2404, %v2544
      %v2679 = vadd.f32 %v2405, %v2549
      %v2680 = vadd.f32 %v2406, %v2554
      %v2681 = vadd.f32 %v2407, %v2559
      %v2682 = vadd.f32 %v2408, %v2564
      %v2683 = vadd.f32 %v2409, %v2569
      %v2684 = vadd.f32 %v2410, %v2574
      %v2685 = vadd.f32 %v2411, %v2579
      %v2686 = vadd.f32 %v2412, %v2584
      %v2687 = vadd.f32 %v2413, %v2589
      %v2688 = vadd.f32 %v2414, %v2594
      %v2689 = vadd.f32 %v2415, %v2599
      %v2690 = vadd.f32 %v2416, %v2604
      %v2691 = vadd.f32 %v2417, %v2609
      %v2692 = vadd.f32 %v2418, %v2614
      %v2693 = vadd.f32 %v2419, %v2619
      %v2694 = vadd.f32 %v2420, %v2624
      %v2695 = vadd.f32 %v2421, %v2629
      %v2696 = vadd.f32 %v2422, %v2634
      %v2697 = vadd.f32 %v2423, %v2639
      %v2698 = vadd.f32 %v2424, %v2644
      %v2699 = vadd.f32 %v2425, %v2649
      %v2700 = vadd.f32 %v2426, %v2654
      %v2701 = vadd.f32 %v2427, %v2659
      %v2702 = vadd.f32 %v2428, %v2664
      %v2703 = vadd.f32 %v2429, %v2669
      %s2704 = scalar_lea.vmem %s3, 896
      %v2705 = vld [vmem:[%s2704] sm:$0xff]
      %v2706 = vld [vmem:[%s2704 + $0x8] sm:$0xff]
      %v2707 = vld [vmem:[%s2704 + $0x10] sm:$0xff]
      %v2708 = vld [vmem:[%s2704 + $0x18] sm:$0xff]
      %v2709 = vld [vmem:[%s2704 + $0x20] sm:$0xff]
      %v2710 = vld [vmem:[%s2704 + $0x28] sm:$0xff]
      %v2711 = vld [vmem:[%s2704 + $0x30] sm:$0xff]
      %v2712 = vld [vmem:[%s2704 + $0x38] sm:$0xff]
      %v2713 = vld [vmem:[%s2704 + $0x40] sm:$0xff]
      %v2714 = vld [vmem:[%s2704 + $0x48] sm:$0xff]
      %v2715 = vld [vmem:[%s2704 + $0x50] sm:$0xff]
      %v2716 = vld [vmem:[%s2704 + $0x58] sm:$0xff]
      %v2717 = vld [vmem:[%s2704 + $0x60] sm:$0xff]
      %v2718 = vld [vmem:[%s2704 + $0x68] sm:$0xff]
      %v2719 = vld [vmem:[%s2704 + $0x70] sm:$0xff]
      %v2720 = vld [vmem:[%s2704 + $0x78] sm:$0xff]
      %2721 = vmatprep.subr.mxu0 0.0
      %2722 = vmatpush1.msra.mxu0 %v2705
      %2723 = vmatprep.subr.mxu0 0.0
      %2724 = vmatpush1.msra.mxu0 %v2706
      %2725 = vmatprep.subr.mxu0 0.0
      %2726 = vmatpush1.msra.mxu0 %v2707
      %2727 = vmatprep.subr.mxu0 0.0
      %2728 = vmatpush1.msra.mxu0 %v2708
      %2729 = vmatprep.subr.mxu0 0.0
      %2730 = vmatpush1.msra.mxu0 %v2709
      %2731 = vmatprep.subr.mxu0 0.0
      %2732 = vmatpush1.msra.mxu0 %v2710
      %2733 = vmatprep.subr.mxu0 0.0
      %2734 = vmatpush1.msra.mxu0 %v2711
      %2735 = vmatprep.subr.mxu0 0.0
      %2736 = vmatpush1.msra.mxu0 %v2712
      %2737 = vmatprep.subr.mxu0 0.0
      %2738 = vmatpush1.msra.mxu0 %v2713
      %2739 = vmatprep.subr.mxu0 0.0
      %2740 = vmatpush1.msra.mxu0 %v2714
      %2741 = vmatprep.subr.mxu0 0.0
      %2742 = vmatpush1.msra.mxu0 %v2715
      %2743 = vmatprep.subr.mxu0 0.0
      %2744 = vmatpush1.msra.mxu0 %v2716
      %2745 = vmatprep.subr.mxu0 0.0
      %2746 = vmatpush1.msra.mxu0 %v2717
      %2747 = vmatprep.subr.mxu0 0.0
      %2748 = vmatpush1.msra.mxu0 %v2718
      %2749 = vmatprep.subr.mxu0 0.0
      %2750 = vmatpush1.msra.mxu0 %v2719
      %2751 = vmatprep.subr.mxu0 0.0
      %2752 = vmatpush1.msra.mxu0 %v2720
      %2753 = vmatprep.subr.mxu0 0.0
      %2754 = vmatpush1.msra.mxu0 0.0
      %2755 = vmatprep.subr.mxu0 0.0
      %2756 = vmatpush1.msra.mxu0 0.0
      %2757 = vmatprep.subr.mxu0 0.0
      %2758 = vmatpush1.msra.mxu0 0.0
      %2759 = vmatprep.subr.mxu0 0.0
      %2760 = vmatpush1.msra.mxu0 0.0
      %2761 = vmatprep.subr.mxu0 0.0
      %2762 = vmatpush1.msra.mxu0 0.0
      %2763 = vmatprep.subr.mxu0 0.0
      %2764 = vmatpush1.msra.mxu0 0.0
      %2765 = vmatprep.subr.mxu0 0.0
      %2766 = vmatpush1.msra.mxu0 0.0
      %2767 = vmatprep.subr.mxu0 0.0
      %2768 = vmatpush1.msra.mxu0 0.0
      %2769 = vmatprep.subr.mxu0 0.0
      %2770 = vmatpush1.msra.mxu0 0.0
      %2771 = vmatprep.subr.mxu0 0.0
      %2772 = vmatpush1.msra.mxu0 0.0
      %2773 = vmatprep.subr.mxu0 0.0
      %2774 = vmatpush1.msra.mxu0 0.0
      %2775 = vmatprep.subr.mxu0 0.0
      %2776 = vmatpush1.msra.mxu0 0.0
      %2777 = vmatprep.subr.mxu0 0.0
      %2778 = vmatpush1.msra.mxu0 0.0
      %2779 = vmatprep.subr.mxu0 0.0
      %2780 = vmatpush1.msra.mxu0 0.0
      %2781 = vmatprep.subr.mxu0 0.0
      %2782 = vmatpush1.msra.mxu0 0.0
      %2783 = vmatprep.subr.mxu0 0.0
      %2784 = vmatpush1.msra.mxu0 0.0
      %2785 = vmatprep.mubr.f32.mxu0 0.0
      %2786 = vmatmul.mubr.f32.gmra.mrb[0].mxu0 %v567
      %v2787 = vpop.f32.mrb[0].mxu0
      %v2788 = vadd.f32 0.0, %v2787
      %v2789 = vpop.f32.mrb[0].mxu0
      %2790 = vmatprep.mubr.f32.mxu0 0.0
      %2791 = vmatmul.mubr.f32.gmra.mrb[0].mxu0 %v568
      %v2792 = vpop.f32.mrb[0].mxu0
      %v2793 = vadd.f32 0.0, %v2792
      %v2794 = vpop.f32.mrb[0].mxu0
      %2795 = vmatprep.mubr.f32.mxu0 0.0
      %2796 = vmatmul.mubr.f32.gmra.mrb[0].mxu0 %v569
      %v2797 = vpop.f32.mrb[0].mxu0
      %v2798 = vadd.f32 0.0, %v2797
      %v2799 = vpop.f32.mrb[0].mxu0
      %2800 = vmatprep.mubr.f32.mxu0 0.0
      %2801 = vmatmul.mubr.f32.gmra.mrb[0].mxu0 %v570
      %v2802 = vpop.f32.mrb[0].mxu0
      %v2803 = vadd.f32 0.0, %v2802
      %v2804 = vpop.f32.mrb[0].mxu0
      %2805 = vmatprep.mubr.f32.mxu0 0.0
      %2806 = vmatmul.mubr.f32.gmra.mrb[0].mxu0 %v571
      %v2807 = vpop.f32.mrb[0].mxu0
      %v2808 = vadd.f32 0.0, %v2807
      %v2809 = vpop.f32.mrb[0].mxu0
      %2810 = vmatprep.mubr.f32.mxu0 0.0
      %2811 = vmatmul.mubr.f32.gmra.mrb[0].mxu0 %v572
      %v2812 = vpop.f32.mrb[0].mxu0
      %v2813 = vadd.f32 0.0, %v2812
      %v2814 = vpop.f32.mrb[0].mxu0
      %2815 = vmatprep.mubr.f32.mxu0 0.0
      %2816 = vmatmul.mubr.f32.gmra.mrb[0].mxu0 %v573
      %v2817 = vpop.f32.mrb[0].mxu0
      %v2818 = vadd.f32 0.0, %v2817
      %v2819 = vpop.f32.mrb[0].mxu0
      %2820 = vmatprep.mubr.f32.mxu0 0.0
      %2821 = vmatmul.mubr.f32.gmra.mrb[0].mxu0 %v574
      %v2822 = vpop.f32.mrb[0].mxu0
      %v2823 = vadd.f32 0.0, %v2822
      %v2824 = vpop.f32.mrb[0].mxu0
      %2825 = vmatprep.mubr.f32.mxu0 0.0
      %2826 = vmatmul.mubr.f32.gmra.mrb[0].mxu0 %v575
      %v2827 = vpop.f32.mrb[0].mxu0
      %v2828 = vadd.f32 0.0, %v2827
      %v2829 = vpop.f32.mrb[0].mxu0
      %2830 = vmatprep.mubr.f32.mxu0 0.0
      %2831 = vmatmul.mubr.f32.gmra.mrb[0].mxu0 %v576
      %v2832 = vpop.f32.mrb[0].mxu0
      %v2833 = vadd.f32 0.0, %v2832
      %v2834 = vpop.f32.mrb[0].mxu0
      %2835 = vmatprep.mubr.f32.mxu0 0.0
      %2836 = vmatmul.mubr.f32.gmra.mrb[0].mxu0 %v577
      %v2837 = vpop.f32.mrb[0].mxu0
      %v2838 = vadd.f32 0.0, %v2837
      %v2839 = vpop.f32.mrb[0].mxu0
      %2840 = vmatprep.mubr.f32.mxu0 0.0
      %2841 = vmatmul.mubr.f32.gmra.mrb[0].mxu0 %v578
      %v2842 = vpop.f32.mrb[0].mxu0
      %v2843 = vadd.f32 0.0, %v2842
      %v2844 = vpop.f32.mrb[0].mxu0
      %2845 = vmatprep.mubr.f32.mxu0 0.0
      %2846 = vmatmul.mubr.f32.gmra.mrb[0].mxu0 %v579
      %v2847 = vpop.f32.mrb[0].mxu0
      %v2848 = vadd.f32 0.0, %v2847
      %v2849 = vpop.f32.mrb[0].mxu0
      %2850 = vmatprep.mubr.f32.mxu0 0.0
      %2851 = vmatmul.mubr.f32.gmra.mrb[0].mxu0 %v580
      %v2852 = vpop.f32.mrb[0].mxu0
      %v2853 = vadd.f32 0.0, %v2852
      %v2854 = vpop.f32.mrb[0].mxu0
      %2855 = vmatprep.mubr.f32.mxu0 0.0
      %2856 = vmatmul.mubr.f32.gmra.mrb[0].mxu0 %v581
      %v2857 = vpop.f32.mrb[0].mxu0
      %v2858 = vadd.f32 0.0, %v2857
      %v2859 = vpop.f32.mrb[0].mxu0
      %2860 = vmatprep.mubr.f32.mxu0 0.0
      %2861 = vmatmul.mubr.f32.gmra.mrb[0].mxu0 %v582
      %v2862 = vpop.f32.mrb[0].mxu0
      %v2863 = vadd.f32 0.0, %v2862
      %v2864 = vpop.f32.mrb[0].mxu0
      %2865 = vmatprep.mubr.f32.mxu0 0.0
      %2866 = vmatmul.mubr.f32.gmra.mrb[0].mxu0 %v583
      %v2867 = vpop.f32.mrb[0].mxu0
      %v2868 = vadd.f32 0.0, %v2867
      %v2869 = vpop.f32.mrb[0].mxu0
      %2870 = vmatprep.mubr.f32.mxu0 0.0
      %2871 = vmatmul.mubr.f32.gmra.mrb[0].mxu0 %v584
      %v2872 = vpop.f32.mrb[0].mxu0
      %v2873 = vadd.f32 0.0, %v2872
      %v2874 = vpop.f32.mrb[0].mxu0
      %2875 = vmatprep.mubr.f32.mxu0 0.0
      %2876 = vmatmul.mubr.f32.gmra.mrb[0].mxu0 %v585
      %v2877 = vpop.f32.mrb[0].mxu0
      %v2878 = vadd.f32 0.0, %v2877
      %v2879 = vpop.f32.mrb[0].mxu0
      %2880 = vmatprep.mubr.f32.mxu0 0.0
      %2881 = vmatmul.mubr.f32.gmra.mrb[0].mxu0 %v586
      %v2882 = vpop.f32.mrb[0].mxu0
      %v2883 = vadd.f32 0.0, %v2882
      %v2884 = vpop.f32.mrb[0].mxu0
      %2885 = vmatprep.mubr.f32.mxu0 0.0
      %2886 = vmatmul.mubr.f32.gmra.mrb[0].mxu0 %v587
      %v2887 = vpop.f32.mrb[0].mxu0
      %v2888 = vadd.f32 0.0, %v2887
      %v2889 = vpop.f32.mrb[0].mxu0
      %2890 = vmatprep.mubr.f32.mxu0 0.0
      %2891 = vmatmul.mubr.f32.gmra.mrb[0].mxu0 %v588
      %v2892 = vpop.f32.mrb[0].mxu0
      %v2893 = vadd.f32 0.0, %v2892
      %v2894 = vpop.f32.mrb[0].mxu0
      %2895 = vmatprep.mubr.f32.mxu0 0.0
      %2896 = vmatmul.mubr.f32.gmra.mrb[0].mxu0 %v589
      %v2897 = vpop.f32.mrb[0].mxu0
      %v2898 = vadd.f32 0.0, %v2897
      %v2899 = vpop.f32.mrb[0].mxu0
      %2900 = vmatprep.mubr.f32.mxu0 0.0
      %2901 = vmatmul.mubr.f32.gmra.mrb[0].mxu0 %v590
      %v2902 = vpop.f32.mrb[0].mxu0
      %v2903 = vadd.f32 0.0, %v2902
      %v2904 = vpop.f32.mrb[0].mxu0
      %2905 = vmatprep.mubr.f32.mxu0 0.0
      %2906 = vmatmul.mubr.f32.gmra.mrb[0].mxu0 %v591
      %v2907 = vpop.f32.mrb[0].mxu0
      %v2908 = vadd.f32 0.0, %v2907
      %v2909 = vpop.f32.mrb[0].mxu0
      %2910 = vmatprep.mubr.f32.mxu0 0.0
      %2911 = vmatmul.mubr.f32.gmra.mrb[0].mxu0 %v592
      %v2912 = vpop.f32.mrb[0].mxu0
      %v2913 = vadd.f32 0.0, %v2912
      %v2914 = vpop.f32.mrb[0].mxu0
      %2915 = vmatprep.mubr.f32.mxu0 0.0
      %2916 = vmatmul.mubr.f32.gmra.mrb[0].mxu0 %v593
      %v2917 = vpop.f32.mrb[0].mxu0
      %v2918 = vadd.f32 0.0, %v2917
      %v2919 = vpop.f32.mrb[0].mxu0
      %2920 = vmatprep.mubr.f32.mxu0 0.0
      %2921 = vmatmul.mubr.f32.gmra.mrb[0].mxu0 %v594
      %v2922 = vpop.f32.mrb[0].mxu0
      %v2923 = vadd.f32 0.0, %v2922
      %v2924 = vpop.f32.mrb[0].mxu0
      %2925 = vmatprep.mubr.f32.mxu0 0.0
      %2926 = vmatmul.mubr.f32.gmra.mrb[0].mxu0 %v595
      %v2927 = vpop.f32.mrb[0].mxu0
      %v2928 = vadd.f32 0.0, %v2927
      %v2929 = vpop.f32.mrb[0].mxu0
      %2930 = vmatprep.mubr.f32.mxu0 0.0
      %2931 = vmatmul.mubr.f32.gmra.mrb[0].mxu0 %v596
      %v2932 = vpop.f32.mrb[0].mxu0
      %v2933 = vadd.f32 0.0, %v2932
      %v2934 = vpop.f32.mrb[0].mxu0
      %2935 = vmatprep.mubr.f32.mxu0 0.0
      %2936 = vmatmul.mubr.f32.gmra.mrb[0].mxu0 %v499
      %v2937 = vpop.f32.mrb[0].mxu0
      %v2938 = vadd.f32 0.0, %v2937
      %v2939 = vpop.f32.mrb[0].mxu0
      %2940 = vmatprep.mubr.f32.mxu0 0.0
      %2941 = vmatmul.mubr.f32.gmra.mrb[0].mxu0 %v500
      %v2942 = vpop.f32.mrb[0].mxu0
      %v2943 = vadd.f32 0.0, %v2942
      %v2944 = vpop.f32.mrb[0].mxu0
      %2945 = vdwg.mxu0
      %v2946 = vadd.f32 %v2672, %v2788
      %v2947 = vadd.f32 %v2673, %v2793
      %v2948 = vadd.f32 %v2674, %v2798
      %v2949 = vadd.f32 %v2675, %v2803
      %v2950 = vadd.f32 %v2676, %v2808
      %v2951 = vadd.f32 %v2677, %v2813
      %v2952 = vadd.f32 %v2678, %v2818
      %v2953 = vadd.f32 %v2679, %v2823
      %v2954 = vadd.f32 %v2680, %v2828
      %v2955 = vadd.f32 %v2681, %v2833
      %v2956 = vadd.f32 %v2682, %v2838
      %v2957 = vadd.f32 %v2683, %v2843
      %v2958 = vadd.f32 %v2684, %v2848
      %v2959 = vadd.f32 %v2685, %v2853
      %v2960 = vadd.f32 %v2686, %v2858
      %v2961 = vadd.f32 %v2687, %v2863
      %v2962 = vadd.f32 %v2688, %v2868
      %v2963 = vadd.f32 %v2689, %v2873
      %v2964 = vadd.f32 %v2690, %v2878
      %v2965 = vadd.f32 %v2691, %v2883
      %v2966 = vadd.f32 %v2692, %v2888
      %v2967 = vadd.f32 %v2693, %v2893
      %v2968 = vadd.f32 %v2694, %v2898
      %v2969 = vadd.f32 %v2695, %v2903
      %v2970 = vadd.f32 %v2696, %v2908
      %v2971 = vadd.f32 %v2697, %v2913
      %v2972 = vadd.f32 %v2698, %v2918
      %v2973 = vadd.f32 %v2699, %v2923
      %v2974 = vadd.f32 %v2700, %v2928
      %v2975 = vadd.f32 %v2701, %v2933
      %v2976 = vadd.f32 %v2702, %v2938
      %v2977 = vadd.f32 %v2703, %v2943
      %s2978 = scalar_lea.vmem %s3, 1024
      %v2979 = vld [vmem:[%s2978] sm:$0xff]
      %v2980 = vld [vmem:[%s2978 + $0x8] sm:$0xff]
      %v2981 = vld [vmem:[%s2978 + $0x10] sm:$0xff]
      %v2982 = vld [vmem:[%s2978 + $0x18] sm:$0xff]
      %v2983 = vld [vmem:[%s2978 + $0x20] sm:$0xff]
      %v2984 = vld [vmem:[%s2978 + $0x28] sm:$0xff]
      %v2985 = vld [vmem:[%s2978 + $0x30] sm:$0xff]
      %v2986 = vld [vmem:[%s2978 + $0x38] sm:$0xff]
      %v2987 = vld [vmem:[%s2978 + $0x40] sm:$0xff]
      %v2988 = vld [vmem:[%s2978 + $0x48] sm:$0xff]
      %v2989 = vld [vmem:[%s2978 + $0x50] sm:$0xff]
      %v2990 = vld [vmem:[%s2978 + $0x58] sm:$0xff]
      %v2991 = vld [vmem:[%s2978 + $0x60] sm:$0xff]
      %v2992 = vld [vmem:[%s2978 + $0x68] sm:$0xff]
      %v2993 = vld [vmem:[%s2978 + $0x70] sm:$0xff]
      %v2994 = vld [vmem:[%s2978 + $0x78] sm:$0xff]
      %2995 = vmatprep.subr.mxu0 0.0
      %2996 = vmatpush1.msra.mxu0 %v2979
      %2997 = vmatprep.subr.mxu0 0.0
      %2998 = vmatpush1.msra.mxu0 %v2980
      %2999 = vmatprep.subr.mxu0 0.0
      %3000 = vmatpush1.msra.mxu0 %v2981
      %3001 = vmatprep.subr.mxu0 0.0
      %3002 = vmatpush1.msra.mxu0 %v2982
      %3003 = vmatprep.subr.mxu0 0.0
      %3004 = vmatpush1.msra.mxu0 %v2983
      %3005 = vmatprep.subr.mxu0 0.0
      %3006 = vmatpush1.msra.mxu0 %v2984
      %3007 = vmatprep.subr.mxu0 0.0
      %3008 = vmatpush1.msra.mxu0 %v2985
      %3009 = vmatprep.subr.mxu0 0.0
      %3010 = vmatpush1.msra.mxu0 %v2986
      %3011 = vmatprep.subr.mxu0 0.0
      %3012 = vmatpush1.msra.mxu0 %v2987
      %3013 = vmatprep.subr.mxu0 0.0
      %3014 = vmatpush1.msra.mxu0 %v2988
      %3015 = vmatprep.subr.mxu0 0.0
      %3016 = vmatpush1.msra.mxu0 %v2989
      %3017 = vmatprep.subr.mxu0 0.0
      %3018 = vmatpush1.msra.mxu0 %v2990
      %3019 = vmatprep.subr.mxu0 0.0
      %3020 = vmatpush1.msra.mxu0 %v2991
      %3021 = vmatprep.subr.mxu0 0.0
      %3022 = vmatpush1.msra.mxu0 %v2992
      %3023 = vmatprep.subr.mxu0 0.0
      %3024 = vmatpush1.msra.mxu0 %v2993
      %3025 = vmatprep.subr.mxu0 0.0
      %3026 = vmatpush1.msra.mxu0 %v2994
      %3027 = vmatprep.subr.mxu0 0.0
      %3028 = vmatpush1.msra.mxu0 0.0
      %3029 = vmatprep.subr.mxu0 0.0
      %3030 = vmatpush1.msra.mxu0 0.0
      %3031 = vmatprep.subr.mxu0 0.0
      %3032 = vmatpush1.msra.mxu0 0.0
      %3033 = vmatprep.subr.mxu0 0.0
      %3034 = vmatpush1.msra.mxu0 0.0
      %3035 = vmatprep.subr.mxu0 0.0
      %3036 = vmatpush1.msra.mxu0 0.0
      %3037 = vmatprep.subr.mxu0 0.0
      %3038 = vmatpush1.msra.mxu0 0.0
      %3039 = vmatprep.subr.mxu0 0.0
      %3040 = vmatpush1.msra.mxu0 0.0
      %3041 = vmatprep.subr.mxu0 0.0
      %3042 = vmatpush1.msra.mxu0 0.0
      %3043 = vmatprep.subr.mxu0 0.0
      %3044 = vmatpush1.msra.mxu0 0.0
      %3045 = vmatprep.subr.mxu0 0.0
      %3046 = vmatpush1.msra.mxu0 0.0
      %3047 = vmatprep.subr.mxu0 0.0
      %3048 = vmatpush1.msra.mxu0 0.0
      %3049 = vmatprep.subr.mxu0 0.0
      %3050 = vmatpush1.msra.mxu0 0.0
      %3051 = vmatprep.subr.mxu0 0.0
      %3052 = vmatpush1.msra.mxu0 0.0
      %3053 = vmatprep.subr.mxu0 0.0
      %3054 = vmatpush1.msra.mxu0 0.0
      %3055 = vmatprep.subr.mxu0 0.0
      %3056 = vmatpush1.msra.mxu0 0.0
      %3057 = vmatprep.subr.mxu0 0.0
      %3058 = vmatpush1.msra.mxu0 0.0
      %3059 = vmatprep.mubr.f32.mxu0 0.0
      %3060 = vmatmul.mubr.f32.gmra.mrb[0].mxu0 %v751
      %v3061 = vpop.f32.mrb[0].mxu0
      %v3062 = vadd.f32 0.0, %v3061
      %v3063 = vpop.f32.mrb[0].mxu0
      %3064 = vmatprep.mubr.f32.mxu0 0.0
      %3065 = vmatmul.mubr.f32.gmra.mrb[0].mxu0 %v835
      %v3066 = vpop.f32.mrb[0].mxu0
      %v3067 = vadd.f32 0.0, %v3066
      %v3068 = vpop.f32.mrb[0].mxu0
      %3069 = vmatprep.mubr.f32.mxu0 0.0
      %3070 = vmatmul.mubr.f32.gmra.mrb[0].mxu0 %v754
      %v3071 = vpop.f32.mrb[0].mxu0
      %v3072 = vadd.f32 0.0, %v3071
      %v3073 = vpop.f32.mrb[0].mxu0
      %3074 = vmatprep.mubr.f32.mxu0 0.0
      %3075 = vmatmul.mubr.f32.gmra.mrb[0].mxu0 %v836
      %v3076 = vpop.f32.mrb[0].mxu0
      %v3077 = vadd.f32 0.0, %v3076
      %v3078 = vpop.f32.mrb[0].mxu0
      %3079 = vmatprep.mubr.f32.mxu0 0.0
      %3080 = vmatmul.mubr.f32.gmra.mrb[0].mxu0 %v757
      %v3081 = vpop.f32.mrb[0].mxu0
      %v3082 = vadd.f32 0.0, %v3081
      %v3083 = vpop.f32.mrb[0].mxu0
      %3084 = vmatprep.mubr.f32.mxu0 0.0
      %3085 = vmatmul.mubr.f32.gmra.mrb[0].mxu0 %v837
      %v3086 = vpop.f32.mrb[0].mxu0
      %v3087 = vadd.f32 0.0, %v3086
      %v3088 = vpop.f32.mrb[0].mxu0
      %3089 = vmatprep.mubr.f32.mxu0 0.0
      %3090 = vmatmul.mubr.f32.gmra.mrb[0].mxu0 %v760
      %v3091 = vpop.f32.mrb[0].mxu0
      %v3092 = vadd.f32 0.0, %v3091
      %v3093 = vpop.f32.mrb[0].mxu0
      %3094 = vmatprep.mubr.f32.mxu0 0.0
      %3095 = vmatmul.mubr.f32.gmra.mrb[0].mxu0 %v838
      %v3096 = vpop.f32.mrb[0].mxu0
      %v3097 = vadd.f32 0.0, %v3096
      %v3098 = vpop.f32.mrb[0].mxu0
      %3099 = vmatprep.mubr.f32.mxu0 0.0
      %3100 = vmatmul.mubr.f32.gmra.mrb[0].mxu0 %v763
      %v3101 = vpop.f32.mrb[0].mxu0
      %v3102 = vadd.f32 0.0, %v3101
      %v3103 = vpop.f32.mrb[0].mxu0
      %3104 = vmatprep.mubr.f32.mxu0 0.0
      %3105 = vmatmul.mubr.f32.gmra.mrb[0].mxu0 %v839
      %v3106 = vpop.f32.mrb[0].mxu0
      %v3107 = vadd.f32 0.0, %v3106
      %v3108 = vpop.f32.mrb[0].mxu0
      %3109 = vmatprep.mubr.f32.mxu0 0.0
      %3110 = vmatmul.mubr.f32.gmra.mrb[0].mxu0 %v766
      %v3111 = vpop.f32.mrb[0].mxu0
      %v3112 = vadd.f32 0.0, %v3111
      %v3113 = vpop.f32.mrb[0].mxu0
      %3114 = vmatprep.mubr.f32.mxu0 0.0
      %3115 = vmatmul.mubr.f32.gmra.mrb[0].mxu0 %v840
      %v3116 = vpop.f32.mrb[0].mxu0
      %v3117 = vadd.f32 0.0, %v3116
      %v3118 = vpop.f32.mrb[0].mxu0
      %3119 = vmatprep.mubr.f32.mxu0 0.0
      %3120 = vmatmul.mubr.f32.gmra.mrb[0].mxu0 %v769
      %v3121 = vpop.f32.mrb[0].mxu0
      %v3122 = vadd.f32 0.0, %v3121
      %v3123 = vpop.f32.mrb[0].mxu0
      %3124 = vmatprep.mubr.f32.mxu0 0.0
      %3125 = vmatmul.mubr.f32.gmra.mrb[0].mxu0 %v841
      %v3126 = vpop.f32.mrb[0].mxu0
      %v3127 = vadd.f32 0.0, %v3126
      %v3128 = vpop.f32.mrb[0].mxu0
      %3129 = vmatprep.mubr.f32.mxu0 0.0
      %3130 = vmatmul.mubr.f32.gmra.mrb[0].mxu0 %v772
      %v3131 = vpop.f32.mrb[0].mxu0
      %v3132 = vadd.f32 0.0, %v3131
      %v3133 = vpop.f32.mrb[0].mxu0
      %3134 = vmatprep.mubr.f32.mxu0 0.0
      %3135 = vmatmul.mubr.f32.gmra.mrb[0].mxu0 %v842
      %v3136 = vpop.f32.mrb[0].mxu0
      %v3137 = vadd.f32 0.0, %v3136
      %v3138 = vpop.f32.mrb[0].mxu0
      %3139 = vmatprep.mubr.f32.mxu0 0.0
      %3140 = vmatmul.mubr.f32.gmra.mrb[0].mxu0 %v775
      %v3141 = vpop.f32.mrb[0].mxu0
      %v3142 = vadd.f32 0.0, %v3141
      %v3143 = vpop.f32.mrb[0].mxu0
      %3144 = vmatprep.mubr.f32.mxu0 0.0
      %3145 = vmatmul.mubr.f32.gmra.mrb[0].mxu0 %v843
      %v3146 = vpop.f32.mrb[0].mxu0
      %v3147 = vadd.f32 0.0, %v3146
      %v3148 = vpop.f32.mrb[0].mxu0
      %3149 = vmatprep.mubr.f32.mxu0 0.0
      %3150 = vmatmul.mubr.f32.gmra.mrb[0].mxu0 %v778
      %v3151 = vpop.f32.mrb[0].mxu0
      %v3152 = vadd.f32 0.0, %v3151
      %v3153 = vpop.f32.mrb[0].mxu0
      %3154 = vmatprep.mubr.f32.mxu0 0.0
      %3155 = vmatmul.mubr.f32.gmra.mrb[0].mxu0 %v844
      %v3156 = vpop.f32.mrb[0].mxu0
      %v3157 = vadd.f32 0.0, %v3156
      %v3158 = vpop.f32.mrb[0].mxu0
      %3159 = vmatprep.mubr.f32.mxu0 0.0
      %3160 = vmatmul.mubr.f32.gmra.mrb[0].mxu0 %v781
      %v3161 = vpop.f32.mrb[0].mxu0
      %v3162 = vadd.f32 0.0, %v3161
      %v3163 = vpop.f32.mrb[0].mxu0
      %3164 = vmatprep.mubr.f32.mxu0 0.0
      %3165 = vmatmul.mubr.f32.gmra.mrb[0].mxu0 %v845
      %v3166 = vpop.f32.mrb[0].mxu0
      %v3167 = vadd.f32 0.0, %v3166
      %v3168 = vpop.f32.mrb[0].mxu0
      %3169 = vmatprep.mubr.f32.mxu0 0.0
      %3170 = vmatmul.mubr.f32.gmra.mrb[0].mxu0 %v784
      %v3171 = vpop.f32.mrb[0].mxu0
      %v3172 = vadd.f32 0.0, %v3171
      %v3173 = vpop.f32.mrb[0].mxu0
      %3174 = vmatprep.mubr.f32.mxu0 0.0
      %3175 = vmatmul.mubr.f32.gmra.mrb[0].mxu0 %v846
      %v3176 = vpop.f32.mrb[0].mxu0
      %v3177 = vadd.f32 0.0, %v3176
      %v3178 = vpop.f32.mrb[0].mxu0
      %3179 = vmatprep.mubr.f32.mxu0 0.0
      %3180 = vmatmul.mubr.f32.gmra.mrb[0].mxu0 %v787
      %v3181 = vpop.f32.mrb[0].mxu0
      %v3182 = vadd.f32 0.0, %v3181
      %v3183 = vpop.f32.mrb[0].mxu0
      %3184 = vmatprep.mubr.f32.mxu0 0.0
      %3185 = vmatmul.mubr.f32.gmra.mrb[0].mxu0 %v847
      %v3186 = vpop.f32.mrb[0].mxu0
      %v3187 = vadd.f32 0.0, %v3186
      %v3188 = vpop.f32.mrb[0].mxu0
      %3189 = vmatprep.mubr.f32.mxu0 0.0
      %3190 = vmatmul.mubr.f32.gmra.mrb[0].mxu0 %v790
      %v3191 = vpop.f32.mrb[0].mxu0
      %v3192 = vadd.f32 0.0, %v3191
      %v3193 = vpop.f32.mrb[0].mxu0
      %3194 = vmatprep.mubr.f32.mxu0 0.0
      %3195 = vmatmul.mubr.f32.gmra.mrb[0].mxu0 %v848
      %v3196 = vpop.f32.mrb[0].mxu0
      %v3197 = vadd.f32 0.0, %v3196
      %v3198 = vpop.f32.mrb[0].mxu0
      %3199 = vmatprep.mubr.f32.mxu0 0.0
      %3200 = vmatmul.mubr.f32.gmra.mrb[0].mxu0 %v793
      %v3201 = vpop.f32.mrb[0].mxu0
      %v3202 = vadd.f32 0.0, %v3201
      %v3203 = vpop.f32.mrb[0].mxu0
      %3204 = vmatprep.mubr.f32.mxu0 0.0
      %3205 = vmatmul.mubr.f32.gmra.mrb[0].mxu0 %v849
      %v3206 = vpop.f32.mrb[0].mxu0
      %v3207 = vadd.f32 0.0, %v3206
      %v3208 = vpop.f32.mrb[0].mxu0
      %3209 = vmatprep.mubr.f32.mxu0 0.0
      %3210 = vmatmul.mubr.f32.gmra.mrb[0].mxu0 %v796
      %v3211 = vpop.f32.mrb[0].mxu0
      %v3212 = vadd.f32 0.0, %v3211
      %v3213 = vpop.f32.mrb[0].mxu0
      %3214 = vmatprep.mubr.f32.mxu0 0.0
      %3215 = vmatmul.mubr.f32.gmra.mrb[0].mxu0 %v850
      %v3216 = vpop.f32.mrb[0].mxu0
      %v3217 = vadd.f32 0.0, %v3216
      %v3218 = vpop.f32.mrb[0].mxu0
      %3219 = vdwg.mxu0
      %v3220 = vadd.f32 %v2946, %v3062
      %v3221 = vadd.f32 %v2947, %v3067
      %v3222 = vadd.f32 %v2948, %v3072
      %v3223 = vadd.f32 %v2949, %v3077
      %v3224 = vadd.f32 %v2950, %v3082
      %v3225 = vadd.f32 %v2951, %v3087
      %v3226 = vadd.f32 %v2952, %v3092
      %v3227 = vadd.f32 %v2953, %v3097
      %v3228 = vadd.f32 %v2954, %v3102
      %v3229 = vadd.f32 %v2955, %v3107
      %v3230 = vadd.f32 %v2956, %v3112
      %v3231 = vadd.f32 %v2957, %v3117
      %v3232 = vadd.f32 %v2958, %v3122
      %v3233 = vadd.f32 %v2959, %v3127
      %v3234 = vadd.f32 %v2960, %v3132
      %v3235 = vadd.f32 %v2961, %v3137
      %v3236 = vadd.f32 %v2962, %v3142
      %v3237 = vadd.f32 %v2963, %v3147
      %v3238 = vadd.f32 %v2964, %v3152
      %v3239 = vadd.f32 %v2965, %v3157
      %v3240 = vadd.f32 %v2966, %v3162
      %v3241 = vadd.f32 %v2967, %v3167
      %v3242 = vadd.f32 %v2968, %v3172
      %v3243 = vadd.f32 %v2969, %v3177
      %v3244 = vadd.f32 %v2970, %v3182
      %v3245 = vadd.f32 %v2971, %v3187
      %v3246 = vadd.f32 %v2972, %v3192
      %v3247 = vadd.f32 %v2973, %v3197
      %v3248 = vadd.f32 %v2974, %v3202
      %v3249 = vadd.f32 %v2975, %v3207
      %v3250 = vadd.f32 %v2976, %v3212
      %v3251 = vadd.f32 %v2977, %v3217
      %3252 = vst [vmem:[%s455] sm:$0xff] %v3220
      %3253 = vst [vmem:[%s455 + $0x8] sm:$0xff] %v3221
      %3254 = vst [vmem:[%s455 + $0x10] sm:$0xff] %v3222
      %3255 = vst [vmem:[%s455 + $0x18] sm:$0xff] %v3223
      %3256 = vst [vmem:[%s455 + $0x20] sm:$0xff] %v3224
      %3257 = vst [vmem:[%s455 + $0x28] sm:$0xff] %v3225
      %3258 = vst [vmem:[%s455 + $0x30] sm:$0xff] %v3226
      %3259 = vst [vmem:[%s455 + $0x38] sm:$0xff] %v3227
      %3260 = vst [vmem:[%s455 + $0x40] sm:$0xff] %v3228
      %3261 = vst [vmem:[%s455 + $0x48] sm:$0xff] %v3229
      %3262 = vst [vmem:[%s455 + $0x50] sm:$0xff] %v3230
      %3263 = vst [vmem:[%s455 + $0x58] sm:$0xff] %v3231
      %3264 = vst [vmem:[%s455 + $0x60] sm:$0xff] %v3232
      %3265 = vst [vmem:[%s455 + $0x68] sm:$0xff] %v3233
      %3266 = vst [vmem:[%s455 + $0x70] sm:$0xff] %v3234
      %3267 = vst [vmem:[%s455 + $0x78] sm:$0xff] %v3235
      %3268 = vst [vmem:[%s455 + $0x80] sm:$0xff] %v3236
      %3269 = vst [vmem:[%s455 + $0x88] sm:$0xff] %v3237
      %3270 = vst [vmem:[%s455 + $0x90] sm:$0xff] %v3238
      %3271 = vst [vmem:[%s455 + $0x98] sm:$0xff] %v3239
      %3272 = vst [vmem:[%s455 + $0xa0] sm:$0xff] %v3240
      %3273 = vst [vmem:[%s455 + $0xa8] sm:$0xff] %v3241
      %3274 = vst [vmem:[%s455 + $0xb0] sm:$0xff] %v3242
      %3275 = vst [vmem:[%s455 + $0xb8] sm:$0xff] %v3243
      %3276 = vst [vmem:[%s455 + $0xc0] sm:$0xff] %v3244
      %3277 = vst [vmem:[%s455 + $0xc8] sm:$0xff] %v3245
      %3278 = vst [vmem:[%s455 + $0xd0] sm:$0xff] %v3246
      %3279 = vst [vmem:[%s455 + $0xd8] sm:$0xff] %v3247
      %3280 = vst [vmem:[%s455 + $0xe0] sm:$0xff] %v3248
      %3281 = vst [vmem:[%s455 + $0xe8] sm:$0xff] %v3249
      %3282 = vst [vmem:[%s455 + $0xf0] sm:$0xff] %v3250
      %3283 = vst [vmem:[%s455 + $0xf8] sm:$0xff] %v3251
      %v3284 = vadd.f32 %v3220, %v3221
      %v3285 = vadd.f32 %v3284, %v3222
      %v3286 = vadd.f32 %v3285, %v3223
      %v3287 = vadd.f32 %v3286, %v3224
      %v3288 = vadd.f32 %v3287, %v3225
      %v3289 = vadd.f32 %v3288, %v3226
      %v3290 = vadd.f32 %v3289, %v3227
      %v3291 = vadd.f32 %v3290, %v3228
      %v3292 = vadd.f32 %v3291, %v3229
      %v3293 = vadd.f32 %v3292, %v3230
      %v3294 = vadd.f32 %v3293, %v3231
      %v3295 = vadd.f32 %v3294, %v3232
      %v3296 = vadd.f32 %v3295, %v3233
      %v3297 = vadd.f32 %v3296, %v3234
      %v3298 = vadd.f32 %v3297, %v3235
      %v3299 = vadd.f32 %v3298, %v3236
      %v3300 = vadd.f32 %v3299, %v3237
      %v3301 = vadd.f32 %v3300, %v3238
      %v3302 = vadd.f32 %v3301, %v3239
      %v3303 = vadd.f32 %v3302, %v3240
      %v3304 = vadd.f32 %v3303, %v3241
      %v3305 = vadd.f32 %v3304, %v3242
      %v3306 = vadd.f32 %v3305, %v3243
      %v3307 = vadd.f32 %v3306, %v3244
      %v3308 = vadd.f32 %v3307, %v3245
      %v3309 = vadd.f32 %v3308, %v3246
      %v3310 = vadd.f32 %v3309, %v3247
      %v3311 = vadd.f32 %v3310, %v3248
      %v3312 = vadd.f32 %v3311, %v3249
      %v3313 = vadd.f32 %v3312, %v3250
      %v3314 = vadd.f32 %v3313, %v3251
      %v3315 = vrot.slane %v3314, 4
      %v3316 = vadd.f32 %v3314, %v3315
      %v3317 = vrot.slane %v3316, 2
      %v3318 = vadd.f32 %v3316, %v3317
      %v3319 = vrot.slane %v3318, 1
      %v3320 = vadd.f32 %v3318, %v3319
      %v3321 = vmul.f32 %v3220, %v3220
      %v3322 = vmul.f32 %v3221, %v3221
      %v3323 = vmul.f32 %v3222, %v3222
      %v3324 = vmul.f32 %v3223, %v3223
      %v3325 = vmul.f32 %v3224, %v3224
      %v3326 = vmul.f32 %v3225, %v3225
      %v3327 = vmul.f32 %v3226, %v3226
      %v3328 = vmul.f32 %v3227, %v3227
      %v3329 = vmul.f32 %v3228, %v3228
      %v3330 = vmul.f32 %v3229, %v3229
      %v3331 = vmul.f32 %v3230, %v3230
      %v3332 = vmul.f32 %v3231, %v3231
      %v3333 = vmul.f32 %v3232, %v3232
      %v3334 = vmul.f32 %v3233, %v3233
      %v3335 = vmul.f32 %v3234, %v3234
      %v3336 = vmul.f32 %v3235, %v3235
      %v3337 = vmul.f32 %v3236, %v3236
      %v3338 = vmul.f32 %v3237, %v3237
      %v3339 = vmul.f32 %v3238, %v3238
      %v3340 = vmul.f32 %v3239, %v3239
      %v3341 = vmul.f32 %v3240, %v3240
      %v3342 = vmul.f32 %v3241, %v3241
      %v3343 = vmul.f32 %v3242, %v3242
      %v3344 = vmul.f32 %v3243, %v3243
      %v3345 = vmul.f32 %v3244, %v3244
      %v3346 = vmul.f32 %v3245, %v3245
      %v3347 = vmul.f32 %v3246, %v3246
      %v3348 = vmul.f32 %v3247, %v3247
      %v3349 = vmul.f32 %v3248, %v3248
      %v3350 = vmul.f32 %v3249, %v3249
      %v3351 = vmul.f32 %v3250, %v3250
      %v3352 = vmul.f32 %v3251, %v3251
      %v3353 = vadd.f32 %v3321, %v3322
      %v3354 = vadd.f32 %v3353, %v3323
      %v3355 = vadd.f32 %v3354, %v3324
      %v3356 = vadd.f32 %v3355, %v3325
      %v3357 = vadd.f32 %v3356, %v3326
      %v3358 = vadd.f32 %v3357, %v3327
      %v3359 = vadd.f32 %v3358, %v3328
      %v3360 = vadd.f32 %v3359, %v3329
      %v3361 = vadd.f32 %v3360, %v3330
      %v3362 = vadd.f32 %v3361, %v3331
      %v3363 = vadd.f32 %v3362, %v3332
      %v3364 = vadd.f32 %v3363, %v3333
      %v3365 = vadd.f32 %v3364, %v3334
      %v3366 = vadd.f32 %v3365, %v3335
      %v3367 = vadd.f32 %v3366, %v3336
      %v3368 = vadd.f32 %v3367, %v3337
      %v3369 = vadd.f32 %v3368, %v3338
      %v3370 = vadd.f32 %v3369, %v3339
      %v3371 = vadd.f32 %v3370, %v3340
      %v3372 = vadd.f32 %v3371, %v3341
      %v3373 = vadd.f32 %v3372, %v3342
      %v3374 = vadd.f32 %v3373, %v3343
      %v3375 = vadd.f32 %v3374, %v3344
      %v3376 = vadd.f32 %v3375, %v3345
      %v3377 = vadd.f32 %v3376, %v3346
      %v3378 = vadd.f32 %v3377, %v3347
      %v3379 = vadd.f32 %v3378, %v3348
      %v3380 = vadd.f32 %v3379, %v3349
      %v3381 = vadd.f32 %v3380, %v3350
      %v3382 = vadd.f32 %v3381, %v3351
      %v3383 = vadd.f32 %v3382, %v3352
      %v3384 = vrot.slane %v3383, 4
      %v3385 = vadd.f32 %v3383, %v3384
      %v3386 = vrot.slane %v3385, 2
      %v3387 = vadd.f32 %v3385, %v3386
      %v3388 = vrot.slane %v3387, 1
      %v3389 = vadd.f32 %v3387, %v3388
      %v3390 = vsel %vm633, %v3320, %v3389
      %3391 = vst [vmem:[%s461] sm:$0x3] %v3390
      %s3392 = smul.u32 16, %s24
      %p3393 = scmp.lt.s32.totalorder %s23, 1
      %s3394 = scalar_select %p3393, %s23, 1
      %p3395 = scmp.lt.s32.totalorder %s3392, 15
      %s3396 = scalar_select %p3395, %s3392, 15
      %s3397 = smul.addr %s3396, 2
      %s3398 = smul.addr %s3394, 32
      %s3399 = sadd.s32 %s3397, %s3398
      %s3400 = smul.addr %s3399, 8
      %s3401 = scalar_lea.vmem %s6, %s3400
      %s3402 = sadd.s32 %s23, %s24
      %p3403 = scmp.lt.s32.totalorder %s3402, 1
      %s3404 = scalar_select %p3403, %s3402, 1
      %s3405 = smul.addr %s3404, 2
      %s3406 = scalar_lea.vmem %s7, %s3405
      // Predicated region
      $region45: #{conv_block_forward.4} parent=43 // pred_check
        %p3407 = pneg %p214
      $region46: #{conv_block_forward.4} parent=43 // pred_check_branch
        %3409 = sbr.rel (%p3407) target = $region48
      $region47: #{conv_block_forward.4} parent=43 // pred_region
        %s3410 = smul.u32 16, %s24
      $region48: #{conv_block_forward.4} parent=43 // pred_fallthru
        _
      // Predicated region
      $region49: #{conv_block_forward.4} parent=43 // pred_check
        %p3411 = pneg %p242
      $region50: #{conv_block_forward.4} parent=43 // pred_check_branch
        %3413 = sbr.rel (%p3411) target = $region52
      $region51: #{conv_block_forward.4} parent=43 // pred_region
        %s3414 = sadd.s32 %s23, %s24
      $region52: #{conv_block_forward.4} parent=43 // pred_fallthru
        _
    $region44: #{conv_block_forward.4} parent=5 // pred_fallthru
      _
    %p3415 = scmp.le.s32.totalorder 2, %s14
    // Predicated region
    $region53: #{conv_block_forward.4} parent=5 // pred_check
      %p3416 = pneg %p3415
    $region54: #{conv_block_forward.4} parent=5 // pred_check_branch
      %3418 = sbr.rel (%p3416) target = $region56
    $region55: #{conv_block_forward.4} parent=5 // pred_region
      %s3419 = ssub.s32 %s14, 2
      // Predicated region
      $region57: #{conv_block_forward.4} parent=55 // pred_check
        %p3420 = pneg %p220
      $region58: #{conv_block_forward.4} parent=55 // pred_check_branch
        %3422 = sbr.rel (%p3420) target = $region60
      $region59: #{conv_block_forward.4} parent=55 // pred_region
        %s3423 = smul.u32 16, %s26
        %p3424 = scmp.lt.s32.totalorder %s25, 1
        %s3425 = scalar_select %p3424, %s25, 1
        %p3426 = scmp.lt.s32.totalorder %s3423, 15
        %s3427 = scalar_select %p3426, %s3423, 15
        %s3428 = smul.addr %s3427, 2
        %s3429 = smul.addr %s3425, 32
        %s3430 = sadd.s32 %s3428, %s3429
        %s3431 = smul.addr %s3430, 8
        %s3432 = scalar_lea.vmem %s6, %s3431
      $region60: #{conv_block_forward.4} parent=55 // pred_fallthru
        _
      // Predicated region
      $region61: #{conv_block_forward.4} parent=55 // pred_check
        %p3433 = pneg %p248
      $region62: #{conv_block_forward.4} parent=55 // pred_check_branch
        %3435 = sbr.rel (%p3433) target = $region64
      $region63: #{conv_block_forward.4} parent=55 // pred_region
        %s3436 = sadd.s32 %s25, %s26
        %p3437 = scmp.lt.s32.totalorder %s3436, 1
        %s3438 = scalar_select %p3437, %s3436, 1
        %s3439 = smul.addr %s3438, 2
        %s3440 = scalar_lea.vmem %s7, %s3439
      $region64: #{conv_block_forward.4} parent=55 // pred_fallthru
        _
    $region56: #{conv_block_forward.4} parent=5 // pred_fallthru
      _
  $region6: #{conv_block_forward.4} parent=0 // loop_footer
    %s18 = sadd.s32 1, %s14
  $region7: #{conv_block_forward.4} parent=0 // loop_footer_branch
    %13 = sbr.rel target = $region3
  $region8: #{conv_block_forward.4} parent=0 // loop_exit
    _

</llo_original>
